<compile_context>
chip_gen: v7x
topology: tpu7x:2x2x1
jax: 0.10.0
libtpu: 0.0.40
codegen_flags: <defaults>
</compile_context>

<pallas_src>
import numpy as np

import jax
import jax.numpy as jnp
from jax.experimental import pallas as pl
from jax.experimental.pallas import tpu as pltpu


# ---------------------------------------------------------------------------
# Fused per-image kernel (grid=(N,), one image per grid step)
# ---------------------------------------------------------------------------
def _net_kernel(xp_ref, w1_ref, b1_ref, w2_ref, b2_ref,
                fw1_ref, fb1_ref, fw2_ref, fb2_ref, fw3_ref, fb3_ref,
                out_ref,
                a1_ref, p1c_ref, patch_ref, a2_ref, p2_ref, flat_ref):
    f32 = jnp.float32
    bf16 = jnp.bfloat16

    # ---- conv1 + ReLU: ONE MXU matmul over wrapper-built im2col rows --------
    # a1[32*h + w, co] = relu(b1[co] + sum_k xp[32*h + w, k] * w1[k, co])
    # (rows with w >= 28 hold relu(b1) junk; they never feed a valid output)
    a1_ref[...] = jnp.maximum(
        jnp.dot(xp_ref[...], w1_ref[...], preferred_element_type=f32)
        + b1_ref[...], 0.0)

    # Zero only the p1c pad tail that conv2's shifted windows can touch.
    p1c_ref[224:240, :] = jnp.zeros((16, 32), bf16)

    # ---- maxpool1 2x2: stride-2 reads on the 28x(32) grid -> 14x(16) grid ----
    for ho in range(14):
        ev = a1_ref[pl.ds(64 * ho, 32, stride=2), :]      # h in {2ho,2ho+1}, even w
        od = a1_ref[pl.ds(64 * ho + 1, 32, stride=2), :]  # h in {2ho,2ho+1}, odd  w
        m = jnp.maximum(ev, od)                 # rows 0..15: h=2ho, rows 16..31: h=2ho+1
        p1c_ref[16 * ho:16 * ho + 16, :] = (
            jnp.maximum(m[0:16, :], m[16:32, :]).astype(bf16))

    # ---- conv2 im2col: 7 lane-dense 128-wide stores (4 taps each, K=896) -----
    # patch[r, 32*k + ci] = p1c[r + 16*i + j, ci],  k = 5*i + j  (rows r = 16*oh + ow)
    for g in range(7):
        cols = []
        for k in range(4 * g, 4 * g + 4):
            if k < 25:
                d = 16 * (k // 5) + (k % 5)
                cols.append(p1c_ref[d:d + 160, :])
            else:
                cols.append(jnp.zeros((160, 32), bf16))   # zero pad taps (match zero w2 rows)
        patch_ref[:, 128 * g:128 * g + 128] = jnp.concatenate(cols, axis=1)

    # ---- conv2 + ReLU: ONE MXU matmul (160,896)@(896,64) ---------------------
    a2_ref[...] = jnp.maximum(
        jnp.dot(patch_ref[...], w2_ref[...], preferred_element_type=f32)
        + b2_ref[...], 0.0)

    # ---- maxpool2 2x2 on the 10x(16) grid -> 5x(8) grid -----------------------
    for po in range(5):
        ev = a2_ref[pl.ds(32 * po, 16, stride=2), :]
        od = a2_ref[pl.ds(32 * po + 1, 16, stride=2), :]
        m = jnp.maximum(ev, od)                 # rows 0..7: oh=2po, rows 8..15: oh=2po+1
        p2_ref[8 * po:8 * po + 8, :] = jnp.maximum(m[0:8, :], m[8:16, :])

    # ---- flatten: 13 lane-dense (1,128) stores (two spatial positions each) ---
    # flat[s*64 + c] = p2[8*(s//5) + s%5, c]   (fc1 weights pre-permuted to match)
    zpad = jnp.zeros((1, 64), bf16)
    for t in range(13):
        s0 = 2 * t
        r0 = 8 * (s0 // 5) + (s0 % 5)
        left = p2_ref[r0:r0 + 1, :].astype(bf16)
        if s0 + 1 < 25:
            r1 = 8 * ((s0 + 1) // 5) + ((s0 + 1) % 5)
            right = p2_ref[r1:r1 + 1, :].astype(bf16)
        else:
            right = zpad                        # also zeroes the 1600..1663 pad lanes
        flat_ref[:, 128 * t:128 * t + 128] = jnp.concatenate([left, right], axis=1)

    # ---- fc1 -> relu -> fc2 -> relu -> fc3 (all lane-padded to 128) ----------
    h = jnp.dot(flat_ref[...], fw1_ref[...], preferred_element_type=f32) + fb1_ref[...]
    h = jnp.maximum(h, 0.0)
    h = jnp.dot(h.astype(bf16), fw2_ref[...], preferred_element_type=f32) + fb2_ref[...]
    h = jnp.maximum(h, 0.0)
    y = jnp.dot(h.astype(bf16), fw3_ref[...], preferred_element_type=f32) + fb3_ref[...]
    out_ref[...] = jnp.broadcast_to(y, (8, 128))          # full-width aligned store


# ---------------------------------------------------------------------------
# pallas_call wrapper
# ---------------------------------------------------------------------------
def _forward_impl(x_patch, pk):
    N = x_patch.shape[0]
    weights = (pk["w1"], pk["b1"], pk["w2"], pk["b2"],
               pk["fw1"], pk["fb1"], pk["fw2"], pk["fb2"], pk["fw3"], pk["fb3"])
    in_specs = [pl.BlockSpec((None, 896, 32), lambda n: (n, 0, 0))]
    in_specs += [pl.BlockSpec(w.shape, lambda n: (0, 0)) for w in weights]
    out = pl.pallas_call(
        _net_kernel,
        out_shape=jax.ShapeDtypeStruct((N, 8, 128), jnp.float32),
        grid=(N,),
        in_specs=in_specs,
        out_specs=pl.BlockSpec((None, 8, 128), lambda n: (n, 0, 0)),
        scratch_shapes=[
            pltpu.VMEM((896, 32), jnp.float32),     # a1   conv1 output (28x32 grid)
            pltpu.VMEM((240, 32), jnp.bfloat16),    # p1c  pool1 output (14x16 grid + pad)
            pltpu.VMEM((160, 896), jnp.bfloat16),   # conv2 im2col patch matrix
            pltpu.VMEM((160, 64), jnp.float32),     # a2   conv2 output (10x16 grid)
            pltpu.VMEM((40, 64), jnp.float32),      # p2   pool2 output (5x8 grid)
            pltpu.VMEM((1, 1664), jnp.bfloat16),    # flattened features (padded)
        ],
        compiler_params=pltpu.CompilerParams(dimension_semantics=("parallel",)),
    )(x_patch, *weights)
    return out[:, 0, :2]


def _conv1_patches(x):
    # x: (N,1,32,32) f32 -> (N, 896, 32) bf16 conv1 im2col.
    # Row = 32*h + w (28x28 valid, w padded to 32 with zeros); lane k = 5*i + j
    # (25 taps, padded to 32 zero lanes).
    N = x.shape[0]
    xi = x[:, 0]
    cols = jnp.stack([xi[:, i:i + 28, j:j + 28] for i in range(5) for j in range(5)],
                     axis=-1)                                   # (N, 28, 28, 25)
    cols = jnp.pad(cols, ((0, 0), (0, 0), (0, 4), (0, 7)))      # (N, 28, 32, 32)
    return cols.reshape(N, 896, 32).astype(jnp.bfloat16)


@jax.jit
def net_forward(x, packed):
    N, C, H, W = x.shape
    assert C == 1 and H == 32 and W == 32, "Net expects (N, 1, 32, 32) inputs"
    return _forward_impl(_conv1_patches(x), packed)


# ---------------------------------------------------------------------------
# One-time host-side weight packing (transpose / permute / pad / cast)
# ---------------------------------------------------------------------------
def pack_params(p):
    # conv1: (32,1,5,5) -> (32, 32) bf16, row = 5*i + j (rows 25..31 zero)
    w1 = jnp.transpose(p["conv1_w"], (2, 3, 1, 0)).reshape(25, 32)
    w1 = jnp.pad(w1, ((0, 7), (0, 0))).astype(jnp.bfloat16)
    b1 = p["conv1_b"].reshape(1, 32).astype(jnp.float32)
    # conv2: (64,32,5,5) -> (896, 64) bf16, row = (5*i + j)*32 + ci (rows 800..895 zero)
    w2 = jnp.transpose(p["conv2_w"], (2, 3, 1, 0)).reshape(800, 64)
    w2 = jnp.pad(w2, ((0, 96), (0, 0))).astype(jnp.bfloat16)
    b2 = p["conv2_b"].reshape(1, 64).astype(jnp.float32)
    # fc1: permute rows to the kernel's flatten order (s*64 + c) from torch's
    # (c*25 + s); pad K 1600->1664 and N 120->128 with zeros.
    idx = np.arange(1600)
    perm = (idx % 64) * 25 + (idx // 64)
    fw1 = jnp.pad(p["fc1_w"][perm, :], ((0, 64), (0, 8))).astype(jnp.bfloat16)
    fb1 = jnp.pad(p["fc1_b"], (0, 8)).reshape(1, 128).astype(jnp.float32)
    fw2 = jnp.pad(p["fc2_w"], ((0, 8), (0, 44))).astype(jnp.bfloat16)
    fb2 = jnp.pad(p["fc2_b"], (0, 44)).reshape(1, 128).astype(jnp.float32)
    fw3 = jnp.pad(p["fc3_w"], ((0, 44), (0, 126))).astype(jnp.bfloat16)
    fb3 = jnp.pad(p["fc3_b"], (0, 126)).reshape(1, 128).astype(jnp.float32)
    return dict(w1=w1, b1=b1, w2=w2, b2=b2,
                fw1=fw1, fb1=fb1, fw2=fw2, fb2=fb2, fw3=fw3, fb3=fb3)


# ---------------------------------------------------------------------------
# Parameter init (mirrors the PyTorch module's shapes; fc stored as (in, out))
# ---------------------------------------------------------------------------
def init_params(key):
    ks = jax.random.split(key, 10)

    def u(k, shape, scale):
        return jax.random.uniform(k, shape, jnp.float32, -1.0, 1.0) * scale

    return {
        "conv1_w": u(ks[0], (32, 1, 5, 5), 0.2),
        "conv1_b": u(ks[1], (32,), 0.1),
        "conv2_w": u(ks[2], (64, 32, 5, 5), 0.05),
        "conv2_b": u(ks[3], (64,), 0.1),
        "fc1_w": u(ks[4], (1600, 120), 0.02),
        "fc1_b": u(ks[5], (120,), 0.1),
        "fc2_w": u(ks[6], (120, 84), 0.05),
        "fc2_b": u(ks[7], (84,), 0.1),
        "fc3_w": u(ks[8], (84, 2), 0.1),
        "fc3_b": u(ks[9], (2,), 0.1),
    }


# ---------------------------------------------------------------------------
# Pure-JAX reference (im2col, float32) used as a correctness cross-check
# ---------------------------------------------------------------------------
def _reference_forward(x, p):
    def im2col(x, kh, kw):
        N, C, H, W = x.shape
        Ho, Wo = H - kh + 1, W - kw + 1
        cols = [x[:, :, i:i + Ho, j:j + Wo] for i in range(kh) for j in range(kw)]
        pm = jnp.stack(cols, axis=2).transpose(0, 3, 4, 1, 2)
        return pm.reshape(N * Ho * Wo, C * kh * kw), Ho, Wo

    def conv_relu(x, w, b):
        N = x.shape[0]
        Cout, Cin, kh, kw = w.shape
        pm, Ho, Wo = im2col(x, kh, kw)
        y = jnp.maximum(pm @ w.reshape(Cout, -1).T + b, 0.0)
        return y.reshape(N, Ho, Wo, Cout).transpose(0, 3, 1, 2)

    def pool(x):
        return jnp.maximum(
            jnp.maximum(x[:, :, 0::2, 0::2], x[:, :, 0::2, 1::2]),
            jnp.maximum(x[:, :, 1::2, 0::2], x[:, :, 1::2, 1::2]))

    h = pool(conv_relu(x, p["conv1_w"], p["conv1_b"]))
    h = pool(conv_relu(h, p["conv2_w"], p["conv2_b"]))
    h = h.reshape(h.shape[0], -1)
    h = jnp.maximum(h @ p["fc1_w"] + p["fc1_b"], 0.0)
    h = jnp.maximum(h @ p["fc2_w"] + p["fc2_b"], 0.0)
    return h @ p["fc3_w"] + p["fc3_b"]


if __name__ == "__main__":
    key = jax.random.PRNGKey(0)
    k_in, k_par = jax.random.split(key)
    # fc1 = LazyLinear(120) materializing at 1600 inputs implies a
    # single-channel 32x32 input (classic LeNet geometry).
    x = jax.random.normal(k_in, (2, 1, 32, 32), dtype=jnp.float32)
    params = init_params(k_par)
    packed = pack_params(params)          # one-time weight packing (host side)

    out = net_forward(x, packed)
    out = jax.block_until_ready(out)
    assert out.shape == (2, 2) and out.dtype == jnp.float32

    # Cross-check vs an f32 reference (kernel matmuls use bf16 operands).
    ref = _reference_forward(x, params)
    rel = float(jnp.max(jnp.abs(out - ref)) / (jnp.max(jnp.abs(ref)) + 1e-6))
    assert rel < 0.08, f"kernel/reference mismatch: normalized max diff {rel:.4f}"

    print("KERNEL_OK")
</pallas_src>

<mosaic_0001>
module attributes {stable_mosaic.version = 11 : i64} {
  func.func @_net_kernel(%arg0: i32, %arg1: memref<1x896x32xbf16, #tpu.memory_space<vmem>>, %arg2: memref<32x32xbf16, #tpu.memory_space<vmem>>, %arg3: memref<1x32xf32, #tpu.memory_space<vmem>>, %arg4: memref<896x64xbf16, #tpu.memory_space<vmem>>, %arg5: memref<1x64xf32, #tpu.memory_space<vmem>>, %arg6: memref<1664x128xbf16, #tpu.memory_space<vmem>>, %arg7: memref<1x128xf32, #tpu.memory_space<vmem>>, %arg8: memref<128x128xbf16, #tpu.memory_space<vmem>>, %arg9: memref<1x128xf32, #tpu.memory_space<vmem>>, %arg10: memref<128x128xbf16, #tpu.memory_space<vmem>>, %arg11: memref<1x128xf32, #tpu.memory_space<vmem>>, %arg12: memref<1x8x128xf32, #tpu.memory_space<vmem>>, %arg13: memref<896x32xf32, #tpu.memory_space<vmem>>, %arg14: memref<240x32xbf16, #tpu.memory_space<vmem>>, %arg15: memref<160x896xbf16, #tpu.memory_space<vmem>>, %arg16: memref<160x64xf32, #tpu.memory_space<vmem>>, %arg17: memref<40x64xf32, #tpu.memory_space<vmem>>, %arg18: memref<1x1664xbf16, #tpu.memory_space<vmem>>) attributes {dimension_semantics = [#tpu.dimension_semantics<parallel>], iteration_bounds = array<i64: 2>, scalar_prefetch = 0 : i64, scratch_operands = 6 : i64, tpu.core_type = #tpu.core_type<tc>, window_params = [{transform_indices = @transform_0, window_bounds = array<i64: 1, 896, 32>}, {pipeline_mode = #tpu.pipeline_mode<synchronous>, transform_indices = @transform_1, window_bounds = array<i64: 32, 32>}, {pipeline_mode = #tpu.pipeline_mode<synchronous>, transform_indices = @transform_2, window_bounds = array<i64: 1, 32>}, {pipeline_mode = #tpu.pipeline_mode<synchronous>, transform_indices = @transform_3, window_bounds = array<i64: 896, 64>}, {pipeline_mode = #tpu.pipeline_mode<synchronous>, transform_indices = @transform_4, window_bounds = array<i64: 1, 64>}, {pipeline_mode = #tpu.pipeline_mode<synchronous>, transform_indices = @transform_5, window_bounds = array<i64: 1664, 128>}, {pipeline_mode = #tpu.pipeline_mode<synchronous>, transform_indices = @transform_6, window_bounds = array<i64: 1, 128>}, {pipeline_mode = #tpu.pipeline_mode<synchronous>, transform_indices = @transform_7, window_bounds = array<i64: 128, 128>}, {pipeline_mode = #tpu.pipeline_mode<synchronous>, transform_indices = @transform_8, window_bounds = array<i64: 1, 128>}, {pipeline_mode = #tpu.pipeline_mode<synchronous>, transform_indices = @transform_9, window_bounds = array<i64: 128, 128>}, {pipeline_mode = #tpu.pipeline_mode<synchronous>, transform_indices = @transform_10, window_bounds = array<i64: 1, 128>}, {transform_indices = @transform_11, window_bounds = array<i64: 1, 8, 128>}]} {
    %c0 = arith.constant 0 : index
    %c0_0 = arith.constant 0 : index
    %c0_1 = arith.constant 0 : index
    %0 = vector.load %arg1[%c0, %c0_0, %c0_1] : memref<1x896x32xbf16, #tpu.memory_space<vmem>>, vector<1x896x32xbf16>
    %1 = vector.shape_cast %0 : vector<1x896x32xbf16> to vector<896x32xbf16>
    %c0_2 = arith.constant 0 : index
    %c0_3 = arith.constant 0 : index
    %2 = vector.load %arg2[%c0_2, %c0_3] : memref<32x32xbf16, #tpu.memory_space<vmem>>, vector<32x32xbf16>
    %cst = arith.constant dense<0.000000e+00> : vector<896x32xf32>
    %3 = tpu.matmul %1, %2, %cst {dimension_numbers = #tpu.dot_dimension_numbers<[1], [0], [0], [1], [0, 0, 1, 1], [], []>} : vector<896x32xbf16>, vector<32x32xbf16>, vector<896x32xf32> -> vector<896x32xf32>
    %c0_4 = arith.constant 0 : index
    %c0_5 = arith.constant 0 : index
    %4 = vector.load %arg3[%c0_4, %c0_5] : memref<1x32xf32, #tpu.memory_space<vmem>>, vector<1x32xf32>
    %5 = vector.broadcast %4 : vector<1x32xf32> to vector<896x32xf32>
    %6 = arith.addf %3, %5 : vector<896x32xf32>
    %cst_6 = arith.constant 0.000000e+00 : f32
    %7 = vector.broadcast %cst_6 : f32 to vector<896x32xf32>
    %8 = arith.maximumf %6, %7 : vector<896x32xf32>
    %c0_7 = arith.constant 0 : index
    %c0_8 = arith.constant 0 : index
    %9 = vector.load %arg13[%c0_7, %c0_8] : memref<896x32xf32, #tpu.memory_space<vmem>>, vector<896x32xf32>
    tpu.vector_store %arg13[%c0_7, %c0_8], %8 {strides = array<i32>} : memref<896x32xf32, #tpu.memory_space<vmem>>, vector<896x32xf32>,
    %cst_9 = arith.constant 0.000000e+00 : bf16
    %10 = vector.broadcast %cst_9 : bf16 to vector<16x32xbf16>
    %c224 = arith.constant 224 : index
    %c0_10 = arith.constant 0 : index
    %11 = vector.load %arg14[%c224, %c0_10] : memref<240x32xbf16, #tpu.memory_space<vmem>>, vector<16x32xbf16>
    tpu.vector_store %arg14[%c224, %c0_10], %10 {strides = array<i32>} : memref<240x32xbf16, #tpu.memory_space<vmem>>, vector<16x32xbf16>,
    %c0_11 = arith.constant 0 : index
    %c0_12 = arith.constant 0 : index
    %12 = tpu.strided_load %arg13[%c0_11, %c0_12] {strides = array<i32: 2, 1>} : memref<896x32xf32, #tpu.memory_space<vmem>>, vector<32x32xf32>
    %c1 = arith.constant 1 : index
    %c0_13 = arith.constant 0 : index
    %13 = tpu.strided_load %arg13[%c1, %c0_13] {strides = array<i32: 2, 1>} : memref<896x32xf32, #tpu.memory_space<vmem>>, vector<32x32xf32>
    %14 = arith.maximumf %12, %13 : vector<32x32xf32>
    %15 = vector.extract_strided_slice %14 {offsets = [0, 0], sizes = [16, 32], strides = [1, 1]} : vector<32x32xf32> to vector<16x32xf32>
    %16 = vector.extract_strided_slice %14 {offsets = [16, 0], sizes = [16, 32], strides = [1, 1]} : vector<32x32xf32> to vector<16x32xf32>
    %17 = arith.maximumf %15, %16 : vector<16x32xf32>
    %18 = arith.truncf %17 : vector<16x32xf32> to vector<16x32xbf16>
    %c0_14 = arith.constant 0 : index
    %c0_15 = arith.constant 0 : index
    %19 = vector.load %arg14[%c0_14, %c0_15] : memref<240x32xbf16, #tpu.memory_space<vmem>>, vector<16x32xbf16>
    tpu.vector_store %arg14[%c0_14, %c0_15], %18 {strides = array<i32>} : memref<240x32xbf16, #tpu.memory_space<vmem>>, vector<16x32xbf16>,
    %c64 = arith.constant 64 : index
    %c0_16 = arith.constant 0 : index
    %20 = tpu.strided_load %arg13[%c64, %c0_16] {strides = array<i32: 2, 1>} : memref<896x32xf32, #tpu.memory_space<vmem>>, vector<32x32xf32>
    %c65 = arith.constant 65 : index
    %c0_17 = arith.constant 0 : index
    %21 = tpu.strided_load %arg13[%c65, %c0_17] {strides = array<i32: 2, 1>} : memref<896x32xf32, #tpu.memory_space<vmem>>, vector<32x32xf32>
    %22 = arith.maximumf %20, %21 : vector<32x32xf32>
    %23 = vector.extract_strided_slice %22 {offsets = [0, 0], sizes = [16, 32], strides = [1, 1]} : vector<32x32xf32> to vector<16x32xf32>
    %24 = vector.extract_strided_slice %22 {offsets = [16, 0], sizes = [16, 32], strides = [1, 1]} : vector<32x32xf32> to vector<16x32xf32>
    %25 = arith.maximumf %23, %24 : vector<16x32xf32>
    %26 = arith.truncf %25 : vector<16x32xf32> to vector<16x32xbf16>
    %c16 = arith.constant 16 : index
    %c0_18 = arith.constant 0 : index
    %27 = vector.load %arg14[%c16, %c0_18] : memref<240x32xbf16, #tpu.memory_space<vmem>>, vector<16x32xbf16>
    tpu.vector_store %arg14[%c16, %c0_18], %26 {strides = array<i32>} : memref<240x32xbf16, #tpu.memory_space<vmem>>, vector<16x32xbf16>,
    %c128 = arith.constant 128 : index
    %c0_19 = arith.constant 0 : index
    %28 = tpu.strided_load %arg13[%c128, %c0_19] {strides = array<i32: 2, 1>} : memref<896x32xf32, #tpu.memory_space<vmem>>, vector<32x32xf32>
    %c129 = arith.constant 129 : index
    %c0_20 = arith.constant 0 : index
    %29 = tpu.strided_load %arg13[%c129, %c0_20] {strides = array<i32: 2, 1>} : memref<896x32xf32, #tpu.memory_space<vmem>>, vector<32x32xf32>
    %30 = arith.maximumf %28, %29 : vector<32x32xf32>
    %31 = vector.extract_strided_slice %30 {offsets = [0, 0], sizes = [16, 32], strides = [1, 1]} : vector<32x32xf32> to vector<16x32xf32>
    %32 = vector.extract_strided_slice %30 {offsets = [16, 0], sizes = [16, 32], strides = [1, 1]} : vector<32x32xf32> to vector<16x32xf32>
    %33 = arith.maximumf %31, %32 : vector<16x32xf32>
    %34 = arith.truncf %33 : vector<16x32xf32> to vector<16x32xbf16>
    %c32 = arith.constant 32 : index
    %c0_21 = arith.constant 0 : index
    %35 = vector.load %arg14[%c32, %c0_21] : memref<240x32xbf16, #tpu.memory_space<vmem>>, vector<16x32xbf16>
    tpu.vector_store %arg14[%c32, %c0_21], %34 {strides = array<i32>} : memref<240x32xbf16, #tpu.memory_space<vmem>>, vector<16x32xbf16>,
    %c192 = arith.constant 192 : index
    %c0_22 = arith.constant 0 : index
    %36 = tpu.strided_load %arg13[%c192, %c0_22] {strides = array<i32: 2, 1>} : memref<896x32xf32, #tpu.memory_space<vmem>>, vector<32x32xf32>
    %c193 = arith.constant 193 : index
    %c0_23 = arith.constant 0 : index
    %37 = tpu.strided_load %arg13[%c193, %c0_23] {strides = array<i32: 2, 1>} : memref<896x32xf32, #tpu.memory_space<vmem>>, vector<32x32xf32>
    %38 = arith.maximumf %36, %37 : vector<32x32xf32>
    %39 = vector.extract_strided_slice %38 {offsets = [0, 0], sizes = [16, 32], strides = [1, 1]} : vector<32x32xf32> to vector<16x32xf32>
    %40 = vector.extract_strided_slice %38 {offsets = [16, 0], sizes = [16, 32], strides = [1, 1]} : vector<32x32xf32> to vector<16x32xf32>
    %41 = arith.maximumf %39, %40 : vector<16x32xf32>
    %42 = arith.truncf %41 : vector<16x32xf32> to vector<16x32xbf16>
    %c48 = arith.constant 48 : index
    %c0_24 = arith.constant 0 : index
    %43 = vector.load %arg14[%c48, %c0_24] : memref<240x32xbf16, #tpu.memory_space<vmem>>, vector<16x32xbf16>
    tpu.vector_store %arg14[%c48, %c0_24], %42 {strides = array<i32>} : memref<240x32xbf16, #tpu.memory_space<vmem>>, vector<16x32xbf16>,
    %c256 = arith.constant 256 : index
    %c0_25 = arith.constant 0 : index
    %44 = tpu.strided_load %arg13[%c256, %c0_25] {strides = array<i32: 2, 1>} : memref<896x32xf32, #tpu.memory_space<vmem>>, vector<32x32xf32>
    %c257 = arith.constant 257 : index
    %c0_26 = arith.constant 0 : index
    %45 = tpu.strided_load %arg13[%c257, %c0_26] {strides = array<i32: 2, 1>} : memref<896x32xf32, #tpu.memory_space<vmem>>, vector<32x32xf32>
    %46 = arith.maximumf %44, %45 : vector<32x32xf32>
    %47 = vector.extract_strided_slice %46 {offsets = [0, 0], sizes = [16, 32], strides = [1, 1]} : vector<32x32xf32> to vector<16x32xf32>
    %48 = vector.extract_strided_slice %46 {offsets = [16, 0], sizes = [16, 32], strides = [1, 1]} : vector<32x32xf32> to vector<16x32xf32>
    %49 = arith.maximumf %47, %48 : vector<16x32xf32>
    %50 = arith.truncf %49 : vector<16x32xf32> to vector<16x32xbf16>
    %c64_27 = arith.constant 64 : index
    %c0_28 = arith.constant 0 : index
    %51 = vector.load %arg14[%c64_27, %c0_28] : memref<240x32xbf16, #tpu.memory_space<vmem>>, vector<16x32xbf16>
    tpu.vector_store %arg14[%c64_27, %c0_28], %50 {strides = array<i32>} : memref<240x32xbf16, #tpu.memory_space<vmem>>, vector<16x32xbf16>,
    %c320 = arith.constant 320 : index
    %c0_29 = arith.constant 0 : index
    %52 = tpu.strided_load %arg13[%c320, %c0_29] {strides = array<i32: 2, 1>} : memref<896x32xf32, #tpu.memory_space<vmem>>, vector<32x32xf32>
    %c321 = arith.constant 321 : index
    %c0_30 = arith.constant 0 : index
    %53 = tpu.strided_load %arg13[%c321, %c0_30] {strides = array<i32: 2, 1>} : memref<896x32xf32, #tpu.memory_space<vmem>>, vector<32x32xf32>
    %54 = arith.maximumf %52, %53 : vector<32x32xf32>
    %55 = vector.extract_strided_slice %54 {offsets = [0, 0], sizes = [16, 32], strides = [1, 1]} : vector<32x32xf32> to vector<16x32xf32>
    %56 = vector.extract_strided_slice %54 {offsets = [16, 0], sizes = [16, 32], strides = [1, 1]} : vector<32x32xf32> to vector<16x32xf32>
    %57 = arith.maximumf %55, %56 : vector<16x32xf32>
    %58 = arith.truncf %57 : vector<16x32xf32> to vector<16x32xbf16>
    %c80 = arith.constant 80 : index
    %c0_31 = arith.constant 0 : index
    %59 = vector.load %arg14[%c80, %c0_31] : memref<240x32xbf16, #tpu.memory_space<vmem>>, vector<16x32xbf16>
    tpu.vector_store %arg14[%c80, %c0_31], %58 {strides = array<i32>} : memref<240x32xbf16, #tpu.memory_space<vmem>>, vector<16x32xbf16>,
    %c384 = arith.constant 384 : index
    %c0_32 = arith.constant 0 : index
    %60 = tpu.strided_load %arg13[%c384, %c0_32] {strides = array<i32: 2, 1>} : memref<896x32xf32, #tpu.memory_space<vmem>>, vector<32x32xf32>
    %c385 = arith.constant 385 : index
    %c0_33 = arith.constant 0 : index
    %61 = tpu.strided_load %arg13[%c385, %c0_33] {strides = array<i32: 2, 1>} : memref<896x32xf32, #tpu.memory_space<vmem>>, vector<32x32xf32>
    %62 = arith.maximumf %60, %61 : vector<32x32xf32>
    %63 = vector.extract_strided_slice %62 {offsets = [0, 0], sizes = [16, 32], strides = [1, 1]} : vector<32x32xf32> to vector<16x32xf32>
    %64 = vector.extract_strided_slice %62 {offsets = [16, 0], sizes = [16, 32], strides = [1, 1]} : vector<32x32xf32> to vector<16x32xf32>
    %65 = arith.maximumf %63, %64 : vector<16x32xf32>
    %66 = arith.truncf %65 : vector<16x32xf32> to vector<16x32xbf16>
    %c96 = arith.constant 96 : index
    %c0_34 = arith.constant 0 : index
    %67 = vector.load %arg14[%c96, %c0_34] : memref<240x32xbf16, #tpu.memory_space<vmem>>, vector<16x32xbf16>
    tpu.vector_store %arg14[%c96, %c0_34], %66 {strides = array<i32>} : memref<240x32xbf16, #tpu.memory_space<vmem>>, vector<16x32xbf16>,
    %c448 = arith.constant 448 : index
    %c0_35 = arith.constant 0 : index
    %68 = tpu.strided_load %arg13[%c448, %c0_35] {strides = array<i32: 2, 1>} : memref<896x32xf32, #tpu.memory_space<vmem>>, vector<32x32xf32>
    %c449 = arith.constant 449 : index
    %c0_36 = arith.constant 0 : index
    %69 = tpu.strided_load %arg13[%c449, %c0_36] {strides = array<i32: 2, 1>} : memref<896x32xf32, #tpu.memory_space<vmem>>, vector<32x32xf32>
    %70 = arith.maximumf %68, %69 : vector<32x32xf32>
    %71 = vector.extract_strided_slice %70 {offsets = [0, 0], sizes = [16, 32], strides = [1, 1]} : vector<32x32xf32> to vector<16x32xf32>
    %72 = vector.extract_strided_slice %70 {offsets = [16, 0], sizes = [16, 32], strides = [1, 1]} : vector<32x32xf32> to vector<16x32xf32>
    %73 = arith.maximumf %71, %72 : vector<16x32xf32>
    %74 = arith.truncf %73 : vector<16x32xf32> to vector<16x32xbf16>
    %c112 = arith.constant 112 : index
    %c0_37 = arith.constant 0 : index
    %75 = vector.load %arg14[%c112, %c0_37] : memref<240x32xbf16, #tpu.memory_space<vmem>>, vector<16x32xbf16>
    tpu.vector_store %arg14[%c112, %c0_37], %74 {strides = array<i32>} : memref<240x32xbf16, #tpu.memory_space<vmem>>, vector<16x32xbf16>,
    %c512 = arith.constant 512 : index
    %c0_38 = arith.constant 0 : index
    %76 = tpu.strided_load %arg13[%c512, %c0_38] {strides = array<i32: 2, 1>} : memref<896x32xf32, #tpu.memory_space<vmem>>, vector<32x32xf32>
    %c513 = arith.constant 513 : index
    %c0_39 = arith.constant 0 : index
    %77 = tpu.strided_load %arg13[%c513, %c0_39] {strides = array<i32: 2, 1>} : memref<896x32xf32, #tpu.memory_space<vmem>>, vector<32x32xf32>
    %78 = arith.maximumf %76, %77 : vector<32x32xf32>
    %79 = vector.extract_strided_slice %78 {offsets = [0, 0], sizes = [16, 32], strides = [1, 1]} : vector<32x32xf32> to vector<16x32xf32>
    %80 = vector.extract_strided_slice %78 {offsets = [16, 0], sizes = [16, 32], strides = [1, 1]} : vector<32x32xf32> to vector<16x32xf32>
    %81 = arith.maximumf %79, %80 : vector<16x32xf32>
    %82 = arith.truncf %81 : vector<16x32xf32> to vector<16x32xbf16>
    %c128_40 = arith.constant 128 : index
    %c0_41 = arith.constant 0 : index
    %83 = vector.load %arg14[%c128_40, %c0_41] : memref<240x32xbf16, #tpu.memory_space<vmem>>, vector<16x32xbf16>
    tpu.vector_store %arg14[%c128_40, %c0_41], %82 {strides = array<i32>} : memref<240x32xbf16, #tpu.memory_space<vmem>>, vector<16x32xbf16>,
    %c576 = arith.constant 576 : index
    %c0_42 = arith.constant 0 : index
    %84 = tpu.strided_load %arg13[%c576, %c0_42] {strides = array<i32: 2, 1>} : memref<896x32xf32, #tpu.memory_space<vmem>>, vector<32x32xf32>
    %c577 = arith.constant 577 : index
    %c0_43 = arith.constant 0 : index
    %85 = tpu.strided_load %arg13[%c577, %c0_43] {strides = array<i32: 2, 1>} : memref<896x32xf32, #tpu.memory_space<vmem>>, vector<32x32xf32>
    %86 = arith.maximumf %84, %85 : vector<32x32xf32>
    %87 = vector.extract_strided_slice %86 {offsets = [0, 0], sizes = [16, 32], strides = [1, 1]} : vector<32x32xf32> to vector<16x32xf32>
    %88 = vector.extract_strided_slice %86 {offsets = [16, 0], sizes = [16, 32], strides = [1, 1]} : vector<32x32xf32> to vector<16x32xf32>
    %89 = arith.maximumf %87, %88 : vector<16x32xf32>
    %90 = arith.truncf %89 : vector<16x32xf32> to vector<16x32xbf16>
    %c144 = arith.constant 144 : index
    %c0_44 = arith.constant 0 : index
    %91 = vector.load %arg14[%c144, %c0_44] : memref<240x32xbf16, #tpu.memory_space<vmem>>, vector<16x32xbf16>
    tpu.vector_store %arg14[%c144, %c0_44], %90 {strides = array<i32>} : memref<240x32xbf16, #tpu.memory_space<vmem>>, vector<16x32xbf16>,
    %c640 = arith.constant 640 : index
    %c0_45 = arith.constant 0 : index
    %92 = tpu.strided_load %arg13[%c640, %c0_45] {strides = array<i32: 2, 1>} : memref<896x32xf32, #tpu.memory_space<vmem>>, vector<32x32xf32>
    %c641 = arith.constant 641 : index
    %c0_46 = arith.constant 0 : index
    %93 = tpu.strided_load %arg13[%c641, %c0_46] {strides = array<i32: 2, 1>} : memref<896x32xf32, #tpu.memory_space<vmem>>, vector<32x32xf32>
    %94 = arith.maximumf %92, %93 : vector<32x32xf32>
    %95 = vector.extract_strided_slice %94 {offsets = [0, 0], sizes = [16, 32], strides = [1, 1]} : vector<32x32xf32> to vector<16x32xf32>
    %96 = vector.extract_strided_slice %94 {offsets = [16, 0], sizes = [16, 32], strides = [1, 1]} : vector<32x32xf32> to vector<16x32xf32>
    %97 = arith.maximumf %95, %96 : vector<16x32xf32>
    %98 = arith.truncf %97 : vector<16x32xf32> to vector<16x32xbf16>
    %c160 = arith.constant 160 : index
    %c0_47 = arith.constant 0 : index
    %99 = vector.load %arg14[%c160, %c0_47] : memref<240x32xbf16, #tpu.memory_space<vmem>>, vector<16x32xbf16>
    tpu.vector_store %arg14[%c160, %c0_47], %98 {strides = array<i32>} : memref<240x32xbf16, #tpu.memory_space<vmem>>, vector<16x32xbf16>,
    %c704 = arith.constant 704 : index
    %c0_48 = arith.constant 0 : index
    %100 = tpu.strided_load %arg13[%c704, %c0_48] {strides = array<i32: 2, 1>} : memref<896x32xf32, #tpu.memory_space<vmem>>, vector<32x32xf32>
    %c705 = arith.constant 705 : index
    %c0_49 = arith.constant 0 : index
    %101 = tpu.strided_load %arg13[%c705, %c0_49] {strides = array<i32: 2, 1>} : memref<896x32xf32, #tpu.memory_space<vmem>>, vector<32x32xf32>
    %102 = arith.maximumf %100, %101 : vector<32x32xf32>
    %103 = vector.extract_strided_slice %102 {offsets = [0, 0], sizes = [16, 32], strides = [1, 1]} : vector<32x32xf32> to vector<16x32xf32>
    %104 = vector.extract_strided_slice %102 {offsets = [16, 0], sizes = [16, 32], strides = [1, 1]} : vector<32x32xf32> to vector<16x32xf32>
    %105 = arith.maximumf %103, %104 : vector<16x32xf32>
    %106 = arith.truncf %105 : vector<16x32xf32> to vector<16x32xbf16>
    %c176 = arith.constant 176 : index
    %c0_50 = arith.constant 0 : index
    %107 = vector.load %arg14[%c176, %c0_50] : memref<240x32xbf16, #tpu.memory_space<vmem>>, vector<16x32xbf16>
    tpu.vector_store %arg14[%c176, %c0_50], %106 {strides = array<i32>} : memref<240x32xbf16, #tpu.memory_space<vmem>>, vector<16x32xbf16>,
    %c768 = arith.constant 768 : index
    %c0_51 = arith.constant 0 : index
    %108 = tpu.strided_load %arg13[%c768, %c0_51] {strides = array<i32: 2, 1>} : memref<896x32xf32, #tpu.memory_space<vmem>>, vector<32x32xf32>
    %c769 = arith.constant 769 : index
    %c0_52 = arith.constant 0 : index
    %109 = tpu.strided_load %arg13[%c769, %c0_52] {strides = array<i32: 2, 1>} : memref<896x32xf32, #tpu.memory_space<vmem>>, vector<32x32xf32>
    %110 = arith.maximumf %108, %109 : vector<32x32xf32>
    %111 = vector.extract_strided_slice %110 {offsets = [0, 0], sizes = [16, 32], strides = [1, 1]} : vector<32x32xf32> to vector<16x32xf32>
    %112 = vector.extract_strided_slice %110 {offsets = [16, 0], sizes = [16, 32], strides = [1, 1]} : vector<32x32xf32> to vector<16x32xf32>
    %113 = arith.maximumf %111, %112 : vector<16x32xf32>
    %114 = arith.truncf %113 : vector<16x32xf32> to vector<16x32xbf16>
    %c192_53 = arith.constant 192 : index
    %c0_54 = arith.constant 0 : index
    %115 = vector.load %arg14[%c192_53, %c0_54] : memref<240x32xbf16, #tpu.memory_space<vmem>>, vector<16x32xbf16>
    tpu.vector_store %arg14[%c192_53, %c0_54], %114 {strides = array<i32>} : memref<240x32xbf16, #tpu.memory_space<vmem>>, vector<16x32xbf16>,
    %c832 = arith.constant 832 : index
    %c0_55 = arith.constant 0 : index
    %116 = tpu.strided_load %arg13[%c832, %c0_55] {strides = array<i32: 2, 1>} : memref<896x32xf32, #tpu.memory_space<vmem>>, vector<32x32xf32>
    %c833 = arith.constant 833 : index
    %c0_56 = arith.constant 0 : index
    %117 = tpu.strided_load %arg13[%c833, %c0_56] {strides = array<i32: 2, 1>} : memref<896x32xf32, #tpu.memory_space<vmem>>, vector<32x32xf32>
    %118 = arith.maximumf %116, %117 : vector<32x32xf32>
    %119 = vector.extract_strided_slice %118 {offsets = [0, 0], sizes = [16, 32], strides = [1, 1]} : vector<32x32xf32> to vector<16x32xf32>
    %120 = vector.extract_strided_slice %118 {offsets = [16, 0], sizes = [16, 32], strides = [1, 1]} : vector<32x32xf32> to vector<16x32xf32>
    %121 = arith.maximumf %119, %120 : vector<16x32xf32>
    %122 = arith.truncf %121 : vector<16x32xf32> to vector<16x32xbf16>
    %c208 = arith.constant 208 : index
    %c0_57 = arith.constant 0 : index
    %123 = vector.load %arg14[%c208, %c0_57] : memref<240x32xbf16, #tpu.memory_space<vmem>>, vector<16x32xbf16>
    tpu.vector_store %arg14[%c208, %c0_57], %122 {strides = array<i32>} : memref<240x32xbf16, #tpu.memory_space<vmem>>, vector<16x32xbf16>,
    %c0_58 = arith.constant 0 : index
    %c0_59 = arith.constant 0 : index
    %124 = vector.load %arg14[%c0_58, %c0_59] : memref<240x32xbf16, #tpu.memory_space<vmem>>, vector<160x32xbf16>
    %c1_60 = arith.constant 1 : index
    %c0_61 = arith.constant 0 : index
    %125 = vector.load %arg14[%c1_60, %c0_61] : memref<240x32xbf16, #tpu.memory_space<vmem>>, vector<160x32xbf16>
    %c2 = arith.constant 2 : index
    %c0_62 = arith.constant 0 : index
    %126 = vector.load %arg14[%c2, %c0_62] : memref<240x32xbf16, #tpu.memory_space<vmem>>, vector<160x32xbf16>
    %c3 = arith.constant 3 : index
    %c0_63 = arith.constant 0 : index
    %127 = vector.load %arg14[%c3, %c0_63] : memref<240x32xbf16, #tpu.memory_space<vmem>>, vector<160x32xbf16>
    %128 = tpu.concatenate %124, %125, %126, %127 in 1 : vector<160x32xbf16>, vector<160x32xbf16>, vector<160x32xbf16>, vector<160x32xbf16> -> vector<160x128xbf16>
    %c0_64 = arith.constant 0 : index
    %c0_65 = arith.constant 0 : index
    %129 = vector.load %arg15[%c0_64, %c0_65] : memref<160x896xbf16, #tpu.memory_space<vmem>>, vector<160x128xbf16>
    tpu.vector_store %arg15[%c0_64, %c0_65], %128 {strides = array<i32>} : memref<160x896xbf16, #tpu.memory_space<vmem>>, vector<160x128xbf16>,
    %c4 = arith.constant 4 : index
    %c0_66 = arith.constant 0 : index
    %130 = vector.load %arg14[%c4, %c0_66] : memref<240x32xbf16, #tpu.memory_space<vmem>>, vector<160x32xbf16>
    %c16_67 = arith.constant 16 : index
    %c0_68 = arith.constant 0 : index
    %131 = vector.load %arg14[%c16_67, %c0_68] : memref<240x32xbf16, #tpu.memory_space<vmem>>, vector<160x32xbf16>
    %c17 = arith.constant 17 : index
    %c0_69 = arith.constant 0 : index
    %132 = vector.load %arg14[%c17, %c0_69] : memref<240x32xbf16, #tpu.memory_space<vmem>>, vector<160x32xbf16>
    %c18 = arith.constant 18 : index
    %c0_70 = arith.constant 0 : index
    %133 = vector.load %arg14[%c18, %c0_70] : memref<240x32xbf16, #tpu.memory_space<vmem>>, vector<160x32xbf16>
    %134 = tpu.concatenate %130, %131, %132, %133 in 1 : vector<160x32xbf16>, vector<160x32xbf16>, vector<160x32xbf16>, vector<160x32xbf16> -> vector<160x128xbf16>
    %c0_71 = arith.constant 0 : index
    %c128_72 = arith.constant 128 : index
    %135 = vector.load %arg15[%c0_71, %c128_72] : memref<160x896xbf16, #tpu.memory_space<vmem>>, vector<160x128xbf16>
    tpu.vector_store %arg15[%c0_71, %c128_72], %134 {strides = array<i32>} : memref<160x896xbf16, #tpu.memory_space<vmem>>, vector<160x128xbf16>,
    %c19 = arith.constant 19 : index
    %c0_73 = arith.constant 0 : index
    %136 = vector.load %arg14[%c19, %c0_73] : memref<240x32xbf16, #tpu.memory_space<vmem>>, vector<160x32xbf16>
    %c20 = arith.constant 20 : index
    %c0_74 = arith.constant 0 : index
    %137 = vector.load %arg14[%c20, %c0_74] : memref<240x32xbf16, #tpu.memory_space<vmem>>, vector<160x32xbf16>
    %c32_75 = arith.constant 32 : index
    %c0_76 = arith.constant 0 : index
    %138 = vector.load %arg14[%c32_75, %c0_76] : memref<240x32xbf16, #tpu.memory_space<vmem>>, vector<160x32xbf16>
    %c33 = arith.constant 33 : index
    %c0_77 = arith.constant 0 : index
    %139 = vector.load %arg14[%c33, %c0_77] : memref<240x32xbf16, #tpu.memory_space<vmem>>, vector<160x32xbf16>
    %140 = tpu.concatenate %136, %137, %138, %139 in 1 : vector<160x32xbf16>, vector<160x32xbf16>, vector<160x32xbf16>, vector<160x32xbf16> -> vector<160x128xbf16>
    %c0_78 = arith.constant 0 : index
    %c256_79 = arith.constant 256 : index
    %141 = vector.load %arg15[%c0_78, %c256_79] : memref<160x896xbf16, #tpu.memory_space<vmem>>, vector<160x128xbf16>
    tpu.vector_store %arg15[%c0_78, %c256_79], %140 {strides = array<i32>} : memref<160x896xbf16, #tpu.memory_space<vmem>>, vector<160x128xbf16>,
    %c34 = arith.constant 34 : index
    %c0_80 = arith.constant 0 : index
    %142 = vector.load %arg14[%c34, %c0_80] : memref<240x32xbf16, #tpu.memory_space<vmem>>, vector<160x32xbf16>
    %c35 = arith.constant 35 : index
    %c0_81 = arith.constant 0 : index
    %143 = vector.load %arg14[%c35, %c0_81] : memref<240x32xbf16, #tpu.memory_space<vmem>>, vector<160x32xbf16>
    %c36 = arith.constant 36 : index
    %c0_82 = arith.constant 0 : index
    %144 = vector.load %arg14[%c36, %c0_82] : memref<240x32xbf16, #tpu.memory_space<vmem>>, vector<160x32xbf16>
    %c48_83 = arith.constant 48 : index
    %c0_84 = arith.constant 0 : index
    %145 = vector.load %arg14[%c48_83, %c0_84] : memref<240x32xbf16, #tpu.memory_space<vmem>>, vector<160x32xbf16>
    %146 = tpu.concatenate %142, %143, %144, %145 in 1 : vector<160x32xbf16>, vector<160x32xbf16>, vector<160x32xbf16>, vector<160x32xbf16> -> vector<160x128xbf16>
    %c0_85 = arith.constant 0 : index
    %c384_86 = arith.constant 384 : index
    %147 = vector.load %arg15[%c0_85, %c384_86] : memref<160x896xbf16, #tpu.memory_space<vmem>>, vector<160x128xbf16>
    tpu.vector_store %arg15[%c0_85, %c384_86], %146 {strides = array<i32>} : memref<160x896xbf16, #tpu.memory_space<vmem>>, vector<160x128xbf16>,
    %c49 = arith.constant 49 : index
    %c0_87 = arith.constant 0 : index
    %148 = vector.load %arg14[%c49, %c0_87] : memref<240x32xbf16, #tpu.memory_space<vmem>>, vector<160x32xbf16>
    %c50 = arith.constant 50 : index
    %c0_88 = arith.constant 0 : index
    %149 = vector.load %arg14[%c50, %c0_88] : memref<240x32xbf16, #tpu.memory_space<vmem>>, vector<160x32xbf16>
    %c51 = arith.constant 51 : index
    %c0_89 = arith.constant 0 : index
    %150 = vector.load %arg14[%c51, %c0_89] : memref<240x32xbf16, #tpu.memory_space<vmem>>, vector<160x32xbf16>
    %c52 = arith.constant 52 : index
    %c0_90 = arith.constant 0 : index
    %151 = vector.load %arg14[%c52, %c0_90] : memref<240x32xbf16, #tpu.memory_space<vmem>>, vector<160x32xbf16>
    %152 = tpu.concatenate %148, %149, %150, %151 in 1 : vector<160x32xbf16>, vector<160x32xbf16>, vector<160x32xbf16>, vector<160x32xbf16> -> vector<160x128xbf16>
    %c0_91 = arith.constant 0 : index
    %c512_92 = arith.constant 512 : index
    %153 = vector.load %arg15[%c0_91, %c512_92] : memref<160x896xbf16, #tpu.memory_space<vmem>>, vector<160x128xbf16>
    tpu.vector_store %arg15[%c0_91, %c512_92], %152 {strides = array<i32>} : memref<160x896xbf16, #tpu.memory_space<vmem>>, vector<160x128xbf16>,
    %c64_93 = arith.constant 64 : index
    %c0_94 = arith.constant 0 : index
    %154 = vector.load %arg14[%c64_93, %c0_94] : memref<240x32xbf16, #tpu.memory_space<vmem>>, vector<160x32xbf16>
    %c65_95 = arith.constant 65 : index
    %c0_96 = arith.constant 0 : index
    %155 = vector.load %arg14[%c65_95, %c0_96] : memref<240x32xbf16, #tpu.memory_space<vmem>>, vector<160x32xbf16>
    %c66 = arith.constant 66 : index
    %c0_97 = arith.constant 0 : index
    %156 = vector.load %arg14[%c66, %c0_97] : memref<240x32xbf16, #tpu.memory_space<vmem>>, vector<160x32xbf16>
    %c67 = arith.constant 67 : index
    %c0_98 = arith.constant 0 : index
    %157 = vector.load %arg14[%c67, %c0_98] : memref<240x32xbf16, #tpu.memory_space<vmem>>, vector<160x32xbf16>
    %158 = tpu.concatenate %154, %155, %156, %157 in 1 : vector<160x32xbf16>, vector<160x32xbf16>, vector<160x32xbf16>, vector<160x32xbf16> -> vector<160x128xbf16>
    %c0_99 = arith.constant 0 : index
    %c640_100 = arith.constant 640 : index
    %159 = vector.load %arg15[%c0_99, %c640_100] : memref<160x896xbf16, #tpu.memory_space<vmem>>, vector<160x128xbf16>
    tpu.vector_store %arg15[%c0_99, %c640_100], %158 {strides = array<i32>} : memref<160x896xbf16, #tpu.memory_space<vmem>>, vector<160x128xbf16>,
    %c68 = arith.constant 68 : index
    %c0_101 = arith.constant 0 : index
    %160 = vector.load %arg14[%c68, %c0_101] : memref<240x32xbf16, #tpu.memory_space<vmem>>, vector<160x32xbf16>
    %cst_102 = arith.constant 0.000000e+00 : bf16
    %161 = vector.broadcast %cst_102 : bf16 to vector<160x32xbf16>
    %cst_103 = arith.constant 0.000000e+00 : bf16
    %162 = vector.broadcast %cst_103 : bf16 to vector<160x32xbf16>
    %cst_104 = arith.constant 0.000000e+00 : bf16
    %163 = vector.broadcast %cst_104 : bf16 to vector<160x32xbf16>
    %164 = tpu.concatenate %160, %161, %162, %163 in 1 : vector<160x32xbf16>, vector<160x32xbf16>, vector<160x32xbf16>, vector<160x32xbf16> -> vector<160x128xbf16>
    %c0_105 = arith.constant 0 : index
    %c768_106 = arith.constant 768 : index
    %165 = vector.load %arg15[%c0_105, %c768_106] : memref<160x896xbf16, #tpu.memory_space<vmem>>, vector<160x128xbf16>
    tpu.vector_store %arg15[%c0_105, %c768_106], %164 {strides = array<i32>} : memref<160x896xbf16, #tpu.memory_space<vmem>>, vector<160x128xbf16>,
    %c0_107 = arith.constant 0 : index
    %c0_108 = arith.constant 0 : index
    %166 = vector.load %arg15[%c0_107, %c0_108] : memref<160x896xbf16, #tpu.memory_space<vmem>>, vector<160x896xbf16>
    %c0_109 = arith.constant 0 : index
    %c0_110 = arith.constant 0 : index
    %167 = vector.load %arg4[%c0_109, %c0_110] : memref<896x64xbf16, #tpu.memory_space<vmem>>, vector<896x64xbf16>
    %cst_111 = arith.constant dense<0.000000e+00> : vector<160x64xf32>
    %168 = tpu.matmul %166, %167, %cst_111 {dimension_numbers = #tpu.dot_dimension_numbers<[1], [0], [0], [1], [0, 0, 1, 1], [], []>} : vector<160x896xbf16>, vector<896x64xbf16>, vector<160x64xf32> -> vector<160x64xf32>
    %c0_112 = arith.constant 0 : index
    %c0_113 = arith.constant 0 : index
    %169 = vector.load %arg5[%c0_112, %c0_113] : memref<1x64xf32, #tpu.memory_space<vmem>>, vector<1x64xf32>
    %170 = vector.broadcast %169 : vector<1x64xf32> to vector<160x64xf32>
    %171 = arith.addf %168, %170 : vector<160x64xf32>
    %cst_114 = arith.constant 0.000000e+00 : f32
    %172 = vector.broadcast %cst_114 : f32 to vector<160x64xf32>
    %173 = arith.maximumf %171, %172 : vector<160x64xf32>
    %c0_115 = arith.constant 0 : index
    %c0_116 = arith.constant 0 : index
    %174 = vector.load %arg16[%c0_115, %c0_116] : memref<160x64xf32, #tpu.memory_space<vmem>>, vector<160x64xf32>
    tpu.vector_store %arg16[%c0_115, %c0_116], %173 {strides = array<i32>} : memref<160x64xf32, #tpu.memory_space<vmem>>, vector<160x64xf32>,
    %c0_117 = arith.constant 0 : index
    %c0_118 = arith.constant 0 : index
    %175 = tpu.strided_load %arg16[%c0_117, %c0_118] {strides = array<i32: 2, 1>} : memref<160x64xf32, #tpu.memory_space<vmem>>, vector<16x64xf32>
    %c1_119 = arith.constant 1 : index
    %c0_120 = arith.constant 0 : index
    %176 = tpu.strided_load %arg16[%c1_119, %c0_120] {strides = array<i32: 2, 1>} : memref<160x64xf32, #tpu.memory_space<vmem>>, vector<16x64xf32>
    %177 = arith.maximumf %175, %176 : vector<16x64xf32>
    %178 = vector.extract_strided_slice %177 {offsets = [0, 0], sizes = [8, 64], strides = [1, 1]} : vector<16x64xf32> to vector<8x64xf32>
    %179 = vector.extract_strided_slice %177 {offsets = [8, 0], sizes = [8, 64], strides = [1, 1]} : vector<16x64xf32> to vector<8x64xf32>
    %180 = arith.maximumf %178, %179 : vector<8x64xf32>
    %c0_121 = arith.constant 0 : index
    %c0_122 = arith.constant 0 : index
    %181 = vector.load %arg17[%c0_121, %c0_122] : memref<40x64xf32, #tpu.memory_space<vmem>>, vector<8x64xf32>
    tpu.vector_store %arg17[%c0_121, %c0_122], %180 {strides = array<i32>} : memref<40x64xf32, #tpu.memory_space<vmem>>, vector<8x64xf32>,
    %c32_123 = arith.constant 32 : index
    %c0_124 = arith.constant 0 : index
    %182 = tpu.strided_load %arg16[%c32_123, %c0_124] {strides = array<i32: 2, 1>} : memref<160x64xf32, #tpu.memory_space<vmem>>, vector<16x64xf32>
    %c33_125 = arith.constant 33 : index
    %c0_126 = arith.constant 0 : index
    %183 = tpu.strided_load %arg16[%c33_125, %c0_126] {strides = array<i32: 2, 1>} : memref<160x64xf32, #tpu.memory_space<vmem>>, vector<16x64xf32>
    %184 = arith.maximumf %182, %183 : vector<16x64xf32>
    %185 = vector.extract_strided_slice %184 {offsets = [0, 0], sizes = [8, 64], strides = [1, 1]} : vector<16x64xf32> to vector<8x64xf32>
    %186 = vector.extract_strided_slice %184 {offsets = [8, 0], sizes = [8, 64], strides = [1, 1]} : vector<16x64xf32> to vector<8x64xf32>
    %187 = arith.maximumf %185, %186 : vector<8x64xf32>
    %c8 = arith.constant 8 : index
    %c0_127 = arith.constant 0 : index
    %188 = vector.load %arg17[%c8, %c0_127] : memref<40x64xf32, #tpu.memory_space<vmem>>, vector<8x64xf32>
    tpu.vector_store %arg17[%c8, %c0_127], %187 {strides = array<i32>} : memref<40x64xf32, #tpu.memory_space<vmem>>, vector<8x64xf32>,
    %c64_128 = arith.constant 64 : index
    %c0_129 = arith.constant 0 : index
    %189 = tpu.strided_load %arg16[%c64_128, %c0_129] {strides = array<i32: 2, 1>} : memref<160x64xf32, #tpu.memory_space<vmem>>, vector<16x64xf32>
    %c65_130 = arith.constant 65 : index
    %c0_131 = arith.constant 0 : index
    %190 = tpu.strided_load %arg16[%c65_130, %c0_131] {strides = array<i32: 2, 1>} : memref<160x64xf32, #tpu.memory_space<vmem>>, vector<16x64xf32>
    %191 = arith.maximumf %189, %190 : vector<16x64xf32>
    %192 = vector.extract_strided_slice %191 {offsets = [0, 0], sizes = [8, 64], strides = [1, 1]} : vector<16x64xf32> to vector<8x64xf32>
    %193 = vector.extract_strided_slice %191 {offsets = [8, 0], sizes = [8, 64], strides = [1, 1]} : vector<16x64xf32> to vector<8x64xf32>
    %194 = arith.maximumf %192, %193 : vector<8x64xf32>
    %c16_132 = arith.constant 16 : index
    %c0_133 = arith.constant 0 : index
    %195 = vector.load %arg17[%c16_132, %c0_133] : memref<40x64xf32, #tpu.memory_space<vmem>>, vector<8x64xf32>
    tpu.vector_store %arg17[%c16_132, %c0_133], %194 {strides = array<i32>} : memref<40x64xf32, #tpu.memory_space<vmem>>, vector<8x64xf32>,
    %c96_134 = arith.constant 96 : index
    %c0_135 = arith.constant 0 : index
    %196 = tpu.strided_load %arg16[%c96_134, %c0_135] {strides = array<i32: 2, 1>} : memref<160x64xf32, #tpu.memory_space<vmem>>, vector<16x64xf32>
    %c97 = arith.constant 97 : index
    %c0_136 = arith.constant 0 : index
    %197 = tpu.strided_load %arg16[%c97, %c0_136] {strides = array<i32: 2, 1>} : memref<160x64xf32, #tpu.memory_space<vmem>>, vector<16x64xf32>
    %198 = arith.maximumf %196, %197 : vector<16x64xf32>
    %199 = vector.extract_strided_slice %198 {offsets = [0, 0], sizes = [8, 64], strides = [1, 1]} : vector<16x64xf32> to vector<8x64xf32>
    %200 = vector.extract_strided_slice %198 {offsets = [8, 0], sizes = [8, 64], strides = [1, 1]} : vector<16x64xf32> to vector<8x64xf32>
    %201 = arith.maximumf %199, %200 : vector<8x64xf32>
    %c24 = arith.constant 24 : index
    %c0_137 = arith.constant 0 : index
    %202 = vector.load %arg17[%c24, %c0_137] : memref<40x64xf32, #tpu.memory_space<vmem>>, vector<8x64xf32>
    tpu.vector_store %arg17[%c24, %c0_137], %201 {strides = array<i32>} : memref<40x64xf32, #tpu.memory_space<vmem>>, vector<8x64xf32>,
    %c128_138 = arith.constant 128 : index
    %c0_139 = arith.constant 0 : index
    %203 = tpu.strided_load %arg16[%c128_138, %c0_139] {strides = array<i32: 2, 1>} : memref<160x64xf32, #tpu.memory_space<vmem>>, vector<16x64xf32>
    %c129_140 = arith.constant 129 : index
    %c0_141 = arith.constant 0 : index
    %204 = tpu.strided_load %arg16[%c129_140, %c0_141] {strides = array<i32: 2, 1>} : memref<160x64xf32, #tpu.memory_space<vmem>>, vector<16x64xf32>
    %205 = arith.maximumf %203, %204 : vector<16x64xf32>
    %206 = vector.extract_strided_slice %205 {offsets = [0, 0], sizes = [8, 64], strides = [1, 1]} : vector<16x64xf32> to vector<8x64xf32>
    %207 = vector.extract_strided_slice %205 {offsets = [8, 0], sizes = [8, 64], strides = [1, 1]} : vector<16x64xf32> to vector<8x64xf32>
    %208 = arith.maximumf %206, %207 : vector<8x64xf32>
    %c32_142 = arith.constant 32 : index
    %c0_143 = arith.constant 0 : index
    %209 = vector.load %arg17[%c32_142, %c0_143] : memref<40x64xf32, #tpu.memory_space<vmem>>, vector<8x64xf32>
    tpu.vector_store %arg17[%c32_142, %c0_143], %208 {strides = array<i32>} : memref<40x64xf32, #tpu.memory_space<vmem>>, vector<8x64xf32>,
    %cst_144 = arith.constant 0.000000e+00 : bf16
    %210 = vector.broadcast %cst_144 : bf16 to vector<1x64xbf16>
    %c0_145 = arith.constant 0 : index
    %c0_146 = arith.constant 0 : index
    %211 = vector.load %arg17[%c0_145, %c0_146] : memref<40x64xf32, #tpu.memory_space<vmem>>, vector<1x64xf32>
    %212 = arith.truncf %211 : vector<1x64xf32> to vector<1x64xbf16>
    %c1_147 = arith.constant 1 : index
    %c0_148 = arith.constant 0 : index
    %213 = vector.load %arg17[%c1_147, %c0_148] : memref<40x64xf32, #tpu.memory_space<vmem>>, vector<1x64xf32>
    %214 = arith.truncf %213 : vector<1x64xf32> to vector<1x64xbf16>
    %215 = tpu.concatenate %212, %214 in 1 : vector<1x64xbf16>, vector<1x64xbf16> -> vector<1x128xbf16>
    %c0_149 = arith.constant 0 : index
    %c0_150 = arith.constant 0 : index
    %216 = vector.load %arg18[%c0_149, %c0_150] : memref<1x1664xbf16, #tpu.memory_space<vmem>>, vector<1x128xbf16>
    tpu.vector_store %arg18[%c0_149, %c0_150], %215 {strides = array<i32>} : memref<1x1664xbf16, #tpu.memory_space<vmem>>, vector<1x128xbf16>,
    %c2_151 = arith.constant 2 : index
    %c0_152 = arith.constant 0 : index
    %217 = vector.load %arg17[%c2_151, %c0_152] : memref<40x64xf32, #tpu.memory_space<vmem>>, vector<1x64xf32>
    %218 = arith.truncf %217 : vector<1x64xf32> to vector<1x64xbf16>
    %c3_153 = arith.constant 3 : index
    %c0_154 = arith.constant 0 : index
    %219 = vector.load %arg17[%c3_153, %c0_154] : memref<40x64xf32, #tpu.memory_space<vmem>>, vector<1x64xf32>
    %220 = arith.truncf %219 : vector<1x64xf32> to vector<1x64xbf16>
    %221 = tpu.concatenate %218, %220 in 1 : vector<1x64xbf16>, vector<1x64xbf16> -> vector<1x128xbf16>
    %c0_155 = arith.constant 0 : index
    %c128_156 = arith.constant 128 : index
    %222 = vector.load %arg18[%c0_155, %c128_156] : memref<1x1664xbf16, #tpu.memory_space<vmem>>, vector<1x128xbf16>
    tpu.vector_store %arg18[%c0_155, %c128_156], %221 {strides = array<i32>} : memref<1x1664xbf16, #tpu.memory_space<vmem>>, vector<1x128xbf16>,
    %c4_157 = arith.constant 4 : index
    %c0_158 = arith.constant 0 : index
    %223 = vector.load %arg17[%c4_157, %c0_158] : memref<40x64xf32, #tpu.memory_space<vmem>>, vector<1x64xf32>
    %224 = arith.truncf %223 : vector<1x64xf32> to vector<1x64xbf16>
    %c8_159 = arith.constant 8 : index
    %c0_160 = arith.constant 0 : index
    %225 = vector.load %arg17[%c8_159, %c0_160] : memref<40x64xf32, #tpu.memory_space<vmem>>, vector<1x64xf32>
    %226 = arith.truncf %225 : vector<1x64xf32> to vector<1x64xbf16>
    %227 = tpu.concatenate %224, %226 in 1 : vector<1x64xbf16>, vector<1x64xbf16> -> vector<1x128xbf16>
    %c0_161 = arith.constant 0 : index
    %c256_162 = arith.constant 256 : index
    %228 = vector.load %arg18[%c0_161, %c256_162] : memref<1x1664xbf16, #tpu.memory_space<vmem>>, vector<1x128xbf16>
    tpu.vector_store %arg18[%c0_161, %c256_162], %227 {strides = array<i32>} : memref<1x1664xbf16, #tpu.memory_space<vmem>>, vector<1x128xbf16>,
    %c9 = arith.constant 9 : index
    %c0_163 = arith.constant 0 : index
    %229 = vector.load %arg17[%c9, %c0_163] : memref<40x64xf32, #tpu.memory_space<vmem>>, vector<1x64xf32>
    %230 = arith.truncf %229 : vector<1x64xf32> to vector<1x64xbf16>
    %c10 = arith.constant 10 : index
    %c0_164 = arith.constant 0 : index
    %231 = vector.load %arg17[%c10, %c0_164] : memref<40x64xf32, #tpu.memory_space<vmem>>, vector<1x64xf32>
    %232 = arith.truncf %231 : vector<1x64xf32> to vector<1x64xbf16>
    %233 = tpu.concatenate %230, %232 in 1 : vector<1x64xbf16>, vector<1x64xbf16> -> vector<1x128xbf16>
    %c0_165 = arith.constant 0 : index
    %c384_166 = arith.constant 384 : index
    %234 = vector.load %arg18[%c0_165, %c384_166] : memref<1x1664xbf16, #tpu.memory_space<vmem>>, vector<1x128xbf16>
    tpu.vector_store %arg18[%c0_165, %c384_166], %233 {strides = array<i32>} : memref<1x1664xbf16, #tpu.memory_space<vmem>>, vector<1x128xbf16>,
    %c11 = arith.constant 11 : index
    %c0_167 = arith.constant 0 : index
    %235 = vector.load %arg17[%c11, %c0_167] : memref<40x64xf32, #tpu.memory_space<vmem>>, vector<1x64xf32>
    %236 = arith.truncf %235 : vector<1x64xf32> to vector<1x64xbf16>
    %c12 = arith.constant 12 : index
    %c0_168 = arith.constant 0 : index
    %237 = vector.load %arg17[%c12, %c0_168] : memref<40x64xf32, #tpu.memory_space<vmem>>, vector<1x64xf32>
    %238 = arith.truncf %237 : vector<1x64xf32> to vector<1x64xbf16>
    %239 = tpu.concatenate %236, %238 in 1 : vector<1x64xbf16>, vector<1x64xbf16> -> vector<1x128xbf16>
    %c0_169 = arith.constant 0 : index
    %c512_170 = arith.constant 512 : index
    %240 = vector.load %arg18[%c0_169, %c512_170] : memref<1x1664xbf16, #tpu.memory_space<vmem>>, vector<1x128xbf16>
    tpu.vector_store %arg18[%c0_169, %c512_170], %239 {strides = array<i32>} : memref<1x1664xbf16, #tpu.memory_space<vmem>>, vector<1x128xbf16>,
    %c16_171 = arith.constant 16 : index
    %c0_172 = arith.constant 0 : index
    %241 = vector.load %arg17[%c16_171, %c0_172] : memref<40x64xf32, #tpu.memory_space<vmem>>, vector<1x64xf32>
    %242 = arith.truncf %241 : vector<1x64xf32> to vector<1x64xbf16>
    %c17_173 = arith.constant 17 : index
    %c0_174 = arith.constant 0 : index
    %243 = vector.load %arg17[%c17_173, %c0_174] : memref<40x64xf32, #tpu.memory_space<vmem>>, vector<1x64xf32>
    %244 = arith.truncf %243 : vector<1x64xf32> to vector<1x64xbf16>
    %245 = tpu.concatenate %242, %244 in 1 : vector<1x64xbf16>, vector<1x64xbf16> -> vector<1x128xbf16>
    %c0_175 = arith.constant 0 : index
    %c640_176 = arith.constant 640 : index
    %246 = vector.load %arg18[%c0_175, %c640_176] : memref<1x1664xbf16, #tpu.memory_space<vmem>>, vector<1x128xbf16>
    tpu.vector_store %arg18[%c0_175, %c640_176], %245 {strides = array<i32>} : memref<1x1664xbf16, #tpu.memory_space<vmem>>, vector<1x128xbf16>,
    %c18_177 = arith.constant 18 : index
    %c0_178 = arith.constant 0 : index
    %247 = vector.load %arg17[%c18_177, %c0_178] : memref<40x64xf32, #tpu.memory_space<vmem>>, vector<1x64xf32>
    %248 = arith.truncf %247 : vector<1x64xf32> to vector<1x64xbf16>
    %c19_179 = arith.constant 19 : index
    %c0_180 = arith.constant 0 : index
    %249 = vector.load %arg17[%c19_179, %c0_180] : memref<40x64xf32, #tpu.memory_space<vmem>>, vector<1x64xf32>
    %250 = arith.truncf %249 : vector<1x64xf32> to vector<1x64xbf16>
    %251 = tpu.concatenate %248, %250 in 1 : vector<1x64xbf16>, vector<1x64xbf16> -> vector<1x128xbf16>
    %c0_181 = arith.constant 0 : index
    %c768_182 = arith.constant 768 : index
    %252 = vector.load %arg18[%c0_181, %c768_182] : memref<1x1664xbf16, #tpu.memory_space<vmem>>, vector<1x128xbf16>
    tpu.vector_store %arg18[%c0_181, %c768_182], %251 {strides = array<i32>} : memref<1x1664xbf16, #tpu.memory_space<vmem>>, vector<1x128xbf16>,
    %c20_183 = arith.constant 20 : index
    %c0_184 = arith.constant 0 : index
    %253 = vector.load %arg17[%c20_183, %c0_184] : memref<40x64xf32, #tpu.memory_space<vmem>>, vector<1x64xf32>
    %254 = arith.truncf %253 : vector<1x64xf32> to vector<1x64xbf16>
    %c24_185 = arith.constant 24 : index
    %c0_186 = arith.constant 0 : index
    %255 = vector.load %arg17[%c24_185, %c0_186] : memref<40x64xf32, #tpu.memory_space<vmem>>, vector<1x64xf32>
    %256 = arith.truncf %255 : vector<1x64xf32> to vector<1x64xbf16>
    %257 = tpu.concatenate %254, %256 in 1 : vector<1x64xbf16>, vector<1x64xbf16> -> vector<1x128xbf16>
    %c0_187 = arith.constant 0 : index
    %c896 = arith.constant 896 : index
    %258 = vector.load %arg18[%c0_187, %c896] : memref<1x1664xbf16, #tpu.memory_space<vmem>>, vector<1x128xbf16>
    tpu.vector_store %arg18[%c0_187, %c896], %257 {strides = array<i32>} : memref<1x1664xbf16, #tpu.memory_space<vmem>>, vector<1x128xbf16>,
    %c25 = arith.constant 25 : index
    %c0_188 = arith.constant 0 : index
    %259 = vector.load %arg17[%c25, %c0_188] : memref<40x64xf32, #tpu.memory_space<vmem>>, vector<1x64xf32>
    %260 = arith.truncf %259 : vector<1x64xf32> to vector<1x64xbf16>
    %c26 = arith.constant 26 : index
    %c0_189 = arith.constant 0 : index
    %261 = vector.load %arg17[%c26, %c0_189] : memref<40x64xf32, #tpu.memory_space<vmem>>, vector<1x64xf32>
    %262 = arith.truncf %261 : vector<1x64xf32> to vector<1x64xbf16>
    %263 = tpu.concatenate %260, %262 in 1 : vector<1x64xbf16>, vector<1x64xbf16> -> vector<1x128xbf16>
    %c0_190 = arith.constant 0 : index
    %c1024 = arith.constant 1024 : index
    %264 = vector.load %arg18[%c0_190, %c1024] : memref<1x1664xbf16, #tpu.memory_space<vmem>>, vector<1x128xbf16>
    tpu.vector_store %arg18[%c0_190, %c1024], %263 {strides = array<i32>} : memref<1x1664xbf16, #tpu.memory_space<vmem>>, vector<1x128xbf16>,
    %c27 = arith.constant 27 : index
    %c0_191 = arith.constant 0 : index
    %265 = vector.load %arg17[%c27, %c0_191] : memref<40x64xf32, #tpu.memory_space<vmem>>, vector<1x64xf32>
    %266 = arith.truncf %265 : vector<1x64xf32> to vector<1x64xbf16>
    %c28 = arith.constant 28 : index
    %c0_192 = arith.constant 0 : index
    %267 = vector.load %arg17[%c28, %c0_192] : memref<40x64xf32, #tpu.memory_space<vmem>>, vector<1x64xf32>
    %268 = arith.truncf %267 : vector<1x64xf32> to vector<1x64xbf16>
    %269 = tpu.concatenate %266, %268 in 1 : vector<1x64xbf16>, vector<1x64xbf16> -> vector<1x128xbf16>
    %c0_193 = arith.constant 0 : index
    %c1152 = arith.constant 1152 : index
    %270 = vector.load %arg18[%c0_193, %c1152] : memref<1x1664xbf16, #tpu.memory_space<vmem>>, vector<1x128xbf16>
    tpu.vector_store %arg18[%c0_193, %c1152], %269 {strides = array<i32>} : memref<1x1664xbf16, #tpu.memory_space<vmem>>, vector<1x128xbf16>,
    %c32_194 = arith.constant 32 : index
    %c0_195 = arith.constant 0 : index
    %271 = vector.load %arg17[%c32_194, %c0_195] : memref<40x64xf32, #tpu.memory_space<vmem>>, vector<1x64xf32>
    %272 = arith.truncf %271 : vector<1x64xf32> to vector<1x64xbf16>
    %c33_196 = arith.constant 33 : index
    %c0_197 = arith.constant 0 : index
    %273 = vector.load %arg17[%c33_196, %c0_197] : memref<40x64xf32, #tpu.memory_space<vmem>>, vector<1x64xf32>
    %274 = arith.truncf %273 : vector<1x64xf32> to vector<1x64xbf16>
    %275 = tpu.concatenate %272, %274 in 1 : vector<1x64xbf16>, vector<1x64xbf16> -> vector<1x128xbf16>
    %c0_198 = arith.constant 0 : index
    %c1280 = arith.constant 1280 : index
    %276 = vector.load %arg18[%c0_198, %c1280] : memref<1x1664xbf16, #tpu.memory_space<vmem>>, vector<1x128xbf16>
    tpu.vector_store %arg18[%c0_198, %c1280], %275 {strides = array<i32>} : memref<1x1664xbf16, #tpu.memory_space<vmem>>, vector<1x128xbf16>,
    %c34_199 = arith.constant 34 : index
    %c0_200 = arith.constant 0 : index
    %277 = vector.load %arg17[%c34_199, %c0_200] : memref<40x64xf32, #tpu.memory_space<vmem>>, vector<1x64xf32>
    %278 = arith.truncf %277 : vector<1x64xf32> to vector<1x64xbf16>
    %c35_201 = arith.constant 35 : index
    %c0_202 = arith.constant 0 : index
    %279 = vector.load %arg17[%c35_201, %c0_202] : memref<40x64xf32, #tpu.memory_space<vmem>>, vector<1x64xf32>
    %280 = arith.truncf %279 : vector<1x64xf32> to vector<1x64xbf16>
    %281 = tpu.concatenate %278, %280 in 1 : vector<1x64xbf16>, vector<1x64xbf16> -> vector<1x128xbf16>
    %c0_203 = arith.constant 0 : index
    %c1408 = arith.constant 1408 : index
    %282 = vector.load %arg18[%c0_203, %c1408] : memref<1x1664xbf16, #tpu.memory_space<vmem>>, vector<1x128xbf16>
    tpu.vector_store %arg18[%c0_203, %c1408], %281 {strides = array<i32>} : memref<1x1664xbf16, #tpu.memory_space<vmem>>, vector<1x128xbf16>,
    %c36_204 = arith.constant 36 : index
    %c0_205 = arith.constant 0 : index
    %283 = vector.load %arg17[%c36_204, %c0_205] : memref<40x64xf32, #tpu.memory_space<vmem>>, vector<1x64xf32>
    %284 = arith.truncf %283 : vector<1x64xf32> to vector<1x64xbf16>
    %285 = tpu.concatenate %284, %210 in 1 : vector<1x64xbf16>, vector<1x64xbf16> -> vector<1x128xbf16>
    %c0_206 = arith.constant 0 : index
    %c1536 = arith.constant 1536 : index
    %286 = vector.load %arg18[%c0_206, %c1536] : memref<1x1664xbf16, #tpu.memory_space<vmem>>, vector<1x128xbf16>
    tpu.vector_store %arg18[%c0_206, %c1536], %285 {strides = array<i32>} : memref<1x1664xbf16, #tpu.memory_space<vmem>>, vector<1x128xbf16>,
    %c0_207 = arith.constant 0 : index
    %c0_208 = arith.constant 0 : index
    %287 = vector.load %arg18[%c0_207, %c0_208] : memref<1x1664xbf16, #tpu.memory_space<vmem>>, vector<1x1664xbf16>
    %c0_209 = arith.constant 0 : index
    %c0_210 = arith.constant 0 : index
    %288 = vector.load %arg6[%c0_209, %c0_210] : memref<1664x128xbf16, #tpu.memory_space<vmem>>, vector<1664x128xbf16>
    %cst_211 = arith.constant dense<0.000000e+00> : vector<1x128xf32>
    %289 = tpu.matmul %287, %288, %cst_211 {dimension_numbers = #tpu.dot_dimension_numbers<[1], [0], [0], [1], [0, 0, 1, 1], [], []>} : vector<1x1664xbf16>, vector<1664x128xbf16>, vector<1x128xf32> -> vector<1x128xf32>
    %c0_212 = arith.constant 0 : index
    %c0_213 = arith.constant 0 : index
    %290 = vector.load %arg7[%c0_212, %c0_213] : memref<1x128xf32, #tpu.memory_space<vmem>>, vector<1x128xf32>
    %291 = arith.addf %289, %290 : vector<1x128xf32>
    %cst_214 = arith.constant 0.000000e+00 : f32
    %292 = vector.broadcast %cst_214 : f32 to vector<1x128xf32>
    %293 = arith.maximumf %291, %292 : vector<1x128xf32>
    %294 = arith.truncf %293 : vector<1x128xf32> to vector<1x128xbf16>
    %c0_215 = arith.constant 0 : index
    %c0_216 = arith.constant 0 : index
    %295 = vector.load %arg8[%c0_215, %c0_216] : memref<128x128xbf16, #tpu.memory_space<vmem>>, vector<128x128xbf16>
    %cst_217 = arith.constant dense<0.000000e+00> : vector<1x128xf32>
    %296 = tpu.matmul %294, %295, %cst_217 {dimension_numbers = #tpu.dot_dimension_numbers<[1], [0], [0], [1], [0, 0, 1, 1], [], []>} : vector<1x128xbf16>, vector<128x128xbf16>, vector<1x128xf32> -> vector<1x128xf32>
    %c0_218 = arith.constant 0 : index
    %c0_219 = arith.constant 0 : index
    %297 = vector.load %arg9[%c0_218, %c0_219] : memref<1x128xf32, #tpu.memory_space<vmem>>, vector<1x128xf32>
    %298 = arith.addf %296, %297 : vector<1x128xf32>
    %cst_220 = arith.constant 0.000000e+00 : f32
    %299 = vector.broadcast %cst_220 : f32 to vector<1x128xf32>
    %300 = arith.maximumf %298, %299 : vector<1x128xf32>
    %301 = arith.truncf %300 : vector<1x128xf32> to vector<1x128xbf16>
    %c0_221 = arith.constant 0 : index
    %c0_222 = arith.constant 0 : index
    %302 = vector.load %arg10[%c0_221, %c0_222] : memref<128x128xbf16, #tpu.memory_space<vmem>>, vector<128x128xbf16>
    %cst_223 = arith.constant dense<0.000000e+00> : vector<1x128xf32>
    %303 = tpu.matmul %301, %302, %cst_223 {dimension_numbers = #tpu.dot_dimension_numbers<[1], [0], [0], [1], [0, 0, 1, 1], [], []>} : vector<1x128xbf16>, vector<128x128xbf16>, vector<1x128xf32> -> vector<1x128xf32>
    %c0_224 = arith.constant 0 : index
    %c0_225 = arith.constant 0 : index
    %304 = vector.load %arg11[%c0_224, %c0_225] : memref<1x128xf32, #tpu.memory_space<vmem>>, vector<1x128xf32>
    %305 = arith.addf %303, %304 : vector<1x128xf32>
    %306 = vector.shape_cast %305 : vector<1x128xf32> to vector<1x128xf32>
    %307 = vector.broadcast %306 : vector<1x128xf32> to vector<8x128xf32>
    %c0_226 = arith.constant 0 : index
    %c0_227 = arith.constant 0 : index
    %c0_228 = arith.constant 0 : index
    %308 = vector.load %arg12[%c0_226, %c0_227, %c0_228] : memref<1x8x128xf32, #tpu.memory_space<vmem>>, vector<1x8x128xf32>
    %309 = vector.shape_cast %308 : vector<1x8x128xf32> to vector<8x128xf32>
    %310 = vector.shape_cast %307 : vector<8x128xf32> to vector<1x8x128xf32>
    tpu.vector_store %arg12[%c0_226, %c0_227, %c0_228], %310 {strides = array<i32>} : memref<1x8x128xf32, #tpu.memory_space<vmem>>, vector<1x8x128xf32>,
    return
  }
  func.func @transform_0(%arg0: i32) -> (i32, i32, i32) {
    %c0_i32 = arith.constant 0 : i32
    %c0_i32_0 = arith.constant 0 : i32
    %c0_i32_1 = arith.constant 0 : i32
    return %arg0, %c0_i32, %c0_i32_0 : i32, i32, i32
  }
  func.func @transform_1(%arg0: i32) -> (i32, i32) {
    %c0_i32 = arith.constant 0 : i32
    %c0_i32_0 = arith.constant 0 : i32
    %c0_i32_1 = arith.constant 0 : i32
    return %c0_i32, %c0_i32_0 : i32, i32
  }
  func.func @transform_2(%arg0: i32) -> (i32, i32) {
    %c0_i32 = arith.constant 0 : i32
    %c0_i32_0 = arith.constant 0 : i32
    %c0_i32_1 = arith.constant 0 : i32
    return %c0_i32, %c0_i32_0 : i32, i32
  }
  func.func @transform_3(%arg0: i32) -> (i32, i32) {
    %c0_i32 = arith.constant 0 : i32
    %c0_i32_0 = arith.constant 0 : i32
    %c0_i32_1 = arith.constant 0 : i32
    return %c0_i32, %c0_i32_0 : i32, i32
  }
  func.func @transform_4(%arg0: i32) -> (i32, i32) {
    %c0_i32 = arith.constant 0 : i32
    %c0_i32_0 = arith.constant 0 : i32
    %c0_i32_1 = arith.constant 0 : i32
    return %c0_i32, %c0_i32_0 : i32, i32
  }
  func.func @transform_5(%arg0: i32) -> (i32, i32) {
    %c0_i32 = arith.constant 0 : i32
    %c0_i32_0 = arith.constant 0 : i32
    %c0_i32_1 = arith.constant 0 : i32
    return %c0_i32, %c0_i32_0 : i32, i32
  }
  func.func @transform_6(%arg0: i32) -> (i32, i32) {
    %c0_i32 = arith.constant 0 : i32
    %c0_i32_0 = arith.constant 0 : i32
    %c0_i32_1 = arith.constant 0 : i32
    return %c0_i32, %c0_i32_0 : i32, i32
  }
  func.func @transform_7(%arg0: i32) -> (i32, i32) {
    %c0_i32 = arith.constant 0 : i32
    %c0_i32_0 = arith.constant 0 : i32
    %c0_i32_1 = arith.constant 0 : i32
    return %c0_i32, %c0_i32_0 : i32, i32
  }
  func.func @transform_8(%arg0: i32) -> (i32, i32) {
    %c0_i32 = arith.constant 0 : i32
    %c0_i32_0 = arith.constant 0 : i32
    %c0_i32_1 = arith.constant 0 : i32
    return %c0_i32, %c0_i32_0 : i32, i32
  }
  func.func @transform_9(%arg0: i32) -> (i32, i32) {
    %c0_i32 = arith.constant 0 : i32
    %c0_i32_0 = arith.constant 0 : i32
    %c0_i32_1 = arith.constant 0 : i32
    return %c0_i32, %c0_i32_0 : i32, i32
  }
  func.func @transform_10(%arg0: i32) -> (i32, i32) {
    %c0_i32 = arith.constant 0 : i32
    %c0_i32_0 = arith.constant 0 : i32
    %c0_i32_1 = arith.constant 0 : i32
    return %c0_i32, %c0_i32_0 : i32, i32
  }
  func.func @transform_11(%arg0: i32) -> (i32, i32, i32) {
    %c0_i32 = arith.constant 0 : i32
    %c0_i32_0 = arith.constant 0 : i32
    %c0_i32_1 = arith.constant 0 : i32
    return %arg0, %c0_i32, %c0_i32_0 : i32, i32, i32
  }
}

</mosaic_0001>

<llo_original>
// kernel: net_forward.1
$region0: #{net_forward.1}
  #allocation0 [shape = 'u32[]', space=smem, size = 0x4, offset = 0x4, fixed_abs, tag = 'smem constant byte address 0x4 - core index']
  #allocation1 [shape = 'u32[144,128]{1,0:T(1,128)}', space=vmem, size = 0x12000, scoped, tag = 'internal scratch']
  #allocation2 [shape = 'f32[896,32]{1,0:T(8,128)}', space=vmem, size = 0x70000, scoped, tag = 'scratch operand']
  #allocation3 [shape = 'bf16[240,32]{1,0:T(16,128)(2,1)}', space=vmem, size = 0xf000, scoped, tag = 'scratch operand']
  #allocation4 [shape = 'bf16[160,896]{1,0:T(16,128)(2,1)}', space=vmem, size = 0x46000, scoped, tag = 'scratch operand']
  #allocation5 [shape = 'f32[160,64]{1,0:T(8,128)}', space=vmem, size = 0x14000, scoped, tag = 'scratch operand']
  #allocation6 [shape = 'f32[40,64]{1,0:T(8,128)}', space=vmem, size = 0x5000, scoped, tag = 'scratch operand']
  #allocation7 [shape = 'bf16[1,1664]{1,0:T(2,128)(2,1)}', space=vmem, size = 0x1a00, scoped, tag = 'scratch operand']
  %s0 = inlined_call_operand.vmem [shape: bf16[2,896,32], index: 0, kind: input, shape index: {}]
  %s1 = inlined_call_operand.vmem [shape: bf16[32,32], index: 1, kind: input, shape index: {}]
  %s2 = inlined_call_operand.vmem [shape: f32[1,32], index: 2, kind: input, shape index: {}]
  %s3 = inlined_call_operand.vmem [shape: bf16[896,64], index: 3, kind: input, shape index: {}]
  %s4 = inlined_call_operand.vmem [shape: f32[1,64], index: 4, kind: input, shape index: {}]
  %s5 = inlined_call_operand.vmem [shape: bf16[1664,128], index: 5, kind: input, shape index: {}]
  %s6 = inlined_call_operand.vmem [shape: f32[1,128], index: 6, kind: input, shape index: {}]
  %s7 = inlined_call_operand.vmem [shape: bf16[128,128], index: 7, kind: input, shape index: {}]
  %s8 = inlined_call_operand.vmem [shape: f32[1,128], index: 8, kind: input, shape index: {}]
  %s9 = inlined_call_operand.vmem [shape: bf16[128,128], index: 9, kind: input, shape index: {}]
  %s10 = inlined_call_operand.vmem [shape: f32[1,128], index: 10, kind: input, shape index: {}]
  %s11 = inlined_call_operand.vmem [shape: f32[2,8,128], index: 11, kind: output, shape index: {}]
  %s12 = sld [smem:[#allocation0]]
  $region77: #{net_forward.1} parent=0
    _
  %s14 = ssub.s32 1, %s12
  %s15 = scalar_select 0, %s14, %s12
  loop: start=0, step=1, limit=4
  $region2: #{net_forward.1} parent=0 // loop_pre_header
    _
  $region3: #{net_forward.1} parent=0 // loop_header
    %s17 = sphi 0, %s21
    %p18 = scmp.ge.s32.totalorder %s17, 4
    %s27 = sphi 0, %s29
    %s30 = sphi 0, %s27
    %s31 = sphi 0, %s30
    %s47 = sphi 0, %s31
    %s51 = sphi 0, %s51
    %s53 = sphi 0, %s51
    %s54 = sphi 0, %s53
    %s68 = sphi 0, %s54
    %s72 = sphi 0, %s72
    %s74 = sphi 0, %s72
    %s75 = sphi 0, %s74
    %s89 = sphi 0, %s75
    %s93 = sphi 0, %s93
    %s95 = sphi 0, %s93
    %s96 = sphi 0, %s95
    %s110 = sphi 0, %s96
    %s114 = sphi 0, %s114
    %s116 = sphi 0, %s114
    %s117 = sphi 0, %s116
    %s131 = sphi 0, %s117
    %s135 = sphi 0, %s135
    %s137 = sphi 0, %s135
    %s138 = sphi 0, %s137
    %s152 = sphi 0, %s138
    %s156 = sphi 0, %s156
    %s158 = sphi 0, %s156
    %s159 = sphi 0, %s158
    %s173 = sphi 0, %s159
    %s177 = sphi 0, %s177
    %s179 = sphi 0, %s177
    %s180 = sphi 0, %s179
    %s194 = sphi 0, %s180
    %s198 = sphi 0, %s198
    %s200 = sphi 0, %s198
    %s201 = sphi 0, %s200
    %s215 = sphi 0, %s201
    %s219 = sphi 0, %s219
    %s221 = sphi 0, %s219
    %s222 = sphi 0, %s221
    %s236 = sphi 0, %s222
    %s240 = sphi 0, %s240
    %s242 = sphi 0, %s240
    %s243 = sphi 0, %s242
    %s257 = sphi 0, %s243
    %s263 = sphi 0, %s265
    %s266 = sphi 0, %s263
    %s267 = sphi 0, %s266
    %s283 = sphi 0, %s267
  $region4: #{net_forward.1} parent=0 // loop_header_branch
    %20 = sbr.rel (%p18) target = $region8
  $region5: #{net_forward.1} parent=0 // loop_body
    %s22 = ssub.s32 %s17, 1
    %s23 = ssub.s32 %s17, 2
    %s24 = sadd.s32 %s17, 1
    %s25 = ssub.s32 %s17, %s24
    %p26 = scmp.eq.s32.totalorder %s25, 0
    %s28 = sadd.s32 %s27, 1
    %s29 = scalar_select %p26, %s27, %s28
    %p32 = pneg %p26
    %p33 = scmp.eq.s32.totalorder %s17, 1
    %p34 = por %p32, %p33
    %p35 = scmp.ne.s32.totalorder %s27, %s30
    %p36 = scmp.eq.s32.totalorder %s17, 0
    %p37 = por %p35, %p36
    %p38 = scmp.ne.s32.totalorder %s27, %s30
    %p39 = scmp.eq.s32.totalorder %s22, 1
    %p40 = por %p38, %p39
    %p41 = scmp.ne.s32.totalorder %s30, %s31
    %p42 = scmp.eq.s32.totalorder %s22, 0
    %p43 = por %p41, %p42
    %p44 = scmp.ne.s32.totalorder %s30, %s31
    %p45 = scmp.eq.s32.totalorder %s23, 1
    %p46 = por %p44, %p45
    %p48 = scmp.ne.s32.totalorder %s31, %s47
    %p49 = scmp.eq.s32.totalorder %s23, 0
    %p50 = por %p48, %p49
    %s52 = sadd.s32 %s51, 1
    %p55 = scmp.eq.s32.totalorder %s17, 1
    %p56 = scmp.ne.s32.totalorder %s51, %s53
    %p57 = scmp.eq.s32.totalorder %s17, 0
    %p58 = por %p56, %p57
    %p59 = scmp.ne.s32.totalorder %s51, %s53
    %p60 = scmp.eq.s32.totalorder %s22, 1
    %p61 = por %p59, %p60
    %p62 = scmp.ne.s32.totalorder %s53, %s54
    %p63 = scmp.eq.s32.totalorder %s22, 0
    %p64 = por %p62, %p63
    %p65 = scmp.ne.s32.totalorder %s53, %s54
    %p66 = scmp.eq.s32.totalorder %s23, 1
    %p67 = por %p65, %p66
    %p69 = scmp.ne.s32.totalorder %s54, %s68
    %p70 = scmp.eq.s32.totalorder %s23, 0
    %p71 = por %p69, %p70
    %s73 = sadd.s32 %s72, 1
    %p76 = scmp.eq.s32.totalorder %s17, 1
    %p77 = scmp.ne.s32.totalorder %s72, %s74
    %p78 = scmp.eq.s32.totalorder %s17, 0
    %p79 = por %p77, %p78
    %p80 = scmp.ne.s32.totalorder %s72, %s74
    %p81 = scmp.eq.s32.totalorder %s22, 1
    %p82 = por %p80, %p81
    %p83 = scmp.ne.s32.totalorder %s74, %s75
    %p84 = scmp.eq.s32.totalorder %s22, 0
    %p85 = por %p83, %p84
    %p86 = scmp.ne.s32.totalorder %s74, %s75
    %p87 = scmp.eq.s32.totalorder %s23, 1
    %p88 = por %p86, %p87
    %p90 = scmp.ne.s32.totalorder %s75, %s89
    %p91 = scmp.eq.s32.totalorder %s23, 0
    %p92 = por %p90, %p91
    %s94 = sadd.s32 %s93, 1
    %p97 = scmp.eq.s32.totalorder %s17, 1
    %p98 = scmp.ne.s32.totalorder %s93, %s95
    %p99 = scmp.eq.s32.totalorder %s17, 0
    %p100 = por %p98, %p99
    %p101 = scmp.ne.s32.totalorder %s93, %s95
    %p102 = scmp.eq.s32.totalorder %s22, 1
    %p103 = por %p101, %p102
    %p104 = scmp.ne.s32.totalorder %s95, %s96
    %p105 = scmp.eq.s32.totalorder %s22, 0
    %p106 = por %p104, %p105
    %p107 = scmp.ne.s32.totalorder %s95, %s96
    %p108 = scmp.eq.s32.totalorder %s23, 1
    %p109 = por %p107, %p108
    %p111 = scmp.ne.s32.totalorder %s96, %s110
    %p112 = scmp.eq.s32.totalorder %s23, 0
    %p113 = por %p111, %p112
    %s115 = sadd.s32 %s114, 1
    %p118 = scmp.eq.s32.totalorder %s17, 1
    %p119 = scmp.ne.s32.totalorder %s114, %s116
    %p120 = scmp.eq.s32.totalorder %s17, 0
    %p121 = por %p119, %p120
    %p122 = scmp.ne.s32.totalorder %s114, %s116
    %p123 = scmp.eq.s32.totalorder %s22, 1
    %p124 = por %p122, %p123
    %p125 = scmp.ne.s32.totalorder %s116, %s117
    %p126 = scmp.eq.s32.totalorder %s22, 0
    %p127 = por %p125, %p126
    %p128 = scmp.ne.s32.totalorder %s116, %s117
    %p129 = scmp.eq.s32.totalorder %s23, 1
    %p130 = por %p128, %p129
    %p132 = scmp.ne.s32.totalorder %s117, %s131
    %p133 = scmp.eq.s32.totalorder %s23, 0
    %p134 = por %p132, %p133
    %s136 = sadd.s32 %s135, 1
    %p139 = scmp.eq.s32.totalorder %s17, 1
    %p140 = scmp.ne.s32.totalorder %s135, %s137
    %p141 = scmp.eq.s32.totalorder %s17, 0
    %p142 = por %p140, %p141
    %p143 = scmp.ne.s32.totalorder %s135, %s137
    %p144 = scmp.eq.s32.totalorder %s22, 1
    %p145 = por %p143, %p144
    %p146 = scmp.ne.s32.totalorder %s137, %s138
    %p147 = scmp.eq.s32.totalorder %s22, 0
    %p148 = por %p146, %p147
    %p149 = scmp.ne.s32.totalorder %s137, %s138
    %p150 = scmp.eq.s32.totalorder %s23, 1
    %p151 = por %p149, %p150
    %p153 = scmp.ne.s32.totalorder %s138, %s152
    %p154 = scmp.eq.s32.totalorder %s23, 0
    %p155 = por %p153, %p154
    %s157 = sadd.s32 %s156, 1
    %p160 = scmp.eq.s32.totalorder %s17, 1
    %p161 = scmp.ne.s32.totalorder %s156, %s158
    %p162 = scmp.eq.s32.totalorder %s17, 0
    %p163 = por %p161, %p162
    %p164 = scmp.ne.s32.totalorder %s156, %s158
    %p165 = scmp.eq.s32.totalorder %s22, 1
    %p166 = por %p164, %p165
    %p167 = scmp.ne.s32.totalorder %s158, %s159
    %p168 = scmp.eq.s32.totalorder %s22, 0
    %p169 = por %p167, %p168
    %p170 = scmp.ne.s32.totalorder %s158, %s159
    %p171 = scmp.eq.s32.totalorder %s23, 1
    %p172 = por %p170, %p171
    %p174 = scmp.ne.s32.totalorder %s159, %s173
    %p175 = scmp.eq.s32.totalorder %s23, 0
    %p176 = por %p174, %p175
    %s178 = sadd.s32 %s177, 1
    %p181 = scmp.eq.s32.totalorder %s17, 1
    %p182 = scmp.ne.s32.totalorder %s177, %s179
    %p183 = scmp.eq.s32.totalorder %s17, 0
    %p184 = por %p182, %p183
    %p185 = scmp.ne.s32.totalorder %s177, %s179
    %p186 = scmp.eq.s32.totalorder %s22, 1
    %p187 = por %p185, %p186
    %p188 = scmp.ne.s32.totalorder %s179, %s180
    %p189 = scmp.eq.s32.totalorder %s22, 0
    %p190 = por %p188, %p189
    %p191 = scmp.ne.s32.totalorder %s179, %s180
    %p192 = scmp.eq.s32.totalorder %s23, 1
    %p193 = por %p191, %p192
    %p195 = scmp.ne.s32.totalorder %s180, %s194
    %p196 = scmp.eq.s32.totalorder %s23, 0
    %p197 = por %p195, %p196
    %s199 = sadd.s32 %s198, 1
    %p202 = scmp.eq.s32.totalorder %s17, 1
    %p203 = scmp.ne.s32.totalorder %s198, %s200
    %p204 = scmp.eq.s32.totalorder %s17, 0
    %p205 = por %p203, %p204
    %p206 = scmp.ne.s32.totalorder %s198, %s200
    %p207 = scmp.eq.s32.totalorder %s22, 1
    %p208 = por %p206, %p207
    %p209 = scmp.ne.s32.totalorder %s200, %s201
    %p210 = scmp.eq.s32.totalorder %s22, 0
    %p211 = por %p209, %p210
    %p212 = scmp.ne.s32.totalorder %s200, %s201
    %p213 = scmp.eq.s32.totalorder %s23, 1
    %p214 = por %p212, %p213
    %p216 = scmp.ne.s32.totalorder %s201, %s215
    %p217 = scmp.eq.s32.totalorder %s23, 0
    %p218 = por %p216, %p217
    %s220 = sadd.s32 %s219, 1
    %p223 = scmp.eq.s32.totalorder %s17, 1
    %p224 = scmp.ne.s32.totalorder %s219, %s221
    %p225 = scmp.eq.s32.totalorder %s17, 0
    %p226 = por %p224, %p225
    %p227 = scmp.ne.s32.totalorder %s219, %s221
    %p228 = scmp.eq.s32.totalorder %s22, 1
    %p229 = por %p227, %p228
    %p230 = scmp.ne.s32.totalorder %s221, %s222
    %p231 = scmp.eq.s32.totalorder %s22, 0
    %p232 = por %p230, %p231
    %p233 = scmp.ne.s32.totalorder %s221, %s222
    %p234 = scmp.eq.s32.totalorder %s23, 1
    %p235 = por %p233, %p234
    %p237 = scmp.ne.s32.totalorder %s222, %s236
    %p238 = scmp.eq.s32.totalorder %s23, 0
    %p239 = por %p237, %p238
    %s241 = sadd.s32 %s240, 1
    %p244 = scmp.eq.s32.totalorder %s17, 1
    %p245 = scmp.ne.s32.totalorder %s240, %s242
    %p246 = scmp.eq.s32.totalorder %s17, 0
    %p247 = por %p245, %p246
    %p248 = scmp.ne.s32.totalorder %s240, %s242
    %p249 = scmp.eq.s32.totalorder %s22, 1
    %p250 = por %p248, %p249
    %p251 = scmp.ne.s32.totalorder %s242, %s243
    %p252 = scmp.eq.s32.totalorder %s22, 0
    %p253 = por %p251, %p252
    %p254 = scmp.ne.s32.totalorder %s242, %s243
    %p255 = scmp.eq.s32.totalorder %s23, 1
    %p256 = por %p254, %p255
    %p258 = scmp.ne.s32.totalorder %s243, %s257
    %p259 = scmp.eq.s32.totalorder %s23, 0
    %p260 = por %p258, %p259
    %s261 = ssub.s32 %s17, %s24
    %p262 = scmp.eq.s32.totalorder %s261, 0
    %s264 = sadd.s32 %s263, 1
    %s265 = scalar_select %p262, %s263, %s264
    %p268 = pneg %p262
    %p269 = scmp.eq.s32.totalorder %s17, 1
    %p270 = por %p268, %p269
    %p271 = scmp.ne.s32.totalorder %s263, %s266
    %p272 = scmp.eq.s32.totalorder %s17, 0
    %p273 = por %p271, %p272
    %p274 = scmp.ne.s32.totalorder %s263, %s266
    %p275 = scmp.eq.s32.totalorder %s22, 1
    %p276 = por %p274, %p275
    %p277 = scmp.ne.s32.totalorder %s266, %s267
    %p278 = scmp.eq.s32.totalorder %s22, 0
    %p279 = por %p277, %p278
    %p280 = scmp.ne.s32.totalorder %s266, %s267
    %p281 = scmp.eq.s32.totalorder %s23, 1
    %p282 = por %p280, %p281
    %p284 = scmp.ne.s32.totalorder %s267, %s283
    %p285 = scmp.eq.s32.totalorder %s23, 0
    %p286 = por %p284, %p285
    %p287 = scmp.le.s32.totalorder 1, %s17
    %p288 = scmp.lt.s32.totalorder %s17, 3
    %p289 = pnand %p287, %p288
    %p290 = pneg %p289
    // Predicated region
    $region9: #{net_forward.1} parent=5 // pred_check
      _
    $region10: #{net_forward.1} parent=5 // pred_check_branch
      %292 = sbr.rel (%p289) target = $region12
    $region11: #{net_forward.1} parent=5 // pred_region
      %s293 = ssub.s32 %s17, 1
      // Predicated region
      $region13: #{net_forward.1} parent=11 // pred_check
        %p294 = pneg %p64
      $region14: #{net_forward.1} parent=11 // pred_check_branch
        %296 = sbr.rel (%p294) target = $region16
      $region15: #{net_forward.1} parent=11 // pred_region
        _
      $region16: #{net_forward.1} parent=11 // pred_fallthru
        _
      // Predicated region
      $region17: #{net_forward.1} parent=11 // pred_check
        %p297 = pneg %p85
      $region18: #{net_forward.1} parent=11 // pred_check_branch
        %299 = sbr.rel (%p297) target = $region20
      $region19: #{net_forward.1} parent=11 // pred_region
        _
      $region20: #{net_forward.1} parent=11 // pred_fallthru
        _
      // Predicated region
      $region21: #{net_forward.1} parent=11 // pred_check
        %p300 = pneg %p106
      $region22: #{net_forward.1} parent=11 // pred_check_branch
        %302 = sbr.rel (%p300) target = $region24
      $region23: #{net_forward.1} parent=11 // pred_region
        _
      $region24: #{net_forward.1} parent=11 // pred_fallthru
        _
      // Predicated region
      $region25: #{net_forward.1} parent=11 // pred_check
        %p303 = pneg %p127
      $region26: #{net_forward.1} parent=11 // pred_check_branch
        %305 = sbr.rel (%p303) target = $region28
      $region27: #{net_forward.1} parent=11 // pred_region
        _
      $region28: #{net_forward.1} parent=11 // pred_fallthru
        _
      // Predicated region
      $region29: #{net_forward.1} parent=11 // pred_check
        %p306 = pneg %p148
      $region30: #{net_forward.1} parent=11 // pred_check_branch
        %308 = sbr.rel (%p306) target = $region32
      $region31: #{net_forward.1} parent=11 // pred_region
        _
      $region32: #{net_forward.1} parent=11 // pred_fallthru
        _
      // Predicated region
      $region33: #{net_forward.1} parent=11 // pred_check
        %p309 = pneg %p169
      $region34: #{net_forward.1} parent=11 // pred_check_branch
        %311 = sbr.rel (%p309) target = $region36
      $region35: #{net_forward.1} parent=11 // pred_region
        _
      $region36: #{net_forward.1} parent=11 // pred_fallthru
        _
      // Predicated region
      $region37: #{net_forward.1} parent=11 // pred_check
        %p312 = pneg %p190
      $region38: #{net_forward.1} parent=11 // pred_check_branch
        %314 = sbr.rel (%p312) target = $region40
      $region39: #{net_forward.1} parent=11 // pred_region
        _
      $region40: #{net_forward.1} parent=11 // pred_fallthru
        _
      // Predicated region
      $region41: #{net_forward.1} parent=11 // pred_check
        %p315 = pneg %p211
      $region42: #{net_forward.1} parent=11 // pred_check_branch
        %317 = sbr.rel (%p315) target = $region44
      $region43: #{net_forward.1} parent=11 // pred_region
        _
      $region44: #{net_forward.1} parent=11 // pred_fallthru
        _
      // Predicated region
      $region45: #{net_forward.1} parent=11 // pred_check
        %p318 = pneg %p232
      $region46: #{net_forward.1} parent=11 // pred_check_branch
        %320 = sbr.rel (%p318) target = $region48
      $region47: #{net_forward.1} parent=11 // pred_region
        _
      $region48: #{net_forward.1} parent=11 // pred_fallthru
        _
      // Predicated region
      $region49: #{net_forward.1} parent=11 // pred_check
        %p321 = pneg %p253
      $region50: #{net_forward.1} parent=11 // pred_check_branch
        %323 = sbr.rel (%p321) target = $region52
      $region51: #{net_forward.1} parent=11 // pred_region
        _
      $region52: #{net_forward.1} parent=11 // pred_fallthru
        _
    $region12: #{net_forward.1} parent=5 // pred_fallthru
      _
    %p324 = scmp.lt.s32.totalorder %s17, 2
    // Predicated region
    $region53: #{net_forward.1} parent=5 // pred_check
      %p325 = pneg %p324
    $region54: #{net_forward.1} parent=5 // pred_check_branch
      %327 = sbr.rel (%p325) target = $region56
    $region55: #{net_forward.1} parent=5 // pred_region
      // Predicated region
      $region57: #{net_forward.1} parent=55 // pred_check
        %p328 = pneg %p37
      $region58: #{net_forward.1} parent=55 // pred_check_branch
        %330 = sbr.rel (%p328) target = $region60
      $region59: #{net_forward.1} parent=55 // pred_region
        %p331 = scmp.lt.s32.totalorder %s17, 1
        %s332 = scalar_select %p331, %s17, 1
        %s333 = smul.addr %s332, 112
        %s334 = smul.addr %s333, 4
        %s335 = scalar_lea.vmem %s0, %s334
      $region60: #{net_forward.1} parent=55 // pred_fallthru
        _
    $region56: #{net_forward.1} parent=5 // pred_fallthru
      _
    %p336 = scmp.le.s32.totalorder 1, %s17
    %p337 = scmp.lt.s32.totalorder %s17, 3
    %p338 = pnand %p336, %p337
    %p339 = pneg %p338
    // Predicated region
    $region61: #{net_forward.1} parent=5 // pred_check
      _
    $region62: #{net_forward.1} parent=5 // pred_check_branch
      %341 = sbr.rel (%p338) target = $region64
    $region63: #{net_forward.1} parent=5 // pred_region
      %s342 = ssub.s32 %s17, 1
      %p343 = scmp.lt.s32.totalorder %s22, 1
      %s344 = scalar_select %p343, %s22, 1
      %s345 = smul.addr %s344, 112
      %s346 = smul.addr %s345, 4
      %s347 = scalar_lea.vmem %s0, %s346
      %p348 = pneg %p43
      %p349 = pneg %p40
      %p350 = pneg %p64
      %p351 = pneg %p61
      %p352 = pneg %p85
      %p353 = pneg %p82
      %p354 = pneg %p106
      %p355 = pneg %p103
      %p356 = pneg %p127
      %p357 = pneg %p124
      %p358 = pneg %p148
      %p359 = pneg %p145
      %p360 = pneg %p169
      %p361 = pneg %p166
      %p362 = pneg %p190
      %p363 = pneg %p187
      %p364 = pneg %p211
      %p365 = pneg %p208
      %p366 = pneg %p232
      %p367 = pneg %p229
      %p368 = pneg %p253
      %p369 = pneg %p250
      %p370 = pneg %p279
      %p371 = pneg %p276
      %p372 = scmp.lt.s32.totalorder %s22, 1
      %s373 = scalar_select %p372, %s22, 1
      %s374 = smul.addr %s373, 8
      %s375 = scalar_lea.vmem %s11, %s374
      %p376 = scmp.lt.s32.totalorder %s22, 1
      %s377 = scalar_select %p376, %s22, 1
      %s378 = smul.addr %s377, 112
      %s379 = smul.addr %s378, 4
      %s380 = scalar_lea.vmem %s0, %s379
      %p381 = scmp.lt.s32.totalorder %s22, 1
      %s382 = scalar_select %p381, %s22, 1
      %s383 = smul.addr %s382, 8
      %s384 = scalar_lea.vmem %s11, %s383
      %v386 = vld [vmem:[%s380] sm:$0xf]
      %v387 = vld [vmem:[%s380 + $0x4] sm:$0xf]
      %v388 = vld [vmem:[%s380 + $0x8] sm:$0xf]
      %v389 = vld [vmem:[%s380 + $0xc] sm:$0xf]
      %v390 = vld [vmem:[%s380 + $0x10] sm:$0xf]
      %v391 = vld [vmem:[%s380 + $0x14] sm:$0xf]
      %v392 = vld [vmem:[%s380 + $0x18] sm:$0xf]
      %v393 = vld [vmem:[%s380 + $0x1c] sm:$0xf]
      %v394 = vld [vmem:[%s380 + $0x20] sm:$0xf]
      %v395 = vld [vmem:[%s380 + $0x24] sm:$0xf]
      %v396 = vld [vmem:[%s380 + $0x28] sm:$0xf]
      %v397 = vld [vmem:[%s380 + $0x2c] sm:$0xf]
      %v398 = vld [vmem:[%s380 + $0x30] sm:$0xf]
      %v399 = vld [vmem:[%s380 + $0x34] sm:$0xf]
      %v400 = vld [vmem:[%s380 + $0x38] sm:$0xf]
      %v401 = vld [vmem:[%s380 + $0x3c] sm:$0xf]
      %v402 = vld [vmem:[%s380 + $0x40] sm:$0xf]
      %v403 = vld [vmem:[%s380 + $0x44] sm:$0xf]
      %v404 = vld [vmem:[%s380 + $0x48] sm:$0xf]
      %v405 = vld [vmem:[%s380 + $0x4c] sm:$0xf]
      %v406 = vld [vmem:[%s380 + $0x50] sm:$0xf]
      %v407 = vld [vmem:[%s380 + $0x54] sm:$0xf]
      %v408 = vld [vmem:[%s380 + $0x58] sm:$0xf]
      %v409 = vld [vmem:[%s380 + $0x5c] sm:$0xf]
      %v410 = vld [vmem:[%s380 + $0x60] sm:$0xf]
      %v411 = vld [vmem:[%s380 + $0x64] sm:$0xf]
      %v412 = vld [vmem:[%s380 + $0x68] sm:$0xf]
      %v413 = vld [vmem:[%s380 + $0x6c] sm:$0xf]
      %v414 = vld [vmem:[%s380 + $0x70] sm:$0xf]
      %v415 = vld [vmem:[%s380 + $0x74] sm:$0xf]
      %v416 = vld [vmem:[%s380 + $0x78] sm:$0xf]
      %v417 = vld [vmem:[%s380 + $0x7c] sm:$0xf]
      %v418 = vld [vmem:[%s380 + $0x80] sm:$0xf]
      %v419 = vld [vmem:[%s380 + $0x84] sm:$0xf]
      %v420 = vld [vmem:[%s380 + $0x88] sm:$0xf]
      %v421 = vld [vmem:[%s380 + $0x8c] sm:$0xf]
      %v422 = vld [vmem:[%s380 + $0x90] sm:$0xf]
      %v423 = vld [vmem:[%s380 + $0x94] sm:$0xf]
      %v424 = vld [vmem:[%s380 + $0x98] sm:$0xf]
      %v425 = vld [vmem:[%s380 + $0x9c] sm:$0xf]
      %v426 = vld [vmem:[%s380 + $0xa0] sm:$0xf]
      %v427 = vld [vmem:[%s380 + $0xa4] sm:$0xf]
      %v428 = vld [vmem:[%s380 + $0xa8] sm:$0xf]
      %v429 = vld [vmem:[%s380 + $0xac] sm:$0xf]
      %v430 = vld [vmem:[%s380 + $0xb0] sm:$0xf]
      %v431 = vld [vmem:[%s380 + $0xb4] sm:$0xf]
      %v432 = vld [vmem:[%s380 + $0xb8] sm:$0xf]
      %v433 = vld [vmem:[%s380 + $0xbc] sm:$0xf]
      %v434 = vld [vmem:[%s380 + $0xc0] sm:$0xf]
      %v435 = vld [vmem:[%s380 + $0xc4] sm:$0xf]
      %v436 = vld [vmem:[%s380 + $0xc8] sm:$0xf]
      %v437 = vld [vmem:[%s380 + $0xcc] sm:$0xf]
      %v438 = vld [vmem:[%s380 + $0xd0] sm:$0xf]
      %v439 = vld [vmem:[%s380 + $0xd4] sm:$0xf]
      %v440 = vld [vmem:[%s380 + $0xd8] sm:$0xf]
      %v441 = vld [vmem:[%s380 + $0xdc] sm:$0xf]
      %v442 = vld [vmem:[%s380 + $0xe0] sm:$0xf]
      %v443 = vld [vmem:[%s380 + $0xe4] sm:$0xf]
      %v444 = vld [vmem:[%s380 + $0xe8] sm:$0xf]
      %v445 = vld [vmem:[%s380 + $0xec] sm:$0xf]
      %v446 = vld [vmem:[%s380 + $0xf0] sm:$0xf]
      %v447 = vld [vmem:[%s380 + $0xf4] sm:$0xf]
      %v448 = vld [vmem:[%s380 + $0xf8] sm:$0xf]
      %v449 = vld [vmem:[%s380 + $0xfc] sm:$0xf]
      %v450 = vld [vmem:[%s380 + $0x100] sm:$0xf]
      %v451 = vld [vmem:[%s380 + $0x104] sm:$0xf]
      %v452 = vld [vmem:[%s380 + $0x108] sm:$0xf]
      %v453 = vld [vmem:[%s380 + $0x10c] sm:$0xf]
      %v454 = vld [vmem:[%s380 + $0x110] sm:$0xf]
      %v455 = vld [vmem:[%s380 + $0x114] sm:$0xf]
      %v456 = vld [vmem:[%s380 + $0x118] sm:$0xf]
      %v457 = vld [vmem:[%s380 + $0x11c] sm:$0xf]
      %v458 = vld [vmem:[%s380 + $0x120] sm:$0xf]
      %v459 = vld [vmem:[%s380 + $0x124] sm:$0xf]
      %v460 = vld [vmem:[%s380 + $0x128] sm:$0xf]
      %v461 = vld [vmem:[%s380 + $0x12c] sm:$0xf]
      %v462 = vld [vmem:[%s380 + $0x130] sm:$0xf]
      %v463 = vld [vmem:[%s380 + $0x134] sm:$0xf]
      %v464 = vld [vmem:[%s380 + $0x138] sm:$0xf]
      %v465 = vld [vmem:[%s380 + $0x13c] sm:$0xf]
      %v466 = vld [vmem:[%s380 + $0x140] sm:$0xf]
      %v467 = vld [vmem:[%s380 + $0x144] sm:$0xf]
      %v468 = vld [vmem:[%s380 + $0x148] sm:$0xf]
      %v469 = vld [vmem:[%s380 + $0x14c] sm:$0xf]
      %v470 = vld [vmem:[%s380 + $0x150] sm:$0xf]
      %v471 = vld [vmem:[%s380 + $0x154] sm:$0xf]
      %v472 = vld [vmem:[%s380 + $0x158] sm:$0xf]
      %v473 = vld [vmem:[%s380 + $0x15c] sm:$0xf]
      %v474 = vld [vmem:[%s380 + $0x160] sm:$0xf]
      %v475 = vld [vmem:[%s380 + $0x164] sm:$0xf]
      %v476 = vld [vmem:[%s380 + $0x168] sm:$0xf]
      %v477 = vld [vmem:[%s380 + $0x16c] sm:$0xf]
      %v478 = vld [vmem:[%s380 + $0x170] sm:$0xf]
      %v479 = vld [vmem:[%s380 + $0x174] sm:$0xf]
      %v480 = vld [vmem:[%s380 + $0x178] sm:$0xf]
      %v481 = vld [vmem:[%s380 + $0x17c] sm:$0xf]
      %v482 = vld [vmem:[%s380 + $0x180] sm:$0xf]
      %v483 = vld [vmem:[%s380 + $0x184] sm:$0xf]
      %v484 = vld [vmem:[%s380 + $0x188] sm:$0xf]
      %v485 = vld [vmem:[%s380 + $0x18c] sm:$0xf]
      %v486 = vld [vmem:[%s380 + $0x190] sm:$0xf]
      %v487 = vld [vmem:[%s380 + $0x194] sm:$0xf]
      %v488 = vld [vmem:[%s380 + $0x198] sm:$0xf]
      %v489 = vld [vmem:[%s380 + $0x19c] sm:$0xf]
      %v490 = vld [vmem:[%s380 + $0x1a0] sm:$0xf]
      %v491 = vld [vmem:[%s380 + $0x1a4] sm:$0xf]
      %v492 = vld [vmem:[%s380 + $0x1a8] sm:$0xf]
      %v493 = vld [vmem:[%s380 + $0x1ac] sm:$0xf]
      %v494 = vld [vmem:[%s380 + $0x1b0] sm:$0xf]
      %v495 = vld [vmem:[%s380 + $0x1b4] sm:$0xf]
      %v496 = vld [vmem:[%s380 + $0x1b8] sm:$0xf]
      %v497 = vld [vmem:[%s380 + $0x1bc] sm:$0xf]
      %v498 = vld [vmem:[%s1] sm:$0xf]
      %v499 = vld [vmem:[%s1 + $0x4] sm:$0xf]
      %v500 = vld [vmem:[%s1 + $0x8] sm:$0xf]
      %v501 = vld [vmem:[%s1 + $0xc] sm:$0xf]
      %v502 = vld [vmem:[%s2] sm:$0x1]
      %v504 = vlaneseq
      %v505 = vshrl.u32 %v504, 7
      %v506 = vsub.s32 0, %v505
      %v507 = vrot.slane %v502, %v506
      %v621 = vunpack.c.l.b16 %v386
      %v622 = vunpack.c.l.b16 %v387
      %v623 = vunpack.c.l.b16 %v388
      %v624 = vunpack.c.l.b16 %v389
      %v625 = vunpack.c.l.b16 %v390
      %v626 = vunpack.c.l.b16 %v391
      %v627 = vunpack.c.l.b16 %v392
      %v628 = vunpack.c.l.b16 %v393
      %v629 = vunpack.c.l.b16 %v394
      %v630 = vunpack.c.l.b16 %v395
      %v631 = vunpack.c.l.b16 %v396
      %v632 = vunpack.c.l.b16 %v397
      %v633 = vunpack.c.l.b16 %v398
      %v634 = vunpack.c.l.b16 %v399
      %v635 = vunpack.c.l.b16 %v400
      %v636 = vunpack.c.l.b16 %v401
      %v637 = vunpack.c.l.b16 %v402
      %v638 = vunpack.c.l.b16 %v403
      %v639 = vunpack.c.l.b16 %v404
      %v640 = vunpack.c.l.b16 %v405
      %v641 = vunpack.c.l.b16 %v406
      %v642 = vunpack.c.l.b16 %v407
      %v643 = vunpack.c.l.b16 %v408
      %v644 = vunpack.c.l.b16 %v409
      %v645 = vunpack.c.l.b16 %v410
      %v646 = vunpack.c.l.b16 %v411
      %v647 = vunpack.c.l.b16 %v412
      %v648 = vunpack.c.l.b16 %v413
      %v649 = vunpack.c.l.b16 %v414
      %v650 = vunpack.c.l.b16 %v415
      %v651 = vunpack.c.l.b16 %v416
      %v652 = vunpack.c.l.b16 %v417
      %v653 = vunpack.c.l.b16 %v418
      %v654 = vunpack.c.l.b16 %v419
      %v655 = vunpack.c.l.b16 %v420
      %v656 = vunpack.c.l.b16 %v421
      %v657 = vunpack.c.l.b16 %v422
      %v658 = vunpack.c.l.b16 %v423
      %v659 = vunpack.c.l.b16 %v424
      %v660 = vunpack.c.l.b16 %v425
      %v661 = vunpack.c.l.b16 %v426
      %v662 = vunpack.c.l.b16 %v427
      %v663 = vunpack.c.l.b16 %v428
      %v664 = vunpack.c.l.b16 %v429
      %v665 = vunpack.c.l.b16 %v430
      %v666 = vunpack.c.l.b16 %v431
      %v667 = vunpack.c.l.b16 %v432
      %v668 = vunpack.c.l.b16 %v433
      %v669 = vunpack.c.l.b16 %v434
      %v670 = vunpack.c.l.b16 %v435
      %v671 = vunpack.c.l.b16 %v436
      %v672 = vunpack.c.l.b16 %v437
      %v673 = vunpack.c.l.b16 %v438
      %v674 = vunpack.c.l.b16 %v439
      %v675 = vunpack.c.l.b16 %v440
      %v676 = vunpack.c.l.b16 %v441
      %v677 = vunpack.c.l.b16 %v442
      %v678 = vunpack.c.l.b16 %v443
      %v679 = vunpack.c.l.b16 %v444
      %v680 = vunpack.c.l.b16 %v445
      %v681 = vunpack.c.l.b16 %v446
      %v682 = vunpack.c.l.b16 %v447
      %v683 = vunpack.c.l.b16 %v448
      %v684 = vunpack.c.l.b16 %v449
      %v685 = vunpack.c.l.b16 %v450
      %v686 = vunpack.c.l.b16 %v451
      %v687 = vunpack.c.l.b16 %v452
      %v688 = vunpack.c.l.b16 %v453
      %v689 = vunpack.c.l.b16 %v454
      %v690 = vunpack.c.l.b16 %v455
      %v691 = vunpack.c.l.b16 %v456
      %v692 = vunpack.c.l.b16 %v457
      %v693 = vunpack.c.l.b16 %v458
      %v694 = vunpack.c.l.b16 %v459
      %v695 = vunpack.c.l.b16 %v460
      %v696 = vunpack.c.l.b16 %v461
      %v697 = vunpack.c.l.b16 %v462
      %v698 = vunpack.c.l.b16 %v463
      %v699 = vunpack.c.l.b16 %v464
      %v700 = vunpack.c.l.b16 %v465
      %v701 = vunpack.c.l.b16 %v466
      %v702 = vunpack.c.l.b16 %v467
      %v703 = vunpack.c.l.b16 %v468
      %v704 = vunpack.c.l.b16 %v469
      %v705 = vunpack.c.l.b16 %v470
      %v706 = vunpack.c.l.b16 %v471
      %v707 = vunpack.c.l.b16 %v472
      %v708 = vunpack.c.l.b16 %v473
      %v709 = vunpack.c.l.b16 %v474
      %v710 = vunpack.c.l.b16 %v475
      %v711 = vunpack.c.l.b16 %v476
      %v712 = vunpack.c.l.b16 %v477
      %v713 = vunpack.c.l.b16 %v478
      %v714 = vunpack.c.l.b16 %v479
      %v715 = vunpack.c.l.b16 %v480
      %v716 = vunpack.c.l.b16 %v481
      %v717 = vunpack.c.l.b16 %v482
      %v718 = vunpack.c.l.b16 %v483
      %v719 = vunpack.c.l.b16 %v484
      %v720 = vunpack.c.l.b16 %v485
      %v721 = vunpack.c.l.b16 %v486
      %v722 = vunpack.c.l.b16 %v487
      %v723 = vunpack.c.l.b16 %v488
      %v724 = vunpack.c.l.b16 %v489
      %v725 = vunpack.c.l.b16 %v490
      %v726 = vunpack.c.l.b16 %v491
      %v727 = vunpack.c.l.b16 %v492
      %v728 = vunpack.c.l.b16 %v493
      %v729 = vunpack.c.l.b16 %v494
      %v730 = vunpack.c.l.b16 %v495
      %v731 = vunpack.c.l.b16 %v496
      %v732 = vunpack.c.l.b16 %v497
      %v733 = vpack.c.b16 %v622, %v621
      %v734 = vpack.c.b16 %v624, %v623
      %v735 = vpack.c.b16 %v626, %v625
      %v736 = vpack.c.b16 %v628, %v627
      %v737 = vpack.c.b16 %v630, %v629
      %v738 = vpack.c.b16 %v632, %v631
      %v739 = vpack.c.b16 %v634, %v633
      %v740 = vpack.c.b16 %v636, %v635
      %v741 = vpack.c.b16 %v638, %v637
      %v742 = vpack.c.b16 %v640, %v639
      %v743 = vpack.c.b16 %v642, %v641
      %v744 = vpack.c.b16 %v644, %v643
      %v745 = vpack.c.b16 %v646, %v645
      %v746 = vpack.c.b16 %v648, %v647
      %v747 = vpack.c.b16 %v650, %v649
      %v748 = vpack.c.b16 %v652, %v651
      %v749 = vpack.c.b16 %v654, %v653
      %v750 = vpack.c.b16 %v656, %v655
      %v751 = vpack.c.b16 %v658, %v657
      %v752 = vpack.c.b16 %v660, %v659
      %v753 = vpack.c.b16 %v662, %v661
      %v754 = vpack.c.b16 %v664, %v663
      %v755 = vpack.c.b16 %v666, %v665
      %v756 = vpack.c.b16 %v668, %v667
      %v757 = vpack.c.b16 %v670, %v669
      %v758 = vpack.c.b16 %v672, %v671
      %v759 = vpack.c.b16 %v674, %v673
      %v760 = vpack.c.b16 %v676, %v675
      %v761 = vpack.c.b16 %v678, %v677
      %v762 = vpack.c.b16 %v680, %v679
      %v763 = vpack.c.b16 %v682, %v681
      %v764 = vpack.c.b16 %v684, %v683
      %v765 = vpack.c.b16 %v686, %v685
      %v766 = vpack.c.b16 %v688, %v687
      %v767 = vpack.c.b16 %v690, %v689
      %v768 = vpack.c.b16 %v692, %v691
      %v769 = vpack.c.b16 %v694, %v693
      %v770 = vpack.c.b16 %v696, %v695
      %v771 = vpack.c.b16 %v698, %v697
      %v772 = vpack.c.b16 %v700, %v699
      %v773 = vpack.c.b16 %v702, %v701
      %v774 = vpack.c.b16 %v704, %v703
      %v775 = vpack.c.b16 %v706, %v705
      %v776 = vpack.c.b16 %v708, %v707
      %v777 = vpack.c.b16 %v710, %v709
      %v778 = vpack.c.b16 %v712, %v711
      %v779 = vpack.c.b16 %v714, %v713
      %v780 = vpack.c.b16 %v716, %v715
      %v781 = vpack.c.b16 %v718, %v717
      %v782 = vpack.c.b16 %v720, %v719
      %v783 = vpack.c.b16 %v722, %v721
      %v784 = vpack.c.b16 %v724, %v723
      %v785 = vpack.c.b16 %v726, %v725
      %v786 = vpack.c.b16 %v728, %v727
      %v787 = vpack.c.b16 %v730, %v729
      %v788 = vpack.c.b16 %v732, %v731
      %v793 = vunpack.c.l.b16 %v498
      %v794 = vunpack.c.l.b16 %v499
      %v795 = vunpack.c.l.b16 %v500
      %v796 = vunpack.c.l.b16 %v501
      %v797 = vpack.c.b16 %v794, %v793
      %v798 = vpack.c.b16 %v796, %v795
      %vm801 = vcmask 261120
      %v803 = vsel %vm801, %v733, 0
      %v806 = vsel %vm801, %v734, 0
      %v809 = vsel %vm801, %v735, 0
      %v812 = vsel %vm801, %v736, 0
      %v815 = vsel %vm801, %v737, 0
      %v818 = vsel %vm801, %v738, 0
      %v821 = vsel %vm801, %v739, 0
      %v824 = vsel %vm801, %v740, 0
      %v827 = vsel %vm801, %v741, 0
      %v830 = vsel %vm801, %v742, 0
      %v833 = vsel %vm801, %v743, 0
      %v836 = vsel %vm801, %v744, 0
      %v839 = vsel %vm801, %v745, 0
      %v842 = vsel %vm801, %v746, 0
      %v845 = vsel %vm801, %v747, 0
      %v848 = vsel %vm801, %v748, 0
      %v851 = vsel %vm801, %v749, 0
      %v854 = vsel %vm801, %v750, 0
      %v857 = vsel %vm801, %v751, 0
      %v860 = vsel %vm801, %v752, 0
      %v863 = vsel %vm801, %v753, 0
      %v866 = vsel %vm801, %v754, 0
      %v869 = vsel %vm801, %v755, 0
      %v872 = vsel %vm801, %v756, 0
      %v875 = vsel %vm801, %v757, 0
      %v878 = vsel %vm801, %v758, 0
      %v881 = vsel %vm801, %v759, 0
      %v884 = vsel %vm801, %v760, 0
      %v887 = vsel %vm801, %v761, 0
      %v890 = vsel %vm801, %v762, 0
      %v893 = vsel %vm801, %v763, 0
      %v896 = vsel %vm801, %v764, 0
      %v899 = vsel %vm801, %v765, 0
      %v902 = vsel %vm801, %v766, 0
      %v905 = vsel %vm801, %v767, 0
      %v908 = vsel %vm801, %v768, 0
      %v911 = vsel %vm801, %v769, 0
      %v914 = vsel %vm801, %v770, 0
      %v917 = vsel %vm801, %v771, 0
      %v920 = vsel %vm801, %v772, 0
      %v923 = vsel %vm801, %v773, 0
      %v926 = vsel %vm801, %v774, 0
      %v929 = vsel %vm801, %v775, 0
      %v932 = vsel %vm801, %v776, 0
      %v935 = vsel %vm801, %v777, 0
      %v938 = vsel %vm801, %v778, 0
      %v941 = vsel %vm801, %v779, 0
      %v944 = vsel %vm801, %v780, 0
      %v947 = vsel %vm801, %v781, 0
      %v950 = vsel %vm801, %v782, 0
      %v953 = vsel %vm801, %v783, 0
      %v956 = vsel %vm801, %v784, 0
      %v959 = vsel %vm801, %v785, 0
      %v962 = vsel %vm801, %v786, 0
      %v965 = vsel %vm801, %v787, 0
      %v968 = vsel %vm801, %v788, 0
      %970 = vmatprep.subr.bf16.mxu0 0
      %971 = vmatpush1.bf16.msra.mxu0 %v797
      %972 = vmatprep.subr.bf16.mxu0 0
      %973 = vmatpush1.bf16.msra.mxu0 %v798
      %974 = vmatprep.subr.bf16.mxu0 0
      %975 = vmatpush1.bf16.msra.mxu0 0
      %976 = vmatprep.subr.bf16.mxu0 0
      %977 = vmatpush1.bf16.msra.mxu0 0
      %978 = vmatprep.subr.bf16.mxu0 0
      %979 = vmatpush1.bf16.msra.mxu0 0
      %980 = vmatprep.subr.bf16.mxu0 0
      %981 = vmatpush1.bf16.msra.mxu0 0
      %982 = vmatprep.subr.bf16.mxu0 0
      %983 = vmatpush1.bf16.msra.mxu0 0
      %984 = vmatprep.subr.bf16.mxu0 0
      %985 = vmatpush1.bf16.msra.mxu0 0
      %986 = vmatprep.subr.bf16.mxu0 0
      %987 = vmatpush1.bf16.msra.mxu0 0
      %988 = vmatprep.subr.bf16.mxu0 0
      %989 = vmatpush1.bf16.msra.mxu0 0
      %990 = vmatprep.subr.bf16.mxu0 0
      %991 = vmatpush1.bf16.msra.mxu0 0
      %992 = vmatprep.subr.bf16.mxu0 0
      %993 = vmatpush1.bf16.msra.mxu0 0
      %994 = vmatprep.subr.bf16.mxu0 0
      %995 = vmatpush1.bf16.msra.mxu0 0
      %996 = vmatprep.subr.bf16.mxu0 0
      %997 = vmatpush1.bf16.msra.mxu0 0
      %998 = vmatprep.subr.bf16.mxu0 0
      %999 = vmatpush1.bf16.msra.mxu0 0
      %1000 = vmatprep.subr.bf16.mxu0 0
      %1001 = vmatpush1.bf16.msra.mxu0 0
      %1002 = vmatprep.mubr.bf16.mxu0 0
      %1003 = vmatmul.mubr.bf16.gmra.mrb[0].mxu0 %v803
      %v1004 = vpop.f32.mrb[0].mxu0
      %v1005 = vadd.f32 %v507, %v1004
      %v1006 = vpop.f32.mrb[0].mxu0
      %v1007 = vpop.f32.mrb[0].mxu0
      %v1008 = vadd.f32 %v507, %v1007
      %v1009 = vpop.f32.mrb[0].mxu0
      %1010 = vmatprep.mubr.bf16.mxu0 0
      %1011 = vmatmul.mubr.bf16.gmra.mrb[0].mxu0 %v806
      %v1012 = vpop.f32.mrb[0].mxu0
      %v1013 = vadd.f32 %v507, %v1012
      %v1014 = vpop.f32.mrb[0].mxu0
      %v1015 = vpop.f32.mrb[0].mxu0
      %v1016 = vadd.f32 %v507, %v1015
      %v1017 = vpop.f32.mrb[0].mxu0
      %1018 = vmatprep.mubr.bf16.mxu0 0
      %1019 = vmatmul.mubr.bf16.gmra.mrb[0].mxu0 %v809
      %v1020 = vpop.f32.mrb[0].mxu0
      %v1021 = vadd.f32 %v507, %v1020
      %v1022 = vpop.f32.mrb[0].mxu0
      %v1023 = vpop.f32.mrb[0].mxu0
      %v1024 = vadd.f32 %v507, %v1023
      %v1025 = vpop.f32.mrb[0].mxu0
      %1026 = vmatprep.mubr.bf16.mxu0 0
      %1027 = vmatmul.mubr.bf16.gmra.mrb[0].mxu0 %v812
      %v1028 = vpop.f32.mrb[0].mxu0
      %v1029 = vadd.f32 %v507, %v1028
      %v1030 = vpop.f32.mrb[0].mxu0
      %v1031 = vpop.f32.mrb[0].mxu0
      %v1032 = vadd.f32 %v507, %v1031
      %v1033 = vpop.f32.mrb[0].mxu0
      %1034 = vmatprep.mubr.bf16.mxu0 0
      %1035 = vmatmul.mubr.bf16.gmra.mrb[0].mxu0 %v815
      %v1036 = vpop.f32.mrb[0].mxu0
      %v1037 = vadd.f32 %v507, %v1036
      %v1038 = vpop.f32.mrb[0].mxu0
      %v1039 = vpop.f32.mrb[0].mxu0
      %v1040 = vadd.f32 %v507, %v1039
      %v1041 = vpop.f32.mrb[0].mxu0
      %1042 = vmatprep.mubr.bf16.mxu0 0
      %1043 = vmatmul.mubr.bf16.gmra.mrb[0].mxu0 %v818
      %v1044 = vpop.f32.mrb[0].mxu0
      %v1045 = vadd.f32 %v507, %v1044
      %v1046 = vpop.f32.mrb[0].mxu0
      %v1047 = vpop.f32.mrb[0].mxu0
      %v1048 = vadd.f32 %v507, %v1047
      %v1049 = vpop.f32.mrb[0].mxu0
      %1050 = vmatprep.mubr.bf16.mxu0 0
      %1051 = vmatmul.mubr.bf16.gmra.mrb[0].mxu0 %v821
      %v1052 = vpop.f32.mrb[0].mxu0
      %v1053 = vadd.f32 %v507, %v1052
      %v1054 = vpop.f32.mrb[0].mxu0
      %v1055 = vpop.f32.mrb[0].mxu0
      %v1056 = vadd.f32 %v507, %v1055
      %v1057 = vpop.f32.mrb[0].mxu0
      %1058 = vmatprep.mubr.bf16.mxu0 0
      %1059 = vmatmul.mubr.bf16.gmra.mrb[0].mxu0 %v824
      %v1060 = vpop.f32.mrb[0].mxu0
      %v1061 = vadd.f32 %v507, %v1060
      %v1062 = vpop.f32.mrb[0].mxu0
      %v1063 = vpop.f32.mrb[0].mxu0
      %v1064 = vadd.f32 %v507, %v1063
      %v1065 = vpop.f32.mrb[0].mxu0
      %1066 = vmatprep.mubr.bf16.mxu0 0
      %1067 = vmatmul.mubr.bf16.gmra.mrb[0].mxu0 %v827
      %v1068 = vpop.f32.mrb[0].mxu0
      %v1069 = vadd.f32 %v507, %v1068
      %v1070 = vpop.f32.mrb[0].mxu0
      %v1071 = vpop.f32.mrb[0].mxu0
      %v1072 = vadd.f32 %v507, %v1071
      %v1073 = vpop.f32.mrb[0].mxu0
      %1074 = vmatprep.mubr.bf16.mxu0 0
      %1075 = vmatmul.mubr.bf16.gmra.mrb[0].mxu0 %v830
      %v1076 = vpop.f32.mrb[0].mxu0
      %v1077 = vadd.f32 %v507, %v1076
      %v1078 = vpop.f32.mrb[0].mxu0
      %v1079 = vpop.f32.mrb[0].mxu0
      %v1080 = vadd.f32 %v507, %v1079
      %v1081 = vpop.f32.mrb[0].mxu0
      %1082 = vmatprep.mubr.bf16.mxu0 0
      %1083 = vmatmul.mubr.bf16.gmra.mrb[0].mxu0 %v833
      %v1084 = vpop.f32.mrb[0].mxu0
      %v1085 = vadd.f32 %v507, %v1084
      %v1086 = vpop.f32.mrb[0].mxu0
      %v1087 = vpop.f32.mrb[0].mxu0
      %v1088 = vadd.f32 %v507, %v1087
      %v1089 = vpop.f32.mrb[0].mxu0
      %1090 = vmatprep.mubr.bf16.mxu0 0
      %1091 = vmatmul.mubr.bf16.gmra.mrb[0].mxu0 %v836
      %v1092 = vpop.f32.mrb[0].mxu0
      %v1093 = vadd.f32 %v507, %v1092
      %v1094 = vpop.f32.mrb[0].mxu0
      %v1095 = vpop.f32.mrb[0].mxu0
      %v1096 = vadd.f32 %v507, %v1095
      %v1097 = vpop.f32.mrb[0].mxu0
      %1098 = vmatprep.mubr.bf16.mxu0 0
      %1099 = vmatmul.mubr.bf16.gmra.mrb[0].mxu0 %v839
      %v1100 = vpop.f32.mrb[0].mxu0
      %v1101 = vadd.f32 %v507, %v1100
      %v1102 = vpop.f32.mrb[0].mxu0
      %v1103 = vpop.f32.mrb[0].mxu0
      %v1104 = vadd.f32 %v507, %v1103
      %v1105 = vpop.f32.mrb[0].mxu0
      %1106 = vmatprep.mubr.bf16.mxu0 0
      %1107 = vmatmul.mubr.bf16.gmra.mrb[0].mxu0 %v842
      %v1108 = vpop.f32.mrb[0].mxu0
      %v1109 = vadd.f32 %v507, %v1108
      %v1110 = vpop.f32.mrb[0].mxu0
      %v1111 = vpop.f32.mrb[0].mxu0
      %v1112 = vadd.f32 %v507, %v1111
      %v1113 = vpop.f32.mrb[0].mxu0
      %1114 = vmatprep.mubr.bf16.mxu0 0
      %1115 = vmatmul.mubr.bf16.gmra.mrb[0].mxu0 %v845
      %v1116 = vpop.f32.mrb[0].mxu0
      %v1117 = vadd.f32 %v507, %v1116
      %v1118 = vpop.f32.mrb[0].mxu0
      %v1119 = vpop.f32.mrb[0].mxu0
      %v1120 = vadd.f32 %v507, %v1119
      %v1121 = vpop.f32.mrb[0].mxu0
      %1122 = vmatprep.mubr.bf16.mxu0 0
      %1123 = vmatmul.mubr.bf16.gmra.mrb[0].mxu0 %v848
      %v1124 = vpop.f32.mrb[0].mxu0
      %v1125 = vadd.f32 %v507, %v1124
      %v1126 = vpop.f32.mrb[0].mxu0
      %v1127 = vpop.f32.mrb[0].mxu0
      %v1128 = vadd.f32 %v507, %v1127
      %v1129 = vpop.f32.mrb[0].mxu0
      %1130 = vmatprep.mubr.bf16.mxu0 0
      %1131 = vmatmul.mubr.bf16.gmra.mrb[0].mxu0 %v851
      %v1132 = vpop.f32.mrb[0].mxu0
      %v1133 = vadd.f32 %v507, %v1132
      %v1134 = vpop.f32.mrb[0].mxu0
      %v1135 = vpop.f32.mrb[0].mxu0
      %v1136 = vadd.f32 %v507, %v1135
      %v1137 = vpop.f32.mrb[0].mxu0
      %1138 = vmatprep.mubr.bf16.mxu0 0
      %1139 = vmatmul.mubr.bf16.gmra.mrb[0].mxu0 %v854
      %v1140 = vpop.f32.mrb[0].mxu0
      %v1141 = vadd.f32 %v507, %v1140
      %v1142 = vpop.f32.mrb[0].mxu0
      %v1143 = vpop.f32.mrb[0].mxu0
      %v1144 = vadd.f32 %v507, %v1143
      %v1145 = vpop.f32.mrb[0].mxu0
      %1146 = vmatprep.mubr.bf16.mxu0 0
      %1147 = vmatmul.mubr.bf16.gmra.mrb[0].mxu0 %v857
      %v1148 = vpop.f32.mrb[0].mxu0
      %v1149 = vadd.f32 %v507, %v1148
      %v1150 = vpop.f32.mrb[0].mxu0
      %v1151 = vpop.f32.mrb[0].mxu0
      %v1152 = vadd.f32 %v507, %v1151
      %v1153 = vpop.f32.mrb[0].mxu0
      %1154 = vmatprep.mubr.bf16.mxu0 0
      %1155 = vmatmul.mubr.bf16.gmra.mrb[0].mxu0 %v860
      %v1156 = vpop.f32.mrb[0].mxu0
      %v1157 = vadd.f32 %v507, %v1156
      %v1158 = vpop.f32.mrb[0].mxu0
      %v1159 = vpop.f32.mrb[0].mxu0
      %v1160 = vadd.f32 %v507, %v1159
      %v1161 = vpop.f32.mrb[0].mxu0
      %1162 = vmatprep.mubr.bf16.mxu0 0
      %1163 = vmatmul.mubr.bf16.gmra.mrb[0].mxu0 %v863
      %v1164 = vpop.f32.mrb[0].mxu0
      %v1165 = vadd.f32 %v507, %v1164
      %v1166 = vpop.f32.mrb[0].mxu0
      %v1167 = vpop.f32.mrb[0].mxu0
      %v1168 = vadd.f32 %v507, %v1167
      %v1169 = vpop.f32.mrb[0].mxu0
      %1170 = vmatprep.mubr.bf16.mxu0 0
      %1171 = vmatmul.mubr.bf16.gmra.mrb[0].mxu0 %v866
      %v1172 = vpop.f32.mrb[0].mxu0
      %v1173 = vadd.f32 %v507, %v1172
      %v1174 = vpop.f32.mrb[0].mxu0
      %v1175 = vpop.f32.mrb[0].mxu0
      %v1176 = vadd.f32 %v507, %v1175
      %v1177 = vpop.f32.mrb[0].mxu0
      %1178 = vmatprep.mubr.bf16.mxu0 0
      %1179 = vmatmul.mubr.bf16.gmra.mrb[0].mxu0 %v869
      %v1180 = vpop.f32.mrb[0].mxu0
      %v1181 = vadd.f32 %v507, %v1180
      %v1182 = vpop.f32.mrb[0].mxu0
      %v1183 = vpop.f32.mrb[0].mxu0
      %v1184 = vadd.f32 %v507, %v1183
      %v1185 = vpop.f32.mrb[0].mxu0
      %1186 = vmatprep.mubr.bf16.mxu0 0
      %1187 = vmatmul.mubr.bf16.gmra.mrb[0].mxu0 %v872
      %v1188 = vpop.f32.mrb[0].mxu0
      %v1189 = vadd.f32 %v507, %v1188
      %v1190 = vpop.f32.mrb[0].mxu0
      %v1191 = vpop.f32.mrb[0].mxu0
      %v1192 = vadd.f32 %v507, %v1191
      %v1193 = vpop.f32.mrb[0].mxu0
      %1194 = vmatprep.mubr.bf16.mxu0 0
      %1195 = vmatmul.mubr.bf16.gmra.mrb[0].mxu0 %v875
      %v1196 = vpop.f32.mrb[0].mxu0
      %v1197 = vadd.f32 %v507, %v1196
      %v1198 = vpop.f32.mrb[0].mxu0
      %v1199 = vpop.f32.mrb[0].mxu0
      %v1200 = vadd.f32 %v507, %v1199
      %v1201 = vpop.f32.mrb[0].mxu0
      %1202 = vmatprep.mubr.bf16.mxu0 0
      %1203 = vmatmul.mubr.bf16.gmra.mrb[0].mxu0 %v878
      %v1204 = vpop.f32.mrb[0].mxu0
      %v1205 = vadd.f32 %v507, %v1204
      %v1206 = vpop.f32.mrb[0].mxu0
      %v1207 = vpop.f32.mrb[0].mxu0
      %v1208 = vadd.f32 %v507, %v1207
      %v1209 = vpop.f32.mrb[0].mxu0
      %1210 = vmatprep.mubr.bf16.mxu0 0
      %1211 = vmatmul.mubr.bf16.gmra.mrb[0].mxu0 %v881
      %v1212 = vpop.f32.mrb[0].mxu0
      %v1213 = vadd.f32 %v507, %v1212
      %v1214 = vpop.f32.mrb[0].mxu0
      %v1215 = vpop.f32.mrb[0].mxu0
      %v1216 = vadd.f32 %v507, %v1215
      %v1217 = vpop.f32.mrb[0].mxu0
      %1218 = vmatprep.mubr.bf16.mxu0 0
      %1219 = vmatmul.mubr.bf16.gmra.mrb[0].mxu0 %v884
      %v1220 = vpop.f32.mrb[0].mxu0
      %v1221 = vadd.f32 %v507, %v1220
      %v1222 = vpop.f32.mrb[0].mxu0
      %v1223 = vpop.f32.mrb[0].mxu0
      %v1224 = vadd.f32 %v507, %v1223
      %v1225 = vpop.f32.mrb[0].mxu0
      %1226 = vmatprep.mubr.bf16.mxu0 0
      %1227 = vmatmul.mubr.bf16.gmra.mrb[0].mxu0 %v887
      %v1228 = vpop.f32.mrb[0].mxu0
      %v1229 = vadd.f32 %v507, %v1228
      %v1230 = vpop.f32.mrb[0].mxu0
      %v1231 = vpop.f32.mrb[0].mxu0
      %v1232 = vadd.f32 %v507, %v1231
      %v1233 = vpop.f32.mrb[0].mxu0
      %1234 = vmatprep.mubr.bf16.mxu0 0
      %1235 = vmatmul.mubr.bf16.gmra.mrb[0].mxu0 %v890
      %v1236 = vpop.f32.mrb[0].mxu0
      %v1237 = vadd.f32 %v507, %v1236
      %v1238 = vpop.f32.mrb[0].mxu0
      %v1239 = vpop.f32.mrb[0].mxu0
      %v1240 = vadd.f32 %v507, %v1239
      %v1241 = vpop.f32.mrb[0].mxu0
      %1242 = vmatprep.mubr.bf16.mxu0 0
      %1243 = vmatmul.mubr.bf16.gmra.mrb[0].mxu0 %v893
      %v1244 = vpop.f32.mrb[0].mxu0
      %v1245 = vadd.f32 %v507, %v1244
      %v1246 = vpop.f32.mrb[0].mxu0
      %v1247 = vpop.f32.mrb[0].mxu0
      %v1248 = vadd.f32 %v507, %v1247
      %v1249 = vpop.f32.mrb[0].mxu0
      %1250 = vmatprep.mubr.bf16.mxu0 0
      %1251 = vmatmul.mubr.bf16.gmra.mrb[0].mxu0 %v896
      %v1252 = vpop.f32.mrb[0].mxu0
      %v1253 = vadd.f32 %v507, %v1252
      %v1254 = vpop.f32.mrb[0].mxu0
      %v1255 = vpop.f32.mrb[0].mxu0
      %v1256 = vadd.f32 %v507, %v1255
      %v1257 = vpop.f32.mrb[0].mxu0
      %1258 = vmatprep.mubr.bf16.mxu0 0
      %1259 = vmatmul.mubr.bf16.gmra.mrb[0].mxu0 %v899
      %v1260 = vpop.f32.mrb[0].mxu0
      %v1261 = vadd.f32 %v507, %v1260
      %v1262 = vpop.f32.mrb[0].mxu0
      %v1263 = vpop.f32.mrb[0].mxu0
      %v1264 = vadd.f32 %v507, %v1263
      %v1265 = vpop.f32.mrb[0].mxu0
      %1266 = vmatprep.mubr.bf16.mxu0 0
      %1267 = vmatmul.mubr.bf16.gmra.mrb[0].mxu0 %v902
      %v1268 = vpop.f32.mrb[0].mxu0
      %v1269 = vadd.f32 %v507, %v1268
      %v1270 = vpop.f32.mrb[0].mxu0
      %v1271 = vpop.f32.mrb[0].mxu0
      %v1272 = vadd.f32 %v507, %v1271
      %v1273 = vpop.f32.mrb[0].mxu0
      %1274 = vmatprep.mubr.bf16.mxu0 0
      %1275 = vmatmul.mubr.bf16.gmra.mrb[0].mxu0 %v905
      %v1276 = vpop.f32.mrb[0].mxu0
      %v1277 = vadd.f32 %v507, %v1276
      %v1278 = vpop.f32.mrb[0].mxu0
      %v1279 = vpop.f32.mrb[0].mxu0
      %v1280 = vadd.f32 %v507, %v1279
      %v1281 = vpop.f32.mrb[0].mxu0
      %1282 = vmatprep.mubr.bf16.mxu0 0
      %1283 = vmatmul.mubr.bf16.gmra.mrb[0].mxu0 %v908
      %v1284 = vpop.f32.mrb[0].mxu0
      %v1285 = vadd.f32 %v507, %v1284
      %v1286 = vpop.f32.mrb[0].mxu0
      %v1287 = vpop.f32.mrb[0].mxu0
      %v1288 = vadd.f32 %v507, %v1287
      %v1289 = vpop.f32.mrb[0].mxu0
      %1290 = vmatprep.mubr.bf16.mxu0 0
      %1291 = vmatmul.mubr.bf16.gmra.mrb[0].mxu0 %v911
      %v1292 = vpop.f32.mrb[0].mxu0
      %v1293 = vadd.f32 %v507, %v1292
      %v1294 = vpop.f32.mrb[0].mxu0
      %v1295 = vpop.f32.mrb[0].mxu0
      %v1296 = vadd.f32 %v507, %v1295
      %v1297 = vpop.f32.mrb[0].mxu0
      %1298 = vmatprep.mubr.bf16.mxu0 0
      %1299 = vmatmul.mubr.bf16.gmra.mrb[0].mxu0 %v914
      %v1300 = vpop.f32.mrb[0].mxu0
      %v1301 = vadd.f32 %v507, %v1300
      %v1302 = vpop.f32.mrb[0].mxu0
      %v1303 = vpop.f32.mrb[0].mxu0
      %v1304 = vadd.f32 %v507, %v1303
      %v1305 = vpop.f32.mrb[0].mxu0
      %1306 = vmatprep.mubr.bf16.mxu0 0
      %1307 = vmatmul.mubr.bf16.gmra.mrb[0].mxu0 %v917
      %v1308 = vpop.f32.mrb[0].mxu0
      %v1309 = vadd.f32 %v507, %v1308
      %v1310 = vpop.f32.mrb[0].mxu0
      %v1311 = vpop.f32.mrb[0].mxu0
      %v1312 = vadd.f32 %v507, %v1311
      %v1313 = vpop.f32.mrb[0].mxu0
      %1314 = vmatprep.mubr.bf16.mxu0 0
      %1315 = vmatmul.mubr.bf16.gmra.mrb[0].mxu0 %v920
      %v1316 = vpop.f32.mrb[0].mxu0
      %v1317 = vadd.f32 %v507, %v1316
      %v1318 = vpop.f32.mrb[0].mxu0
      %v1319 = vpop.f32.mrb[0].mxu0
      %v1320 = vadd.f32 %v507, %v1319
      %v1321 = vpop.f32.mrb[0].mxu0
      %1322 = vmatprep.mubr.bf16.mxu0 0
      %1323 = vmatmul.mubr.bf16.gmra.mrb[0].mxu0 %v923
      %v1324 = vpop.f32.mrb[0].mxu0
      %v1325 = vadd.f32 %v507, %v1324
      %v1326 = vpop.f32.mrb[0].mxu0
      %v1327 = vpop.f32.mrb[0].mxu0
      %v1328 = vadd.f32 %v507, %v1327
      %v1329 = vpop.f32.mrb[0].mxu0
      %1330 = vmatprep.mubr.bf16.mxu0 0
      %1331 = vmatmul.mubr.bf16.gmra.mrb[0].mxu0 %v926
      %v1332 = vpop.f32.mrb[0].mxu0
      %v1333 = vadd.f32 %v507, %v1332
      %v1334 = vpop.f32.mrb[0].mxu0
      %v1335 = vpop.f32.mrb[0].mxu0
      %v1336 = vadd.f32 %v507, %v1335
      %v1337 = vpop.f32.mrb[0].mxu0
      %1338 = vmatprep.mubr.bf16.mxu0 0
      %1339 = vmatmul.mubr.bf16.gmra.mrb[0].mxu0 %v929
      %v1340 = vpop.f32.mrb[0].mxu0
      %v1341 = vadd.f32 %v507, %v1340
      %v1342 = vpop.f32.mrb[0].mxu0
      %v1343 = vpop.f32.mrb[0].mxu0
      %v1344 = vadd.f32 %v507, %v1343
      %v1345 = vpop.f32.mrb[0].mxu0
      %1346 = vmatprep.mubr.bf16.mxu0 0
      %1347 = vmatmul.mubr.bf16.gmra.mrb[0].mxu0 %v932
      %v1348 = vpop.f32.mrb[0].mxu0
      %v1349 = vadd.f32 %v507, %v1348
      %v1350 = vpop.f32.mrb[0].mxu0
      %v1351 = vpop.f32.mrb[0].mxu0
      %v1352 = vadd.f32 %v507, %v1351
      %v1353 = vpop.f32.mrb[0].mxu0
      %1354 = vmatprep.mubr.bf16.mxu0 0
      %1355 = vmatmul.mubr.bf16.gmra.mrb[0].mxu0 %v935
      %v1356 = vpop.f32.mrb[0].mxu0
      %v1357 = vadd.f32 %v507, %v1356
      %v1358 = vpop.f32.mrb[0].mxu0
      %v1359 = vpop.f32.mrb[0].mxu0
      %v1360 = vadd.f32 %v507, %v1359
      %v1361 = vpop.f32.mrb[0].mxu0
      %1362 = vmatprep.mubr.bf16.mxu0 0
      %1363 = vmatmul.mubr.bf16.gmra.mrb[0].mxu0 %v938
      %v1364 = vpop.f32.mrb[0].mxu0
      %v1365 = vadd.f32 %v507, %v1364
      %v1366 = vpop.f32.mrb[0].mxu0
      %v1367 = vpop.f32.mrb[0].mxu0
      %v1368 = vadd.f32 %v507, %v1367
      %v1369 = vpop.f32.mrb[0].mxu0
      %1370 = vmatprep.mubr.bf16.mxu0 0
      %1371 = vmatmul.mubr.bf16.gmra.mrb[0].mxu0 %v941
      %v1372 = vpop.f32.mrb[0].mxu0
      %v1373 = vadd.f32 %v507, %v1372
      %v1374 = vpop.f32.mrb[0].mxu0
      %v1375 = vpop.f32.mrb[0].mxu0
      %v1376 = vadd.f32 %v507, %v1375
      %v1377 = vpop.f32.mrb[0].mxu0
      %1378 = vmatprep.mubr.bf16.mxu0 0
      %1379 = vmatmul.mubr.bf16.gmra.mrb[0].mxu0 %v944
      %v1380 = vpop.f32.mrb[0].mxu0
      %v1381 = vadd.f32 %v507, %v1380
      %v1382 = vpop.f32.mrb[0].mxu0
      %v1383 = vpop.f32.mrb[0].mxu0
      %v1384 = vadd.f32 %v507, %v1383
      %v1385 = vpop.f32.mrb[0].mxu0
      %1386 = vmatprep.mubr.bf16.mxu0 0
      %1387 = vmatmul.mubr.bf16.gmra.mrb[0].mxu0 %v947
      %v1388 = vpop.f32.mrb[0].mxu0
      %v1389 = vadd.f32 %v507, %v1388
      %v1390 = vpop.f32.mrb[0].mxu0
      %v1391 = vpop.f32.mrb[0].mxu0
      %v1392 = vadd.f32 %v507, %v1391
      %v1393 = vpop.f32.mrb[0].mxu0
      %1394 = vmatprep.mubr.bf16.mxu0 0
      %1395 = vmatmul.mubr.bf16.gmra.mrb[0].mxu0 %v950
      %v1396 = vpop.f32.mrb[0].mxu0
      %v1397 = vadd.f32 %v507, %v1396
      %v1398 = vpop.f32.mrb[0].mxu0
      %v1399 = vpop.f32.mrb[0].mxu0
      %v1400 = vadd.f32 %v507, %v1399
      %v1401 = vpop.f32.mrb[0].mxu0
      %1402 = vmatprep.mubr.bf16.mxu0 0
      %1403 = vmatmul.mubr.bf16.gmra.mrb[0].mxu0 %v953
      %v1404 = vpop.f32.mrb[0].mxu0
      %v1405 = vadd.f32 %v507, %v1404
      %v1406 = vpop.f32.mrb[0].mxu0
      %v1407 = vpop.f32.mrb[0].mxu0
      %v1408 = vadd.f32 %v507, %v1407
      %v1409 = vpop.f32.mrb[0].mxu0
      %1410 = vmatprep.mubr.bf16.mxu0 0
      %1411 = vmatmul.mubr.bf16.gmra.mrb[0].mxu0 %v956
      %v1412 = vpop.f32.mrb[0].mxu0
      %v1413 = vadd.f32 %v507, %v1412
      %v1414 = vpop.f32.mrb[0].mxu0
      %v1415 = vpop.f32.mrb[0].mxu0
      %v1416 = vadd.f32 %v507, %v1415
      %v1417 = vpop.f32.mrb[0].mxu0
      %1418 = vmatprep.mubr.bf16.mxu0 0
      %1419 = vmatmul.mubr.bf16.gmra.mrb[0].mxu0 %v959
      %v1420 = vpop.f32.mrb[0].mxu0
      %v1421 = vadd.f32 %v507, %v1420
      %v1422 = vpop.f32.mrb[0].mxu0
      %v1423 = vpop.f32.mrb[0].mxu0
      %v1424 = vadd.f32 %v507, %v1423
      %v1425 = vpop.f32.mrb[0].mxu0
      %1426 = vmatprep.mubr.bf16.mxu0 0
      %1427 = vmatmul.mubr.bf16.gmra.mrb[0].mxu0 %v962
      %v1428 = vpop.f32.mrb[0].mxu0
      %v1429 = vadd.f32 %v507, %v1428
      %v1430 = vpop.f32.mrb[0].mxu0
      %v1431 = vpop.f32.mrb[0].mxu0
      %v1432 = vadd.f32 %v507, %v1431
      %v1433 = vpop.f32.mrb[0].mxu0
      %1434 = vmatprep.mubr.bf16.mxu0 0
      %1435 = vmatmul.mubr.bf16.gmra.mrb[0].mxu0 %v965
      %v1436 = vpop.f32.mrb[0].mxu0
      %v1437 = vadd.f32 %v507, %v1436
      %v1438 = vpop.f32.mrb[0].mxu0
      %v1439 = vpop.f32.mrb[0].mxu0
      %v1440 = vadd.f32 %v507, %v1439
      %v1441 = vpop.f32.mrb[0].mxu0
      %1442 = vmatprep.mubr.bf16.mxu0 0
      %1443 = vmatmul.mubr.bf16.gmra.mrb[0].mxu0 %v968
      %v1444 = vpop.f32.mrb[0].mxu0
      %v1445 = vadd.f32 %v507, %v1444
      %v1446 = vpop.f32.mrb[0].mxu0
      %v1447 = vpop.f32.mrb[0].mxu0
      %v1448 = vadd.f32 %v507, %v1447
      %v1449 = vpop.f32.mrb[0].mxu0
      %1450 = vdwg.mxu0
      %v1451 = vmax.f32 %v1005, 0.0
      %v1452 = vmax.f32 %v1008, 0.0
      %v1453 = vmax.f32 %v1013, 0.0
      %v1454 = vmax.f32 %v1016, 0.0
      %v1455 = vmax.f32 %v1021, 0.0
      %v1456 = vmax.f32 %v1024, 0.0
      %v1457 = vmax.f32 %v1029, 0.0
      %v1458 = vmax.f32 %v1032, 0.0
      %v1459 = vmax.f32 %v1037, 0.0
      %v1460 = vmax.f32 %v1040, 0.0
      %v1461 = vmax.f32 %v1045, 0.0
      %v1462 = vmax.f32 %v1048, 0.0
      %v1463 = vmax.f32 %v1053, 0.0
      %v1464 = vmax.f32 %v1056, 0.0
      %v1465 = vmax.f32 %v1061, 0.0
      %v1466 = vmax.f32 %v1064, 0.0
      %v1467 = vmax.f32 %v1069, 0.0
      %v1468 = vmax.f32 %v1072, 0.0
      %v1469 = vmax.f32 %v1077, 0.0
      %v1470 = vmax.f32 %v1080, 0.0
      %v1471 = vmax.f32 %v1085, 0.0
      %v1472 = vmax.f32 %v1088, 0.0
      %v1473 = vmax.f32 %v1093, 0.0
      %v1474 = vmax.f32 %v1096, 0.0
      %v1475 = vmax.f32 %v1101, 0.0
      %v1476 = vmax.f32 %v1104, 0.0
      %v1477 = vmax.f32 %v1109, 0.0
      %v1478 = vmax.f32 %v1112, 0.0
      %v1479 = vmax.f32 %v1117, 0.0
      %v1480 = vmax.f32 %v1120, 0.0
      %v1481 = vmax.f32 %v1125, 0.0
      %v1482 = vmax.f32 %v1128, 0.0
      %v1483 = vmax.f32 %v1133, 0.0
      %v1484 = vmax.f32 %v1136, 0.0
      %v1485 = vmax.f32 %v1141, 0.0
      %v1486 = vmax.f32 %v1144, 0.0
      %v1487 = vmax.f32 %v1149, 0.0
      %v1488 = vmax.f32 %v1152, 0.0
      %v1489 = vmax.f32 %v1157, 0.0
      %v1490 = vmax.f32 %v1160, 0.0
      %v1491 = vmax.f32 %v1165, 0.0
      %v1492 = vmax.f32 %v1168, 0.0
      %v1493 = vmax.f32 %v1173, 0.0
      %v1494 = vmax.f32 %v1176, 0.0
      %v1495 = vmax.f32 %v1181, 0.0
      %v1496 = vmax.f32 %v1184, 0.0
      %v1497 = vmax.f32 %v1189, 0.0
      %v1498 = vmax.f32 %v1192, 0.0
      %v1499 = vmax.f32 %v1197, 0.0
      %v1500 = vmax.f32 %v1200, 0.0
      %v1501 = vmax.f32 %v1205, 0.0
      %v1502 = vmax.f32 %v1208, 0.0
      %v1503 = vmax.f32 %v1213, 0.0
      %v1504 = vmax.f32 %v1216, 0.0
      %v1505 = vmax.f32 %v1221, 0.0
      %v1506 = vmax.f32 %v1224, 0.0
      %v1507 = vmax.f32 %v1229, 0.0
      %v1508 = vmax.f32 %v1232, 0.0
      %v1509 = vmax.f32 %v1237, 0.0
      %v1510 = vmax.f32 %v1240, 0.0
      %v1511 = vmax.f32 %v1245, 0.0
      %v1512 = vmax.f32 %v1248, 0.0
      %v1513 = vmax.f32 %v1253, 0.0
      %v1514 = vmax.f32 %v1256, 0.0
      %v1515 = vmax.f32 %v1261, 0.0
      %v1516 = vmax.f32 %v1264, 0.0
      %v1517 = vmax.f32 %v1269, 0.0
      %v1518 = vmax.f32 %v1272, 0.0
      %v1519 = vmax.f32 %v1277, 0.0
      %v1520 = vmax.f32 %v1280, 0.0
      %v1521 = vmax.f32 %v1285, 0.0
      %v1522 = vmax.f32 %v1288, 0.0
      %v1523 = vmax.f32 %v1293, 0.0
      %v1524 = vmax.f32 %v1296, 0.0
      %v1525 = vmax.f32 %v1301, 0.0
      %v1526 = vmax.f32 %v1304, 0.0
      %v1527 = vmax.f32 %v1309, 0.0
      %v1528 = vmax.f32 %v1312, 0.0
      %v1529 = vmax.f32 %v1317, 0.0
      %v1530 = vmax.f32 %v1320, 0.0
      %v1531 = vmax.f32 %v1325, 0.0
      %v1532 = vmax.f32 %v1328, 0.0
      %v1533 = vmax.f32 %v1333, 0.0
      %v1534 = vmax.f32 %v1336, 0.0
      %v1535 = vmax.f32 %v1341, 0.0
      %v1536 = vmax.f32 %v1344, 0.0
      %v1537 = vmax.f32 %v1349, 0.0
      %v1538 = vmax.f32 %v1352, 0.0
      %v1539 = vmax.f32 %v1357, 0.0
      %v1540 = vmax.f32 %v1360, 0.0
      %v1541 = vmax.f32 %v1365, 0.0
      %v1542 = vmax.f32 %v1368, 0.0
      %v1543 = vmax.f32 %v1373, 0.0
      %v1544 = vmax.f32 %v1376, 0.0
      %v1545 = vmax.f32 %v1381, 0.0
      %v1546 = vmax.f32 %v1384, 0.0
      %v1547 = vmax.f32 %v1389, 0.0
      %v1548 = vmax.f32 %v1392, 0.0
      %v1549 = vmax.f32 %v1397, 0.0
      %v1550 = vmax.f32 %v1400, 0.0
      %v1551 = vmax.f32 %v1405, 0.0
      %v1552 = vmax.f32 %v1408, 0.0
      %v1553 = vmax.f32 %v1413, 0.0
      %v1554 = vmax.f32 %v1416, 0.0
      %v1555 = vmax.f32 %v1421, 0.0
      %v1556 = vmax.f32 %v1424, 0.0
      %v1557 = vmax.f32 %v1429, 0.0
      %v1558 = vmax.f32 %v1432, 0.0
      %v1559 = vmax.f32 %v1437, 0.0
      %v1560 = vmax.f32 %v1440, 0.0
      %v1561 = vmax.f32 %v1445, 0.0
      %v1562 = vmax.f32 %v1448, 0.0
      %1563 = vst.msk [vmem:[#allocation2] sm:$0xff] %vm801, %v1451
      %1564 = vst.msk [vmem:[#allocation2 + $0x8] sm:$0xff] %vm801, %v1452
      %1565 = vst.msk [vmem:[#allocation2 + $0x10] sm:$0xff] %vm801, %v1453
      %1566 = vst.msk [vmem:[#allocation2 + $0x18] sm:$0xff] %vm801, %v1454
      %1567 = vst.msk [vmem:[#allocation2 + $0x20] sm:$0xff] %vm801, %v1455
      %1568 = vst.msk [vmem:[#allocation2 + $0x28] sm:$0xff] %vm801, %v1456
      %1569 = vst.msk [vmem:[#allocation2 + $0x30] sm:$0xff] %vm801, %v1457
      %1570 = vst.msk [vmem:[#allocation2 + $0x38] sm:$0xff] %vm801, %v1458
      %1571 = vst.msk [vmem:[#allocation2 + $0x40] sm:$0xff] %vm801, %v1459
      %1572 = vst.msk [vmem:[#allocation2 + $0x48] sm:$0xff] %vm801, %v1460
      %1573 = vst.msk [vmem:[#allocation2 + $0x50] sm:$0xff] %vm801, %v1461
      %1574 = vst.msk [vmem:[#allocation2 + $0x58] sm:$0xff] %vm801, %v1462
      %1575 = vst.msk [vmem:[#allocation2 + $0x60] sm:$0xff] %vm801, %v1463
      %1576 = vst.msk [vmem:[#allocation2 + $0x68] sm:$0xff] %vm801, %v1464
      %1577 = vst.msk [vmem:[#allocation2 + $0x70] sm:$0xff] %vm801, %v1465
      %1578 = vst.msk [vmem:[#allocation2 + $0x78] sm:$0xff] %vm801, %v1466
      %1579 = vst.msk [vmem:[#allocation2 + $0x80] sm:$0xff] %vm801, %v1467
      %1580 = vst.msk [vmem:[#allocation2 + $0x88] sm:$0xff] %vm801, %v1468
      %1581 = vst.msk [vmem:[#allocation2 + $0x90] sm:$0xff] %vm801, %v1469
      %1582 = vst.msk [vmem:[#allocation2 + $0x98] sm:$0xff] %vm801, %v1470
      %1583 = vst.msk [vmem:[#allocation2 + $0xa0] sm:$0xff] %vm801, %v1471
      %1584 = vst.msk [vmem:[#allocation2 + $0xa8] sm:$0xff] %vm801, %v1472
      %1585 = vst.msk [vmem:[#allocation2 + $0xb0] sm:$0xff] %vm801, %v1473
      %1586 = vst.msk [vmem:[#allocation2 + $0xb8] sm:$0xff] %vm801, %v1474
      %1587 = vst.msk [vmem:[#allocation2 + $0xc0] sm:$0xff] %vm801, %v1475
      %1588 = vst.msk [vmem:[#allocation2 + $0xc8] sm:$0xff] %vm801, %v1476
      %1589 = vst.msk [vmem:[#allocation2 + $0xd0] sm:$0xff] %vm801, %v1477
      %1590 = vst.msk [vmem:[#allocation2 + $0xd8] sm:$0xff] %vm801, %v1478
      %1591 = vst.msk [vmem:[#allocation2 + $0xe0] sm:$0xff] %vm801, %v1479
      %1592 = vst.msk [vmem:[#allocation2 + $0xe8] sm:$0xff] %vm801, %v1480
      %1593 = vst.msk [vmem:[#allocation2 + $0xf0] sm:$0xff] %vm801, %v1481
      %1594 = vst.msk [vmem:[#allocation2 + $0xf8] sm:$0xff] %vm801, %v1482
      %1595 = vst.msk [vmem:[#allocation2 + $0x100] sm:$0xff] %vm801, %v1483
      %1596 = vst.msk [vmem:[#allocation2 + $0x108] sm:$0xff] %vm801, %v1484
      %1597 = vst.msk [vmem:[#allocation2 + $0x110] sm:$0xff] %vm801, %v1485
      %1598 = vst.msk [vmem:[#allocation2 + $0x118] sm:$0xff] %vm801, %v1486
      %1599 = vst.msk [vmem:[#allocation2 + $0x120] sm:$0xff] %vm801, %v1487
      %1600 = vst.msk [vmem:[#allocation2 + $0x128] sm:$0xff] %vm801, %v1488
      %1601 = vst.msk [vmem:[#allocation2 + $0x130] sm:$0xff] %vm801, %v1489
      %1602 = vst.msk [vmem:[#allocation2 + $0x138] sm:$0xff] %vm801, %v1490
      %1603 = vst.msk [vmem:[#allocation2 + $0x140] sm:$0xff] %vm801, %v1491
      %1604 = vst.msk [vmem:[#allocation2 + $0x148] sm:$0xff] %vm801, %v1492
      %1605 = vst.msk [vmem:[#allocation2 + $0x150] sm:$0xff] %vm801, %v1493
      %1606 = vst.msk [vmem:[#allocation2 + $0x158] sm:$0xff] %vm801, %v1494
      %1607 = vst.msk [vmem:[#allocation2 + $0x160] sm:$0xff] %vm801, %v1495
      %1608 = vst.msk [vmem:[#allocation2 + $0x168] sm:$0xff] %vm801, %v1496
      %1609 = vst.msk [vmem:[#allocation2 + $0x170] sm:$0xff] %vm801, %v1497
      %1610 = vst.msk [vmem:[#allocation2 + $0x178] sm:$0xff] %vm801, %v1498
      %1611 = vst.msk [vmem:[#allocation2 + $0x180] sm:$0xff] %vm801, %v1499
      %1612 = vst.msk [vmem:[#allocation2 + $0x188] sm:$0xff] %vm801, %v1500
      %1613 = vst.msk [vmem:[#allocation2 + $0x190] sm:$0xff] %vm801, %v1501
      %1614 = vst.msk [vmem:[#allocation2 + $0x198] sm:$0xff] %vm801, %v1502
      %1615 = vst.msk [vmem:[#allocation2 + $0x1a0] sm:$0xff] %vm801, %v1503
      %1616 = vst.msk [vmem:[#allocation2 + $0x1a8] sm:$0xff] %vm801, %v1504
      %1617 = vst.msk [vmem:[#allocation2 + $0x1b0] sm:$0xff] %vm801, %v1505
      %1618 = vst.msk [vmem:[#allocation2 + $0x1b8] sm:$0xff] %vm801, %v1506
      %1619 = vst.msk [vmem:[#allocation2 + $0x1c0] sm:$0xff] %vm801, %v1507
      %1620 = vst.msk [vmem:[#allocation2 + $0x1c8] sm:$0xff] %vm801, %v1508
      %1621 = vst.msk [vmem:[#allocation2 + $0x1d0] sm:$0xff] %vm801, %v1509
      %1622 = vst.msk [vmem:[#allocation2 + $0x1d8] sm:$0xff] %vm801, %v1510
      %1623 = vst.msk [vmem:[#allocation2 + $0x1e0] sm:$0xff] %vm801, %v1511
      %1624 = vst.msk [vmem:[#allocation2 + $0x1e8] sm:$0xff] %vm801, %v1512
      %1625 = vst.msk [vmem:[#allocation2 + $0x1f0] sm:$0xff] %vm801, %v1513
      %1626 = vst.msk [vmem:[#allocation2 + $0x1f8] sm:$0xff] %vm801, %v1514
      %1627 = vst.msk [vmem:[#allocation2 + $0x200] sm:$0xff] %vm801, %v1515
      %1628 = vst.msk [vmem:[#allocation2 + $0x208] sm:$0xff] %vm801, %v1516
      %1629 = vst.msk [vmem:[#allocation2 + $0x210] sm:$0xff] %vm801, %v1517
      %1630 = vst.msk [vmem:[#allocation2 + $0x218] sm:$0xff] %vm801, %v1518
      %1631 = vst.msk [vmem:[#allocation2 + $0x220] sm:$0xff] %vm801, %v1519
      %1632 = vst.msk [vmem:[#allocation2 + $0x228] sm:$0xff] %vm801, %v1520
      %1633 = vst.msk [vmem:[#allocation2 + $0x230] sm:$0xff] %vm801, %v1521
      %1634 = vst.msk [vmem:[#allocation2 + $0x238] sm:$0xff] %vm801, %v1522
      %1635 = vst.msk [vmem:[#allocation2 + $0x240] sm:$0xff] %vm801, %v1523
      %1636 = vst.msk [vmem:[#allocation2 + $0x248] sm:$0xff] %vm801, %v1524
      %1637 = vst.msk [vmem:[#allocation2 + $0x250] sm:$0xff] %vm801, %v1525
      %1638 = vst.msk [vmem:[#allocation2 + $0x258] sm:$0xff] %vm801, %v1526
      %1639 = vst.msk [vmem:[#allocation2 + $0x260] sm:$0xff] %vm801, %v1527
      %1640 = vst.msk [vmem:[#allocation2 + $0x268] sm:$0xff] %vm801, %v1528
      %1641 = vst.msk [vmem:[#allocation2 + $0x270] sm:$0xff] %vm801, %v1529
      %1642 = vst.msk [vmem:[#allocation2 + $0x278] sm:$0xff] %vm801, %v1530
      %1643 = vst.msk [vmem:[#allocation2 + $0x280] sm:$0xff] %vm801, %v1531
      %1644 = vst.msk [vmem:[#allocation2 + $0x288] sm:$0xff] %vm801, %v1532
      %1645 = vst.msk [vmem:[#allocation2 + $0x290] sm:$0xff] %vm801, %v1533
      %1646 = vst.msk [vmem:[#allocation2 + $0x298] sm:$0xff] %vm801, %v1534
      %1647 = vst.msk [vmem:[#allocation2 + $0x2a0] sm:$0xff] %vm801, %v1535
      %1648 = vst.msk [vmem:[#allocation2 + $0x2a8] sm:$0xff] %vm801, %v1536
      %1649 = vst.msk [vmem:[#allocation2 + $0x2b0] sm:$0xff] %vm801, %v1537
      %1650 = vst.msk [vmem:[#allocation2 + $0x2b8] sm:$0xff] %vm801, %v1538
      %1651 = vst.msk [vmem:[#allocation2 + $0x2c0] sm:$0xff] %vm801, %v1539
      %1652 = vst.msk [vmem:[#allocation2 + $0x2c8] sm:$0xff] %vm801, %v1540
      %1653 = vst.msk [vmem:[#allocation2 + $0x2d0] sm:$0xff] %vm801, %v1541
      %1654 = vst.msk [vmem:[#allocation2 + $0x2d8] sm:$0xff] %vm801, %v1542
      %1655 = vst.msk [vmem:[#allocation2 + $0x2e0] sm:$0xff] %vm801, %v1543
      %1656 = vst.msk [vmem:[#allocation2 + $0x2e8] sm:$0xff] %vm801, %v1544
      %1657 = vst.msk [vmem:[#allocation2 + $0x2f0] sm:$0xff] %vm801, %v1545
      %1658 = vst.msk [vmem:[#allocation2 + $0x2f8] sm:$0xff] %vm801, %v1546
      %1659 = vst.msk [vmem:[#allocation2 + $0x300] sm:$0xff] %vm801, %v1547
      %1660 = vst.msk [vmem:[#allocation2 + $0x308] sm:$0xff] %vm801, %v1548
      %1661 = vst.msk [vmem:[#allocation2 + $0x310] sm:$0xff] %vm801, %v1549
      %1662 = vst.msk [vmem:[#allocation2 + $0x318] sm:$0xff] %vm801, %v1550
      %1663 = vst.msk [vmem:[#allocation2 + $0x320] sm:$0xff] %vm801, %v1551
      %1664 = vst.msk [vmem:[#allocation2 + $0x328] sm:$0xff] %vm801, %v1552
      %1665 = vst.msk [vmem:[#allocation2 + $0x330] sm:$0xff] %vm801, %v1553
      %1666 = vst.msk [vmem:[#allocation2 + $0x338] sm:$0xff] %vm801, %v1554
      %1667 = vst.msk [vmem:[#allocation2 + $0x340] sm:$0xff] %vm801, %v1555
      %1668 = vst.msk [vmem:[#allocation2 + $0x348] sm:$0xff] %vm801, %v1556
      %1669 = vst.msk [vmem:[#allocation2 + $0x350] sm:$0xff] %vm801, %v1557
      %1670 = vst.msk [vmem:[#allocation2 + $0x358] sm:$0xff] %vm801, %v1558
      %1671 = vst.msk [vmem:[#allocation2 + $0x360] sm:$0xff] %vm801, %v1559
      %1672 = vst.msk [vmem:[#allocation2 + $0x368] sm:$0xff] %vm801, %v1560
      %1673 = vst.msk [vmem:[#allocation2 + $0x370] sm:$0xff] %vm801, %v1561
      %1674 = vst.msk [vmem:[#allocation2 + $0x378] sm:$0xff] %vm801, %v1562
      %1675 = vst.msk [vmem:[#allocation3 + $0x70] sm:$0xff] %vm801, 0
      %v1676 = vld [vmem:[#allocation2] ss:$2 sm:$0xff]
      %s1677 = scalar_lea.vmem [#allocation2], 16
      %v1678 = vld [vmem:[%s1677] ss:$2 sm:$0xff]
      %s1679 = scalar_lea.vmem [#allocation2], 32
      %v1680 = vld [vmem:[%s1679] ss:$2 sm:$0xff]
      %s1681 = scalar_lea.vmem [#allocation2], 48
      %v1682 = vld [vmem:[%s1681] ss:$2 sm:$0xff]
      %s1683 = scalar_lea.vmem [#allocation2], 1
      %v1684 = vld [vmem:[%s1683] ss:$2 sm:$0xff]
      %s1685 = scalar_lea.vmem [#allocation2], 17
      %v1686 = vld [vmem:[%s1685] ss:$2 sm:$0xff]
      %s1687 = scalar_lea.vmem [#allocation2], 33
      %v1688 = vld [vmem:[%s1687] ss:$2 sm:$0xff]
      %s1689 = scalar_lea.vmem [#allocation2], 49
      %v1690 = vld [vmem:[%s1689] ss:$2 sm:$0xff]
      %v1691 = vmax.f32 %v1676, %v1684
      %v1692 = vmax.f32 %v1678, %v1686
      %v1693 = vmax.f32 %v1680, %v1688
      %v1694 = vmax.f32 %v1682, %v1690
      %v1695 = vmax.f32 %v1691, %v1693
      %v1696 = vmax.f32 %v1692, %v1694
      %v1697 = vpack.c.bf16 %v1696, %v1695
      %1698 = vst.msk [vmem:[#allocation3] sm:$0xff] %vm801, %v1697
      %s1699 = scalar_lea.vmem [#allocation2], 64
      %v1700 = vld [vmem:[%s1699] ss:$2 sm:$0xff]
      %s1701 = scalar_lea.vmem [#allocation2], 80
      %v1702 = vld [vmem:[%s1701] ss:$2 sm:$0xff]
      %s1703 = scalar_lea.vmem [#allocation2], 96
      %v1704 = vld [vmem:[%s1703] ss:$2 sm:$0xff]
      %s1705 = scalar_lea.vmem [#allocation2], 112
      %v1706 = vld [vmem:[%s1705] ss:$2 sm:$0xff]
      %s1707 = scalar_lea.vmem [#allocation2], 65
      %v1708 = vld [vmem:[%s1707] ss:$2 sm:$0xff]
      %s1709 = scalar_lea.vmem [#allocation2], 81
      %v1710 = vld [vmem:[%s1709] ss:$2 sm:$0xff]
      %s1711 = scalar_lea.vmem [#allocation2], 97
      %v1712 = vld [vmem:[%s1711] ss:$2 sm:$0xff]
      %s1713 = scalar_lea.vmem [#allocation2], 113
      %v1714 = vld [vmem:[%s1713] ss:$2 sm:$0xff]
      %v1715 = vmax.f32 %v1700, %v1708
      %v1716 = vmax.f32 %v1702, %v1710
      %v1717 = vmax.f32 %v1704, %v1712
      %v1718 = vmax.f32 %v1706, %v1714
      %v1719 = vmax.f32 %v1715, %v1717
      %v1720 = vmax.f32 %v1716, %v1718
      %v1721 = vpack.c.bf16 %v1720, %v1719
      %1722 = vst.msk [vmem:[#allocation3 + $0x8] sm:$0xff] %vm801, %v1721
      %s1723 = scalar_lea.vmem [#allocation2], 128
      %v1724 = vld [vmem:[%s1723] ss:$2 sm:$0xff]
      %s1725 = scalar_lea.vmem [#allocation2], 144
      %v1726 = vld [vmem:[%s1725] ss:$2 sm:$0xff]
      %s1727 = scalar_lea.vmem [#allocation2], 160
      %v1728 = vld [vmem:[%s1727] ss:$2 sm:$0xff]
      %s1729 = scalar_lea.vmem [#allocation2], 176
      %v1730 = vld [vmem:[%s1729] ss:$2 sm:$0xff]
      %s1731 = scalar_lea.vmem [#allocation2], 129
      %v1732 = vld [vmem:[%s1731] ss:$2 sm:$0xff]
      %s1733 = scalar_lea.vmem [#allocation2], 145
      %v1734 = vld [vmem:[%s1733] ss:$2 sm:$0xff]
      %s1735 = scalar_lea.vmem [#allocation2], 161
      %v1736 = vld [vmem:[%s1735] ss:$2 sm:$0xff]
      %s1737 = scalar_lea.vmem [#allocation2], 177
      %v1738 = vld [vmem:[%s1737] ss:$2 sm:$0xff]
      %v1739 = vmax.f32 %v1724, %v1732
      %v1740 = vmax.f32 %v1726, %v1734
      %v1741 = vmax.f32 %v1728, %v1736
      %v1742 = vmax.f32 %v1730, %v1738
      %v1743 = vmax.f32 %v1739, %v1741
      %v1744 = vmax.f32 %v1740, %v1742
      %v1745 = vpack.c.bf16 %v1744, %v1743
      %1746 = vst.msk [vmem:[#allocation3 + $0x10] sm:$0xff] %vm801, %v1745
      %s1747 = scalar_lea.vmem [#allocation2], 192
      %v1748 = vld [vmem:[%s1747] ss:$2 sm:$0xff]
      %s1749 = scalar_lea.vmem [#allocation2], 208
      %v1750 = vld [vmem:[%s1749] ss:$2 sm:$0xff]
      %s1751 = scalar_lea.vmem [#allocation2], 224
      %v1752 = vld [vmem:[%s1751] ss:$2 sm:$0xff]
      %s1753 = scalar_lea.vmem [#allocation2], 240
      %v1754 = vld [vmem:[%s1753] ss:$2 sm:$0xff]
      %s1755 = scalar_lea.vmem [#allocation2], 193
      %v1756 = vld [vmem:[%s1755] ss:$2 sm:$0xff]
      %s1757 = scalar_lea.vmem [#allocation2], 209
      %v1758 = vld [vmem:[%s1757] ss:$2 sm:$0xff]
      %s1759 = scalar_lea.vmem [#allocation2], 225
      %v1760 = vld [vmem:[%s1759] ss:$2 sm:$0xff]
      %s1761 = scalar_lea.vmem [#allocation2], 241
      %v1762 = vld [vmem:[%s1761] ss:$2 sm:$0xff]
      %v1763 = vmax.f32 %v1748, %v1756
      %v1764 = vmax.f32 %v1750, %v1758
      %v1765 = vmax.f32 %v1752, %v1760
      %v1766 = vmax.f32 %v1754, %v1762
      %v1767 = vmax.f32 %v1763, %v1765
      %v1768 = vmax.f32 %v1764, %v1766
      %v1769 = vpack.c.bf16 %v1768, %v1767
      %1770 = vst.msk [vmem:[#allocation3 + $0x18] sm:$0xff] %vm801, %v1769
      %s1771 = scalar_lea.vmem [#allocation2], 256
      %v1772 = vld [vmem:[%s1771] ss:$2 sm:$0xff]
      %s1773 = scalar_lea.vmem [#allocation2], 272
      %v1774 = vld [vmem:[%s1773] ss:$2 sm:$0xff]
      %s1775 = scalar_lea.vmem [#allocation2], 288
      %v1776 = vld [vmem:[%s1775] ss:$2 sm:$0xff]
      %s1777 = scalar_lea.vmem [#allocation2], 304
      %v1778 = vld [vmem:[%s1777] ss:$2 sm:$0xff]
      %s1779 = scalar_lea.vmem [#allocation2], 257
      %v1780 = vld [vmem:[%s1779] ss:$2 sm:$0xff]
      %s1781 = scalar_lea.vmem [#allocation2], 273
      %v1782 = vld [vmem:[%s1781] ss:$2 sm:$0xff]
      %s1783 = scalar_lea.vmem [#allocation2], 289
      %v1784 = vld [vmem:[%s1783] ss:$2 sm:$0xff]
      %s1785 = scalar_lea.vmem [#allocation2], 305
      %v1786 = vld [vmem:[%s1785] ss:$2 sm:$0xff]
      %v1787 = vmax.f32 %v1772, %v1780
      %v1788 = vmax.f32 %v1774, %v1782
      %v1789 = vmax.f32 %v1776, %v1784
      %v1790 = vmax.f32 %v1778, %v1786
      %v1791 = vmax.f32 %v1787, %v1789
      %v1792 = vmax.f32 %v1788, %v1790
      %v1793 = vpack.c.bf16 %v1792, %v1791
      %1794 = vst.msk [vmem:[#allocation3 + $0x20] sm:$0xff] %vm801, %v1793
      %s1795 = scalar_lea.vmem [#allocation2], 320
      %v1796 = vld [vmem:[%s1795] ss:$2 sm:$0xff]
      %s1797 = scalar_lea.vmem [#allocation2], 336
      %v1798 = vld [vmem:[%s1797] ss:$2 sm:$0xff]
      %s1799 = scalar_lea.vmem [#allocation2], 352
      %v1800 = vld [vmem:[%s1799] ss:$2 sm:$0xff]
      %s1801 = scalar_lea.vmem [#allocation2], 368
      %v1802 = vld [vmem:[%s1801] ss:$2 sm:$0xff]
      %s1803 = scalar_lea.vmem [#allocation2], 321
      %v1804 = vld [vmem:[%s1803] ss:$2 sm:$0xff]
      %s1805 = scalar_lea.vmem [#allocation2], 337
      %v1806 = vld [vmem:[%s1805] ss:$2 sm:$0xff]
      %s1807 = scalar_lea.vmem [#allocation2], 353
      %v1808 = vld [vmem:[%s1807] ss:$2 sm:$0xff]
      %s1809 = scalar_lea.vmem [#allocation2], 369
      %v1810 = vld [vmem:[%s1809] ss:$2 sm:$0xff]
      %v1811 = vmax.f32 %v1796, %v1804
      %v1812 = vmax.f32 %v1798, %v1806
      %v1813 = vmax.f32 %v1800, %v1808
      %v1814 = vmax.f32 %v1802, %v1810
      %v1815 = vmax.f32 %v1811, %v1813
      %v1816 = vmax.f32 %v1812, %v1814
      %v1817 = vpack.c.bf16 %v1816, %v1815
      %1818 = vst.msk [vmem:[#allocation3 + $0x28] sm:$0xff] %vm801, %v1817
      %s1819 = scalar_lea.vmem [#allocation2], 384
      %v1820 = vld [vmem:[%s1819] ss:$2 sm:$0xff]
      %s1821 = scalar_lea.vmem [#allocation2], 400
      %v1822 = vld [vmem:[%s1821] ss:$2 sm:$0xff]
      %s1823 = scalar_lea.vmem [#allocation2], 416
      %v1824 = vld [vmem:[%s1823] ss:$2 sm:$0xff]
      %s1825 = scalar_lea.vmem [#allocation2], 432
      %v1826 = vld [vmem:[%s1825] ss:$2 sm:$0xff]
      %s1827 = scalar_lea.vmem [#allocation2], 385
      %v1828 = vld [vmem:[%s1827] ss:$2 sm:$0xff]
      %s1829 = scalar_lea.vmem [#allocation2], 401
      %v1830 = vld [vmem:[%s1829] ss:$2 sm:$0xff]
      %s1831 = scalar_lea.vmem [#allocation2], 417
      %v1832 = vld [vmem:[%s1831] ss:$2 sm:$0xff]
      %s1833 = scalar_lea.vmem [#allocation2], 433
      %v1834 = vld [vmem:[%s1833] ss:$2 sm:$0xff]
      %v1835 = vmax.f32 %v1820, %v1828
      %v1836 = vmax.f32 %v1822, %v1830
      %v1837 = vmax.f32 %v1824, %v1832
      %v1838 = vmax.f32 %v1826, %v1834
      %v1839 = vmax.f32 %v1835, %v1837
      %v1840 = vmax.f32 %v1836, %v1838
      %v1841 = vpack.c.bf16 %v1840, %v1839
      %1842 = vst.msk [vmem:[#allocation3 + $0x30] sm:$0xff] %vm801, %v1841
      %s1843 = scalar_lea.vmem [#allocation2], 448
      %v1844 = vld [vmem:[%s1843] ss:$2 sm:$0xff]
      %s1845 = scalar_lea.vmem [#allocation2], 464
      %v1846 = vld [vmem:[%s1845] ss:$2 sm:$0xff]
      %s1847 = scalar_lea.vmem [#allocation2], 480
      %v1848 = vld [vmem:[%s1847] ss:$2 sm:$0xff]
      %s1849 = scalar_lea.vmem [#allocation2], 496
      %v1850 = vld [vmem:[%s1849] ss:$2 sm:$0xff]
      %s1851 = scalar_lea.vmem [#allocation2], 449
      %v1852 = vld [vmem:[%s1851] ss:$2 sm:$0xff]
      %s1853 = scalar_lea.vmem [#allocation2], 465
      %v1854 = vld [vmem:[%s1853] ss:$2 sm:$0xff]
      %s1855 = scalar_lea.vmem [#allocation2], 481
      %v1856 = vld [vmem:[%s1855] ss:$2 sm:$0xff]
      %s1857 = scalar_lea.vmem [#allocation2], 497
      %v1858 = vld [vmem:[%s1857] ss:$2 sm:$0xff]
      %v1859 = vmax.f32 %v1844, %v1852
      %v1860 = vmax.f32 %v1846, %v1854
      %v1861 = vmax.f32 %v1848, %v1856
      %v1862 = vmax.f32 %v1850, %v1858
      %v1863 = vmax.f32 %v1859, %v1861
      %v1864 = vmax.f32 %v1860, %v1862
      %v1865 = vpack.c.bf16 %v1864, %v1863
      %1866 = vst.msk [vmem:[#allocation3 + $0x38] sm:$0xff] %vm801, %v1865
      %s1867 = scalar_lea.vmem [#allocation2], 512
      %v1868 = vld [vmem:[%s1867] ss:$2 sm:$0xff]
      %s1869 = scalar_lea.vmem [#allocation2], 528
      %v1870 = vld [vmem:[%s1869] ss:$2 sm:$0xff]
      %s1871 = scalar_lea.vmem [#allocation2], 544
      %v1872 = vld [vmem:[%s1871] ss:$2 sm:$0xff]
      %s1873 = scalar_lea.vmem [#allocation2], 560
      %v1874 = vld [vmem:[%s1873] ss:$2 sm:$0xff]
      %s1875 = scalar_lea.vmem [#allocation2], 513
      %v1876 = vld [vmem:[%s1875] ss:$2 sm:$0xff]
      %s1877 = scalar_lea.vmem [#allocation2], 529
      %v1878 = vld [vmem:[%s1877] ss:$2 sm:$0xff]
      %s1879 = scalar_lea.vmem [#allocation2], 545
      %v1880 = vld [vmem:[%s1879] ss:$2 sm:$0xff]
      %s1881 = scalar_lea.vmem [#allocation2], 561
      %v1882 = vld [vmem:[%s1881] ss:$2 sm:$0xff]
      %v1883 = vmax.f32 %v1868, %v1876
      %v1884 = vmax.f32 %v1870, %v1878
      %v1885 = vmax.f32 %v1872, %v1880
      %v1886 = vmax.f32 %v1874, %v1882
      %v1887 = vmax.f32 %v1883, %v1885
      %v1888 = vmax.f32 %v1884, %v1886
      %v1889 = vpack.c.bf16 %v1888, %v1887
      %1890 = vst.msk [vmem:[#allocation3 + $0x40] sm:$0xff] %vm801, %v1889
      %s1891 = scalar_lea.vmem [#allocation2], 576
      %v1892 = vld [vmem:[%s1891] ss:$2 sm:$0xff]
      %s1893 = scalar_lea.vmem [#allocation2], 592
      %v1894 = vld [vmem:[%s1893] ss:$2 sm:$0xff]
      %s1895 = scalar_lea.vmem [#allocation2], 608
      %v1896 = vld [vmem:[%s1895] ss:$2 sm:$0xff]
      %s1897 = scalar_lea.vmem [#allocation2], 624
      %v1898 = vld [vmem:[%s1897] ss:$2 sm:$0xff]
      %s1899 = scalar_lea.vmem [#allocation2], 577
      %v1900 = vld [vmem:[%s1899] ss:$2 sm:$0xff]
      %s1901 = scalar_lea.vmem [#allocation2], 593
      %v1902 = vld [vmem:[%s1901] ss:$2 sm:$0xff]
      %s1903 = scalar_lea.vmem [#allocation2], 609
      %v1904 = vld [vmem:[%s1903] ss:$2 sm:$0xff]
      %s1905 = scalar_lea.vmem [#allocation2], 625
      %v1906 = vld [vmem:[%s1905] ss:$2 sm:$0xff]
      %v1907 = vmax.f32 %v1892, %v1900
      %v1908 = vmax.f32 %v1894, %v1902
      %v1909 = vmax.f32 %v1896, %v1904
      %v1910 = vmax.f32 %v1898, %v1906
      %v1911 = vmax.f32 %v1907, %v1909
      %v1912 = vmax.f32 %v1908, %v1910
      %v1913 = vpack.c.bf16 %v1912, %v1911
      %1914 = vst.msk [vmem:[#allocation3 + $0x48] sm:$0xff] %vm801, %v1913
      %s1915 = scalar_lea.vmem [#allocation2], 640
      %v1916 = vld [vmem:[%s1915] ss:$2 sm:$0xff]
      %s1917 = scalar_lea.vmem [#allocation2], 656
      %v1918 = vld [vmem:[%s1917] ss:$2 sm:$0xff]
      %s1919 = scalar_lea.vmem [#allocation2], 672
      %v1920 = vld [vmem:[%s1919] ss:$2 sm:$0xff]
      %s1921 = scalar_lea.vmem [#allocation2], 688
      %v1922 = vld [vmem:[%s1921] ss:$2 sm:$0xff]
      %s1923 = scalar_lea.vmem [#allocation2], 641
      %v1924 = vld [vmem:[%s1923] ss:$2 sm:$0xff]
      %s1925 = scalar_lea.vmem [#allocation2], 657
      %v1926 = vld [vmem:[%s1925] ss:$2 sm:$0xff]
      %s1927 = scalar_lea.vmem [#allocation2], 673
      %v1928 = vld [vmem:[%s1927] ss:$2 sm:$0xff]
      %s1929 = scalar_lea.vmem [#allocation2], 689
      %v1930 = vld [vmem:[%s1929] ss:$2 sm:$0xff]
      %v1931 = vmax.f32 %v1916, %v1924
      %v1932 = vmax.f32 %v1918, %v1926
      %v1933 = vmax.f32 %v1920, %v1928
      %v1934 = vmax.f32 %v1922, %v1930
      %v1935 = vmax.f32 %v1931, %v1933
      %v1936 = vmax.f32 %v1932, %v1934
      %v1937 = vpack.c.bf16 %v1936, %v1935
      %1938 = vst.msk [vmem:[#allocation3 + $0x50] sm:$0xff] %vm801, %v1937
      %s1939 = scalar_lea.vmem [#allocation2], 704
      %v1940 = vld [vmem:[%s1939] ss:$2 sm:$0xff]
      %s1941 = scalar_lea.vmem [#allocation2], 720
      %v1942 = vld [vmem:[%s1941] ss:$2 sm:$0xff]
      %s1943 = scalar_lea.vmem [#allocation2], 736
      %v1944 = vld [vmem:[%s1943] ss:$2 sm:$0xff]
      %s1945 = scalar_lea.vmem [#allocation2], 752
      %v1946 = vld [vmem:[%s1945] ss:$2 sm:$0xff]
      %s1947 = scalar_lea.vmem [#allocation2], 705
      %v1948 = vld [vmem:[%s1947] ss:$2 sm:$0xff]
      %s1949 = scalar_lea.vmem [#allocation2], 721
      %v1950 = vld [vmem:[%s1949] ss:$2 sm:$0xff]
      %s1951 = scalar_lea.vmem [#allocation2], 737
      %v1952 = vld [vmem:[%s1951] ss:$2 sm:$0xff]
      %s1953 = scalar_lea.vmem [#allocation2], 753
      %v1954 = vld [vmem:[%s1953] ss:$2 sm:$0xff]
      %v1955 = vmax.f32 %v1940, %v1948
      %v1956 = vmax.f32 %v1942, %v1950
      %v1957 = vmax.f32 %v1944, %v1952
      %v1958 = vmax.f32 %v1946, %v1954
      %v1959 = vmax.f32 %v1955, %v1957
      %v1960 = vmax.f32 %v1956, %v1958
      %v1961 = vpack.c.bf16 %v1960, %v1959
      %1962 = vst.msk [vmem:[#allocation3 + $0x58] sm:$0xff] %vm801, %v1961
      %s1963 = scalar_lea.vmem [#allocation2], 768
      %v1964 = vld [vmem:[%s1963] ss:$2 sm:$0xff]
      %s1965 = scalar_lea.vmem [#allocation2], 784
      %v1966 = vld [vmem:[%s1965] ss:$2 sm:$0xff]
      %s1967 = scalar_lea.vmem [#allocation2], 800
      %v1968 = vld [vmem:[%s1967] ss:$2 sm:$0xff]
      %s1969 = scalar_lea.vmem [#allocation2], 816
      %v1970 = vld [vmem:[%s1969] ss:$2 sm:$0xff]
      %s1971 = scalar_lea.vmem [#allocation2], 769
      %v1972 = vld [vmem:[%s1971] ss:$2 sm:$0xff]
      %s1973 = scalar_lea.vmem [#allocation2], 785
      %v1974 = vld [vmem:[%s1973] ss:$2 sm:$0xff]
      %s1975 = scalar_lea.vmem [#allocation2], 801
      %v1976 = vld [vmem:[%s1975] ss:$2 sm:$0xff]
      %s1977 = scalar_lea.vmem [#allocation2], 817
      %v1978 = vld [vmem:[%s1977] ss:$2 sm:$0xff]
      %v1979 = vmax.f32 %v1964, %v1972
      %v1980 = vmax.f32 %v1966, %v1974
      %v1981 = vmax.f32 %v1968, %v1976
      %v1982 = vmax.f32 %v1970, %v1978
      %v1983 = vmax.f32 %v1979, %v1981
      %v1984 = vmax.f32 %v1980, %v1982
      %v1985 = vpack.c.bf16 %v1984, %v1983
      %1986 = vst.msk [vmem:[#allocation3 + $0x60] sm:$0xff] %vm801, %v1985
      %s1987 = scalar_lea.vmem [#allocation2], 832
      %v1988 = vld [vmem:[%s1987] ss:$2 sm:$0xff]
      %s1989 = scalar_lea.vmem [#allocation2], 848
      %v1990 = vld [vmem:[%s1989] ss:$2 sm:$0xff]
      %s1991 = scalar_lea.vmem [#allocation2], 864
      %v1992 = vld [vmem:[%s1991] ss:$2 sm:$0xff]
      %s1993 = scalar_lea.vmem [#allocation2], 880
      %v1994 = vld [vmem:[%s1993] ss:$2 sm:$0xff]
      %s1995 = scalar_lea.vmem [#allocation2], 833
      %v1996 = vld [vmem:[%s1995] ss:$2 sm:$0xff]
      %s1997 = scalar_lea.vmem [#allocation2], 849
      %v1998 = vld [vmem:[%s1997] ss:$2 sm:$0xff]
      %s1999 = scalar_lea.vmem [#allocation2], 865
      %v2000 = vld [vmem:[%s1999] ss:$2 sm:$0xff]
      %s2001 = scalar_lea.vmem [#allocation2], 881
      %v2002 = vld [vmem:[%s2001] ss:$2 sm:$0xff]
      %v2003 = vmax.f32 %v1988, %v1996
      %v2004 = vmax.f32 %v1990, %v1998
      %v2005 = vmax.f32 %v1992, %v2000
      %v2006 = vmax.f32 %v1994, %v2002
      %v2007 = vmax.f32 %v2003, %v2005
      %v2008 = vmax.f32 %v2004, %v2006
      %v2009 = vpack.c.bf16 %v2008, %v2007
      %2010 = vst.msk [vmem:[#allocation3 + $0x68] sm:$0xff] %vm801, %v2009
      %v2011 = vld [vmem:[#allocation3] sm:$0xff]
      %v2012 = vld [vmem:[#allocation3 + $0x8] sm:$0xff]
      %v2013 = vld [vmem:[#allocation3 + $0x10] sm:$0xff]
      %v2014 = vld [vmem:[#allocation3 + $0x18] sm:$0xff]
      %v2015 = vld [vmem:[#allocation3 + $0x20] sm:$0xff]
      %v2016 = vld [vmem:[#allocation3 + $0x28] sm:$0xff]
      %v2017 = vld [vmem:[#allocation3 + $0x30] sm:$0xff]
      %v2018 = vld [vmem:[#allocation3 + $0x38] sm:$0xff]
      %v2019 = vld [vmem:[#allocation3 + $0x40] sm:$0xff]
      %v2020 = vld [vmem:[#allocation3 + $0x48] sm:$0xff]
      %v2021 = vld [vmem:[#allocation3 + $0x50] sm:$0x1]
      %v2022 = vld [vmem:[#allocation3] sm:$0xfe]
      %v2023 = vld [vmem:[#allocation3 + $0x50] sm:$0x3]
      %vm2024 = vsmask.f32 7424
      %v2026 = vshrl.u32 %v2011, 16
      %v2028 = vshll.u32 %v2011, 16
      %v2030 = vrot.slane %v2028, 1
      %v2031 = vor.u32 %v2026, %v2030
      %v2033 = vshll.u32 %v2012, 16
      %v2035 = vrot.slane %v2033, 1
      %v2036 = vsel %vm2024, %v2031, %v2035
      %v2037 = vshrl.u32 %v2012, 16
      %v2039 = vor.u32 %v2037, %v2035
      %v2041 = vshll.u32 %v2013, 16
      %v2043 = vrot.slane %v2041, 1
      %v2044 = vsel %vm2024, %v2039, %v2043
      %v2045 = vshrl.u32 %v2013, 16
      %v2047 = vor.u32 %v2045, %v2043
      %v2049 = vshll.u32 %v2014, 16
      %v2051 = vrot.slane %v2049, 1
      %v2052 = vsel %vm2024, %v2047, %v2051
      %v2053 = vshrl.u32 %v2014, 16
      %v2055 = vor.u32 %v2053, %v2051
      %v2057 = vshll.u32 %v2015, 16
      %v2059 = vrot.slane %v2057, 1
      %v2060 = vsel %vm2024, %v2055, %v2059
      %v2061 = vshrl.u32 %v2015, 16
      %v2063 = vor.u32 %v2061, %v2059
      %v2065 = vshll.u32 %v2016, 16
      %v2067 = vrot.slane %v2065, 1
      %v2068 = vsel %vm2024, %v2063, %v2067
      %v2069 = vshrl.u32 %v2016, 16
      %v2071 = vor.u32 %v2069, %v2067
      %v2073 = vshll.u32 %v2017, 16
      %v2075 = vrot.slane %v2073, 1
      %v2076 = vsel %vm2024, %v2071, %v2075
      %v2077 = vshrl.u32 %v2017, 16
      %v2079 = vor.u32 %v2077, %v2075
      %v2081 = vshll.u32 %v2018, 16
      %v2083 = vrot.slane %v2081, 1
      %v2084 = vsel %vm2024, %v2079, %v2083
      %v2085 = vshrl.u32 %v2018, 16
      %v2087 = vor.u32 %v2085, %v2083
      %v2089 = vshll.u32 %v2019, 16
      %v2091 = vrot.slane %v2089, 1
      %v2092 = vsel %vm2024, %v2087, %v2091
      %v2093 = vshrl.u32 %v2019, 16
      %v2095 = vor.u32 %v2093, %v2091
      %v2097 = vshll.u32 %v2020, 16
      %v2099 = vrot.slane %v2097, 1
      %v2100 = vsel %vm2024, %v2095, %v2099
      %v2101 = vshrl.u32 %v2020, 16
      %v2103 = vor.u32 %v2101, %v2099
      %v2105 = vshll.u32 %v2021, 16
      %v2107 = vrot.slane %v2105, 1
      %v2108 = vsel %vm2024, %v2103, %v2107
      %2109 = vrot.lane.b32.xlu0 %v2036, 32
      %v2110 = vpop.permute.xlu0 %2109
      %2111 = vrot.lane.b32.xlu0 %v2044, 32
      %v2112 = vpop.permute.xlu0 %2111
      %2113 = vrot.lane.b32.xlu0 %v2052, 32
      %v2114 = vpop.permute.xlu0 %2113
      %2115 = vrot.lane.b32.xlu0 %v2060, 32
      %v2116 = vpop.permute.xlu0 %2115
      %2117 = vrot.lane.b32.xlu0 %v2068, 32
      %v2118 = vpop.permute.xlu0 %2117
      %2119 = vrot.lane.b32.xlu0 %v2076, 32
      %v2120 = vpop.permute.xlu0 %2119
      %2121 = vrot.lane.b32.xlu0 %v2084, 32
      %v2122 = vpop.permute.xlu0 %2121
      %2123 = vrot.lane.b32.xlu0 %v2092, 32
      %v2124 = vpop.permute.xlu0 %2123
      %2125 = vrot.lane.b32.xlu0 %v2100, 32
      %v2126 = vpop.permute.xlu0 %2125
      %2127 = vrot.lane.b32.xlu0 %v2108, 32
      %v2128 = vpop.permute.xlu0 %2127
      %vm2140 = vcmask 1046528
      %v2141 = vrot.slane %v2022, 1
      %v2142 = vrot.slane %v2012, 1
      %v2143 = vsel %vm2140, %v2141, %v2142
      %v2144 = vrot.slane %v2013, 1
      %v2145 = vsel %vm2140, %v2142, %v2144
      %v2146 = vrot.slane %v2014, 1
      %v2147 = vsel %vm2140, %v2144, %v2146
      %v2148 = vrot.slane %v2015, 1
      %v2149 = vsel %vm2140, %v2146, %v2148
      %v2150 = vrot.slane %v2016, 1
      %v2151 = vsel %vm2140, %v2148, %v2150
      %v2152 = vrot.slane %v2017, 1
      %v2153 = vsel %vm2140, %v2150, %v2152
      %v2154 = vrot.slane %v2018, 1
      %v2155 = vsel %vm2140, %v2152, %v2154
      %v2156 = vrot.slane %v2019, 1
      %v2157 = vsel %vm2140, %v2154, %v2156
      %v2158 = vrot.slane %v2020, 1
      %v2159 = vsel %vm2140, %v2156, %v2158
      %v2160 = vrot.slane %v2021, 1
      %v2161 = vsel %vm2140, %v2158, %v2160
      %2162 = vrot.lane.b32.xlu0 %v2143, 64
      %v2163 = vpop.permute.xlu0 %2162
      %2164 = vrot.lane.b32.xlu0 %v2145, 64
      %v2165 = vpop.permute.xlu0 %2164
      %2166 = vrot.lane.b32.xlu0 %v2147, 64
      %v2167 = vpop.permute.xlu0 %2166
      %2168 = vrot.lane.b32.xlu0 %v2149, 64
      %v2169 = vpop.permute.xlu0 %2168
      %2170 = vrot.lane.b32.xlu0 %v2151, 64
      %v2171 = vpop.permute.xlu0 %2170
      %2172 = vrot.lane.b32.xlu0 %v2153, 64
      %v2173 = vpop.permute.xlu0 %2172
      %2174 = vrot.lane.b32.xlu0 %v2155, 64
      %v2175 = vpop.permute.xlu0 %2174
      %2176 = vrot.lane.b32.xlu0 %v2157, 64
      %v2177 = vpop.permute.xlu0 %2176
      %2178 = vrot.lane.b32.xlu0 %v2159, 64
      %v2179 = vpop.permute.xlu0 %2178
      %2180 = vrot.lane.b32.xlu0 %v2161, 64
      %v2181 = vpop.permute.xlu0 %2180
      %vm2182 = vsmask.f32 6400
      %v2184 = vshrl.u32 %v2022, 16
      %v2186 = vrot.slane %v2184, 1
      %v2187 = vshll.u32 %v2022, 16
      %v2189 = vrot.slane %v2187, 2
      %v2190 = vor.u32 %v2186, %v2189
      %v2191 = vrot.slane %v2037, 1
      %v2192 = vrot.slane %v2033, 2
      %v2193 = vor.u32 %v2191, %v2192
      %v2194 = vsel %vm2182, %v2190, %v2193
      %v2195 = vrot.slane %v2045, 1
      %v2196 = vrot.slane %v2041, 2
      %v2197 = vor.u32 %v2195, %v2196
      %v2198 = vsel %vm2182, %v2193, %v2197
      %v2199 = vrot.slane %v2053, 1
      %v2200 = vrot.slane %v2049, 2
      %v2201 = vor.u32 %v2199, %v2200
      %v2202 = vsel %vm2182, %v2197, %v2201
      %v2203 = vrot.slane %v2061, 1
      %v2204 = vrot.slane %v2057, 2
      %v2205 = vor.u32 %v2203, %v2204
      %v2206 = vsel %vm2182, %v2201, %v2205
      %v2207 = vrot.slane %v2069, 1
      %v2208 = vrot.slane %v2065, 2
      %v2209 = vor.u32 %v2207, %v2208
      %v2210 = vsel %vm2182, %v2205, %v2209
      %v2211 = vrot.slane %v2077, 1
      %v2212 = vrot.slane %v2073, 2
      %v2213 = vor.u32 %v2211, %v2212
      %v2214 = vsel %vm2182, %v2209, %v2213
      %v2215 = vrot.slane %v2085, 1
      %v2216 = vrot.slane %v2081, 2
      %v2217 = vor.u32 %v2215, %v2216
      %v2218 = vsel %vm2182, %v2213, %v2217
      %v2219 = vrot.slane %v2093, 1
      %v2220 = vrot.slane %v2089, 2
      %v2221 = vor.u32 %v2219, %v2220
      %v2222 = vsel %vm2182, %v2217, %v2221
      %v2223 = vrot.slane %v2101, 1
      %v2224 = vrot.slane %v2097, 2
      %v2225 = vor.u32 %v2223, %v2224
      %v2226 = vsel %vm2182, %v2221, %v2225
      %v2228 = vshrl.u32 %v2023, 16
      %v2230 = vrot.slane %v2228, 1
      %v2231 = vshll.u32 %v2023, 16
      %v2233 = vrot.slane %v2231, 2
      %v2234 = vor.u32 %v2230, %v2233
      %v2235 = vsel %vm2182, %v2225, %v2234
      %2236 = vrot.lane.b32.xlu0 %v2194, 96
      %v2237 = vpop.permute.xlu0 %2236
      %2238 = vrot.lane.b32.xlu0 %v2198, 96
      %v2239 = vpop.permute.xlu0 %2238
      %2240 = vrot.lane.b32.xlu0 %v2202, 96
      %v2241 = vpop.permute.xlu0 %2240
      %2242 = vrot.lane.b32.xlu0 %v2206, 96
      %v2243 = vpop.permute.xlu0 %2242
      %2244 = vrot.lane.b32.xlu0 %v2210, 96
      %v2245 = vpop.permute.xlu0 %2244
      %2246 = vrot.lane.b32.xlu0 %v2214, 96
      %v2247 = vpop.permute.xlu0 %2246
      %2248 = vrot.lane.b32.xlu0 %v2218, 96
      %v2249 = vpop.permute.xlu0 %2248
      %2250 = vrot.lane.b32.xlu0 %v2222, 96
      %v2251 = vpop.permute.xlu0 %2250
      %2252 = vrot.lane.b32.xlu0 %v2226, 96
      %v2253 = vpop.permute.xlu0 %2252
      %2254 = vrot.lane.b32.xlu0 %v2235, 96
      %v2255 = vpop.permute.xlu0 %2254
      %v2257 = vsel %vm801, %v2011, %v2110
      %v2259 = vsel %vm801, %v2012, %v2112
      %v2261 = vsel %vm801, %v2013, %v2114
      %v2263 = vsel %vm801, %v2014, %v2116
      %v2265 = vsel %vm801, %v2015, %v2118
      %v2267 = vsel %vm801, %v2016, %v2120
      %v2269 = vsel %vm801, %v2017, %v2122
      %v2271 = vsel %vm801, %v2018, %v2124
      %v2273 = vsel %vm801, %v2019, %v2126
      %v2275 = vsel %vm801, %v2020, %v2128
      %vm2276 = vcmask 523264
      %v2278 = vsel %vm2276, %v2257, %v2163
      %v2280 = vsel %vm2276, %v2259, %v2165
      %v2282 = vsel %vm2276, %v2261, %v2167
      %v2284 = vsel %vm2276, %v2263, %v2169
      %v2286 = vsel %vm2276, %v2265, %v2171
      %v2288 = vsel %vm2276, %v2267, %v2173
      %v2290 = vsel %vm2276, %v2269, %v2175
      %v2292 = vsel %vm2276, %v2271, %v2177
      %v2294 = vsel %vm2276, %v2273, %v2179
      %v2296 = vsel %vm2276, %v2275, %v2181
      %vm2297 = vcmask 785408
      %v2299 = vsel %vm2297, %v2278, %v2237
      %v2302 = vsel %vm2297, %v2280, %v2239
      %v2305 = vsel %vm2297, %v2282, %v2241
      %v2308 = vsel %vm2297, %v2284, %v2243
      %v2311 = vsel %vm2297, %v2286, %v2245
      %v2314 = vsel %vm2297, %v2288, %v2247
      %v2317 = vsel %vm2297, %v2290, %v2249
      %v2320 = vsel %vm2297, %v2292, %v2251
      %v2323 = vsel %vm2297, %v2294, %v2253
      %v2326 = vsel %vm2297, %v2296, %v2255
      %2328 = vst [vmem:[#allocation4] sm:$0xff] %v2299
      %2329 = vst [vmem:[#allocation4 + $0x38] sm:$0xff] %v2302
      %2330 = vst [vmem:[#allocation4 + $0x70] sm:$0xff] %v2305
      %2331 = vst [vmem:[#allocation4 + $0xa8] sm:$0xff] %v2308
      %2332 = vst [vmem:[#allocation4 + $0xe0] sm:$0xff] %v2311
      %2333 = vst [vmem:[#allocation4 + $0x118] sm:$0xff] %v2314
      %2334 = vst [vmem:[#allocation4 + $0x150] sm:$0xff] %v2317
      %2335 = vst [vmem:[#allocation4 + $0x188] sm:$0xff] %v2320
      %2336 = vst [vmem:[#allocation4 + $0x1c0] sm:$0xff] %v2323
      %2337 = vst [vmem:[#allocation4 + $0x1f8] sm:$0xff] %v2326
      %v2338 = vld [vmem:[#allocation3] sm:$0xfc]
      %v2339 = vld [vmem:[#allocation3 + $0x8] sm:$0xff]
      %v2340 = vld [vmem:[#allocation3 + $0x10] sm:$0xff]
      %v2341 = vld [vmem:[#allocation3 + $0x18] sm:$0xff]
      %v2342 = vld [vmem:[#allocation3 + $0x20] sm:$0xff]
      %v2343 = vld [vmem:[#allocation3 + $0x28] sm:$0xff]
      %v2344 = vld [vmem:[#allocation3 + $0x30] sm:$0xff]
      %v2345 = vld [vmem:[#allocation3 + $0x38] sm:$0xff]
      %v2346 = vld [vmem:[#allocation3 + $0x40] sm:$0xff]
      %v2347 = vld [vmem:[#allocation3 + $0x48] sm:$0xff]
      %v2348 = vld [vmem:[#allocation3 + $0x50] sm:$0x3]
      %v2349 = vld [vmem:[#allocation3 + $0x50] sm:$0xff]
      %v2350 = vld [vmem:[#allocation3 + $0x58] sm:$0x1]
      %v2351 = vld [vmem:[#allocation3 + $0x8] sm:$0xfe]
      %vm2362 = vcmask 1041408
      %v2363 = vrot.slane %v2339, 6
      %v2364 = vrot.slane %v2340, 6
      %v2365 = vsel %vm2362, %v2363, %v2364
      %v2366 = vrot.slane %v2341, 6
      %v2367 = vsel %vm2362, %v2364, %v2366
      %v2368 = vrot.slane %v2342, 6
      %v2369 = vsel %vm2362, %v2366, %v2368
      %v2370 = vrot.slane %v2343, 6
      %v2371 = vsel %vm2362, %v2368, %v2370
      %v2372 = vrot.slane %v2344, 6
      %v2373 = vsel %vm2362, %v2370, %v2372
      %v2374 = vrot.slane %v2345, 6
      %v2375 = vsel %vm2362, %v2372, %v2374
      %v2376 = vrot.slane %v2346, 6
      %v2377 = vsel %vm2362, %v2374, %v2376
      %v2378 = vrot.slane %v2347, 6
      %v2379 = vsel %vm2362, %v2376, %v2378
      %v2380 = vrot.slane %v2349, 6
      %v2381 = vsel %vm2362, %v2378, %v2380
      %2382 = vrot.lane.b32.xlu0 %v2363, 32
      %v2383 = vpop.permute.xlu0 %2382
      %2384 = vrot.lane.b32.xlu0 %v2365, 32
      %v2385 = vpop.permute.xlu0 %2384
      %2386 = vrot.lane.b32.xlu0 %v2367, 32
      %v2387 = vpop.permute.xlu0 %2386
      %2388 = vrot.lane.b32.xlu0 %v2369, 32
      %v2389 = vpop.permute.xlu0 %2388
      %2390 = vrot.lane.b32.xlu0 %v2371, 32
      %v2391 = vpop.permute.xlu0 %2390
      %2392 = vrot.lane.b32.xlu0 %v2373, 32
      %v2393 = vpop.permute.xlu0 %2392
      %2394 = vrot.lane.b32.xlu0 %v2375, 32
      %v2395 = vpop.permute.xlu0 %2394
      %2396 = vrot.lane.b32.xlu0 %v2377, 32
      %v2397 = vpop.permute.xlu0 %2396
      %2398 = vrot.lane.b32.xlu0 %v2379, 32
      %v2399 = vpop.permute.xlu0 %2398
      %2400 = vrot.lane.b32.xlu0 %v2381, 32
      %v2401 = vpop.permute.xlu0 %2400
      %2402 = vrot.lane.b32.xlu0 %v2380, 32
      %v2403 = vpop.permute.xlu0 %2402
      %vm2404 = vsmask.f32 1280
      %v2406 = vshrl.u32 %v2339, 16
      %v2408 = vrot.slane %v2406, 6
      %v2409 = vshll.u32 %v2339, 16
      %v2411 = vrot.slane %v2409, 7
      %v2412 = vor.u32 %v2408, %v2411
      %v2414 = vshrl.u32 %v2340, 16
      %v2416 = vrot.slane %v2414, 6
      %v2417 = vshll.u32 %v2340, 16
      %v2419 = vrot.slane %v2417, 7
      %v2420 = vor.u32 %v2416, %v2419
      %v2421 = vsel %vm2404, %v2412, %v2420
      %v2423 = vshrl.u32 %v2341, 16
      %v2425 = vrot.slane %v2423, 6
      %v2426 = vshll.u32 %v2341, 16
      %v2428 = vrot.slane %v2426, 7
      %v2429 = vor.u32 %v2425, %v2428
      %v2430 = vsel %vm2404, %v2420, %v2429
      %v2432 = vshrl.u32 %v2342, 16
      %v2434 = vrot.slane %v2432, 6
      %v2435 = vshll.u32 %v2342, 16
      %v2437 = vrot.slane %v2435, 7
      %v2438 = vor.u32 %v2434, %v2437
      %v2439 = vsel %vm2404, %v2429, %v2438
      %v2441 = vshrl.u32 %v2343, 16
      %v2443 = vrot.slane %v2441, 6
      %v2444 = vshll.u32 %v2343, 16
      %v2446 = vrot.slane %v2444, 7
      %v2447 = vor.u32 %v2443, %v2446
      %v2448 = vsel %vm2404, %v2438, %v2447
      %v2450 = vshrl.u32 %v2344, 16
      %v2452 = vrot.slane %v2450, 6
      %v2453 = vshll.u32 %v2344, 16
      %v2455 = vrot.slane %v2453, 7
      %v2456 = vor.u32 %v2452, %v2455
      %v2457 = vsel %vm2404, %v2447, %v2456
      %v2459 = vshrl.u32 %v2345, 16
      %v2461 = vrot.slane %v2459, 6
      %v2462 = vshll.u32 %v2345, 16
      %v2464 = vrot.slane %v2462, 7
      %v2465 = vor.u32 %v2461, %v2464
      %v2466 = vsel %vm2404, %v2456, %v2465
      %v2468 = vshrl.u32 %v2346, 16
      %v2470 = vrot.slane %v2468, 6
      %v2471 = vshll.u32 %v2346, 16
      %v2473 = vrot.slane %v2471, 7
      %v2474 = vor.u32 %v2470, %v2473
      %v2475 = vsel %vm2404, %v2465, %v2474
      %v2477 = vshrl.u32 %v2347, 16
      %v2479 = vrot.slane %v2477, 6
      %v2480 = vshll.u32 %v2347, 16
      %v2482 = vrot.slane %v2480, 7
      %v2483 = vor.u32 %v2479, %v2482
      %v2484 = vsel %vm2404, %v2474, %v2483
      %v2486 = vshrl.u32 %v2349, 16
      %v2488 = vrot.slane %v2486, 6
      %v2489 = vshll.u32 %v2349, 16
      %v2491 = vrot.slane %v2489, 7
      %v2492 = vor.u32 %v2488, %v2491
      %v2493 = vsel %vm2404, %v2483, %v2492
      %v2495 = vshll.u32 %v2350, 16
      %v2497 = vrot.slane %v2495, 7
      %v2498 = vsel %vm2404, %v2492, %v2497
      %2499 = vrot.lane.b32.xlu0 %v2412, 64
      %v2500 = vpop.permute.xlu0 %2499
      %2501 = vrot.lane.b32.xlu0 %v2421, 64
      %v2502 = vpop.permute.xlu0 %2501
      %2503 = vrot.lane.b32.xlu0 %v2430, 64
      %v2504 = vpop.permute.xlu0 %2503
      %2505 = vrot.lane.b32.xlu0 %v2439, 64
      %v2506 = vpop.permute.xlu0 %2505
      %2507 = vrot.lane.b32.xlu0 %v2448, 64
      %v2508 = vpop.permute.xlu0 %2507
      %2509 = vrot.lane.b32.xlu0 %v2457, 64
      %v2510 = vpop.permute.xlu0 %2509
      %2511 = vrot.lane.b32.xlu0 %v2466, 64
      %v2512 = vpop.permute.xlu0 %2511
      %2513 = vrot.lane.b32.xlu0 %v2475, 64
      %v2514 = vpop.permute.xlu0 %2513
      %2515 = vrot.lane.b32.xlu0 %v2484, 64
      %v2516 = vpop.permute.xlu0 %2515
      %2517 = vrot.lane.b32.xlu0 %v2493, 64
      %v2518 = vpop.permute.xlu0 %2517
      %2519 = vrot.lane.b32.xlu0 %v2498, 64
      %v2520 = vpop.permute.xlu0 %2519
      %vm2523 = vcmask 1040384
      %v2524 = vrot.slane %v2351, 7
      %v2525 = vrot.slane %v2340, 7
      %v2526 = vsel %vm2523, %v2524, %v2525
      %v2527 = vrot.slane %v2341, 7
      %v2528 = vsel %vm2523, %v2525, %v2527
      %v2529 = vrot.slane %v2342, 7
      %v2530 = vsel %vm2523, %v2527, %v2529
      %v2531 = vrot.slane %v2343, 7
      %v2532 = vsel %vm2523, %v2529, %v2531
      %v2533 = vrot.slane %v2344, 7
      %v2534 = vsel %vm2523, %v2531, %v2533
      %v2535 = vrot.slane %v2345, 7
      %v2536 = vsel %vm2523, %v2533, %v2535
      %v2537 = vrot.slane %v2346, 7
      %v2538 = vsel %vm2523, %v2535, %v2537
      %v2539 = vrot.slane %v2347, 7
      %v2540 = vsel %vm2523, %v2537, %v2539
      %v2541 = vrot.slane %v2349, 7
      %v2542 = vsel %vm2523, %v2539, %v2541
      %v2543 = vrot.slane %v2350, 7
      %v2544 = vsel %vm2523, %v2541, %v2543
      %2545 = vrot.lane.b32.xlu0 %v2524, 96
      %v2546 = vpop.permute.xlu0 %2545
      %2547 = vrot.lane.b32.xlu0 %v2526, 96
      %v2548 = vpop.permute.xlu0 %2547
      %2549 = vrot.lane.b32.xlu0 %v2528, 96
      %v2550 = vpop.permute.xlu0 %2549
      %2551 = vrot.lane.b32.xlu0 %v2530, 96
      %v2552 = vpop.permute.xlu0 %2551
      %2553 = vrot.lane.b32.xlu0 %v2532, 96
      %v2554 = vpop.permute.xlu0 %2553
      %2555 = vrot.lane.b32.xlu0 %v2534, 96
      %v2556 = vpop.permute.xlu0 %2555
      %2557 = vrot.lane.b32.xlu0 %v2536, 96
      %v2558 = vpop.permute.xlu0 %2557
      %2559 = vrot.lane.b32.xlu0 %v2538, 96
      %v2560 = vpop.permute.xlu0 %2559
      %2561 = vrot.lane.b32.xlu0 %v2540, 96
      %v2562 = vpop.permute.xlu0 %2561
      %2563 = vrot.lane.b32.xlu0 %v2542, 96
      %v2564 = vpop.permute.xlu0 %2563
      %2565 = vrot.lane.b32.xlu0 %v2544, 96
      %v2566 = vpop.permute.xlu0 %2565
      %v2569 = vsel %vm801, %v2338, %v2383
      %v2571 = vsel %vm801, %v2339, %v2385
      %v2573 = vsel %vm801, %v2340, %v2387
      %v2575 = vsel %vm801, %v2341, %v2389
      %v2577 = vsel %vm801, %v2342, %v2391
      %v2579 = vsel %vm801, %v2343, %v2393
      %v2581 = vsel %vm801, %v2344, %v2395
      %v2583 = vsel %vm801, %v2345, %v2397
      %v2585 = vsel %vm801, %v2346, %v2399
      %v2587 = vsel %vm801, %v2347, %v2401
      %v2590 = vsel %vm801, %v2348, %v2403
      %v2592 = vsel %vm2276, %v2569, %v2500
      %v2594 = vsel %vm2276, %v2571, %v2502
      %v2596 = vsel %vm2276, %v2573, %v2504
      %v2598 = vsel %vm2276, %v2575, %v2506
      %v2600 = vsel %vm2276, %v2577, %v2508
      %v2602 = vsel %vm2276, %v2579, %v2510
      %v2604 = vsel %vm2276, %v2581, %v2512
      %v2606 = vsel %vm2276, %v2583, %v2514
      %v2608 = vsel %vm2276, %v2585, %v2516
      %v2610 = vsel %vm2276, %v2587, %v2518
      %v2612 = vsel %vm2276, %v2590, %v2520
      %v2614 = vsel %vm2297, %v2592, %v2546
      %v2616 = vsel %vm2297, %v2594, %v2548
      %v2618 = vsel %vm2297, %v2596, %v2550
      %v2620 = vsel %vm2297, %v2598, %v2552
      %v2622 = vsel %vm2297, %v2600, %v2554
      %v2624 = vsel %vm2297, %v2602, %v2556
      %v2626 = vsel %vm2297, %v2604, %v2558
      %v2628 = vsel %vm2297, %v2606, %v2560
      %v2630 = vsel %vm2297, %v2608, %v2562
      %v2632 = vsel %vm2297, %v2610, %v2564
      %v2634 = vsel %vm2297, %v2612, %v2566
      %vm2646 = vcmask 1045504
      %v2647 = vrot.slane %v2614, 2
      %v2648 = vrot.slane %v2616, 2
      %v2649 = vsel %vm2646, %v2647, %v2648
      %v2650 = vrot.slane %v2618, 2
      %v2651 = vsel %vm2646, %v2648, %v2650
      %v2652 = vrot.slane %v2620, 2
      %v2653 = vsel %vm2646, %v2650, %v2652
      %v2654 = vrot.slane %v2622, 2
      %v2655 = vsel %vm2646, %v2652, %v2654
      %v2656 = vrot.slane %v2624, 2
      %v2657 = vsel %vm2646, %v2654, %v2656
      %v2658 = vrot.slane %v2626, 2
      %v2659 = vsel %vm2646, %v2656, %v2658
      %v2660 = vrot.slane %v2628, 2
      %v2661 = vsel %vm2646, %v2658, %v2660
      %v2662 = vrot.slane %v2630, 2
      %v2663 = vsel %vm2646, %v2660, %v2662
      %v2664 = vrot.slane %v2632, 2
      %v2665 = vsel %vm2646, %v2662, %v2664
      %v2666 = vrot.slane %v2634, 2
      %v2667 = vsel %vm2646, %v2664, %v2666
      %2678 = vst [vmem:[#allocation4 + $0x8] sm:$0xff] %v2649
      %2679 = vst [vmem:[#allocation4 + $0x40] sm:$0xff] %v2651
      %2680 = vst [vmem:[#allocation4 + $0x78] sm:$0xff] %v2653
      %2681 = vst [vmem:[#allocation4 + $0xb0] sm:$0xff] %v2655
      %2682 = vst [vmem:[#allocation4 + $0xe8] sm:$0xff] %v2657
      %2683 = vst [vmem:[#allocation4 + $0x120] sm:$0xff] %v2659
      %2684 = vst [vmem:[#allocation4 + $0x158] sm:$0xff] %v2661
      %2685 = vst [vmem:[#allocation4 + $0x190] sm:$0xff] %v2663
      %2686 = vst [vmem:[#allocation4 + $0x1c8] sm:$0xff] %v2665
      %2687 = vst [vmem:[#allocation4 + $0x200] sm:$0xff] %v2667
      %v2688 = vld [vmem:[#allocation3 + $0x8] sm:$0xfe]
      %v2689 = vld [vmem:[#allocation3 + $0x10] sm:$0xff]
      %v2690 = vld [vmem:[#allocation3 + $0x18] sm:$0xff]
      %v2691 = vld [vmem:[#allocation3 + $0x20] sm:$0xff]
      %v2692 = vld [vmem:[#allocation3 + $0x28] sm:$0xff]
      %v2693 = vld [vmem:[#allocation3 + $0x30] sm:$0xff]
      %v2694 = vld [vmem:[#allocation3 + $0x38] sm:$0xff]
      %v2695 = vld [vmem:[#allocation3 + $0x40] sm:$0xff]
      %v2696 = vld [vmem:[#allocation3 + $0x48] sm:$0xff]
      %v2697 = vld [vmem:[#allocation3 + $0x50] sm:$0xff]
      %v2698 = vld [vmem:[#allocation3 + $0x58] sm:$0x3]
      %v2699 = vld [vmem:[#allocation3 + $0x8] sm:$0xfc]
      %v2700 = vld [vmem:[#allocation3 + $0x58] sm:$0xff]
      %v2701 = vld [vmem:[#allocation3 + $0x60] sm:$0x1]
      %v2703 = vshrl.u32 %v2699, 16
      %v2705 = vshll.u32 %v2699, 16
      %v2707 = vrot.slane %v2705, 1
      %v2708 = vor.u32 %v2703, %v2707
      %v2710 = vshll.u32 %v2689, 16
      %v2712 = vrot.slane %v2710, 1
      %v2713 = vsel %vm2024, %v2708, %v2712
      %v2714 = vshrl.u32 %v2689, 16
      %v2716 = vor.u32 %v2714, %v2712
      %v2718 = vshll.u32 %v2690, 16
      %v2720 = vrot.slane %v2718, 1
      %v2721 = vsel %vm2024, %v2716, %v2720
      %v2722 = vshrl.u32 %v2690, 16
      %v2724 = vor.u32 %v2722, %v2720
      %v2726 = vshll.u32 %v2691, 16
      %v2728 = vrot.slane %v2726, 1
      %v2729 = vsel %vm2024, %v2724, %v2728
      %v2730 = vshrl.u32 %v2691, 16
      %v2732 = vor.u32 %v2730, %v2728
      %v2734 = vshll.u32 %v2692, 16
      %v2736 = vrot.slane %v2734, 1
      %v2737 = vsel %vm2024, %v2732, %v2736
      %v2738 = vshrl.u32 %v2692, 16
      %v2740 = vor.u32 %v2738, %v2736
      %v2742 = vshll.u32 %v2693, 16
      %v2744 = vrot.slane %v2742, 1
      %v2745 = vsel %vm2024, %v2740, %v2744
      %v2746 = vshrl.u32 %v2693, 16
      %v2748 = vor.u32 %v2746, %v2744
      %v2750 = vshll.u32 %v2694, 16
      %v2752 = vrot.slane %v2750, 1
      %v2753 = vsel %vm2024, %v2748, %v2752
      %v2754 = vshrl.u32 %v2694, 16
      %v2756 = vor.u32 %v2754, %v2752
      %v2758 = vshll.u32 %v2695, 16
      %v2760 = vrot.slane %v2758, 1
      %v2761 = vsel %vm2024, %v2756, %v2760
      %v2762 = vshrl.u32 %v2695, 16
      %v2764 = vor.u32 %v2762, %v2760
      %v2766 = vshll.u32 %v2696, 16
      %v2768 = vrot.slane %v2766, 1
      %v2769 = vsel %vm2024, %v2764, %v2768
      %v2770 = vshrl.u32 %v2696, 16
      %v2772 = vor.u32 %v2770, %v2768
      %v2774 = vshll.u32 %v2697, 16
      %v2776 = vrot.slane %v2774, 1
      %v2777 = vsel %vm2024, %v2772, %v2776
      %v2778 = vshrl.u32 %v2697, 16
      %v2780 = vor.u32 %v2778, %v2776
      %v2782 = vshll.u32 %v2698, 16
      %v2784 = vrot.slane %v2782, 1
      %v2785 = vsel %vm2024, %v2780, %v2784
      %v2786 = vshrl.u32 %v2698, 16
      %v2788 = vor.u32 %v2786, %v2784
      %2789 = vrot.lane.b32.xlu0 %v2713, 32
      %v2790 = vpop.permute.xlu0 %2789
      %2791 = vrot.lane.b32.xlu0 %v2721, 32
      %v2792 = vpop.permute.xlu0 %2791
      %2793 = vrot.lane.b32.xlu0 %v2729, 32
      %v2794 = vpop.permute.xlu0 %2793
      %2795 = vrot.lane.b32.xlu0 %v2737, 32
      %v2796 = vpop.permute.xlu0 %2795
      %2797 = vrot.lane.b32.xlu0 %v2745, 32
      %v2798 = vpop.permute.xlu0 %2797
      %2799 = vrot.lane.b32.xlu0 %v2753, 32
      %v2800 = vpop.permute.xlu0 %2799
      %2801 = vrot.lane.b32.xlu0 %v2761, 32
      %v2802 = vpop.permute.xlu0 %2801
      %2803 = vrot.lane.b32.xlu0 %v2769, 32
      %v2804 = vpop.permute.xlu0 %2803
      %2805 = vrot.lane.b32.xlu0 %v2777, 32
      %v2806 = vpop.permute.xlu0 %2805
      %2807 = vrot.lane.b32.xlu0 %v2785, 32
      %v2808 = vpop.permute.xlu0 %2807
      %2809 = vrot.lane.b32.xlu0 %v2788, 32
      %v2810 = vpop.permute.xlu0 %2809
      %v2811 = vrot.slane %v2714, 6
      %v2812 = vrot.slane %v2710, 7
      %v2813 = vor.u32 %v2811, %v2812
      %v2814 = vrot.slane %v2722, 6
      %v2815 = vrot.slane %v2718, 7
      %v2816 = vor.u32 %v2814, %v2815
      %v2817 = vsel %vm2404, %v2813, %v2816
      %v2818 = vrot.slane %v2730, 6
      %v2819 = vrot.slane %v2726, 7
      %v2820 = vor.u32 %v2818, %v2819
      %v2821 = vsel %vm2404, %v2816, %v2820
      %v2822 = vrot.slane %v2738, 6
      %v2823 = vrot.slane %v2734, 7
      %v2824 = vor.u32 %v2822, %v2823
      %v2825 = vsel %vm2404, %v2820, %v2824
      %v2826 = vrot.slane %v2746, 6
      %v2827 = vrot.slane %v2742, 7
      %v2828 = vor.u32 %v2826, %v2827
      %v2829 = vsel %vm2404, %v2824, %v2828
      %v2830 = vrot.slane %v2754, 6
      %v2831 = vrot.slane %v2750, 7
      %v2832 = vor.u32 %v2830, %v2831
      %v2833 = vsel %vm2404, %v2828, %v2832
      %v2834 = vrot.slane %v2762, 6
      %v2835 = vrot.slane %v2758, 7
      %v2836 = vor.u32 %v2834, %v2835
      %v2837 = vsel %vm2404, %v2832, %v2836
      %v2838 = vrot.slane %v2770, 6
      %v2839 = vrot.slane %v2766, 7
      %v2840 = vor.u32 %v2838, %v2839
      %v2841 = vsel %vm2404, %v2836, %v2840
      %v2842 = vrot.slane %v2778, 6
      %v2843 = vrot.slane %v2774, 7
      %v2844 = vor.u32 %v2842, %v2843
      %v2845 = vsel %vm2404, %v2840, %v2844
      %v2847 = vshrl.u32 %v2700, 16
      %v2849 = vrot.slane %v2847, 6
      %v2850 = vshll.u32 %v2700, 16
      %v2852 = vrot.slane %v2850, 7
      %v2853 = vor.u32 %v2849, %v2852
      %v2854 = vsel %vm2404, %v2844, %v2853
      %2855 = vrot.lane.b32.xlu0 %v2813, 64
      %v2856 = vpop.permute.xlu0 %2855
      %2857 = vrot.lane.b32.xlu0 %v2817, 64
      %v2858 = vpop.permute.xlu0 %2857
      %2859 = vrot.lane.b32.xlu0 %v2821, 64
      %v2860 = vpop.permute.xlu0 %2859
      %2861 = vrot.lane.b32.xlu0 %v2825, 64
      %v2862 = vpop.permute.xlu0 %2861
      %2863 = vrot.lane.b32.xlu0 %v2829, 64
      %v2864 = vpop.permute.xlu0 %2863
      %2865 = vrot.lane.b32.xlu0 %v2833, 64
      %v2866 = vpop.permute.xlu0 %2865
      %2867 = vrot.lane.b32.xlu0 %v2837, 64
      %v2868 = vpop.permute.xlu0 %2867
      %2869 = vrot.lane.b32.xlu0 %v2841, 64
      %v2870 = vpop.permute.xlu0 %2869
      %2871 = vrot.lane.b32.xlu0 %v2845, 64
      %v2872 = vpop.permute.xlu0 %2871
      %2873 = vrot.lane.b32.xlu0 %v2854, 64
      %v2874 = vpop.permute.xlu0 %2873
      %2875 = vrot.lane.b32.xlu0 %v2853, 64
      %v2876 = vpop.permute.xlu0 %2875
      %v2888 = vrot.slane %v2689, 7
      %v2889 = vrot.slane %v2690, 7
      %v2890 = vsel %vm2523, %v2888, %v2889
      %v2891 = vrot.slane %v2691, 7
      %v2892 = vsel %vm2523, %v2889, %v2891
      %v2893 = vrot.slane %v2692, 7
      %v2894 = vsel %vm2523, %v2891, %v2893
      %v2895 = vrot.slane %v2693, 7
      %v2896 = vsel %vm2523, %v2893, %v2895
      %v2897 = vrot.slane %v2694, 7
      %v2898 = vsel %vm2523, %v2895, %v2897
      %v2899 = vrot.slane %v2695, 7
      %v2900 = vsel %vm2523, %v2897, %v2899
      %v2901 = vrot.slane %v2696, 7
      %v2902 = vsel %vm2523, %v2899, %v2901
      %v2903 = vrot.slane %v2697, 7
      %v2904 = vsel %vm2523, %v2901, %v2903
      %v2905 = vrot.slane %v2700, 7
      %v2906 = vsel %vm2523, %v2903, %v2905
      %v2907 = vrot.slane %v2701, 7
      %v2908 = vsel %vm2523, %v2905, %v2907
      %2909 = vrot.lane.b32.xlu0 %v2888, 96
      %v2910 = vpop.permute.xlu0 %2909
      %2911 = vrot.lane.b32.xlu0 %v2890, 96
      %v2912 = vpop.permute.xlu0 %2911
      %2913 = vrot.lane.b32.xlu0 %v2892, 96
      %v2914 = vpop.permute.xlu0 %2913
      %2915 = vrot.lane.b32.xlu0 %v2894, 96
      %v2916 = vpop.permute.xlu0 %2915
      %2917 = vrot.lane.b32.xlu0 %v2896, 96
      %v2918 = vpop.permute.xlu0 %2917
      %2919 = vrot.lane.b32.xlu0 %v2898, 96
      %v2920 = vpop.permute.xlu0 %2919
      %2921 = vrot.lane.b32.xlu0 %v2900, 96
      %v2922 = vpop.permute.xlu0 %2921
      %2923 = vrot.lane.b32.xlu0 %v2902, 96
      %v2924 = vpop.permute.xlu0 %2923
      %2925 = vrot.lane.b32.xlu0 %v2904, 96
      %v2926 = vpop.permute.xlu0 %2925
      %2927 = vrot.lane.b32.xlu0 %v2906, 96
      %v2928 = vpop.permute.xlu0 %2927
      %2929 = vrot.lane.b32.xlu0 %v2908, 96
      %v2930 = vpop.permute.xlu0 %2929
      %v2933 = vsel %vm801, %v2688, %v2790
      %v2935 = vsel %vm801, %v2689, %v2792
      %v2937 = vsel %vm801, %v2690, %v2794
      %v2939 = vsel %vm801, %v2691, %v2796
      %v2941 = vsel %vm801, %v2692, %v2798
      %v2943 = vsel %vm801, %v2693, %v2800
      %v2945 = vsel %vm801, %v2694, %v2802
      %v2947 = vsel %vm801, %v2695, %v2804
      %v2949 = vsel %vm801, %v2696, %v2806
      %v2951 = vsel %vm801, %v2697, %v2808
      %v2953 = vsel %vm801, %v2698, %v2810
      %v2955 = vsel %vm2276, %v2933, %v2856
      %v2957 = vsel %vm2276, %v2935, %v2858
      %v2959 = vsel %vm2276, %v2937, %v2860
      %v2961 = vsel %vm2276, %v2939, %v2862
      %v2963 = vsel %vm2276, %v2941, %v2864
      %v2965 = vsel %vm2276, %v2943, %v2866
      %v2967 = vsel %vm2276, %v2945, %v2868
      %v2969 = vsel %vm2276, %v2947, %v2870
      %v2971 = vsel %vm2276, %v2949, %v2872
      %v2973 = vsel %vm2276, %v2951, %v2874
      %v2975 = vsel %vm2276, %v2953, %v2876
      %v2977 = vsel %vm2297, %v2955, %v2910
      %v2979 = vsel %vm2297, %v2957, %v2912
      %v2981 = vsel %vm2297, %v2959, %v2914
      %v2983 = vsel %vm2297, %v2961, %v2916
      %v2985 = vsel %vm2297, %v2963, %v2918
      %v2987 = vsel %vm2297, %v2965, %v2920
      %v2989 = vsel %vm2297, %v2967, %v2922
      %v2991 = vsel %vm2297, %v2969, %v2924
      %v2993 = vsel %vm2297, %v2971, %v2926
      %v2995 = vsel %vm2297, %v2973, %v2928
      %v2997 = vsel %vm2297, %v2975, %v2930
      %v2998 = vshrl.u32 %v2977, 16
      %v3000 = vrot.slane %v2998, 1
      %v3001 = vshll.u32 %v2977, 16
      %v3003 = vrot.slane %v3001, 2
      %v3004 = vor.u32 %v3000, %v3003
      %v3005 = vshrl.u32 %v2979, 16
      %v3007 = vrot.slane %v3005, 1
      %v3008 = vshll.u32 %v2979, 16
      %v3010 = vrot.slane %v3008, 2
      %v3011 = vor.u32 %v3007, %v3010
      %v3012 = vsel %vm2182, %v3004, %v3011
      %v3013 = vshrl.u32 %v2981, 16
      %v3015 = vrot.slane %v3013, 1
      %v3016 = vshll.u32 %v2981, 16
      %v3018 = vrot.slane %v3016, 2
      %v3019 = vor.u32 %v3015, %v3018
      %v3020 = vsel %vm2182, %v3011, %v3019
      %v3021 = vshrl.u32 %v2983, 16
      %v3023 = vrot.slane %v3021, 1
      %v3024 = vshll.u32 %v2983, 16
      %v3026 = vrot.slane %v3024, 2
      %v3027 = vor.u32 %v3023, %v3026
      %v3028 = vsel %vm2182, %v3019, %v3027
      %v3029 = vshrl.u32 %v2985, 16
      %v3031 = vrot.slane %v3029, 1
      %v3032 = vshll.u32 %v2985, 16
      %v3034 = vrot.slane %v3032, 2
      %v3035 = vor.u32 %v3031, %v3034
      %v3036 = vsel %vm2182, %v3027, %v3035
      %v3037 = vshrl.u32 %v2987, 16
      %v3039 = vrot.slane %v3037, 1
      %v3040 = vshll.u32 %v2987, 16
      %v3042 = vrot.slane %v3040, 2
      %v3043 = vor.u32 %v3039, %v3042
      %v3044 = vsel %vm2182, %v3035, %v3043
      %v3045 = vshrl.u32 %v2989, 16
      %v3047 = vrot.slane %v3045, 1
      %v3048 = vshll.u32 %v2989, 16
      %v3050 = vrot.slane %v3048, 2
      %v3051 = vor.u32 %v3047, %v3050
      %v3052 = vsel %vm2182, %v3043, %v3051
      %v3053 = vshrl.u32 %v2991, 16
      %v3055 = vrot.slane %v3053, 1
      %v3056 = vshll.u32 %v2991, 16
      %v3058 = vrot.slane %v3056, 2
      %v3059 = vor.u32 %v3055, %v3058
      %v3060 = vsel %vm2182, %v3051, %v3059
      %v3061 = vshrl.u32 %v2993, 16
      %v3063 = vrot.slane %v3061, 1
      %v3064 = vshll.u32 %v2993, 16
      %v3066 = vrot.slane %v3064, 2
      %v3067 = vor.u32 %v3063, %v3066
      %v3068 = vsel %vm2182, %v3059, %v3067
      %v3069 = vshrl.u32 %v2995, 16
      %v3071 = vrot.slane %v3069, 1
      %v3072 = vshll.u32 %v2995, 16
      %v3074 = vrot.slane %v3072, 2
      %v3075 = vor.u32 %v3071, %v3074
      %v3076 = vsel %vm2182, %v3067, %v3075
      %v3077 = vshrl.u32 %v2997, 16
      %v3079 = vrot.slane %v3077, 1
      %v3080 = vshll.u32 %v2997, 16
      %v3082 = vrot.slane %v3080, 2
      %v3083 = vor.u32 %v3079, %v3082
      %v3084 = vsel %vm2182, %v3075, %v3083
      %3095 = vst [vmem:[#allocation4 + $0x10] sm:$0xff] %v3012
      %3096 = vst [vmem:[#allocation4 + $0x48] sm:$0xff] %v3020
      %3097 = vst [vmem:[#allocation4 + $0x80] sm:$0xff] %v3028
      %3098 = vst [vmem:[#allocation4 + $0xb8] sm:$0xff] %v3036
      %3099 = vst [vmem:[#allocation4 + $0xf0] sm:$0xff] %v3044
      %3100 = vst [vmem:[#allocation4 + $0x128] sm:$0xff] %v3052
      %3101 = vst [vmem:[#allocation4 + $0x160] sm:$0xff] %v3060
      %3102 = vst [vmem:[#allocation4 + $0x198] sm:$0xff] %v3068
      %3103 = vst [vmem:[#allocation4 + $0x1d0] sm:$0xff] %v3076
      %3104 = vst [vmem:[#allocation4 + $0x208] sm:$0xff] %v3084
      %v3105 = vld [vmem:[#allocation3 + $0x10] sm:$0xfe]
      %v3106 = vld [vmem:[#allocation3 + $0x18] sm:$0xff]
      %v3107 = vld [vmem:[#allocation3 + $0x20] sm:$0xff]
      %v3108 = vld [vmem:[#allocation3 + $0x28] sm:$0xff]
      %v3109 = vld [vmem:[#allocation3 + $0x30] sm:$0xff]
      %v3110 = vld [vmem:[#allocation3 + $0x38] sm:$0xff]
      %v3111 = vld [vmem:[#allocation3 + $0x40] sm:$0xff]
      %v3112 = vld [vmem:[#allocation3 + $0x48] sm:$0xff]
      %v3113 = vld [vmem:[#allocation3 + $0x50] sm:$0xff]
      %v3114 = vld [vmem:[#allocation3 + $0x58] sm:$0xff]
      %v3115 = vld [vmem:[#allocation3 + $0x60] sm:$0x1]
      %v3116 = vld [vmem:[#allocation3 + $0x60] sm:$0x3]
      %v3117 = vld [vmem:[#allocation3 + $0x10] sm:$0xfc]
      %v3118 = vld [vmem:[#allocation3 + $0x60] sm:$0xff]
      %v3120 = vshrl.u32 %v3105, 16
      %v3122 = vshll.u32 %v3105, 16
      %v3124 = vrot.slane %v3122, 1
      %v3125 = vor.u32 %v3120, %v3124
      %v3127 = vshll.u32 %v3106, 16
      %v3129 = vrot.slane %v3127, 1
      %v3130 = vsel %vm2024, %v3125, %v3129
      %v3131 = vshrl.u32 %v3106, 16
      %v3133 = vor.u32 %v3131, %v3129
      %v3135 = vshll.u32 %v3107, 16
      %v3137 = vrot.slane %v3135, 1
      %v3138 = vsel %vm2024, %v3133, %v3137
      %v3139 = vshrl.u32 %v3107, 16
      %v3141 = vor.u32 %v3139, %v3137
      %v3143 = vshll.u32 %v3108, 16
      %v3145 = vrot.slane %v3143, 1
      %v3146 = vsel %vm2024, %v3141, %v3145
      %v3147 = vshrl.u32 %v3108, 16
      %v3149 = vor.u32 %v3147, %v3145
      %v3151 = vshll.u32 %v3109, 16
      %v3153 = vrot.slane %v3151, 1
      %v3154 = vsel %vm2024, %v3149, %v3153
      %v3155 = vshrl.u32 %v3109, 16
      %v3157 = vor.u32 %v3155, %v3153
      %v3159 = vshll.u32 %v3110, 16
      %v3161 = vrot.slane %v3159, 1
      %v3162 = vsel %vm2024, %v3157, %v3161
      %v3163 = vshrl.u32 %v3110, 16
      %v3165 = vor.u32 %v3163, %v3161
      %v3167 = vshll.u32 %v3111, 16
      %v3169 = vrot.slane %v3167, 1
      %v3170 = vsel %vm2024, %v3165, %v3169
      %v3171 = vshrl.u32 %v3111, 16
      %v3173 = vor.u32 %v3171, %v3169
      %v3175 = vshll.u32 %v3112, 16
      %v3177 = vrot.slane %v3175, 1
      %v3178 = vsel %vm2024, %v3173, %v3177
      %v3179 = vshrl.u32 %v3112, 16
      %v3181 = vor.u32 %v3179, %v3177
      %v3183 = vshll.u32 %v3113, 16
      %v3185 = vrot.slane %v3183, 1
      %v3186 = vsel %vm2024, %v3181, %v3185
      %v3187 = vshrl.u32 %v3113, 16
      %v3189 = vor.u32 %v3187, %v3185
      %v3191 = vshll.u32 %v3114, 16
      %v3193 = vrot.slane %v3191, 1
      %v3194 = vsel %vm2024, %v3189, %v3193
      %v3195 = vshrl.u32 %v3114, 16
      %v3197 = vor.u32 %v3195, %v3193
      %v3199 = vshll.u32 %v3116, 16
      %v3201 = vrot.slane %v3199, 1
      %v3202 = vsel %vm2024, %v3197, %v3201
      %v3203 = vshrl.u32 %v3116, 16
      %v3205 = vor.u32 %v3203, %v3201
      %3206 = vrot.lane.b32.xlu0 %v3130, 32
      %v3207 = vpop.permute.xlu0 %3206
      %3208 = vrot.lane.b32.xlu0 %v3138, 32
      %v3209 = vpop.permute.xlu0 %3208
      %3210 = vrot.lane.b32.xlu0 %v3146, 32
      %v3211 = vpop.permute.xlu0 %3210
      %3212 = vrot.lane.b32.xlu0 %v3154, 32
      %v3213 = vpop.permute.xlu0 %3212
      %3214 = vrot.lane.b32.xlu0 %v3162, 32
      %v3215 = vpop.permute.xlu0 %3214
      %3216 = vrot.lane.b32.xlu0 %v3170, 32
      %v3217 = vpop.permute.xlu0 %3216
      %3218 = vrot.lane.b32.xlu0 %v3178, 32
      %v3219 = vpop.permute.xlu0 %3218
      %3220 = vrot.lane.b32.xlu0 %v3186, 32
      %v3221 = vpop.permute.xlu0 %3220
      %3222 = vrot.lane.b32.xlu0 %v3194, 32
      %v3223 = vpop.permute.xlu0 %3222
      %3224 = vrot.lane.b32.xlu0 %v3202, 32
      %v3225 = vpop.permute.xlu0 %3224
      %3226 = vrot.lane.b32.xlu0 %v3205, 32
      %v3227 = vpop.permute.xlu0 %3226
      %v3239 = vrot.slane %v3117, 1
      %v3240 = vrot.slane %v3106, 1
      %v3241 = vsel %vm2140, %v3239, %v3240
      %v3242 = vrot.slane %v3107, 1
      %v3243 = vsel %vm2140, %v3240, %v3242
      %v3244 = vrot.slane %v3108, 1
      %v3245 = vsel %vm2140, %v3242, %v3244
      %v3246 = vrot.slane %v3109, 1
      %v3247 = vsel %vm2140, %v3244, %v3246
      %v3248 = vrot.slane %v3110, 1
      %v3249 = vsel %vm2140, %v3246, %v3248
      %v3250 = vrot.slane %v3111, 1
      %v3251 = vsel %vm2140, %v3248, %v3250
      %v3252 = vrot.slane %v3112, 1
      %v3253 = vsel %vm2140, %v3250, %v3252
      %v3254 = vrot.slane %v3113, 1
      %v3255 = vsel %vm2140, %v3252, %v3254
      %v3256 = vrot.slane %v3114, 1
      %v3257 = vsel %vm2140, %v3254, %v3256
      %v3258 = vrot.slane %v3116, 1
      %v3259 = vsel %vm2140, %v3256, %v3258
      %3260 = vrot.lane.b32.xlu0 %v3241, 64
      %v3261 = vpop.permute.xlu0 %3260
      %3262 = vrot.lane.b32.xlu0 %v3243, 64
      %v3263 = vpop.permute.xlu0 %3262
      %3264 = vrot.lane.b32.xlu0 %v3245, 64
      %v3265 = vpop.permute.xlu0 %3264
      %3266 = vrot.lane.b32.xlu0 %v3247, 64
      %v3267 = vpop.permute.xlu0 %3266
      %3268 = vrot.lane.b32.xlu0 %v3249, 64
      %v3269 = vpop.permute.xlu0 %3268
      %3270 = vrot.lane.b32.xlu0 %v3251, 64
      %v3271 = vpop.permute.xlu0 %3270
      %3272 = vrot.lane.b32.xlu0 %v3253, 64
      %v3273 = vpop.permute.xlu0 %3272
      %3274 = vrot.lane.b32.xlu0 %v3255, 64
      %v3275 = vpop.permute.xlu0 %3274
      %3276 = vrot.lane.b32.xlu0 %v3257, 64
      %v3277 = vpop.permute.xlu0 %3276
      %3278 = vrot.lane.b32.xlu0 %v3259, 64
      %v3279 = vpop.permute.xlu0 %3278
      %3280 = vrot.lane.b32.xlu0 %v3258, 64
      %v3281 = vpop.permute.xlu0 %3280
      %v3283 = vrot.slane %v3106, 7
      %v3284 = vrot.slane %v3107, 7
      %v3285 = vsel %vm2523, %v3283, %v3284
      %v3286 = vrot.slane %v3108, 7
      %v3287 = vsel %vm2523, %v3284, %v3286
      %v3288 = vrot.slane %v3109, 7
      %v3289 = vsel %vm2523, %v3286, %v3288
      %v3290 = vrot.slane %v3110, 7
      %v3291 = vsel %vm2523, %v3288, %v3290
      %v3292 = vrot.slane %v3111, 7
      %v3293 = vsel %vm2523, %v3290, %v3292
      %v3294 = vrot.slane %v3112, 7
      %v3295 = vsel %vm2523, %v3292, %v3294
      %v3296 = vrot.slane %v3113, 7
      %v3297 = vsel %vm2523, %v3294, %v3296
      %v3298 = vrot.slane %v3114, 7
      %v3299 = vsel %vm2523, %v3296, %v3298
      %v3300 = vrot.slane %v3118, 7
      %v3301 = vsel %vm2523, %v3298, %v3300
      %3302 = vrot.lane.b32.xlu0 %v3283, 96
      %v3303 = vpop.permute.xlu0 %3302
      %3304 = vrot.lane.b32.xlu0 %v3285, 96
      %v3305 = vpop.permute.xlu0 %3304
      %3306 = vrot.lane.b32.xlu0 %v3287, 96
      %v3307 = vpop.permute.xlu0 %3306
      %3308 = vrot.lane.b32.xlu0 %v3289, 96
      %v3309 = vpop.permute.xlu0 %3308
      %3310 = vrot.lane.b32.xlu0 %v3291, 96
      %v3311 = vpop.permute.xlu0 %3310
      %3312 = vrot.lane.b32.xlu0 %v3293, 96
      %v3313 = vpop.permute.xlu0 %3312
      %3314 = vrot.lane.b32.xlu0 %v3295, 96
      %v3315 = vpop.permute.xlu0 %3314
      %3316 = vrot.lane.b32.xlu0 %v3297, 96
      %v3317 = vpop.permute.xlu0 %3316
      %3318 = vrot.lane.b32.xlu0 %v3299, 96
      %v3319 = vpop.permute.xlu0 %3318
      %3320 = vrot.lane.b32.xlu0 %v3301, 96
      %v3321 = vpop.permute.xlu0 %3320
      %3322 = vrot.lane.b32.xlu0 %v3300, 96
      %v3323 = vpop.permute.xlu0 %3322
      %v3325 = vsel %vm801, %v3105, %v3207
      %v3327 = vsel %vm801, %v3106, %v3209
      %v3329 = vsel %vm801, %v3107, %v3211
      %v3331 = vsel %vm801, %v3108, %v3213
      %v3333 = vsel %vm801, %v3109, %v3215
      %v3335 = vsel %vm801, %v3110, %v3217
      %v3337 = vsel %vm801, %v3111, %v3219
      %v3339 = vsel %vm801, %v3112, %v3221
      %v3341 = vsel %vm801, %v3113, %v3223
      %v3343 = vsel %vm801, %v3114, %v3225
      %v3346 = vsel %vm801, %v3115, %v3227
      %v3348 = vsel %vm2276, %v3325, %v3261
      %v3350 = vsel %vm2276, %v3327, %v3263
      %v3352 = vsel %vm2276, %v3329, %v3265
      %v3354 = vsel %vm2276, %v3331, %v3267
      %v3356 = vsel %vm2276, %v3333, %v3269
      %v3358 = vsel %vm2276, %v3335, %v3271
      %v3360 = vsel %vm2276, %v3337, %v3273
      %v3362 = vsel %vm2276, %v3339, %v3275
      %v3364 = vsel %vm2276, %v3341, %v3277
      %v3366 = vsel %vm2276, %v3343, %v3279
      %v3368 = vsel %vm2276, %v3346, %v3281
      %v3370 = vsel %vm2297, %v3348, %v3303
      %v3372 = vsel %vm2297, %v3350, %v3305
      %v3374 = vsel %vm2297, %v3352, %v3307
      %v3376 = vsel %vm2297, %v3354, %v3309
      %v3378 = vsel %vm2297, %v3356, %v3311
      %v3380 = vsel %vm2297, %v3358, %v3313
      %v3382 = vsel %vm2297, %v3360, %v3315
      %v3384 = vsel %vm2297, %v3362, %v3317
      %v3386 = vsel %vm2297, %v3364, %v3319
      %v3388 = vsel %vm2297, %v3366, %v3321
      %v3390 = vsel %vm2297, %v3368, %v3323
      %v3402 = vrot.slane %v3370, 1
      %v3403 = vrot.slane %v3372, 1
      %v3404 = vsel %vm2140, %v3402, %v3403
      %v3405 = vrot.slane %v3374, 1
      %v3406 = vsel %vm2140, %v3403, %v3405
      %v3407 = vrot.slane %v3376, 1
      %v3408 = vsel %vm2140, %v3405, %v3407
      %v3409 = vrot.slane %v3378, 1
      %v3410 = vsel %vm2140, %v3407, %v3409
      %v3411 = vrot.slane %v3380, 1
      %v3412 = vsel %vm2140, %v3409, %v3411
      %v3413 = vrot.slane %v3382, 1
      %v3414 = vsel %vm2140, %v3411, %v3413
      %v3415 = vrot.slane %v3384, 1
      %v3416 = vsel %vm2140, %v3413, %v3415
      %v3417 = vrot.slane %v3386, 1
      %v3418 = vsel %vm2140, %v3415, %v3417
      %v3419 = vrot.slane %v3388, 1
      %v3420 = vsel %vm2140, %v3417, %v3419
      %v3421 = vrot.slane %v3390, 1
      %v3422 = vsel %vm2140, %v3419, %v3421
      %3433 = vst [vmem:[#allocation4 + $0x18] sm:$0xff] %v3404
      %3434 = vst [vmem:[#allocation4 + $0x50] sm:$0xff] %v3406
      %3435 = vst [vmem:[#allocation4 + $0x88] sm:$0xff] %v3408
      %3436 = vst [vmem:[#allocation4 + $0xc0] sm:$0xff] %v3410
      %3437 = vst [vmem:[#allocation4 + $0xf8] sm:$0xff] %v3412
      %3438 = vst [vmem:[#allocation4 + $0x130] sm:$0xff] %v3414
      %3439 = vst [vmem:[#allocation4 + $0x168] sm:$0xff] %v3416
      %3440 = vst [vmem:[#allocation4 + $0x1a0] sm:$0xff] %v3418
      %3441 = vst [vmem:[#allocation4 + $0x1d8] sm:$0xff] %v3420
      %3442 = vst [vmem:[#allocation4 + $0x210] sm:$0xff] %v3422
      %v3443 = vld [vmem:[#allocation3 + $0x18] sm:$0xff]
      %v3444 = vld [vmem:[#allocation3 + $0x20] sm:$0xff]
      %v3445 = vld [vmem:[#allocation3 + $0x28] sm:$0xff]
      %v3446 = vld [vmem:[#allocation3 + $0x30] sm:$0xff]
      %v3447 = vld [vmem:[#allocation3 + $0x38] sm:$0xff]
      %v3448 = vld [vmem:[#allocation3 + $0x40] sm:$0xff]
      %v3449 = vld [vmem:[#allocation3 + $0x48] sm:$0xff]
      %v3450 = vld [vmem:[#allocation3 + $0x50] sm:$0xff]
      %v3451 = vld [vmem:[#allocation3 + $0x58] sm:$0xff]
      %v3452 = vld [vmem:[#allocation3 + $0x60] sm:$0xff]
      %v3453 = vld [vmem:[#allocation3 + $0x68] sm:$0x1]
      %v3454 = vld [vmem:[#allocation3 + $0x18] sm:$0xfe]
      %v3455 = vld [vmem:[#allocation3 + $0x68] sm:$0x3]
      %v3456 = vld [vmem:[#allocation3 + $0x18] sm:$0xfc]
      %v3458 = vshrl.u32 %v3454, 16
      %v3460 = vshll.u32 %v3454, 16
      %v3462 = vrot.slane %v3460, 1
      %v3463 = vor.u32 %v3458, %v3462
      %v3465 = vshll.u32 %v3444, 16
      %v3467 = vrot.slane %v3465, 1
      %v3468 = vsel %vm2024, %v3463, %v3467
      %v3469 = vshrl.u32 %v3444, 16
      %v3471 = vor.u32 %v3469, %v3467
      %v3473 = vshll.u32 %v3445, 16
      %v3475 = vrot.slane %v3473, 1
      %v3476 = vsel %vm2024, %v3471, %v3475
      %v3477 = vshrl.u32 %v3445, 16
      %v3479 = vor.u32 %v3477, %v3475
      %v3481 = vshll.u32 %v3446, 16
      %v3483 = vrot.slane %v3481, 1
      %v3484 = vsel %vm2024, %v3479, %v3483
      %v3485 = vshrl.u32 %v3446, 16
      %v3487 = vor.u32 %v3485, %v3483
      %v3489 = vshll.u32 %v3447, 16
      %v3491 = vrot.slane %v3489, 1
      %v3492 = vsel %vm2024, %v3487, %v3491
      %v3493 = vshrl.u32 %v3447, 16
      %v3495 = vor.u32 %v3493, %v3491
      %v3497 = vshll.u32 %v3448, 16
      %v3499 = vrot.slane %v3497, 1
      %v3500 = vsel %vm2024, %v3495, %v3499
      %v3501 = vshrl.u32 %v3448, 16
      %v3503 = vor.u32 %v3501, %v3499
      %v3505 = vshll.u32 %v3449, 16
      %v3507 = vrot.slane %v3505, 1
      %v3508 = vsel %vm2024, %v3503, %v3507
      %v3509 = vshrl.u32 %v3449, 16
      %v3511 = vor.u32 %v3509, %v3507
      %v3513 = vshll.u32 %v3450, 16
      %v3515 = vrot.slane %v3513, 1
      %v3516 = vsel %vm2024, %v3511, %v3515
      %v3517 = vshrl.u32 %v3450, 16
      %v3519 = vor.u32 %v3517, %v3515
      %v3521 = vshll.u32 %v3451, 16
      %v3523 = vrot.slane %v3521, 1
      %v3524 = vsel %vm2024, %v3519, %v3523
      %v3525 = vshrl.u32 %v3451, 16
      %v3527 = vor.u32 %v3525, %v3523
      %v3529 = vshll.u32 %v3452, 16
      %v3531 = vrot.slane %v3529, 1
      %v3532 = vsel %vm2024, %v3527, %v3531
      %v3533 = vshrl.u32 %v3452, 16
      %v3535 = vor.u32 %v3533, %v3531
      %v3537 = vshll.u32 %v3453, 16
      %v3539 = vrot.slane %v3537, 1
      %v3540 = vsel %vm2024, %v3535, %v3539
      %v3541 = vshrl.u32 %v3453, 16
      %3543 = vrot.lane.b32.xlu0 %v3468, 32
      %v3544 = vpop.permute.xlu0 %3543
      %3545 = vrot.lane.b32.xlu0 %v3476, 32
      %v3546 = vpop.permute.xlu0 %3545
      %3547 = vrot.lane.b32.xlu0 %v3484, 32
      %v3548 = vpop.permute.xlu0 %3547
      %3549 = vrot.lane.b32.xlu0 %v3492, 32
      %v3550 = vpop.permute.xlu0 %3549
      %3551 = vrot.lane.b32.xlu0 %v3500, 32
      %v3552 = vpop.permute.xlu0 %3551
      %3553 = vrot.lane.b32.xlu0 %v3508, 32
      %v3554 = vpop.permute.xlu0 %3553
      %3555 = vrot.lane.b32.xlu0 %v3516, 32
      %v3556 = vpop.permute.xlu0 %3555
      %3557 = vrot.lane.b32.xlu0 %v3524, 32
      %v3558 = vpop.permute.xlu0 %3557
      %3559 = vrot.lane.b32.xlu0 %v3532, 32
      %v3560 = vpop.permute.xlu0 %3559
      %3561 = vrot.lane.b32.xlu0 %v3540, 32
      %v3562 = vpop.permute.xlu0 %3561
      %3563 = vrot.lane.b32.xlu0 %v3541, 32
      %v3564 = vpop.permute.xlu0 %3563
      %v3576 = vrot.slane %v3454, 1
      %v3577 = vrot.slane %v3444, 1
      %v3578 = vsel %vm2140, %v3576, %v3577
      %v3579 = vrot.slane %v3445, 1
      %v3580 = vsel %vm2140, %v3577, %v3579
      %v3581 = vrot.slane %v3446, 1
      %v3582 = vsel %vm2140, %v3579, %v3581
      %v3583 = vrot.slane %v3447, 1
      %v3584 = vsel %vm2140, %v3581, %v3583
      %v3585 = vrot.slane %v3448, 1
      %v3586 = vsel %vm2140, %v3583, %v3585
      %v3587 = vrot.slane %v3449, 1
      %v3588 = vsel %vm2140, %v3585, %v3587
      %v3589 = vrot.slane %v3450, 1
      %v3590 = vsel %vm2140, %v3587, %v3589
      %v3591 = vrot.slane %v3451, 1
      %v3592 = vsel %vm2140, %v3589, %v3591
      %v3593 = vrot.slane %v3452, 1
      %v3594 = vsel %vm2140, %v3591, %v3593
      %v3595 = vrot.slane %v3455, 1
      %v3596 = vsel %vm2140, %v3593, %v3595
      %3597 = vrot.lane.b32.xlu0 %v3578, 64
      %v3598 = vpop.permute.xlu0 %3597
      %3599 = vrot.lane.b32.xlu0 %v3580, 64
      %v3600 = vpop.permute.xlu0 %3599
      %3601 = vrot.lane.b32.xlu0 %v3582, 64
      %v3602 = vpop.permute.xlu0 %3601
      %3603 = vrot.lane.b32.xlu0 %v3584, 64
      %v3604 = vpop.permute.xlu0 %3603
      %3605 = vrot.lane.b32.xlu0 %v3586, 64
      %v3606 = vpop.permute.xlu0 %3605
      %3607 = vrot.lane.b32.xlu0 %v3588, 64
      %v3608 = vpop.permute.xlu0 %3607
      %3609 = vrot.lane.b32.xlu0 %v3590, 64
      %v3610 = vpop.permute.xlu0 %3609
      %3611 = vrot.lane.b32.xlu0 %v3592, 64
      %v3612 = vpop.permute.xlu0 %3611
      %3613 = vrot.lane.b32.xlu0 %v3594, 64
      %v3614 = vpop.permute.xlu0 %3613
      %3615 = vrot.lane.b32.xlu0 %v3596, 64
      %v3616 = vpop.permute.xlu0 %3615
      %3617 = vrot.lane.b32.xlu0 %v3595, 64
      %v3618 = vpop.permute.xlu0 %3617
      %v3620 = vshrl.u32 %v3456, 16
      %v3622 = vrot.slane %v3620, 1
      %v3623 = vshll.u32 %v3456, 16
      %v3625 = vrot.slane %v3623, 2
      %v3626 = vor.u32 %v3622, %v3625
      %v3627 = vrot.slane %v3469, 1
      %v3628 = vrot.slane %v3465, 2
      %v3629 = vor.u32 %v3627, %v3628
      %v3630 = vsel %vm2182, %v3626, %v3629
      %v3631 = vrot.slane %v3477, 1
      %v3632 = vrot.slane %v3473, 2
      %v3633 = vor.u32 %v3631, %v3632
      %v3634 = vsel %vm2182, %v3629, %v3633
      %v3635 = vrot.slane %v3485, 1
      %v3636 = vrot.slane %v3481, 2
      %v3637 = vor.u32 %v3635, %v3636
      %v3638 = vsel %vm2182, %v3633, %v3637
      %v3639 = vrot.slane %v3493, 1
      %v3640 = vrot.slane %v3489, 2
      %v3641 = vor.u32 %v3639, %v3640
      %v3642 = vsel %vm2182, %v3637, %v3641
      %v3643 = vrot.slane %v3501, 1
      %v3644 = vrot.slane %v3497, 2
      %v3645 = vor.u32 %v3643, %v3644
      %v3646 = vsel %vm2182, %v3641, %v3645
      %v3647 = vrot.slane %v3509, 1
      %v3648 = vrot.slane %v3505, 2
      %v3649 = vor.u32 %v3647, %v3648
      %v3650 = vsel %vm2182, %v3645, %v3649
      %v3651 = vrot.slane %v3517, 1
      %v3652 = vrot.slane %v3513, 2
      %v3653 = vor.u32 %v3651, %v3652
      %v3654 = vsel %vm2182, %v3649, %v3653
      %v3655 = vrot.slane %v3525, 1
      %v3656 = vrot.slane %v3521, 2
      %v3657 = vor.u32 %v3655, %v3656
      %v3658 = vsel %vm2182, %v3653, %v3657
      %v3659 = vrot.slane %v3533, 1
      %v3660 = vrot.slane %v3529, 2
      %v3661 = vor.u32 %v3659, %v3660
      %v3662 = vsel %vm2182, %v3657, %v3661
      %v3664 = vshrl.u32 %v3455, 16
      %v3666 = vrot.slane %v3664, 1
      %v3667 = vshll.u32 %v3455, 16
      %v3669 = vrot.slane %v3667, 2
      %v3670 = vor.u32 %v3666, %v3669
      %v3671 = vsel %vm2182, %v3661, %v3670
      %3672 = vrot.lane.b32.xlu0 %v3630, 96
      %v3673 = vpop.permute.xlu0 %3672
      %3674 = vrot.lane.b32.xlu0 %v3634, 96
      %v3675 = vpop.permute.xlu0 %3674
      %3676 = vrot.lane.b32.xlu0 %v3638, 96
      %v3677 = vpop.permute.xlu0 %3676
      %3678 = vrot.lane.b32.xlu0 %v3642, 96
      %v3679 = vpop.permute.xlu0 %3678
      %3680 = vrot.lane.b32.xlu0 %v3646, 96
      %v3681 = vpop.permute.xlu0 %3680
      %3682 = vrot.lane.b32.xlu0 %v3650, 96
      %v3683 = vpop.permute.xlu0 %3682
      %3684 = vrot.lane.b32.xlu0 %v3654, 96
      %v3685 = vpop.permute.xlu0 %3684
      %3686 = vrot.lane.b32.xlu0 %v3658, 96
      %v3687 = vpop.permute.xlu0 %3686
      %3688 = vrot.lane.b32.xlu0 %v3662, 96
      %v3689 = vpop.permute.xlu0 %3688
      %3690 = vrot.lane.b32.xlu0 %v3671, 96
      %v3691 = vpop.permute.xlu0 %3690
      %3692 = vrot.lane.b32.xlu0 %v3666, 96
      %v3693 = vpop.permute.xlu0 %3692
      %v3696 = vsel %vm801, %v3443, %v3544
      %v3698 = vsel %vm801, %v3444, %v3546
      %v3700 = vsel %vm801, %v3445, %v3548
      %v3702 = vsel %vm801, %v3446, %v3550
      %v3704 = vsel %vm801, %v3447, %v3552
      %v3706 = vsel %vm801, %v3448, %v3554
      %v3708 = vsel %vm801, %v3449, %v3556
      %v3710 = vsel %vm801, %v3450, %v3558
      %v3712 = vsel %vm801, %v3451, %v3560
      %v3714 = vsel %vm801, %v3452, %v3562
      %v3716 = vsel %vm801, %v3453, %v3564
      %v3718 = vsel %vm2276, %v3696, %v3598
      %v3720 = vsel %vm2276, %v3698, %v3600
      %v3722 = vsel %vm2276, %v3700, %v3602
      %v3724 = vsel %vm2276, %v3702, %v3604
      %v3726 = vsel %vm2276, %v3704, %v3606
      %v3728 = vsel %vm2276, %v3706, %v3608
      %v3730 = vsel %vm2276, %v3708, %v3610
      %v3732 = vsel %vm2276, %v3710, %v3612
      %v3734 = vsel %vm2276, %v3712, %v3614
      %v3736 = vsel %vm2276, %v3714, %v3616
      %v3738 = vsel %vm2276, %v3716, %v3618
      %v3740 = vsel %vm2297, %v3718, %v3673
      %v3742 = vsel %vm2297, %v3720, %v3675
      %v3744 = vsel %vm2297, %v3722, %v3677
      %v3746 = vsel %vm2297, %v3724, %v3679
      %v3748 = vsel %vm2297, %v3726, %v3681
      %v3750 = vsel %vm2297, %v3728, %v3683
      %v3752 = vsel %vm2297, %v3730, %v3685
      %v3754 = vsel %vm2297, %v3732, %v3687
      %v3756 = vsel %vm2297, %v3734, %v3689
      %v3758 = vsel %vm2297, %v3736, %v3691
      %v3760 = vsel %vm2297, %v3738, %v3693
      %v3761 = vshrl.u32 %v3740, 16
      %v3763 = vshll.u32 %v3740, 16
      %v3765 = vrot.slane %v3763, 1
      %v3766 = vor.u32 %v3761, %v3765
      %v3767 = vshll.u32 %v3742, 16
      %v3769 = vrot.slane %v3767, 1
      %v3770 = vsel %vm2024, %v3766, %v3769
      %v3771 = vshrl.u32 %v3742, 16
      %v3773 = vor.u32 %v3771, %v3769
      %v3774 = vshll.u32 %v3744, 16
      %v3776 = vrot.slane %v3774, 1
      %v3777 = vsel %vm2024, %v3773, %v3776
      %v3778 = vshrl.u32 %v3744, 16
      %v3780 = vor.u32 %v3778, %v3776
      %v3781 = vshll.u32 %v3746, 16
      %v3783 = vrot.slane %v3781, 1
      %v3784 = vsel %vm2024, %v3780, %v3783
      %v3785 = vshrl.u32 %v3746, 16
      %v3787 = vor.u32 %v3785, %v3783
      %v3788 = vshll.u32 %v3748, 16
      %v3790 = vrot.slane %v3788, 1
      %v3791 = vsel %vm2024, %v3787, %v3790
      %v3792 = vshrl.u32 %v3748, 16
      %v3794 = vor.u32 %v3792, %v3790
      %v3795 = vshll.u32 %v3750, 16
      %v3797 = vrot.slane %v3795, 1
      %v3798 = vsel %vm2024, %v3794, %v3797
      %v3799 = vshrl.u32 %v3750, 16
      %v3801 = vor.u32 %v3799, %v3797
      %v3802 = vshll.u32 %v3752, 16
      %v3804 = vrot.slane %v3802, 1
      %v3805 = vsel %vm2024, %v3801, %v3804
      %v3806 = vshrl.u32 %v3752, 16
      %v3808 = vor.u32 %v3806, %v3804
      %v3809 = vshll.u32 %v3754, 16
      %v3811 = vrot.slane %v3809, 1
      %v3812 = vsel %vm2024, %v3808, %v3811
      %v3813 = vshrl.u32 %v3754, 16
      %v3815 = vor.u32 %v3813, %v3811
      %v3816 = vshll.u32 %v3756, 16
      %v3818 = vrot.slane %v3816, 1
      %v3819 = vsel %vm2024, %v3815, %v3818
      %v3820 = vshrl.u32 %v3756, 16
      %v3822 = vor.u32 %v3820, %v3818
      %v3823 = vshll.u32 %v3758, 16
      %v3825 = vrot.slane %v3823, 1
      %v3826 = vsel %vm2024, %v3822, %v3825
      %v3827 = vshrl.u32 %v3758, 16
      %v3829 = vor.u32 %v3827, %v3825
      %v3830 = vshll.u32 %v3760, 16
      %v3832 = vrot.slane %v3830, 1
      %v3833 = vsel %vm2024, %v3829, %v3832
      %3844 = vst [vmem:[#allocation4 + $0x20] sm:$0xff] %v3770
      %3845 = vst [vmem:[#allocation4 + $0x58] sm:$0xff] %v3777
      %3846 = vst [vmem:[#allocation4 + $0x90] sm:$0xff] %v3784
      %3847 = vst [vmem:[#allocation4 + $0xc8] sm:$0xff] %v3791
      %3848 = vst [vmem:[#allocation4 + $0x100] sm:$0xff] %v3798
      %3849 = vst [vmem:[#allocation4 + $0x138] sm:$0xff] %v3805
      %3850 = vst [vmem:[#allocation4 + $0x170] sm:$0xff] %v3812
      %3851 = vst [vmem:[#allocation4 + $0x1a8] sm:$0xff] %v3819
      %3852 = vst [vmem:[#allocation4 + $0x1e0] sm:$0xff] %v3826
      %3853 = vst [vmem:[#allocation4 + $0x218] sm:$0xff] %v3833
      %v3854 = vld [vmem:[#allocation3 + $0x20] sm:$0xff]
      %v3855 = vld [vmem:[#allocation3 + $0x28] sm:$0xff]
      %v3856 = vld [vmem:[#allocation3 + $0x30] sm:$0xff]
      %v3857 = vld [vmem:[#allocation3 + $0x38] sm:$0xff]
      %v3858 = vld [vmem:[#allocation3 + $0x40] sm:$0xff]
      %v3859 = vld [vmem:[#allocation3 + $0x48] sm:$0xff]
      %v3860 = vld [vmem:[#allocation3 + $0x50] sm:$0xff]
      %v3861 = vld [vmem:[#allocation3 + $0x58] sm:$0xff]
      %v3862 = vld [vmem:[#allocation3 + $0x60] sm:$0xff]
      %v3863 = vld [vmem:[#allocation3 + $0x68] sm:$0xff]
      %v3864 = vld [vmem:[#allocation3 + $0x70] sm:$0x1]
      %v3865 = vld [vmem:[#allocation3 + $0x20] sm:$0xfe]
      %v3866 = vld [vmem:[#allocation3 + $0x70] sm:$0x3]
      %v3868 = vshrl.u32 %v3854, 16
      %v3870 = vshll.u32 %v3854, 16
      %v3872 = vrot.slane %v3870, 1
      %v3873 = vor.u32 %v3868, %v3872
      %v3875 = vshll.u32 %v3855, 16
      %v3877 = vrot.slane %v3875, 1
      %v3878 = vsel %vm2024, %v3873, %v3877
      %v3879 = vshrl.u32 %v3855, 16
      %v3881 = vor.u32 %v3879, %v3877
      %v3883 = vshll.u32 %v3856, 16
      %v3885 = vrot.slane %v3883, 1
      %v3886 = vsel %vm2024, %v3881, %v3885
      %v3887 = vshrl.u32 %v3856, 16
      %v3889 = vor.u32 %v3887, %v3885
      %v3891 = vshll.u32 %v3857, 16
      %v3893 = vrot.slane %v3891, 1
      %v3894 = vsel %vm2024, %v3889, %v3893
      %v3895 = vshrl.u32 %v3857, 16
      %v3897 = vor.u32 %v3895, %v3893
      %v3899 = vshll.u32 %v3858, 16
      %v3901 = vrot.slane %v3899, 1
      %v3902 = vsel %vm2024, %v3897, %v3901
      %v3903 = vshrl.u32 %v3858, 16
      %v3905 = vor.u32 %v3903, %v3901
      %v3907 = vshll.u32 %v3859, 16
      %v3909 = vrot.slane %v3907, 1
      %v3910 = vsel %vm2024, %v3905, %v3909
      %v3911 = vshrl.u32 %v3859, 16
      %v3913 = vor.u32 %v3911, %v3909
      %v3915 = vshll.u32 %v3860, 16
      %v3917 = vrot.slane %v3915, 1
      %v3918 = vsel %vm2024, %v3913, %v3917
      %v3919 = vshrl.u32 %v3860, 16
      %v3921 = vor.u32 %v3919, %v3917
      %v3923 = vshll.u32 %v3861, 16
      %v3925 = vrot.slane %v3923, 1
      %v3926 = vsel %vm2024, %v3921, %v3925
      %v3927 = vshrl.u32 %v3861, 16
      %v3929 = vor.u32 %v3927, %v3925
      %v3931 = vshll.u32 %v3862, 16
      %v3933 = vrot.slane %v3931, 1
      %v3934 = vsel %vm2024, %v3929, %v3933
      %v3935 = vshrl.u32 %v3862, 16
      %v3937 = vor.u32 %v3935, %v3933
      %v3939 = vshll.u32 %v3863, 16
      %v3941 = vrot.slane %v3939, 1
      %v3942 = vsel %vm2024, %v3937, %v3941
      %v3943 = vshrl.u32 %v3863, 16
      %v3945 = vor.u32 %v3943, %v3941
      %v3947 = vshll.u32 %v3864, 16
      %v3949 = vrot.slane %v3947, 1
      %v3950 = vsel %vm2024, %v3945, %v3949
      %3951 = vrot.lane.b32.xlu0 %v3878, 32
      %v3952 = vpop.permute.xlu0 %3951
      %3953 = vrot.lane.b32.xlu0 %v3886, 32
      %v3954 = vpop.permute.xlu0 %3953
      %3955 = vrot.lane.b32.xlu0 %v3894, 32
      %v3956 = vpop.permute.xlu0 %3955
      %3957 = vrot.lane.b32.xlu0 %v3902, 32
      %v3958 = vpop.permute.xlu0 %3957
      %3959 = vrot.lane.b32.xlu0 %v3910, 32
      %v3960 = vpop.permute.xlu0 %3959
      %3961 = vrot.lane.b32.xlu0 %v3918, 32
      %v3962 = vpop.permute.xlu0 %3961
      %3963 = vrot.lane.b32.xlu0 %v3926, 32
      %v3964 = vpop.permute.xlu0 %3963
      %3965 = vrot.lane.b32.xlu0 %v3934, 32
      %v3966 = vpop.permute.xlu0 %3965
      %3967 = vrot.lane.b32.xlu0 %v3942, 32
      %v3968 = vpop.permute.xlu0 %3967
      %3969 = vrot.lane.b32.xlu0 %v3950, 32
      %v3970 = vpop.permute.xlu0 %3969
      %v3982 = vrot.slane %v3865, 1
      %v3983 = vrot.slane %v3855, 1
      %v3984 = vsel %vm2140, %v3982, %v3983
      %v3985 = vrot.slane %v3856, 1
      %v3986 = vsel %vm2140, %v3983, %v3985
      %v3987 = vrot.slane %v3857, 1
      %v3988 = vsel %vm2140, %v3985, %v3987
      %v3989 = vrot.slane %v3858, 1
      %v3990 = vsel %vm2140, %v3987, %v3989
      %v3991 = vrot.slane %v3859, 1
      %v3992 = vsel %vm2140, %v3989, %v3991
      %v3993 = vrot.slane %v3860, 1
      %v3994 = vsel %vm2140, %v3991, %v3993
      %v3995 = vrot.slane %v3861, 1
      %v3996 = vsel %vm2140, %v3993, %v3995
      %v3997 = vrot.slane %v3862, 1
      %v3998 = vsel %vm2140, %v3995, %v3997
      %v3999 = vrot.slane %v3863, 1
      %v4000 = vsel %vm2140, %v3997, %v3999
      %v4001 = vrot.slane %v3864, 1
      %v4002 = vsel %vm2140, %v3999, %v4001
      %4003 = vrot.lane.b32.xlu0 %v3984, 64
      %v4004 = vpop.permute.xlu0 %4003
      %4005 = vrot.lane.b32.xlu0 %v3986, 64
      %v4006 = vpop.permute.xlu0 %4005
      %4007 = vrot.lane.b32.xlu0 %v3988, 64
      %v4008 = vpop.permute.xlu0 %4007
      %4009 = vrot.lane.b32.xlu0 %v3990, 64
      %v4010 = vpop.permute.xlu0 %4009
      %4011 = vrot.lane.b32.xlu0 %v3992, 64
      %v4012 = vpop.permute.xlu0 %4011
      %4013 = vrot.lane.b32.xlu0 %v3994, 64
      %v4014 = vpop.permute.xlu0 %4013
      %4015 = vrot.lane.b32.xlu0 %v3996, 64
      %v4016 = vpop.permute.xlu0 %4015
      %4017 = vrot.lane.b32.xlu0 %v3998, 64
      %v4018 = vpop.permute.xlu0 %4017
      %4019 = vrot.lane.b32.xlu0 %v4000, 64
      %v4020 = vpop.permute.xlu0 %4019
      %4021 = vrot.lane.b32.xlu0 %v4002, 64
      %v4022 = vpop.permute.xlu0 %4021
      %v4024 = vshrl.u32 %v3865, 16
      %v4026 = vrot.slane %v4024, 1
      %v4027 = vshll.u32 %v3865, 16
      %v4029 = vrot.slane %v4027, 2
      %v4030 = vor.u32 %v4026, %v4029
      %v4031 = vrot.slane %v3879, 1
      %v4032 = vrot.slane %v3875, 2
      %v4033 = vor.u32 %v4031, %v4032
      %v4034 = vsel %vm2182, %v4030, %v4033
      %v4035 = vrot.slane %v3887, 1
      %v4036 = vrot.slane %v3883, 2
      %v4037 = vor.u32 %v4035, %v4036
      %v4038 = vsel %vm2182, %v4033, %v4037
      %v4039 = vrot.slane %v3895, 1
      %v4040 = vrot.slane %v3891, 2
      %v4041 = vor.u32 %v4039, %v4040
      %v4042 = vsel %vm2182, %v4037, %v4041
      %v4043 = vrot.slane %v3903, 1
      %v4044 = vrot.slane %v3899, 2
      %v4045 = vor.u32 %v4043, %v4044
      %v4046 = vsel %vm2182, %v4041, %v4045
      %v4047 = vrot.slane %v3911, 1
      %v4048 = vrot.slane %v3907, 2
      %v4049 = vor.u32 %v4047, %v4048
      %v4050 = vsel %vm2182, %v4045, %v4049
      %v4051 = vrot.slane %v3919, 1
      %v4052 = vrot.slane %v3915, 2
      %v4053 = vor.u32 %v4051, %v4052
      %v4054 = vsel %vm2182, %v4049, %v4053
      %v4055 = vrot.slane %v3927, 1
      %v4056 = vrot.slane %v3923, 2
      %v4057 = vor.u32 %v4055, %v4056
      %v4058 = vsel %vm2182, %v4053, %v4057
      %v4059 = vrot.slane %v3935, 1
      %v4060 = vrot.slane %v3931, 2
      %v4061 = vor.u32 %v4059, %v4060
      %v4062 = vsel %vm2182, %v4057, %v4061
      %v4063 = vrot.slane %v3943, 1
      %v4064 = vrot.slane %v3939, 2
      %v4065 = vor.u32 %v4063, %v4064
      %v4066 = vsel %vm2182, %v4061, %v4065
      %v4068 = vshrl.u32 %v3866, 16
      %v4070 = vrot.slane %v4068, 1
      %v4071 = vshll.u32 %v3866, 16
      %v4073 = vrot.slane %v4071, 2
      %v4074 = vor.u32 %v4070, %v4073
      %v4075 = vsel %vm2182, %v4065, %v4074
      %4076 = vrot.lane.b32.xlu0 %v4034, 96
      %v4077 = vpop.permute.xlu0 %4076
      %4078 = vrot.lane.b32.xlu0 %v4038, 96
      %v4079 = vpop.permute.xlu0 %4078
      %4080 = vrot.lane.b32.xlu0 %v4042, 96
      %v4081 = vpop.permute.xlu0 %4080
      %4082 = vrot.lane.b32.xlu0 %v4046, 96
      %v4083 = vpop.permute.xlu0 %4082
      %4084 = vrot.lane.b32.xlu0 %v4050, 96
      %v4085 = vpop.permute.xlu0 %4084
      %4086 = vrot.lane.b32.xlu0 %v4054, 96
      %v4087 = vpop.permute.xlu0 %4086
      %4088 = vrot.lane.b32.xlu0 %v4058, 96
      %v4089 = vpop.permute.xlu0 %4088
      %4090 = vrot.lane.b32.xlu0 %v4062, 96
      %v4091 = vpop.permute.xlu0 %4090
      %4092 = vrot.lane.b32.xlu0 %v4066, 96
      %v4093 = vpop.permute.xlu0 %4092
      %4094 = vrot.lane.b32.xlu0 %v4075, 96
      %v4095 = vpop.permute.xlu0 %4094
      %v4097 = vsel %vm801, %v3854, %v3952
      %v4099 = vsel %vm801, %v3855, %v3954
      %v4101 = vsel %vm801, %v3856, %v3956
      %v4103 = vsel %vm801, %v3857, %v3958
      %v4105 = vsel %vm801, %v3858, %v3960
      %v4107 = vsel %vm801, %v3859, %v3962
      %v4109 = vsel %vm801, %v3860, %v3964
      %v4111 = vsel %vm801, %v3861, %v3966
      %v4113 = vsel %vm801, %v3862, %v3968
      %v4115 = vsel %vm801, %v3863, %v3970
      %v4117 = vsel %vm2276, %v4097, %v4004
      %v4119 = vsel %vm2276, %v4099, %v4006
      %v4121 = vsel %vm2276, %v4101, %v4008
      %v4123 = vsel %vm2276, %v4103, %v4010
      %v4125 = vsel %vm2276, %v4105, %v4012
      %v4127 = vsel %vm2276, %v4107, %v4014
      %v4129 = vsel %vm2276, %v4109, %v4016
      %v4131 = vsel %vm2276, %v4111, %v4018
      %v4133 = vsel %vm2276, %v4113, %v4020
      %v4135 = vsel %vm2276, %v4115, %v4022
      %v4137 = vsel %vm2297, %v4117, %v4077
      %v4140 = vsel %vm2297, %v4119, %v4079
      %v4143 = vsel %vm2297, %v4121, %v4081
      %v4146 = vsel %vm2297, %v4123, %v4083
      %v4149 = vsel %vm2297, %v4125, %v4085
      %v4152 = vsel %vm2297, %v4127, %v4087
      %v4155 = vsel %vm2297, %v4129, %v4089
      %v4158 = vsel %vm2297, %v4131, %v4091
      %v4161 = vsel %vm2297, %v4133, %v4093
      %v4164 = vsel %vm2297, %v4135, %v4095
      %4166 = vst [vmem:[#allocation4 + $0x28] sm:$0xff] %v4137
      %4167 = vst [vmem:[#allocation4 + $0x60] sm:$0xff] %v4140
      %4168 = vst [vmem:[#allocation4 + $0x98] sm:$0xff] %v4143
      %4169 = vst [vmem:[#allocation4 + $0xd0] sm:$0xff] %v4146
      %4170 = vst [vmem:[#allocation4 + $0x108] sm:$0xff] %v4149
      %4171 = vst [vmem:[#allocation4 + $0x140] sm:$0xff] %v4152
      %4172 = vst [vmem:[#allocation4 + $0x178] sm:$0xff] %v4155
      %4173 = vst [vmem:[#allocation4 + $0x1b0] sm:$0xff] %v4158
      %4174 = vst [vmem:[#allocation4 + $0x1e8] sm:$0xff] %v4161
      %4175 = vst [vmem:[#allocation4 + $0x220] sm:$0xff] %v4164
      %v4176 = vld [vmem:[#allocation3 + $0x20] sm:$0xfc]
      %v4177 = vld [vmem:[#allocation3 + $0x28] sm:$0xff]
      %v4178 = vld [vmem:[#allocation3 + $0x30] sm:$0xff]
      %v4179 = vld [vmem:[#allocation3 + $0x38] sm:$0xff]
      %v4180 = vld [vmem:[#allocation3 + $0x40] sm:$0xff]
      %v4181 = vld [vmem:[#allocation3 + $0x48] sm:$0xff]
      %v4182 = vld [vmem:[#allocation3 + $0x50] sm:$0xff]
      %v4183 = vld [vmem:[#allocation3 + $0x58] sm:$0xff]
      %v4184 = vld [vmem:[#allocation3 + $0x60] sm:$0xff]
      %v4185 = vld [vmem:[#allocation3 + $0x68] sm:$0xff]
      %v4186 = vld [vmem:[#allocation3 + $0x70] sm:$0x3]
      %v4189 = vsel %vm801, %v4176, 0
      %v4191 = vsel %vm801, %v4177, 0
      %v4193 = vsel %vm801, %v4178, 0
      %v4195 = vsel %vm801, %v4179, 0
      %v4197 = vsel %vm801, %v4180, 0
      %v4199 = vsel %vm801, %v4181, 0
      %v4201 = vsel %vm801, %v4182, 0
      %v4203 = vsel %vm801, %v4183, 0
      %v4205 = vsel %vm801, %v4184, 0
      %v4207 = vsel %vm801, %v4185, 0
      %v4209 = vsel %vm801, %v4186, 0
      %v4210 = vsel %vm2276, %v4189, 0
      %v4211 = vsel %vm2276, %v4191, 0
      %v4212 = vsel %vm2276, %v4193, 0
      %v4213 = vsel %vm2276, %v4195, 0
      %v4214 = vsel %vm2276, %v4197, 0
      %v4215 = vsel %vm2276, %v4199, 0
      %v4216 = vsel %vm2276, %v4201, 0
      %v4217 = vsel %vm2276, %v4203, 0
      %v4218 = vsel %vm2276, %v4205, 0
      %v4219 = vsel %vm2276, %v4207, 0
      %v4220 = vsel %vm2276, %v4209, 0
      %v4221 = vsel %vm2297, %v4210, 0
      %v4222 = vsel %vm2297, %v4211, 0
      %v4223 = vsel %vm2297, %v4212, 0
      %v4224 = vsel %vm2297, %v4213, 0
      %v4225 = vsel %vm2297, %v4214, 0
      %v4226 = vsel %vm2297, %v4215, 0
      %v4227 = vsel %vm2297, %v4216, 0
      %v4228 = vsel %vm2297, %v4217, 0
      %v4229 = vsel %vm2297, %v4218, 0
      %v4230 = vsel %vm2297, %v4219, 0
      %v4231 = vsel %vm2297, %v4220, 0
      %v4243 = vrot.slane %v4221, 2
      %v4244 = vrot.slane %v4222, 2
      %v4245 = vsel %vm2646, %v4243, %v4244
      %v4246 = vrot.slane %v4223, 2
      %v4247 = vsel %vm2646, %v4244, %v4246
      %v4248 = vrot.slane %v4224, 2
      %v4249 = vsel %vm2646, %v4246, %v4248
      %v4250 = vrot.slane %v4225, 2
      %v4251 = vsel %vm2646, %v4248, %v4250
      %v4252 = vrot.slane %v4226, 2
      %v4253 = vsel %vm2646, %v4250, %v4252
      %v4254 = vrot.slane %v4227, 2
      %v4255 = vsel %vm2646, %v4252, %v4254
      %v4256 = vrot.slane %v4228, 2
      %v4257 = vsel %vm2646, %v4254, %v4256
      %v4258 = vrot.slane %v4229, 2
      %v4259 = vsel %vm2646, %v4256, %v4258
      %v4260 = vrot.slane %v4230, 2
      %v4261 = vsel %vm2646, %v4258, %v4260
      %v4262 = vrot.slane %v4231, 2
      %v4263 = vsel %vm2646, %v4260, %v4262
      %4274 = vst [vmem:[#allocation4 + $0x30] sm:$0xff] %v4245
      %4275 = vst [vmem:[#allocation4 + $0x68] sm:$0xff] %v4247
      %4276 = vst [vmem:[#allocation4 + $0xa0] sm:$0xff] %v4249
      %4277 = vst [vmem:[#allocation4 + $0xd8] sm:$0xff] %v4251
      %4278 = vst [vmem:[#allocation4 + $0x110] sm:$0xff] %v4253
      %4279 = vst [vmem:[#allocation4 + $0x148] sm:$0xff] %v4255
      %4280 = vst [vmem:[#allocation4 + $0x180] sm:$0xff] %v4257
      %4281 = vst [vmem:[#allocation4 + $0x1b8] sm:$0xff] %v4259
      %4282 = vst [vmem:[#allocation4 + $0x1f0] sm:$0xff] %v4261
      %4283 = vst [vmem:[#allocation4 + $0x228] sm:$0xff] %v4263
      %v4284 = vld [vmem:[#allocation4] sm:$0xff]
      %v4285 = vld [vmem:[#allocation4 + $0x8] sm:$0xff]
      %v4286 = vld [vmem:[#allocation4 + $0x10] sm:$0xff]
      %v4287 = vld [vmem:[#allocation4 + $0x18] sm:$0xff]
      %v4288 = vld [vmem:[#allocation4 + $0x20] sm:$0xff]
      %v4289 = vld [vmem:[#allocation4 + $0x28] sm:$0xff]
      %v4290 = vld [vmem:[#allocation4 + $0x30] sm:$0xff]
      %v4291 = vld [vmem:[#allocation4 + $0x38] sm:$0xff]
      %v4292 = vld [vmem:[#allocation4 + $0x40] sm:$0xff]
      %v4293 = vld [vmem:[#allocation4 + $0x48] sm:$0xff]
      %v4294 = vld [vmem:[#allocation4 + $0x50] sm:$0xff]
      %v4295 = vld [vmem:[#allocation4 + $0x58] sm:$0xff]
      %v4296 = vld [vmem:[#allocation4 + $0x60] sm:$0xff]
      %v4297 = vld [vmem:[#allocation4 + $0x68] sm:$0xff]
      %v4298 = vld [vmem:[#allocation4 + $0x70] sm:$0xff]
      %v4299 = vld [vmem:[#allocation4 + $0x78] sm:$0xff]
      %v4300 = vld [vmem:[#allocation4 + $0x80] sm:$0xff]
      %v4301 = vld [vmem:[#allocation4 + $0x88] sm:$0xff]
      %v4302 = vld [vmem:[#allocation4 + $0x90] sm:$0xff]
      %v4303 = vld [vmem:[#allocation4 + $0x98] sm:$0xff]
      %v4304 = vld [vmem:[#allocation4 + $0xa0] sm:$0xff]
      %v4305 = vld [vmem:[#allocation4 + $0xa8] sm:$0xff]
      %v4306 = vld [vmem:[#allocation4 + $0xb0] sm:$0xff]
      %v4307 = vld [vmem:[#allocation4 + $0xb8] sm:$0xff]
      %v4308 = vld [vmem:[#allocation4 + $0xc0] sm:$0xff]
      %v4309 = vld [vmem:[#allocation4 + $0xc8] sm:$0xff]
      %v4310 = vld [vmem:[#allocation4 + $0xd0] sm:$0xff]
      %v4311 = vld [vmem:[#allocation4 + $0xd8] sm:$0xff]
      %v4312 = vld [vmem:[#allocation4 + $0xe0] sm:$0xff]
      %v4313 = vld [vmem:[#allocation4 + $0xe8] sm:$0xff]
      %v4314 = vld [vmem:[#allocation4 + $0xf0] sm:$0xff]
      %v4315 = vld [vmem:[#allocation4 + $0xf8] sm:$0xff]
      %v4316 = vld [vmem:[#allocation4 + $0x100] sm:$0xff]
      %v4317 = vld [vmem:[#allocation4 + $0x108] sm:$0xff]
      %v4318 = vld [vmem:[#allocation4 + $0x110] sm:$0xff]
      %v4319 = vld [vmem:[#allocation4 + $0x118] sm:$0xff]
      %v4320 = vld [vmem:[#allocation4 + $0x120] sm:$0xff]
      %v4321 = vld [vmem:[#allocation4 + $0x128] sm:$0xff]
      %v4322 = vld [vmem:[#allocation4 + $0x130] sm:$0xff]
      %v4323 = vld [vmem:[#allocation4 + $0x138] sm:$0xff]
      %v4324 = vld [vmem:[#allocation4 + $0x140] sm:$0xff]
      %v4325 = vld [vmem:[#allocation4 + $0x148] sm:$0xff]
      %v4326 = vld [vmem:[#allocation4 + $0x150] sm:$0xff]
      %v4327 = vld [vmem:[#allocation4 + $0x158] sm:$0xff]
      %v4328 = vld [vmem:[#allocation4 + $0x160] sm:$0xff]
      %v4329 = vld [vmem:[#allocation4 + $0x168] sm:$0xff]
      %v4330 = vld [vmem:[#allocation4 + $0x170] sm:$0xff]
      %v4331 = vld [vmem:[#allocation4 + $0x178] sm:$0xff]
      %v4332 = vld [vmem:[#allocation4 + $0x180] sm:$0xff]
      %v4333 = vld [vmem:[#allocation4 + $0x188] sm:$0xff]
      %v4334 = vld [vmem:[#allocation4 + $0x190] sm:$0xff]
      %v4335 = vld [vmem:[#allocation4 + $0x198] sm:$0xff]
      %v4336 = vld [vmem:[#allocation4 + $0x1a0] sm:$0xff]
      %v4337 = vld [vmem:[#allocation4 + $0x1a8] sm:$0xff]
      %v4338 = vld [vmem:[#allocation4 + $0x1b0] sm:$0xff]
      %v4339 = vld [vmem:[#allocation4 + $0x1b8] sm:$0xff]
      %v4340 = vld [vmem:[#allocation4 + $0x1c0] sm:$0xff]
      %v4341 = vld [vmem:[#allocation4 + $0x1c8] sm:$0xff]
      %v4342 = vld [vmem:[#allocation4 + $0x1d0] sm:$0xff]
      %v4343 = vld [vmem:[#allocation4 + $0x1d8] sm:$0xff]
      %v4344 = vld [vmem:[#allocation4 + $0x1e0] sm:$0xff]
      %v4345 = vld [vmem:[#allocation4 + $0x1e8] sm:$0xff]
      %v4346 = vld [vmem:[#allocation4 + $0x1f0] sm:$0xff]
      %v4347 = vld [vmem:[#allocation4 + $0x1f8] sm:$0xff]
      %v4348 = vld [vmem:[#allocation4 + $0x200] sm:$0xff]
      %v4349 = vld [vmem:[#allocation4 + $0x208] sm:$0xff]
      %v4350 = vld [vmem:[#allocation4 + $0x210] sm:$0xff]
      %v4351 = vld [vmem:[#allocation4 + $0x218] sm:$0xff]
      %v4352 = vld [vmem:[#allocation4 + $0x220] sm:$0xff]
      %v4353 = vld [vmem:[#allocation4 + $0x228] sm:$0xff]
      %v4354 = vld [vmem:[%s3] sm:$0xf]
      %v4355 = vld [vmem:[%s3 + $0x4] sm:$0xf]
      %v4356 = vld [vmem:[%s3 + $0x8] sm:$0xf]
      %v4357 = vld [vmem:[%s3 + $0xc] sm:$0xf]
      %v4358 = vld [vmem:[%s3 + $0x10] sm:$0xf]
      %v4359 = vld [vmem:[%s3 + $0x14] sm:$0xf]
      %v4360 = vld [vmem:[%s3 + $0x18] sm:$0xf]
      %v4361 = vld [vmem:[%s3 + $0x1c] sm:$0xf]
      %v4362 = vld [vmem:[%s3 + $0x20] sm:$0xf]
      %v4363 = vld [vmem:[%s3 + $0x24] sm:$0xf]
      %v4364 = vld [vmem:[%s3 + $0x28] sm:$0xf]
      %v4365 = vld [vmem:[%s3 + $0x2c] sm:$0xf]
      %v4366 = vld [vmem:[%s3 + $0x30] sm:$0xf]
      %v4367 = vld [vmem:[%s3 + $0x34] sm:$0xf]
      %v4368 = vld [vmem:[%s3 + $0x38] sm:$0xf]
      %v4369 = vld [vmem:[%s3 + $0x3c] sm:$0xf]
      %v4370 = vld [vmem:[%s3 + $0x40] sm:$0xf]
      %v4371 = vld [vmem:[%s3 + $0x44] sm:$0xf]
      %v4372 = vld [vmem:[%s3 + $0x48] sm:$0xf]
      %v4373 = vld [vmem:[%s3 + $0x4c] sm:$0xf]
      %v4374 = vld [vmem:[%s3 + $0x50] sm:$0xf]
      %v4375 = vld [vmem:[%s3 + $0x54] sm:$0xf]
      %v4376 = vld [vmem:[%s3 + $0x58] sm:$0xf]
      %v4377 = vld [vmem:[%s3 + $0x5c] sm:$0xf]
      %v4378 = vld [vmem:[%s3 + $0x60] sm:$0xf]
      %v4379 = vld [vmem:[%s3 + $0x64] sm:$0xf]
      %v4380 = vld [vmem:[%s3 + $0x68] sm:$0xf]
      %v4381 = vld [vmem:[%s3 + $0x6c] sm:$0xf]
      %v4382 = vld [vmem:[%s3 + $0x70] sm:$0xf]
      %v4383 = vld [vmem:[%s3 + $0x74] sm:$0xf]
      %v4384 = vld [vmem:[%s3 + $0x78] sm:$0xf]
      %v4385 = vld [vmem:[%s3 + $0x7c] sm:$0xf]
      %v4386 = vld [vmem:[%s3 + $0x80] sm:$0xf]
      %v4387 = vld [vmem:[%s3 + $0x84] sm:$0xf]
      %v4388 = vld [vmem:[%s3 + $0x88] sm:$0xf]
      %v4389 = vld [vmem:[%s3 + $0x8c] sm:$0xf]
      %v4390 = vld [vmem:[%s3 + $0x90] sm:$0xf]
      %v4391 = vld [vmem:[%s3 + $0x94] sm:$0xf]
      %v4392 = vld [vmem:[%s3 + $0x98] sm:$0xf]
      %v4393 = vld [vmem:[%s3 + $0x9c] sm:$0xf]
      %v4394 = vld [vmem:[%s3 + $0xa0] sm:$0xf]
      %v4395 = vld [vmem:[%s3 + $0xa4] sm:$0xf]
      %v4396 = vld [vmem:[%s3 + $0xa8] sm:$0xf]
      %v4397 = vld [vmem:[%s3 + $0xac] sm:$0xf]
      %v4398 = vld [vmem:[%s3 + $0xb0] sm:$0xf]
      %v4399 = vld [vmem:[%s3 + $0xb4] sm:$0xf]
      %v4400 = vld [vmem:[%s3 + $0xb8] sm:$0xf]
      %v4401 = vld [vmem:[%s3 + $0xbc] sm:$0xf]
      %v4402 = vld [vmem:[%s3 + $0xc0] sm:$0xf]
      %v4403 = vld [vmem:[%s3 + $0xc4] sm:$0xf]
      %v4404 = vld [vmem:[%s3 + $0xc8] sm:$0xf]
      %v4405 = vld [vmem:[%s3 + $0xcc] sm:$0xf]
      %v4406 = vld [vmem:[%s3 + $0xd0] sm:$0xf]
      %v4407 = vld [vmem:[%s3 + $0xd4] sm:$0xf]
      %v4408 = vld [vmem:[%s3 + $0xd8] sm:$0xf]
      %v4409 = vld [vmem:[%s3 + $0xdc] sm:$0xf]
      %v4410 = vld [vmem:[%s3 + $0xe0] sm:$0xf]
      %v4411 = vld [vmem:[%s3 + $0xe4] sm:$0xf]
      %v4412 = vld [vmem:[%s3 + $0xe8] sm:$0xf]
      %v4413 = vld [vmem:[%s3 + $0xec] sm:$0xf]
      %v4414 = vld [vmem:[%s3 + $0xf0] sm:$0xf]
      %v4415 = vld [vmem:[%s3 + $0xf4] sm:$0xf]
      %v4416 = vld [vmem:[%s3 + $0xf8] sm:$0xf]
      %v4417 = vld [vmem:[%s3 + $0xfc] sm:$0xf]
      %v4418 = vld [vmem:[%s3 + $0x100] sm:$0xf]
      %v4419 = vld [vmem:[%s3 + $0x104] sm:$0xf]
      %v4420 = vld [vmem:[%s3 + $0x108] sm:$0xf]
      %v4421 = vld [vmem:[%s3 + $0x10c] sm:$0xf]
      %v4422 = vld [vmem:[%s3 + $0x110] sm:$0xf]
      %v4423 = vld [vmem:[%s3 + $0x114] sm:$0xf]
      %v4424 = vld [vmem:[%s3 + $0x118] sm:$0xf]
      %v4425 = vld [vmem:[%s3 + $0x11c] sm:$0xf]
      %v4426 = vld [vmem:[%s3 + $0x120] sm:$0xf]
      %v4427 = vld [vmem:[%s3 + $0x124] sm:$0xf]
      %v4428 = vld [vmem:[%s3 + $0x128] sm:$0xf]
      %v4429 = vld [vmem:[%s3 + $0x12c] sm:$0xf]
      %v4430 = vld [vmem:[%s3 + $0x130] sm:$0xf]
      %v4431 = vld [vmem:[%s3 + $0x134] sm:$0xf]
      %v4432 = vld [vmem:[%s3 + $0x138] sm:$0xf]
      %v4433 = vld [vmem:[%s3 + $0x13c] sm:$0xf]
      %v4434 = vld [vmem:[%s3 + $0x140] sm:$0xf]
      %v4435 = vld [vmem:[%s3 + $0x144] sm:$0xf]
      %v4436 = vld [vmem:[%s3 + $0x148] sm:$0xf]
      %v4437 = vld [vmem:[%s3 + $0x14c] sm:$0xf]
      %v4438 = vld [vmem:[%s3 + $0x150] sm:$0xf]
      %v4439 = vld [vmem:[%s3 + $0x154] sm:$0xf]
      %v4440 = vld [vmem:[%s3 + $0x158] sm:$0xf]
      %v4441 = vld [vmem:[%s3 + $0x15c] sm:$0xf]
      %v4442 = vld [vmem:[%s3 + $0x160] sm:$0xf]
      %v4443 = vld [vmem:[%s3 + $0x164] sm:$0xf]
      %v4444 = vld [vmem:[%s3 + $0x168] sm:$0xf]
      %v4445 = vld [vmem:[%s3 + $0x16c] sm:$0xf]
      %v4446 = vld [vmem:[%s3 + $0x170] sm:$0xf]
      %v4447 = vld [vmem:[%s3 + $0x174] sm:$0xf]
      %v4448 = vld [vmem:[%s3 + $0x178] sm:$0xf]
      %v4449 = vld [vmem:[%s3 + $0x17c] sm:$0xf]
      %v4450 = vld [vmem:[%s3 + $0x180] sm:$0xf]
      %v4451 = vld [vmem:[%s3 + $0x184] sm:$0xf]
      %v4452 = vld [vmem:[%s3 + $0x188] sm:$0xf]
      %v4453 = vld [vmem:[%s3 + $0x18c] sm:$0xf]
      %v4454 = vld [vmem:[%s3 + $0x190] sm:$0xf]
      %v4455 = vld [vmem:[%s3 + $0x194] sm:$0xf]
      %v4456 = vld [vmem:[%s3 + $0x198] sm:$0xf]
      %v4457 = vld [vmem:[%s3 + $0x19c] sm:$0xf]
      %v4458 = vld [vmem:[%s3 + $0x1a0] sm:$0xf]
      %v4459 = vld [vmem:[%s3 + $0x1a4] sm:$0xf]
      %v4460 = vld [vmem:[%s3 + $0x1a8] sm:$0xf]
      %v4461 = vld [vmem:[%s3 + $0x1ac] sm:$0xf]
      %v4462 = vld [vmem:[%s3 + $0x1b0] sm:$0xf]
      %v4463 = vld [vmem:[%s3 + $0x1b4] sm:$0xf]
      %v4464 = vld [vmem:[%s3 + $0x1b8] sm:$0xf]
      %v4465 = vld [vmem:[%s3 + $0x1bc] sm:$0xf]
      %v4466 = vld [vmem:[%s4] sm:$0x1]
      %v4468 = vlaneseq
      %v4469 = vshrl.u32 %v4468, 7
      %v4470 = vsub.s32 0, %v4469
      %v4471 = vrot.slane %v4466, %v4470
      %v4585 = vunpack.c.l.b16 %v4354
      %v4586 = vunpack.c.l.b16 %v4355
      %v4587 = vunpack.c.l.b16 %v4356
      %v4588 = vunpack.c.l.b16 %v4357
      %v4589 = vunpack.c.l.b16 %v4358
      %v4590 = vunpack.c.l.b16 %v4359
      %v4591 = vunpack.c.l.b16 %v4360
      %v4592 = vunpack.c.l.b16 %v4361
      %v4593 = vunpack.c.l.b16 %v4362
      %v4594 = vunpack.c.l.b16 %v4363
      %v4595 = vunpack.c.l.b16 %v4364
      %v4596 = vunpack.c.l.b16 %v4365
      %v4597 = vunpack.c.l.b16 %v4366
      %v4598 = vunpack.c.l.b16 %v4367
      %v4599 = vunpack.c.l.b16 %v4368
      %v4600 = vunpack.c.l.b16 %v4369
      %v4601 = vunpack.c.l.b16 %v4370
      %v4602 = vunpack.c.l.b16 %v4371
      %v4603 = vunpack.c.l.b16 %v4372
      %v4604 = vunpack.c.l.b16 %v4373
      %v4605 = vunpack.c.l.b16 %v4374
      %v4606 = vunpack.c.l.b16 %v4375
      %v4607 = vunpack.c.l.b16 %v4376
      %v4608 = vunpack.c.l.b16 %v4377
      %v4609 = vunpack.c.l.b16 %v4378
      %v4610 = vunpack.c.l.b16 %v4379
      %v4611 = vunpack.c.l.b16 %v4380
      %v4612 = vunpack.c.l.b16 %v4381
      %v4613 = vunpack.c.l.b16 %v4382
      %v4614 = vunpack.c.l.b16 %v4383
      %v4615 = vunpack.c.l.b16 %v4384
      %v4616 = vunpack.c.l.b16 %v4385
      %v4617 = vunpack.c.l.b16 %v4386
      %v4618 = vunpack.c.l.b16 %v4387
      %v4619 = vunpack.c.l.b16 %v4388
      %v4620 = vunpack.c.l.b16 %v4389
      %v4621 = vunpack.c.l.b16 %v4390
      %v4622 = vunpack.c.l.b16 %v4391
      %v4623 = vunpack.c.l.b16 %v4392
      %v4624 = vunpack.c.l.b16 %v4393
      %v4625 = vunpack.c.l.b16 %v4394
      %v4626 = vunpack.c.l.b16 %v4395
      %v4627 = vunpack.c.l.b16 %v4396
      %v4628 = vunpack.c.l.b16 %v4397
      %v4629 = vunpack.c.l.b16 %v4398
      %v4630 = vunpack.c.l.b16 %v4399
      %v4631 = vunpack.c.l.b16 %v4400
      %v4632 = vunpack.c.l.b16 %v4401
      %v4633 = vunpack.c.l.b16 %v4402
      %v4634 = vunpack.c.l.b16 %v4403
      %v4635 = vunpack.c.l.b16 %v4404
      %v4636 = vunpack.c.l.b16 %v4405
      %v4637 = vunpack.c.l.b16 %v4406
      %v4638 = vunpack.c.l.b16 %v4407
      %v4639 = vunpack.c.l.b16 %v4408
      %v4640 = vunpack.c.l.b16 %v4409
      %v4641 = vunpack.c.l.b16 %v4410
      %v4642 = vunpack.c.l.b16 %v4411
      %v4643 = vunpack.c.l.b16 %v4412
      %v4644 = vunpack.c.l.b16 %v4413
      %v4645 = vunpack.c.l.b16 %v4414
      %v4646 = vunpack.c.l.b16 %v4415
      %v4647 = vunpack.c.l.b16 %v4416
      %v4648 = vunpack.c.l.b16 %v4417
      %v4649 = vunpack.c.l.b16 %v4418
      %v4650 = vunpack.c.l.b16 %v4419
      %v4651 = vunpack.c.l.b16 %v4420
      %v4652 = vunpack.c.l.b16 %v4421
      %v4653 = vunpack.c.l.b16 %v4422
      %v4654 = vunpack.c.l.b16 %v4423
      %v4655 = vunpack.c.l.b16 %v4424
      %v4656 = vunpack.c.l.b16 %v4425
      %v4657 = vunpack.c.l.b16 %v4426
      %v4658 = vunpack.c.l.b16 %v4427
      %v4659 = vunpack.c.l.b16 %v4428
      %v4660 = vunpack.c.l.b16 %v4429
      %v4661 = vunpack.c.l.b16 %v4430
      %v4662 = vunpack.c.l.b16 %v4431
      %v4663 = vunpack.c.l.b16 %v4432
      %v4664 = vunpack.c.l.b16 %v4433
      %v4665 = vunpack.c.l.b16 %v4434
      %v4666 = vunpack.c.l.b16 %v4435
      %v4667 = vunpack.c.l.b16 %v4436
      %v4668 = vunpack.c.l.b16 %v4437
      %v4669 = vunpack.c.l.b16 %v4438
      %v4670 = vunpack.c.l.b16 %v4439
      %v4671 = vunpack.c.l.b16 %v4440
      %v4672 = vunpack.c.l.b16 %v4441
      %v4673 = vunpack.c.l.b16 %v4442
      %v4674 = vunpack.c.l.b16 %v4443
      %v4675 = vunpack.c.l.b16 %v4444
      %v4676 = vunpack.c.l.b16 %v4445
      %v4677 = vunpack.c.l.b16 %v4446
      %v4678 = vunpack.c.l.b16 %v4447
      %v4679 = vunpack.c.l.b16 %v4448
      %v4680 = vunpack.c.l.b16 %v4449
      %v4681 = vunpack.c.l.b16 %v4450
      %v4682 = vunpack.c.l.b16 %v4451
      %v4683 = vunpack.c.l.b16 %v4452
      %v4684 = vunpack.c.l.b16 %v4453
      %v4685 = vunpack.c.l.b16 %v4454
      %v4686 = vunpack.c.l.b16 %v4455
      %v4687 = vunpack.c.l.b16 %v4456
      %v4688 = vunpack.c.l.b16 %v4457
      %v4689 = vunpack.c.l.b16 %v4458
      %v4690 = vunpack.c.l.b16 %v4459
      %v4691 = vunpack.c.l.b16 %v4460
      %v4692 = vunpack.c.l.b16 %v4461
      %v4693 = vunpack.c.l.b16 %v4462
      %v4694 = vunpack.c.l.b16 %v4463
      %v4695 = vunpack.c.l.b16 %v4464
      %v4696 = vunpack.c.l.b16 %v4465
      %v4697 = vpack.c.b16 %v4586, %v4585
      %v4698 = vpack.c.b16 %v4588, %v4587
      %v4699 = vpack.c.b16 %v4590, %v4589
      %v4700 = vpack.c.b16 %v4592, %v4591
      %v4701 = vpack.c.b16 %v4594, %v4593
      %v4702 = vpack.c.b16 %v4596, %v4595
      %v4703 = vpack.c.b16 %v4598, %v4597
      %v4704 = vpack.c.b16 %v4600, %v4599
      %v4705 = vpack.c.b16 %v4602, %v4601
      %v4706 = vpack.c.b16 %v4604, %v4603
      %v4707 = vpack.c.b16 %v4606, %v4605
      %v4708 = vpack.c.b16 %v4608, %v4607
      %v4709 = vpack.c.b16 %v4610, %v4609
      %v4710 = vpack.c.b16 %v4612, %v4611
      %v4711 = vpack.c.b16 %v4614, %v4613
      %v4712 = vpack.c.b16 %v4616, %v4615
      %v4713 = vpack.c.b16 %v4618, %v4617
      %v4714 = vpack.c.b16 %v4620, %v4619
      %v4715 = vpack.c.b16 %v4622, %v4621
      %v4716 = vpack.c.b16 %v4624, %v4623
      %v4717 = vpack.c.b16 %v4626, %v4625
      %v4718 = vpack.c.b16 %v4628, %v4627
      %v4719 = vpack.c.b16 %v4630, %v4629
      %v4720 = vpack.c.b16 %v4632, %v4631
      %v4721 = vpack.c.b16 %v4634, %v4633
      %v4722 = vpack.c.b16 %v4636, %v4635
      %v4723 = vpack.c.b16 %v4638, %v4637
      %v4724 = vpack.c.b16 %v4640, %v4639
      %v4725 = vpack.c.b16 %v4642, %v4641
      %v4726 = vpack.c.b16 %v4644, %v4643
      %v4727 = vpack.c.b16 %v4646, %v4645
      %v4728 = vpack.c.b16 %v4648, %v4647
      %v4729 = vpack.c.b16 %v4650, %v4649
      %v4730 = vpack.c.b16 %v4652, %v4651
      %v4731 = vpack.c.b16 %v4654, %v4653
      %v4732 = vpack.c.b16 %v4656, %v4655
      %v4733 = vpack.c.b16 %v4658, %v4657
      %v4734 = vpack.c.b16 %v4660, %v4659
      %v4735 = vpack.c.b16 %v4662, %v4661
      %v4736 = vpack.c.b16 %v4664, %v4663
      %v4737 = vpack.c.b16 %v4666, %v4665
      %v4738 = vpack.c.b16 %v4668, %v4667
      %v4739 = vpack.c.b16 %v4670, %v4669
      %v4740 = vpack.c.b16 %v4672, %v4671
      %v4741 = vpack.c.b16 %v4674, %v4673
      %v4742 = vpack.c.b16 %v4676, %v4675
      %v4743 = vpack.c.b16 %v4678, %v4677
      %v4744 = vpack.c.b16 %v4680, %v4679
      %v4745 = vpack.c.b16 %v4682, %v4681
      %v4746 = vpack.c.b16 %v4684, %v4683
      %v4747 = vpack.c.b16 %v4686, %v4685
      %v4748 = vpack.c.b16 %v4688, %v4687
      %v4749 = vpack.c.b16 %v4690, %v4689
      %v4750 = vpack.c.b16 %v4692, %v4691
      %v4751 = vpack.c.b16 %v4694, %v4693
      %v4752 = vpack.c.b16 %v4696, %v4695
      %4809 = vmatprep.subr.bf16.mxu0 0
      %4810 = vmatpush1.bf16.msra.mxu0 %v4697
      %4811 = vmatprep.subr.bf16.mxu0 0
      %4812 = vmatpush1.bf16.msra.mxu0 %v4698
      %4813 = vmatprep.subr.bf16.mxu0 0
      %4814 = vmatpush1.bf16.msra.mxu0 %v4699
      %4815 = vmatprep.subr.bf16.mxu0 0
      %4816 = vmatpush1.bf16.msra.mxu0 %v4700
      %4817 = vmatprep.subr.bf16.mxu0 0
      %4818 = vmatpush1.bf16.msra.mxu0 %v4701
      %4819 = vmatprep.subr.bf16.mxu0 0
      %4820 = vmatpush1.bf16.msra.mxu0 %v4702
      %4821 = vmatprep.subr.bf16.mxu0 0
      %4822 = vmatpush1.bf16.msra.mxu0 %v4703
      %4823 = vmatprep.subr.bf16.mxu0 0
      %4824 = vmatpush1.bf16.msra.mxu0 %v4704
      %4825 = vmatprep.subr.bf16.mxu0 0
      %4826 = vmatpush1.bf16.msra.mxu0 %v4705
      %4827 = vmatprep.subr.bf16.mxu0 0
      %4828 = vmatpush1.bf16.msra.mxu0 %v4706
      %4829 = vmatprep.subr.bf16.mxu0 0
      %4830 = vmatpush1.bf16.msra.mxu0 %v4707
      %4831 = vmatprep.subr.bf16.mxu0 0
      %4832 = vmatpush1.bf16.msra.mxu0 %v4708
      %4833 = vmatprep.subr.bf16.mxu0 0
      %4834 = vmatpush1.bf16.msra.mxu0 %v4709
      %4835 = vmatprep.subr.bf16.mxu0 0
      %4836 = vmatpush1.bf16.msra.mxu0 %v4710
      %4837 = vmatprep.subr.bf16.mxu0 0
      %4838 = vmatpush1.bf16.msra.mxu0 %v4711
      %4839 = vmatprep.subr.bf16.mxu0 0
      %4840 = vmatpush1.bf16.msra.mxu0 %v4712
      %4841 = vmatprep.mubr.bf16.mxu0 %v4285
      %4842 = vmatmul.mubr.bf16.gmra.mrb[0].mxu0 %v4284
      %v4843 = vpop.f32.mrb[0].mxu0
      %v4844 = vadd.f32 %v4471, %v4843
      %v4845 = vpop.f32.mrb[0].mxu0
      %v4846 = vpop.f32.mrb[0].mxu0
      %v4847 = vadd.f32 %v4471, %v4846
      %v4848 = vpop.f32.mrb[0].mxu0
      %4849 = vmatprep.mubr.bf16.mxu0 %v4292
      %4850 = vmatmul.mubr.bf16.gmra.mrb[0].mxu0 %v4291
      %v4851 = vpop.f32.mrb[0].mxu0
      %v4852 = vadd.f32 %v4471, %v4851
      %v4853 = vpop.f32.mrb[0].mxu0
      %v4854 = vpop.f32.mrb[0].mxu0
      %v4855 = vadd.f32 %v4471, %v4854
      %v4856 = vpop.f32.mrb[0].mxu0
      %4857 = vmatprep.mubr.bf16.mxu0 %v4299
      %4858 = vmatmul.mubr.bf16.gmra.mrb[0].mxu0 %v4298
      %v4859 = vpop.f32.mrb[0].mxu0
      %v4860 = vadd.f32 %v4471, %v4859
      %v4861 = vpop.f32.mrb[0].mxu0
      %v4862 = vpop.f32.mrb[0].mxu0
      %v4863 = vadd.f32 %v4471, %v4862
      %v4864 = vpop.f32.mrb[0].mxu0
      %4865 = vmatprep.mubr.bf16.mxu0 %v4306
      %4866 = vmatmul.mubr.bf16.gmra.mrb[0].mxu0 %v4305
      %v4867 = vpop.f32.mrb[0].mxu0
      %v4868 = vadd.f32 %v4471, %v4867
      %v4869 = vpop.f32.mrb[0].mxu0
      %v4870 = vpop.f32.mrb[0].mxu0
      %v4871 = vadd.f32 %v4471, %v4870
      %v4872 = vpop.f32.mrb[0].mxu0
      %4873 = vmatprep.mubr.bf16.mxu0 %v4313
      %4874 = vmatmul.mubr.bf16.gmra.mrb[0].mxu0 %v4312
      %v4875 = vpop.f32.mrb[0].mxu0
      %v4876 = vadd.f32 %v4471, %v4875
      %v4877 = vpop.f32.mrb[0].mxu0
      %v4878 = vpop.f32.mrb[0].mxu0
      %v4879 = vadd.f32 %v4471, %v4878
      %v4880 = vpop.f32.mrb[0].mxu0
      %4881 = vmatprep.mubr.bf16.mxu0 %v4320
      %4882 = vmatmul.mubr.bf16.gmra.mrb[0].mxu0 %v4319
      %v4883 = vpop.f32.mrb[0].mxu0
      %v4884 = vadd.f32 %v4471, %v4883
      %v4885 = vpop.f32.mrb[0].mxu0
      %v4886 = vpop.f32.mrb[0].mxu0
      %v4887 = vadd.f32 %v4471, %v4886
      %v4888 = vpop.f32.mrb[0].mxu0
      %4889 = vmatprep.mubr.bf16.mxu0 %v4327
      %4890 = vmatmul.mubr.bf16.gmra.mrb[0].mxu0 %v4326
      %v4891 = vpop.f32.mrb[0].mxu0
      %v4892 = vadd.f32 %v4471, %v4891
      %v4893 = vpop.f32.mrb[0].mxu0
      %v4894 = vpop.f32.mrb[0].mxu0
      %v4895 = vadd.f32 %v4471, %v4894
      %v4896 = vpop.f32.mrb[0].mxu0
      %4897 = vmatprep.mubr.bf16.mxu0 %v4334
      %4898 = vmatmul.mubr.bf16.gmra.mrb[0].mxu0 %v4333
      %v4899 = vpop.f32.mrb[0].mxu0
      %v4900 = vadd.f32 %v4471, %v4899
      %v4901 = vpop.f32.mrb[0].mxu0
      %v4902 = vpop.f32.mrb[0].mxu0
      %v4903 = vadd.f32 %v4471, %v4902
      %v4904 = vpop.f32.mrb[0].mxu0
      %4905 = vmatprep.mubr.bf16.mxu0 %v4341
      %4906 = vmatmul.mubr.bf16.gmra.mrb[0].mxu0 %v4340
      %v4907 = vpop.f32.mrb[0].mxu0
      %v4908 = vadd.f32 %v4471, %v4907
      %v4909 = vpop.f32.mrb[0].mxu0
      %v4910 = vpop.f32.mrb[0].mxu0
      %v4911 = vadd.f32 %v4471, %v4910
      %v4912 = vpop.f32.mrb[0].mxu0
      %4913 = vmatprep.mubr.bf16.mxu0 %v4348
      %4914 = vmatmul.mubr.bf16.gmra.mrb[0].mxu0 %v4347
      %v4915 = vpop.f32.mrb[0].mxu0
      %v4916 = vadd.f32 %v4471, %v4915
      %v4917 = vpop.f32.mrb[0].mxu0
      %v4918 = vpop.f32.mrb[0].mxu0
      %v4919 = vadd.f32 %v4471, %v4918
      %v4920 = vpop.f32.mrb[0].mxu0
      %4921 = vdwg.mxu0
      %4922 = vmatprep.subr.bf16.mxu0 0
      %4923 = vmatpush1.bf16.msra.mxu0 %v4713
      %4924 = vmatprep.subr.bf16.mxu0 0
      %4925 = vmatpush1.bf16.msra.mxu0 %v4714
      %4926 = vmatprep.subr.bf16.mxu0 0
      %4927 = vmatpush1.bf16.msra.mxu0 %v4715
      %4928 = vmatprep.subr.bf16.mxu0 0
      %4929 = vmatpush1.bf16.msra.mxu0 %v4716
      %4930 = vmatprep.subr.bf16.mxu0 0
      %4931 = vmatpush1.bf16.msra.mxu0 %v4717
      %4932 = vmatprep.subr.bf16.mxu0 0
      %4933 = vmatpush1.bf16.msra.mxu0 %v4718
      %4934 = vmatprep.subr.bf16.mxu0 0
      %4935 = vmatpush1.bf16.msra.mxu0 %v4719
      %4936 = vmatprep.subr.bf16.mxu0 0
      %4937 = vmatpush1.bf16.msra.mxu0 %v4720
      %4938 = vmatprep.subr.bf16.mxu0 0
      %4939 = vmatpush1.bf16.msra.mxu0 %v4721
      %4940 = vmatprep.subr.bf16.mxu0 0
      %4941 = vmatpush1.bf16.msra.mxu0 %v4722
      %4942 = vmatprep.subr.bf16.mxu0 0
      %4943 = vmatpush1.bf16.msra.mxu0 %v4723
      %4944 = vmatprep.subr.bf16.mxu0 0
      %4945 = vmatpush1.bf16.msra.mxu0 %v4724
      %4946 = vmatprep.subr.bf16.mxu0 0
      %4947 = vmatpush1.bf16.msra.mxu0 %v4725
      %4948 = vmatprep.subr.bf16.mxu0 0
      %4949 = vmatpush1.bf16.msra.mxu0 %v4726
      %4950 = vmatprep.subr.bf16.mxu0 0
      %4951 = vmatpush1.bf16.msra.mxu0 %v4727
      %4952 = vmatprep.subr.bf16.mxu0 0
      %4953 = vmatpush1.bf16.msra.mxu0 %v4728
      %4954 = vmatprep.mubr.bf16.mxu0 %v4287
      %4955 = vmatmul.mubr.bf16.gmra.mrb[0].mxu0 %v4286
      %v4956 = vpop.f32.mrb[0].mxu0
      %v4957 = vadd.f32 %v4844, %v4956
      %v4958 = vpop.f32.mrb[0].mxu0
      %v4959 = vpop.f32.mrb[0].mxu0
      %v4960 = vadd.f32 %v4847, %v4959
      %v4961 = vpop.f32.mrb[0].mxu0
      %4962 = vmatprep.mubr.bf16.mxu0 %v4294
      %4963 = vmatmul.mubr.bf16.gmra.mrb[0].mxu0 %v4293
      %v4964 = vpop.f32.mrb[0].mxu0
      %v4965 = vadd.f32 %v4852, %v4964
      %v4966 = vpop.f32.mrb[0].mxu0
      %v4967 = vpop.f32.mrb[0].mxu0
      %v4968 = vadd.f32 %v4855, %v4967
      %v4969 = vpop.f32.mrb[0].mxu0
      %4970 = vmatprep.mubr.bf16.mxu0 %v4301
      %4971 = vmatmul.mubr.bf16.gmra.mrb[0].mxu0 %v4300
      %v4972 = vpop.f32.mrb[0].mxu0
      %v4973 = vadd.f32 %v4860, %v4972
      %v4974 = vpop.f32.mrb[0].mxu0
      %v4975 = vpop.f32.mrb[0].mxu0
      %v4976 = vadd.f32 %v4863, %v4975
      %v4977 = vpop.f32.mrb[0].mxu0
      %4978 = vmatprep.mubr.bf16.mxu0 %v4308
      %4979 = vmatmul.mubr.bf16.gmra.mrb[0].mxu0 %v4307
      %v4980 = vpop.f32.mrb[0].mxu0
      %v4981 = vadd.f32 %v4868, %v4980
      %v4982 = vpop.f32.mrb[0].mxu0
      %v4983 = vpop.f32.mrb[0].mxu0
      %v4984 = vadd.f32 %v4871, %v4983
      %v4985 = vpop.f32.mrb[0].mxu0
      %4986 = vmatprep.mubr.bf16.mxu0 %v4315
      %4987 = vmatmul.mubr.bf16.gmra.mrb[0].mxu0 %v4314
      %v4988 = vpop.f32.mrb[0].mxu0
      %v4989 = vadd.f32 %v4876, %v4988
      %v4990 = vpop.f32.mrb[0].mxu0
      %v4991 = vpop.f32.mrb[0].mxu0
      %v4992 = vadd.f32 %v4879, %v4991
      %v4993 = vpop.f32.mrb[0].mxu0
      %4994 = vmatprep.mubr.bf16.mxu0 %v4322
      %4995 = vmatmul.mubr.bf16.gmra.mrb[0].mxu0 %v4321
      %v4996 = vpop.f32.mrb[0].mxu0
      %v4997 = vadd.f32 %v4884, %v4996
      %v4998 = vpop.f32.mrb[0].mxu0
      %v4999 = vpop.f32.mrb[0].mxu0
      %v5000 = vadd.f32 %v4887, %v4999
      %v5001 = vpop.f32.mrb[0].mxu0
      %5002 = vmatprep.mubr.bf16.mxu0 %v4329
      %5003 = vmatmul.mubr.bf16.gmra.mrb[0].mxu0 %v4328
      %v5004 = vpop.f32.mrb[0].mxu0
      %v5005 = vadd.f32 %v4892, %v5004
      %v5006 = vpop.f32.mrb[0].mxu0
      %v5007 = vpop.f32.mrb[0].mxu0
      %v5008 = vadd.f32 %v4895, %v5007
      %v5009 = vpop.f32.mrb[0].mxu0
      %5010 = vmatprep.mubr.bf16.mxu0 %v4336
      %5011 = vmatmul.mubr.bf16.gmra.mrb[0].mxu0 %v4335
      %v5012 = vpop.f32.mrb[0].mxu0
      %v5013 = vadd.f32 %v4900, %v5012
      %v5014 = vpop.f32.mrb[0].mxu0
      %v5015 = vpop.f32.mrb[0].mxu0
      %v5016 = vadd.f32 %v4903, %v5015
      %v5017 = vpop.f32.mrb[0].mxu0
      %5018 = vmatprep.mubr.bf16.mxu0 %v4343
      %5019 = vmatmul.mubr.bf16.gmra.mrb[0].mxu0 %v4342
      %v5020 = vpop.f32.mrb[0].mxu0
      %v5021 = vadd.f32 %v4908, %v5020
      %v5022 = vpop.f32.mrb[0].mxu0
      %v5023 = vpop.f32.mrb[0].mxu0
      %v5024 = vadd.f32 %v4911, %v5023
      %v5025 = vpop.f32.mrb[0].mxu0
      %5026 = vmatprep.mubr.bf16.mxu0 %v4350
      %5027 = vmatmul.mubr.bf16.gmra.mrb[0].mxu0 %v4349
      %v5028 = vpop.f32.mrb[0].mxu0
      %v5029 = vadd.f32 %v4916, %v5028
      %v5030 = vpop.f32.mrb[0].mxu0
      %v5031 = vpop.f32.mrb[0].mxu0
      %v5032 = vadd.f32 %v4919, %v5031
      %v5033 = vpop.f32.mrb[0].mxu0
      %5034 = vdwg.mxu0
      %5035 = vmatprep.subr.bf16.mxu0 0
      %5036 = vmatpush1.bf16.msra.mxu0 %v4729
      %5037 = vmatprep.subr.bf16.mxu0 0
      %5038 = vmatpush1.bf16.msra.mxu0 %v4730
      %5039 = vmatprep.subr.bf16.mxu0 0
      %5040 = vmatpush1.bf16.msra.mxu0 %v4731
      %5041 = vmatprep.subr.bf16.mxu0 0
      %5042 = vmatpush1.bf16.msra.mxu0 %v4732
      %5043 = vmatprep.subr.bf16.mxu0 0
      %5044 = vmatpush1.bf16.msra.mxu0 %v4733
      %5045 = vmatprep.subr.bf16.mxu0 0
      %5046 = vmatpush1.bf16.msra.mxu0 %v4734
      %5047 = vmatprep.subr.bf16.mxu0 0
      %5048 = vmatpush1.bf16.msra.mxu0 %v4735
      %5049 = vmatprep.subr.bf16.mxu0 0
      %5050 = vmatpush1.bf16.msra.mxu0 %v4736
      %5051 = vmatprep.subr.bf16.mxu0 0
      %5052 = vmatpush1.bf16.msra.mxu0 %v4737
      %5053 = vmatprep.subr.bf16.mxu0 0
      %5054 = vmatpush1.bf16.msra.mxu0 %v4738
      %5055 = vmatprep.subr.bf16.mxu0 0
      %5056 = vmatpush1.bf16.msra.mxu0 %v4739
      %5057 = vmatprep.subr.bf16.mxu0 0
      %5058 = vmatpush1.bf16.msra.mxu0 %v4740
      %5059 = vmatprep.subr.bf16.mxu0 0
      %5060 = vmatpush1.bf16.msra.mxu0 %v4741
      %5061 = vmatprep.subr.bf16.mxu0 0
      %5062 = vmatpush1.bf16.msra.mxu0 %v4742
      %5063 = vmatprep.subr.bf16.mxu0 0
      %5064 = vmatpush1.bf16.msra.mxu0 %v4743
      %5065 = vmatprep.subr.bf16.mxu0 0
      %5066 = vmatpush1.bf16.msra.mxu0 %v4744
      %5067 = vmatprep.mubr.bf16.mxu0 %v4289
      %5068 = vmatmul.mubr.bf16.gmra.mrb[0].mxu0 %v4288
      %v5069 = vpop.f32.mrb[0].mxu0
      %v5070 = vadd.f32 %v4957, %v5069
      %v5071 = vpop.f32.mrb[0].mxu0
      %v5072 = vpop.f32.mrb[0].mxu0
      %v5073 = vadd.f32 %v4960, %v5072
      %v5074 = vpop.f32.mrb[0].mxu0
      %5075 = vmatprep.mubr.bf16.mxu0 %v4296
      %5076 = vmatmul.mubr.bf16.gmra.mrb[0].mxu0 %v4295
      %v5077 = vpop.f32.mrb[0].mxu0
      %v5078 = vadd.f32 %v4965, %v5077
      %v5079 = vpop.f32.mrb[0].mxu0
      %v5080 = vpop.f32.mrb[0].mxu0
      %v5081 = vadd.f32 %v4968, %v5080
      %v5082 = vpop.f32.mrb[0].mxu0
      %5083 = vmatprep.mubr.bf16.mxu0 %v4303
      %5084 = vmatmul.mubr.bf16.gmra.mrb[0].mxu0 %v4302
      %v5085 = vpop.f32.mrb[0].mxu0
      %v5086 = vadd.f32 %v4973, %v5085
      %v5087 = vpop.f32.mrb[0].mxu0
      %v5088 = vpop.f32.mrb[0].mxu0
      %v5089 = vadd.f32 %v4976, %v5088
      %v5090 = vpop.f32.mrb[0].mxu0
      %5091 = vmatprep.mubr.bf16.mxu0 %v4310
      %5092 = vmatmul.mubr.bf16.gmra.mrb[0].mxu0 %v4309
      %v5093 = vpop.f32.mrb[0].mxu0
      %v5094 = vadd.f32 %v4981, %v5093
      %v5095 = vpop.f32.mrb[0].mxu0
      %v5096 = vpop.f32.mrb[0].mxu0
      %v5097 = vadd.f32 %v4984, %v5096
      %v5098 = vpop.f32.mrb[0].mxu0
      %5099 = vmatprep.mubr.bf16.mxu0 %v4317
      %5100 = vmatmul.mubr.bf16.gmra.mrb[0].mxu0 %v4316
      %v5101 = vpop.f32.mrb[0].mxu0
      %v5102 = vadd.f32 %v4989, %v5101
      %v5103 = vpop.f32.mrb[0].mxu0
      %v5104 = vpop.f32.mrb[0].mxu0
      %v5105 = vadd.f32 %v4992, %v5104
      %v5106 = vpop.f32.mrb[0].mxu0
      %5107 = vmatprep.mubr.bf16.mxu0 %v4324
      %5108 = vmatmul.mubr.bf16.gmra.mrb[0].mxu0 %v4323
      %v5109 = vpop.f32.mrb[0].mxu0
      %v5110 = vadd.f32 %v4997, %v5109
      %v5111 = vpop.f32.mrb[0].mxu0
      %v5112 = vpop.f32.mrb[0].mxu0
      %v5113 = vadd.f32 %v5000, %v5112
      %v5114 = vpop.f32.mrb[0].mxu0
      %5115 = vmatprep.mubr.bf16.mxu0 %v4331
      %5116 = vmatmul.mubr.bf16.gmra.mrb[0].mxu0 %v4330
      %v5117 = vpop.f32.mrb[0].mxu0
      %v5118 = vadd.f32 %v5005, %v5117
      %v5119 = vpop.f32.mrb[0].mxu0
      %v5120 = vpop.f32.mrb[0].mxu0
      %v5121 = vadd.f32 %v5008, %v5120
      %v5122 = vpop.f32.mrb[0].mxu0
      %5123 = vmatprep.mubr.bf16.mxu0 %v4338
      %5124 = vmatmul.mubr.bf16.gmra.mrb[0].mxu0 %v4337
      %v5125 = vpop.f32.mrb[0].mxu0
      %v5126 = vadd.f32 %v5013, %v5125
      %v5127 = vpop.f32.mrb[0].mxu0
      %v5128 = vpop.f32.mrb[0].mxu0
      %v5129 = vadd.f32 %v5016, %v5128
      %v5130 = vpop.f32.mrb[0].mxu0
      %5131 = vmatprep.mubr.bf16.mxu0 %v4345
      %5132 = vmatmul.mubr.bf16.gmra.mrb[0].mxu0 %v4344
      %v5133 = vpop.f32.mrb[0].mxu0
      %v5134 = vadd.f32 %v5021, %v5133
      %v5135 = vpop.f32.mrb[0].mxu0
      %v5136 = vpop.f32.mrb[0].mxu0
      %v5137 = vadd.f32 %v5024, %v5136
      %v5138 = vpop.f32.mrb[0].mxu0
      %5139 = vmatprep.mubr.bf16.mxu0 %v4352
      %5140 = vmatmul.mubr.bf16.gmra.mrb[0].mxu0 %v4351
      %v5141 = vpop.f32.mrb[0].mxu0
      %v5142 = vadd.f32 %v5029, %v5141
      %v5143 = vpop.f32.mrb[0].mxu0
      %v5144 = vpop.f32.mrb[0].mxu0
      %v5145 = vadd.f32 %v5032, %v5144
      %v5146 = vpop.f32.mrb[0].mxu0
      %5147 = vdwg.mxu0
      %5148 = vmatprep.subr.bf16.mxu0 0
      %5149 = vmatpush1.bf16.msra.mxu0 %v4745
      %5150 = vmatprep.subr.bf16.mxu0 0
      %5151 = vmatpush1.bf16.msra.mxu0 %v4746
      %5152 = vmatprep.subr.bf16.mxu0 0
      %5153 = vmatpush1.bf16.msra.mxu0 %v4747
      %5154 = vmatprep.subr.bf16.mxu0 0
      %5155 = vmatpush1.bf16.msra.mxu0 %v4748
      %5156 = vmatprep.subr.bf16.mxu0 0
      %5157 = vmatpush1.bf16.msra.mxu0 %v4749
      %5158 = vmatprep.subr.bf16.mxu0 0
      %5159 = vmatpush1.bf16.msra.mxu0 %v4750
      %5160 = vmatprep.subr.bf16.mxu0 0
      %5161 = vmatpush1.bf16.msra.mxu0 %v4751
      %5162 = vmatprep.subr.bf16.mxu0 0
      %5163 = vmatpush1.bf16.msra.mxu0 %v4752
      %5164 = vmatprep.subr.bf16.mxu0 0
      %5165 = vmatpush1.bf16.msra.mxu0 0
      %5166 = vmatprep.subr.bf16.mxu0 0
      %5167 = vmatpush1.bf16.msra.mxu0 0
      %5168 = vmatprep.subr.bf16.mxu0 0
      %5169 = vmatpush1.bf16.msra.mxu0 0
      %5170 = vmatprep.subr.bf16.mxu0 0
      %5171 = vmatpush1.bf16.msra.mxu0 0
      %5172 = vmatprep.subr.bf16.mxu0 0
      %5173 = vmatpush1.bf16.msra.mxu0 0
      %5174 = vmatprep.subr.bf16.mxu0 0
      %5175 = vmatpush1.bf16.msra.mxu0 0
      %5176 = vmatprep.subr.bf16.mxu0 0
      %5177 = vmatpush1.bf16.msra.mxu0 0
      %5178 = vmatprep.subr.bf16.mxu0 0
      %5179 = vmatpush1.bf16.msra.mxu0 0
      %5180 = vmatprep.mubr.bf16.mxu0 0
      %5181 = vmatmul.mubr.bf16.gmra.mrb[0].mxu0 %v4290
      %v5182 = vpop.f32.mrb[0].mxu0
      %v5183 = vadd.f32 %v5070, %v5182
      %v5184 = vpop.f32.mrb[0].mxu0
      %v5185 = vpop.f32.mrb[0].mxu0
      %v5186 = vadd.f32 %v5073, %v5185
      %v5187 = vpop.f32.mrb[0].mxu0
      %5188 = vmatprep.mubr.bf16.mxu0 0
      %5189 = vmatmul.mubr.bf16.gmra.mrb[0].mxu0 %v4297
      %v5190 = vpop.f32.mrb[0].mxu0
      %v5191 = vadd.f32 %v5078, %v5190
      %v5192 = vpop.f32.mrb[0].mxu0
      %v5193 = vpop.f32.mrb[0].mxu0
      %v5194 = vadd.f32 %v5081, %v5193
      %v5195 = vpop.f32.mrb[0].mxu0
      %5196 = vmatprep.mubr.bf16.mxu0 0
      %5197 = vmatmul.mubr.bf16.gmra.mrb[0].mxu0 %v4304
      %v5198 = vpop.f32.mrb[0].mxu0
      %v5199 = vadd.f32 %v5086, %v5198
      %v5200 = vpop.f32.mrb[0].mxu0
      %v5201 = vpop.f32.mrb[0].mxu0
      %v5202 = vadd.f32 %v5089, %v5201
      %v5203 = vpop.f32.mrb[0].mxu0
      %5204 = vmatprep.mubr.bf16.mxu0 0
      %5205 = vmatmul.mubr.bf16.gmra.mrb[0].mxu0 %v4311
      %v5206 = vpop.f32.mrb[0].mxu0
      %v5207 = vadd.f32 %v5094, %v5206
      %v5208 = vpop.f32.mrb[0].mxu0
      %v5209 = vpop.f32.mrb[0].mxu0
      %v5210 = vadd.f32 %v5097, %v5209
      %v5211 = vpop.f32.mrb[0].mxu0
      %5212 = vmatprep.mubr.bf16.mxu0 0
      %5213 = vmatmul.mubr.bf16.gmra.mrb[0].mxu0 %v4318
      %v5214 = vpop.f32.mrb[0].mxu0
      %v5215 = vadd.f32 %v5102, %v5214
      %v5216 = vpop.f32.mrb[0].mxu0
      %v5217 = vpop.f32.mrb[0].mxu0
      %v5218 = vadd.f32 %v5105, %v5217
      %v5219 = vpop.f32.mrb[0].mxu0
      %5220 = vmatprep.mubr.bf16.mxu0 0
      %5221 = vmatmul.mubr.bf16.gmra.mrb[0].mxu0 %v4325
      %v5222 = vpop.f32.mrb[0].mxu0
      %v5223 = vadd.f32 %v5110, %v5222
      %v5224 = vpop.f32.mrb[0].mxu0
      %v5225 = vpop.f32.mrb[0].mxu0
      %v5226 = vadd.f32 %v5113, %v5225
      %v5227 = vpop.f32.mrb[0].mxu0
      %5228 = vmatprep.mubr.bf16.mxu0 0
      %5229 = vmatmul.mubr.bf16.gmra.mrb[0].mxu0 %v4332
      %v5230 = vpop.f32.mrb[0].mxu0
      %v5231 = vadd.f32 %v5118, %v5230
      %v5232 = vpop.f32.mrb[0].mxu0
      %v5233 = vpop.f32.mrb[0].mxu0
      %v5234 = vadd.f32 %v5121, %v5233
      %v5235 = vpop.f32.mrb[0].mxu0
      %5236 = vmatprep.mubr.bf16.mxu0 0
      %5237 = vmatmul.mubr.bf16.gmra.mrb[0].mxu0 %v4339
      %v5238 = vpop.f32.mrb[0].mxu0
      %v5239 = vadd.f32 %v5126, %v5238
      %v5240 = vpop.f32.mrb[0].mxu0
      %v5241 = vpop.f32.mrb[0].mxu0
      %v5242 = vadd.f32 %v5129, %v5241
      %v5243 = vpop.f32.mrb[0].mxu0
      %5244 = vmatprep.mubr.bf16.mxu0 0
      %5245 = vmatmul.mubr.bf16.gmra.mrb[0].mxu0 %v4346
      %v5246 = vpop.f32.mrb[0].mxu0
      %v5247 = vadd.f32 %v5134, %v5246
      %v5248 = vpop.f32.mrb[0].mxu0
      %v5249 = vpop.f32.mrb[0].mxu0
      %v5250 = vadd.f32 %v5137, %v5249
      %v5251 = vpop.f32.mrb[0].mxu0
      %5252 = vmatprep.mubr.bf16.mxu0 0
      %5253 = vmatmul.mubr.bf16.gmra.mrb[0].mxu0 %v4353
      %v5254 = vpop.f32.mrb[0].mxu0
      %v5255 = vadd.f32 %v5142, %v5254
      %v5256 = vpop.f32.mrb[0].mxu0
      %v5257 = vpop.f32.mrb[0].mxu0
      %v5258 = vadd.f32 %v5145, %v5257
      %v5259 = vpop.f32.mrb[0].mxu0
      %5260 = vdwg.mxu0
      %v5261 = vmax.f32 %v5183, 0.0
      %v5262 = vmax.f32 %v5186, 0.0
      %v5263 = vmax.f32 %v5191, 0.0
      %v5264 = vmax.f32 %v5194, 0.0
      %v5265 = vmax.f32 %v5199, 0.0
      %v5266 = vmax.f32 %v5202, 0.0
      %v5267 = vmax.f32 %v5207, 0.0
      %v5268 = vmax.f32 %v5210, 0.0
      %v5269 = vmax.f32 %v5215, 0.0
      %v5270 = vmax.f32 %v5218, 0.0
      %v5271 = vmax.f32 %v5223, 0.0
      %v5272 = vmax.f32 %v5226, 0.0
      %v5273 = vmax.f32 %v5231, 0.0
      %v5274 = vmax.f32 %v5234, 0.0
      %v5275 = vmax.f32 %v5239, 0.0
      %v5276 = vmax.f32 %v5242, 0.0
      %v5277 = vmax.f32 %v5247, 0.0
      %v5278 = vmax.f32 %v5250, 0.0
      %v5279 = vmax.f32 %v5255, 0.0
      %v5280 = vmax.f32 %v5258, 0.0
      %5281 = vst.msk [vmem:[#allocation5] sm:$0xff] %vm2276, %v5261
      %5282 = vst.msk [vmem:[#allocation5 + $0x8] sm:$0xff] %vm2276, %v5262
      %5283 = vst.msk [vmem:[#allocation5 + $0x10] sm:$0xff] %vm2276, %v5263
      %5284 = vst.msk [vmem:[#allocation5 + $0x18] sm:$0xff] %vm2276, %v5264
      %5285 = vst.msk [vmem:[#allocation5 + $0x20] sm:$0xff] %vm2276, %v5265
      %5286 = vst.msk [vmem:[#allocation5 + $0x28] sm:$0xff] %vm2276, %v5266
      %5287 = vst.msk [vmem:[#allocation5 + $0x30] sm:$0xff] %vm2276, %v5267
      %5288 = vst.msk [vmem:[#allocation5 + $0x38] sm:$0xff] %vm2276, %v5268
      %5289 = vst.msk [vmem:[#allocation5 + $0x40] sm:$0xff] %vm2276, %v5269
      %5290 = vst.msk [vmem:[#allocation5 + $0x48] sm:$0xff] %vm2276, %v5270
      %5291 = vst.msk [vmem:[#allocation5 + $0x50] sm:$0xff] %vm2276, %v5271
      %5292 = vst.msk [vmem:[#allocation5 + $0x58] sm:$0xff] %vm2276, %v5272
      %5293 = vst.msk [vmem:[#allocation5 + $0x60] sm:$0xff] %vm2276, %v5273
      %5294 = vst.msk [vmem:[#allocation5 + $0x68] sm:$0xff] %vm2276, %v5274
      %5295 = vst.msk [vmem:[#allocation5 + $0x70] sm:$0xff] %vm2276, %v5275
      %5296 = vst.msk [vmem:[#allocation5 + $0x78] sm:$0xff] %vm2276, %v5276
      %5297 = vst.msk [vmem:[#allocation5 + $0x80] sm:$0xff] %vm2276, %v5277
      %5298 = vst.msk [vmem:[#allocation5 + $0x88] sm:$0xff] %vm2276, %v5278
      %5299 = vst.msk [vmem:[#allocation5 + $0x90] sm:$0xff] %vm2276, %v5279
      %5300 = vst.msk [vmem:[#allocation5 + $0x98] sm:$0xff] %vm2276, %v5280
      %v5301 = vld [vmem:[#allocation5] ss:$2 sm:$0xff]
      %s5302 = scalar_lea.vmem [#allocation5], 16
      %v5303 = vld [vmem:[%s5302] ss:$2 sm:$0xff]
      %s5304 = scalar_lea.vmem [#allocation5], 1
      %v5305 = vld [vmem:[%s5304] ss:$2 sm:$0xff]
      %s5306 = scalar_lea.vmem [#allocation5], 17
      %v5307 = vld [vmem:[%s5306] ss:$2 sm:$0xff]
      %v5308 = vmax.f32 %v5301, %v5305
      %v5309 = vmax.f32 %v5303, %v5307
      %v5310 = vmax.f32 %v5308, %v5309
      %5311 = vst.msk [vmem:[#allocation6] sm:$0xff] %vm2276, %v5310
      %s5312 = scalar_lea.vmem [#allocation5], 32
      %v5313 = vld [vmem:[%s5312] ss:$2 sm:$0xff]
      %s5314 = scalar_lea.vmem [#allocation5], 48
      %v5315 = vld [vmem:[%s5314] ss:$2 sm:$0xff]
      %s5316 = scalar_lea.vmem [#allocation5], 33
      %v5317 = vld [vmem:[%s5316] ss:$2 sm:$0xff]
      %s5318 = scalar_lea.vmem [#allocation5], 49
      %v5319 = vld [vmem:[%s5318] ss:$2 sm:$0xff]
      %v5320 = vmax.f32 %v5313, %v5317
      %v5321 = vmax.f32 %v5315, %v5319
      %v5322 = vmax.f32 %v5320, %v5321
      %5323 = vst.msk [vmem:[#allocation6 + $0x8] sm:$0xff] %vm2276, %v5322
      %s5324 = scalar_lea.vmem [#allocation5], 64
      %v5325 = vld [vmem:[%s5324] ss:$2 sm:$0xff]
      %s5326 = scalar_lea.vmem [#allocation5], 80
      %v5327 = vld [vmem:[%s5326] ss:$2 sm:$0xff]
      %s5328 = scalar_lea.vmem [#allocation5], 65
      %v5329 = vld [vmem:[%s5328] ss:$2 sm:$0xff]
      %s5330 = scalar_lea.vmem [#allocation5], 81
      %v5331 = vld [vmem:[%s5330] ss:$2 sm:$0xff]
      %v5332 = vmax.f32 %v5325, %v5329
      %v5333 = vmax.f32 %v5327, %v5331
      %v5334 = vmax.f32 %v5332, %v5333
      %5335 = vst.msk [vmem:[#allocation6 + $0x10] sm:$0xff] %vm2276, %v5334
      %s5336 = scalar_lea.vmem [#allocation5], 96
      %v5337 = vld [vmem:[%s5336] ss:$2 sm:$0xff]
      %s5338 = scalar_lea.vmem [#allocation5], 112
      %v5339 = vld [vmem:[%s5338] ss:$2 sm:$0xff]
      %s5340 = scalar_lea.vmem [#allocation5], 97
      %v5341 = vld [vmem:[%s5340] ss:$2 sm:$0xff]
      %s5342 = scalar_lea.vmem [#allocation5], 113
      %v5343 = vld [vmem:[%s5342] ss:$2 sm:$0xff]
      %v5344 = vmax.f32 %v5337, %v5341
      %v5345 = vmax.f32 %v5339, %v5343
      %v5346 = vmax.f32 %v5344, %v5345
      %5347 = vst.msk [vmem:[#allocation6 + $0x18] sm:$0xff] %vm2276, %v5346
      %s5348 = scalar_lea.vmem [#allocation5], 128
      %v5349 = vld [vmem:[%s5348] ss:$2 sm:$0xff]
      %s5350 = scalar_lea.vmem [#allocation5], 144
      %v5351 = vld [vmem:[%s5350] ss:$2 sm:$0xff]
      %s5352 = scalar_lea.vmem [#allocation5], 129
      %v5353 = vld [vmem:[%s5352] ss:$2 sm:$0xff]
      %s5354 = scalar_lea.vmem [#allocation5], 145
      %v5355 = vld [vmem:[%s5354] ss:$2 sm:$0xff]
      %v5356 = vmax.f32 %v5349, %v5353
      %v5357 = vmax.f32 %v5351, %v5355
      %v5358 = vmax.f32 %v5356, %v5357
      %5359 = vst.msk [vmem:[#allocation6 + $0x20] sm:$0xff] %vm2276, %v5358
      %v5360 = vld [vmem:[#allocation6] sm:$0x1]
      %v5361 = vpack.c.bf16 %v5360, %v5360
      %v5362 = vld [vmem:[#allocation6 + $0x1] sm:$0x1]
      %v5363 = vpack.c.bf16 %v5362, %v5362
      %5365 = vrot.lane.b32.xlu0 %v5363, 64
      %v5366 = vpop.permute.xlu0 %5365
      %v5369 = vsel %vm2276, %v5361, %v5366
      %vm5371 = vsmask.f32 256
      %vm5372 = vmand %vm2523, %vm5371
      %v5373 = vld [vmem:[#allocation7] sm:$0x1]
      %v5374 = vsel %vm5372, %v5369, %v5373
      %5375 = vst [vmem:[#allocation7] sm:$0x1] %v5374
      %v5376 = vld [vmem:[#allocation6 + $0x2] sm:$0x1]
      %v5377 = vpack.c.bf16 %v5376, %v5376
      %v5378 = vld [vmem:[#allocation6 + $0x3] sm:$0x1]
      %v5379 = vpack.c.bf16 %v5378, %v5378
      %5381 = vrot.lane.b32.xlu0 %v5379, 64
      %v5382 = vpop.permute.xlu0 %5381
      %v5385 = vsel %vm2276, %v5377, %v5382
      %v5387 = vld [vmem:[#allocation7 + $0x1] sm:$0x1]
      %v5388 = vsel %vm5372, %v5385, %v5387
      %5389 = vst [vmem:[#allocation7 + $0x1] sm:$0x1] %v5388
      %v5390 = vld [vmem:[#allocation6 + $0x4] sm:$0x1]
      %v5391 = vpack.c.bf16 %v5390, %v5390
      %v5392 = vld [vmem:[#allocation6 + $0x8] sm:$0x1]
      %v5393 = vpack.c.bf16 %v5392, %v5392
      %5395 = vrot.lane.b32.xlu0 %v5393, 64
      %v5396 = vpop.permute.xlu0 %5395
      %v5399 = vsel %vm2276, %v5391, %v5396
      %v5401 = vld [vmem:[#allocation7 + $0x2] sm:$0x1]
      %v5402 = vsel %vm5372, %v5399, %v5401
      %5403 = vst [vmem:[#allocation7 + $0x2] sm:$0x1] %v5402
      %v5404 = vld [vmem:[#allocation6 + $0x9] sm:$0x1]
      %v5405 = vpack.c.bf16 %v5404, %v5404
      %v5406 = vld [vmem:[#allocation6 + $0xa] sm:$0x1]
      %v5407 = vpack.c.bf16 %v5406, %v5406
      %5409 = vrot.lane.b32.xlu0 %v5407, 64
      %v5410 = vpop.permute.xlu0 %5409
      %v5413 = vsel %vm2276, %v5405, %v5410
      %v5415 = vld [vmem:[#allocation7 + $0x3] sm:$0x1]
      %v5416 = vsel %vm5372, %v5413, %v5415
      %5417 = vst [vmem:[#allocation7 + $0x3] sm:$0x1] %v5416
      %v5418 = vld [vmem:[#allocation6 + $0xb] sm:$0x1]
      %v5419 = vpack.c.bf16 %v5418, %v5418
      %v5420 = vld [vmem:[#allocation6 + $0xc] sm:$0x1]
      %v5421 = vpack.c.bf16 %v5420, %v5420
      %5423 = vrot.lane.b32.xlu0 %v5421, 64
      %v5424 = vpop.permute.xlu0 %5423
      %v5427 = vsel %vm2276, %v5419, %v5424
      %v5429 = vld [vmem:[#allocation7 + $0x4] sm:$0x1]
      %v5430 = vsel %vm5372, %v5427, %v5429
      %5431 = vst [vmem:[#allocation7 + $0x4] sm:$0x1] %v5430
      %v5432 = vld [vmem:[#allocation6 + $0x10] sm:$0x1]
      %v5433 = vpack.c.bf16 %v5432, %v5432
      %v5434 = vld [vmem:[#allocation6 + $0x11] sm:$0x1]
      %v5435 = vpack.c.bf16 %v5434, %v5434
      %5437 = vrot.lane.b32.xlu0 %v5435, 64
      %v5438 = vpop.permute.xlu0 %5437
      %v5441 = vsel %vm2276, %v5433, %v5438
      %v5443 = vld [vmem:[#allocation7 + $0x5] sm:$0x1]
      %v5444 = vsel %vm5372, %v5441, %v5443
      %5445 = vst [vmem:[#allocation7 + $0x5] sm:$0x1] %v5444
      %v5446 = vld [vmem:[#allocation6 + $0x12] sm:$0x1]
      %v5447 = vpack.c.bf16 %v5446, %v5446
      %v5448 = vld [vmem:[#allocation6 + $0x13] sm:$0x1]
      %v5449 = vpack.c.bf16 %v5448, %v5448
      %5451 = vrot.lane.b32.xlu0 %v5449, 64
      %v5452 = vpop.permute.xlu0 %5451
      %v5455 = vsel %vm2276, %v5447, %v5452
      %v5457 = vld [vmem:[#allocation7 + $0x6] sm:$0x1]
      %v5458 = vsel %vm5372, %v5455, %v5457
      %5459 = vst [vmem:[#allocation7 + $0x6] sm:$0x1] %v5458
      %v5460 = vld [vmem:[#allocation6 + $0x14] sm:$0x1]
      %v5461 = vpack.c.bf16 %v5460, %v5460
      %v5462 = vld [vmem:[#allocation6 + $0x18] sm:$0x1]
      %v5463 = vpack.c.bf16 %v5462, %v5462
      %5465 = vrot.lane.b32.xlu0 %v5463, 64
      %v5466 = vpop.permute.xlu0 %5465
      %v5469 = vsel %vm2276, %v5461, %v5466
      %v5471 = vld [vmem:[#allocation7 + $0x7] sm:$0x1]
      %v5472 = vsel %vm5372, %v5469, %v5471
      %5473 = vst [vmem:[#allocation7 + $0x7] sm:$0x1] %v5472
      %v5474 = vld [vmem:[#allocation6 + $0x19] sm:$0x1]
      %v5475 = vpack.c.bf16 %v5474, %v5474
      %v5476 = vld [vmem:[#allocation6 + $0x1a] sm:$0x1]
      %v5477 = vpack.c.bf16 %v5476, %v5476
      %5479 = vrot.lane.b32.xlu0 %v5477, 64
      %v5480 = vpop.permute.xlu0 %5479
      %v5483 = vsel %vm2276, %v5475, %v5480
      %v5485 = vld [vmem:[#allocation7 + $0x8] sm:$0x1]
      %v5486 = vsel %vm5372, %v5483, %v5485
      %5487 = vst [vmem:[#allocation7 + $0x8] sm:$0x1] %v5486
      %v5488 = vld [vmem:[#allocation6 + $0x1b] sm:$0x1]
      %v5489 = vpack.c.bf16 %v5488, %v5488
      %v5490 = vld [vmem:[#allocation6 + $0x1c] sm:$0x1]
      %v5491 = vpack.c.bf16 %v5490, %v5490
      %5493 = vrot.lane.b32.xlu0 %v5491, 64
      %v5494 = vpop.permute.xlu0 %5493
      %v5497 = vsel %vm2276, %v5489, %v5494
      %v5499 = vld [vmem:[#allocation7 + $0x9] sm:$0x1]
      %v5500 = vsel %vm5372, %v5497, %v5499
      %5501 = vst [vmem:[#allocation7 + $0x9] sm:$0x1] %v5500
      %v5502 = vld [vmem:[#allocation6 + $0x20] sm:$0x1]
      %v5503 = vpack.c.bf16 %v5502, %v5502
      %v5504 = vld [vmem:[#allocation6 + $0x21] sm:$0x1]
      %v5505 = vpack.c.bf16 %v5504, %v5504
      %5507 = vrot.lane.b32.xlu0 %v5505, 64
      %v5508 = vpop.permute.xlu0 %5507
      %v5511 = vsel %vm2276, %v5503, %v5508
      %v5513 = vld [vmem:[#allocation7 + $0xa] sm:$0x1]
      %v5514 = vsel %vm5372, %v5511, %v5513
      %5515 = vst [vmem:[#allocation7 + $0xa] sm:$0x1] %v5514
      %v5516 = vld [vmem:[#allocation6 + $0x22] sm:$0x1]
      %v5517 = vpack.c.bf16 %v5516, %v5516
      %v5518 = vld [vmem:[#allocation6 + $0x23] sm:$0x1]
      %v5519 = vpack.c.bf16 %v5518, %v5518
      %5521 = vrot.lane.b32.xlu0 %v5519, 64
      %v5522 = vpop.permute.xlu0 %5521
      %v5525 = vsel %vm2276, %v5517, %v5522
      %v5527 = vld [vmem:[#allocation7 + $0xb] sm:$0x1]
      %v5528 = vsel %vm5372, %v5525, %v5527
      %5529 = vst [vmem:[#allocation7 + $0xb] sm:$0x1] %v5528
      %v5530 = vld [vmem:[#allocation6 + $0x24] sm:$0x1]
      %v5531 = vpack.c.bf16 %v5530, %v5530
      %v5533 = vsel %vm2276, %v5531, 0
      %v5535 = vld [vmem:[#allocation7 + $0xc] sm:$0x1]
      %v5536 = vsel %vm5372, %v5533, %v5535
      %5537 = vst [vmem:[#allocation7 + $0xc] sm:$0x1] %v5536
      %v5538 = vld [vmem:[#allocation7] sm:$0xff]
      %v5539 = vld [vmem:[#allocation7 + $0x8] sm:$0x1f]
      %v5540 = vld [vmem:[%s5] sm:$0xf]
      %v5541 = vld [vmem:[%s5 + $0x4] sm:$0xf]
      %v5542 = vld [vmem:[%s5 + $0x8] sm:$0xf]
      %v5543 = vld [vmem:[%s5 + $0xc] sm:$0xf]
      %v5544 = vld [vmem:[%s5 + $0x10] sm:$0xf]
      %v5545 = vld [vmem:[%s5 + $0x14] sm:$0xf]
      %v5546 = vld [vmem:[%s5 + $0x18] sm:$0xf]
      %v5547 = vld [vmem:[%s5 + $0x1c] sm:$0xf]
      %v5548 = vld [vmem:[%s5 + $0x20] sm:$0xf]
      %v5549 = vld [vmem:[%s5 + $0x24] sm:$0xf]
      %v5550 = vld [vmem:[%s5 + $0x28] sm:$0xf]
      %v5551 = vld [vmem:[%s5 + $0x2c] sm:$0xf]
      %v5552 = vld [vmem:[%s5 + $0x30] sm:$0xf]
      %v5553 = vld [vmem:[%s5 + $0x34] sm:$0xf]
      %v5554 = vld [vmem:[%s5 + $0x38] sm:$0xf]
      %v5555 = vld [vmem:[%s5 + $0x3c] sm:$0xf]
      %v5556 = vld [vmem:[%s5 + $0x40] sm:$0xf]
      %v5557 = vld [vmem:[%s5 + $0x44] sm:$0xf]
      %v5558 = vld [vmem:[%s5 + $0x48] sm:$0xf]
      %v5559 = vld [vmem:[%s5 + $0x4c] sm:$0xf]
      %v5560 = vld [vmem:[%s5 + $0x50] sm:$0xf]
      %v5561 = vld [vmem:[%s5 + $0x54] sm:$0xf]
      %v5562 = vld [vmem:[%s5 + $0x58] sm:$0xf]
      %v5563 = vld [vmem:[%s5 + $0x5c] sm:$0xf]
      %v5564 = vld [vmem:[%s5 + $0x60] sm:$0xf]
      %v5565 = vld [vmem:[%s5 + $0x64] sm:$0xf]
      %v5566 = vld [vmem:[%s5 + $0x68] sm:$0xf]
      %v5567 = vld [vmem:[%s5 + $0x6c] sm:$0xf]
      %v5568 = vld [vmem:[%s5 + $0x70] sm:$0xf]
      %v5569 = vld [vmem:[%s5 + $0x74] sm:$0xf]
      %v5570 = vld [vmem:[%s5 + $0x78] sm:$0xf]
      %v5571 = vld [vmem:[%s5 + $0x7c] sm:$0xf]
      %v5572 = vld [vmem:[%s5 + $0x80] sm:$0xf]
      %v5573 = vld [vmem:[%s5 + $0x84] sm:$0xf]
      %v5574 = vld [vmem:[%s5 + $0x88] sm:$0xf]
      %v5575 = vld [vmem:[%s5 + $0x8c] sm:$0xf]
      %v5576 = vld [vmem:[%s5 + $0x90] sm:$0xf]
      %v5577 = vld [vmem:[%s5 + $0x94] sm:$0xf]
      %v5578 = vld [vmem:[%s5 + $0x98] sm:$0xf]
      %v5579 = vld [vmem:[%s5 + $0x9c] sm:$0xf]
      %v5580 = vld [vmem:[%s5 + $0xa0] sm:$0xf]
      %v5581 = vld [vmem:[%s5 + $0xa4] sm:$0xf]
      %v5582 = vld [vmem:[%s5 + $0xa8] sm:$0xf]
      %v5583 = vld [vmem:[%s5 + $0xac] sm:$0xf]
      %v5584 = vld [vmem:[%s5 + $0xb0] sm:$0xf]
      %v5585 = vld [vmem:[%s5 + $0xb4] sm:$0xf]
      %v5586 = vld [vmem:[%s5 + $0xb8] sm:$0xf]
      %v5587 = vld [vmem:[%s5 + $0xbc] sm:$0xf]
      %v5588 = vld [vmem:[%s5 + $0xc0] sm:$0xf]
      %v5589 = vld [vmem:[%s5 + $0xc4] sm:$0xf]
      %v5590 = vld [vmem:[%s5 + $0xc8] sm:$0xf]
      %v5591 = vld [vmem:[%s5 + $0xcc] sm:$0xf]
      %v5592 = vld [vmem:[%s5 + $0xd0] sm:$0xf]
      %v5593 = vld [vmem:[%s5 + $0xd4] sm:$0xf]
      %v5594 = vld [vmem:[%s5 + $0xd8] sm:$0xf]
      %v5595 = vld [vmem:[%s5 + $0xdc] sm:$0xf]
      %v5596 = vld [vmem:[%s5 + $0xe0] sm:$0xf]
      %v5597 = vld [vmem:[%s5 + $0xe4] sm:$0xf]
      %v5598 = vld [vmem:[%s5 + $0xe8] sm:$0xf]
      %v5599 = vld [vmem:[%s5 + $0xec] sm:$0xf]
      %v5600 = vld [vmem:[%s5 + $0xf0] sm:$0xf]
      %v5601 = vld [vmem:[%s5 + $0xf4] sm:$0xf]
      %v5602 = vld [vmem:[%s5 + $0xf8] sm:$0xf]
      %v5603 = vld [vmem:[%s5 + $0xfc] sm:$0xf]
      %v5604 = vld [vmem:[%s5 + $0x100] sm:$0xf]
      %v5605 = vld [vmem:[%s5 + $0x104] sm:$0xf]
      %v5606 = vld [vmem:[%s5 + $0x108] sm:$0xf]
      %v5607 = vld [vmem:[%s5 + $0x10c] sm:$0xf]
      %v5608 = vld [vmem:[%s5 + $0x110] sm:$0xf]
      %v5609 = vld [vmem:[%s5 + $0x114] sm:$0xf]
      %v5610 = vld [vmem:[%s5 + $0x118] sm:$0xf]
      %v5611 = vld [vmem:[%s5 + $0x11c] sm:$0xf]
      %v5612 = vld [vmem:[%s5 + $0x120] sm:$0xf]
      %v5613 = vld [vmem:[%s5 + $0x124] sm:$0xf]
      %v5614 = vld [vmem:[%s5 + $0x128] sm:$0xf]
      %v5615 = vld [vmem:[%s5 + $0x12c] sm:$0xf]
      %v5616 = vld [vmem:[%s5 + $0x130] sm:$0xf]
      %v5617 = vld [vmem:[%s5 + $0x134] sm:$0xf]
      %v5618 = vld [vmem:[%s5 + $0x138] sm:$0xf]
      %v5619 = vld [vmem:[%s5 + $0x13c] sm:$0xf]
      %v5620 = vld [vmem:[%s5 + $0x140] sm:$0xf]
      %v5621 = vld [vmem:[%s5 + $0x144] sm:$0xf]
      %v5622 = vld [vmem:[%s5 + $0x148] sm:$0xf]
      %v5623 = vld [vmem:[%s5 + $0x14c] sm:$0xf]
      %v5624 = vld [vmem:[%s5 + $0x150] sm:$0xf]
      %v5625 = vld [vmem:[%s5 + $0x154] sm:$0xf]
      %v5626 = vld [vmem:[%s5 + $0x158] sm:$0xf]
      %v5627 = vld [vmem:[%s5 + $0x15c] sm:$0xf]
      %v5628 = vld [vmem:[%s5 + $0x160] sm:$0xf]
      %v5629 = vld [vmem:[%s5 + $0x164] sm:$0xf]
      %v5630 = vld [vmem:[%s5 + $0x168] sm:$0xf]
      %v5631 = vld [vmem:[%s5 + $0x16c] sm:$0xf]
      %v5632 = vld [vmem:[%s5 + $0x170] sm:$0xf]
      %v5633 = vld [vmem:[%s5 + $0x174] sm:$0xf]
      %v5634 = vld [vmem:[%s5 + $0x178] sm:$0xf]
      %v5635 = vld [vmem:[%s5 + $0x17c] sm:$0xf]
      %v5636 = vld [vmem:[%s5 + $0x180] sm:$0xf]
      %v5637 = vld [vmem:[%s5 + $0x184] sm:$0xf]
      %v5638 = vld [vmem:[%s5 + $0x188] sm:$0xf]
      %v5639 = vld [vmem:[%s5 + $0x18c] sm:$0xf]
      %v5640 = vld [vmem:[%s5 + $0x190] sm:$0xf]
      %v5641 = vld [vmem:[%s5 + $0x194] sm:$0xf]
      %v5642 = vld [vmem:[%s5 + $0x198] sm:$0xf]
      %v5643 = vld [vmem:[%s5 + $0x19c] sm:$0xf]
      %v5644 = vld [vmem:[%s5 + $0x1a0] sm:$0xf]
      %v5645 = vld [vmem:[%s5 + $0x1a4] sm:$0xf]
      %v5646 = vld [vmem:[%s5 + $0x1a8] sm:$0xf]
      %v5647 = vld [vmem:[%s5 + $0x1ac] sm:$0xf]
      %v5648 = vld [vmem:[%s5 + $0x1b0] sm:$0xf]
      %v5649 = vld [vmem:[%s5 + $0x1b4] sm:$0xf]
      %v5650 = vld [vmem:[%s5 + $0x1b8] sm:$0xf]
      %v5651 = vld [vmem:[%s5 + $0x1bc] sm:$0xf]
      %v5652 = vld [vmem:[%s5 + $0x1c0] sm:$0xf]
      %v5653 = vld [vmem:[%s5 + $0x1c4] sm:$0xf]
      %v5654 = vld [vmem:[%s5 + $0x1c8] sm:$0xf]
      %v5655 = vld [vmem:[%s5 + $0x1cc] sm:$0xf]
      %v5656 = vld [vmem:[%s5 + $0x1d0] sm:$0xf]
      %v5657 = vld [vmem:[%s5 + $0x1d4] sm:$0xf]
      %v5658 = vld [vmem:[%s5 + $0x1d8] sm:$0xf]
      %v5659 = vld [vmem:[%s5 + $0x1dc] sm:$0xf]
      %v5660 = vld [vmem:[%s5 + $0x1e0] sm:$0xf]
      %v5661 = vld [vmem:[%s5 + $0x1e4] sm:$0xf]
      %v5662 = vld [vmem:[%s5 + $0x1e8] sm:$0xf]
      %v5663 = vld [vmem:[%s5 + $0x1ec] sm:$0xf]
      %v5664 = vld [vmem:[%s5 + $0x1f0] sm:$0xf]
      %v5665 = vld [vmem:[%s5 + $0x1f4] sm:$0xf]
      %v5666 = vld [vmem:[%s5 + $0x1f8] sm:$0xf]
      %v5667 = vld [vmem:[%s5 + $0x1fc] sm:$0xf]
      %v5668 = vld [vmem:[%s5 + $0x200] sm:$0xf]
      %v5669 = vld [vmem:[%s5 + $0x204] sm:$0xf]
      %v5670 = vld [vmem:[%s5 + $0x208] sm:$0xf]
      %v5671 = vld [vmem:[%s5 + $0x20c] sm:$0xf]
      %v5672 = vld [vmem:[%s5 + $0x210] sm:$0xf]
      %v5673 = vld [vmem:[%s5 + $0x214] sm:$0xf]
      %v5674 = vld [vmem:[%s5 + $0x218] sm:$0xf]
      %v5675 = vld [vmem:[%s5 + $0x21c] sm:$0xf]
      %v5676 = vld [vmem:[%s5 + $0x220] sm:$0xf]
      %v5677 = vld [vmem:[%s5 + $0x224] sm:$0xf]
      %v5678 = vld [vmem:[%s5 + $0x228] sm:$0xf]
      %v5679 = vld [vmem:[%s5 + $0x22c] sm:$0xf]
      %v5680 = vld [vmem:[%s5 + $0x230] sm:$0xf]
      %v5681 = vld [vmem:[%s5 + $0x234] sm:$0xf]
      %v5682 = vld [vmem:[%s5 + $0x238] sm:$0xf]
      %v5683 = vld [vmem:[%s5 + $0x23c] sm:$0xf]
      %v5684 = vld [vmem:[%s5 + $0x240] sm:$0xf]
      %v5685 = vld [vmem:[%s5 + $0x244] sm:$0xf]
      %v5686 = vld [vmem:[%s5 + $0x248] sm:$0xf]
      %v5687 = vld [vmem:[%s5 + $0x24c] sm:$0xf]
      %v5688 = vld [vmem:[%s5 + $0x250] sm:$0xf]
      %v5689 = vld [vmem:[%s5 + $0x254] sm:$0xf]
      %v5690 = vld [vmem:[%s5 + $0x258] sm:$0xf]
      %v5691 = vld [vmem:[%s5 + $0x25c] sm:$0xf]
      %v5692 = vld [vmem:[%s5 + $0x260] sm:$0xf]
      %v5693 = vld [vmem:[%s5 + $0x264] sm:$0xf]
      %v5694 = vld [vmem:[%s5 + $0x268] sm:$0xf]
      %v5695 = vld [vmem:[%s5 + $0x26c] sm:$0xf]
      %v5696 = vld [vmem:[%s5 + $0x270] sm:$0xf]
      %v5697 = vld [vmem:[%s5 + $0x274] sm:$0xf]
      %v5698 = vld [vmem:[%s5 + $0x278] sm:$0xf]
      %v5699 = vld [vmem:[%s5 + $0x27c] sm:$0xf]
      %v5700 = vld [vmem:[%s5 + $0x280] sm:$0xf]
      %v5701 = vld [vmem:[%s5 + $0x284] sm:$0xf]
      %v5702 = vld [vmem:[%s5 + $0x288] sm:$0xf]
      %v5703 = vld [vmem:[%s5 + $0x28c] sm:$0xf]
      %v5704 = vld [vmem:[%s5 + $0x290] sm:$0xf]
      %v5705 = vld [vmem:[%s5 + $0x294] sm:$0xf]
      %v5706 = vld [vmem:[%s5 + $0x298] sm:$0xf]
      %v5707 = vld [vmem:[%s5 + $0x29c] sm:$0xf]
      %v5708 = vld [vmem:[%s5 + $0x2a0] sm:$0xf]
      %v5709 = vld [vmem:[%s5 + $0x2a4] sm:$0xf]
      %v5710 = vld [vmem:[%s5 + $0x2a8] sm:$0xf]
      %v5711 = vld [vmem:[%s5 + $0x2ac] sm:$0xf]
      %v5712 = vld [vmem:[%s5 + $0x2b0] sm:$0xf]
      %v5713 = vld [vmem:[%s5 + $0x2b4] sm:$0xf]
      %v5714 = vld [vmem:[%s5 + $0x2b8] sm:$0xf]
      %v5715 = vld [vmem:[%s5 + $0x2bc] sm:$0xf]
      %v5716 = vld [vmem:[%s5 + $0x2c0] sm:$0xf]
      %v5717 = vld [vmem:[%s5 + $0x2c4] sm:$0xf]
      %v5718 = vld [vmem:[%s5 + $0x2c8] sm:$0xf]
      %v5719 = vld [vmem:[%s5 + $0x2cc] sm:$0xf]
      %v5720 = vld [vmem:[%s5 + $0x2d0] sm:$0xf]
      %v5721 = vld [vmem:[%s5 + $0x2d4] sm:$0xf]
      %v5722 = vld [vmem:[%s5 + $0x2d8] sm:$0xf]
      %v5723 = vld [vmem:[%s5 + $0x2dc] sm:$0xf]
      %v5724 = vld [vmem:[%s5 + $0x2e0] sm:$0xf]
      %v5725 = vld [vmem:[%s5 + $0x2e4] sm:$0xf]
      %v5726 = vld [vmem:[%s5 + $0x2e8] sm:$0xf]
      %v5727 = vld [vmem:[%s5 + $0x2ec] sm:$0xf]
      %v5728 = vld [vmem:[%s5 + $0x2f0] sm:$0xf]
      %v5729 = vld [vmem:[%s5 + $0x2f4] sm:$0xf]
      %v5730 = vld [vmem:[%s5 + $0x2f8] sm:$0xf]
      %v5731 = vld [vmem:[%s5 + $0x2fc] sm:$0xf]
      %v5732 = vld [vmem:[%s5 + $0x300] sm:$0xf]
      %v5733 = vld [vmem:[%s5 + $0x304] sm:$0xf]
      %v5734 = vld [vmem:[%s5 + $0x308] sm:$0xf]
      %v5735 = vld [vmem:[%s5 + $0x30c] sm:$0xf]
      %v5736 = vld [vmem:[%s5 + $0x310] sm:$0xf]
      %v5737 = vld [vmem:[%s5 + $0x314] sm:$0xf]
      %v5738 = vld [vmem:[%s5 + $0x318] sm:$0xf]
      %v5739 = vld [vmem:[%s5 + $0x31c] sm:$0xf]
      %v5740 = vld [vmem:[%s5 + $0x320] sm:$0xf]
      %v5741 = vld [vmem:[%s5 + $0x324] sm:$0xf]
      %v5742 = vld [vmem:[%s5 + $0x328] sm:$0xf]
      %v5743 = vld [vmem:[%s5 + $0x32c] sm:$0xf]
      %v5744 = vld [vmem:[%s5 + $0x330] sm:$0xf]
      %v5745 = vld [vmem:[%s5 + $0x334] sm:$0xf]
      %v5746 = vld [vmem:[%s5 + $0x338] sm:$0xf]
      %v5747 = vld [vmem:[%s5 + $0x33c] sm:$0xf]
      %v5748 = vld [vmem:[%s6] sm:$0x1]
      %v5751 = vcombine.high %v5538, %v5538
      %v5753 = vunpack.c.l.s4 1966171168
      %v5754 = vunpack.c.0.s8 %v5753
      %v5755 = vlaneseq
      %v5756 = vshrl.u32 %v5755, 7
      %v5757 = vsub.s32 %v5754, %v5756
      %v5758 = vrot.slane %v5538, %v5757
      %v5760 = vunpack.c.l.s4 1966171168
      %v5761 = vunpack.c.0.s8 %v5760
      %v5762 = vlaneseq
      %v5763 = vshrl.u32 %v5762, 7
      %v5764 = vsub.s32 %v5761, %v5763
      %v5765 = vrot.slane %v5751, %v5764
      %v5766 = vcombine.high %v5758, %v5758
      %v5767 = vcombine.high %v5765, %v5765
      %v5769 = vunpack.c.l.s4 1966171168
      %v5770 = vunpack.c.0.s8 %v5769
      %v5771 = vlaneseq
      %v5772 = vshrl.u32 %v5771, 7
      %v5773 = vsub.s32 %v5770, %v5772
      %v5774 = vrot.slane %v5758, %v5773
      %v5776 = vunpack.c.l.s4 1966171168
      %v5777 = vunpack.c.0.s8 %v5776
      %v5778 = vlaneseq
      %v5779 = vshrl.u32 %v5778, 7
      %v5780 = vsub.s32 %v5777, %v5779
      %v5781 = vrot.slane %v5765, %v5780
      %v5783 = vunpack.c.l.s4 1966171168
      %v5784 = vunpack.c.0.s8 %v5783
      %v5785 = vlaneseq
      %v5786 = vshrl.u32 %v5785, 7
      %v5787 = vsub.s32 %v5784, %v5786
      %v5788 = vrot.slane %v5766, %v5787
      %v5790 = vunpack.c.l.s4 1966171168
      %v5791 = vunpack.c.0.s8 %v5790
      %v5792 = vlaneseq
      %v5793 = vshrl.u32 %v5792, 7
      %v5794 = vsub.s32 %v5791, %v5793
      %v5795 = vrot.slane %v5767, %v5794
      %v5796 = vcombine.high %v5774, %v5774
      %v5797 = vcombine.high %v5781, %v5781
      %v5798 = vcombine.high %v5788, %v5788
      %v5799 = vcombine.high %v5795, %v5795
      %v5800 = vcombine.high %v5539, %v5539
      %v5802 = vunpack.c.l.s4 1966171168
      %v5803 = vunpack.c.0.s8 %v5802
      %v5804 = vlaneseq
      %v5805 = vshrl.u32 %v5804, 7
      %v5806 = vsub.s32 %v5803, %v5805
      %v5807 = vrot.slane %v5539, %v5806
      %v5809 = vunpack.c.l.s4 1966171168
      %v5810 = vunpack.c.0.s8 %v5809
      %v5811 = vlaneseq
      %v5812 = vshrl.u32 %v5811, 7
      %v5813 = vsub.s32 %v5810, %v5812
      %v5814 = vrot.slane %v5800, %v5813
      %v5815 = vcombine.high %v5807, %v5807
      %v5817 = vunpack.c.l.s4 1966171168
      %v5818 = vunpack.c.0.s8 %v5817
      %v5819 = vlaneseq
      %v5820 = vshrl.u32 %v5819, 7
      %v5821 = vsub.s32 %v5818, %v5820
      %v5822 = vrot.slane %v5807, %v5821
      %v5824 = vunpack.c.l.s4 1966171168
      %v5825 = vunpack.c.0.s8 %v5824
      %v5826 = vlaneseq
      %v5827 = vshrl.u32 %v5826, 7
      %v5828 = vsub.s32 %v5825, %v5827
      %v5829 = vrot.slane %v5814, %v5828
      %v5831 = vunpack.c.l.s4 1966171168
      %v5832 = vunpack.c.0.s8 %v5831
      %v5833 = vlaneseq
      %v5834 = vshrl.u32 %v5833, 7
      %v5835 = vsub.s32 %v5832, %v5834
      %v5836 = vrot.slane %v5815, %v5835
      %v5837 = vcombine.high %v5822, %v5822
      %v5838 = vcombine.high %v5836, %v5836
      %v6060 = vunpack.c.l.b16 %v5540
      %v6061 = vunpack.c.l.b16 %v5541
      %v6062 = vunpack.c.l.b16 %v5542
      %v6063 = vunpack.c.l.b16 %v5543
      %v6064 = vunpack.c.l.b16 %v5544
      %v6065 = vunpack.c.l.b16 %v5545
      %v6066 = vunpack.c.l.b16 %v5546
      %v6067 = vunpack.c.l.b16 %v5547
      %v6068 = vunpack.c.l.b16 %v5548
      %v6069 = vunpack.c.l.b16 %v5549
      %v6070 = vunpack.c.l.b16 %v5550
      %v6071 = vunpack.c.l.b16 %v5551
      %v6072 = vunpack.c.l.b16 %v5552
      %v6073 = vunpack.c.l.b16 %v5553
      %v6074 = vunpack.c.l.b16 %v5554
      %v6075 = vunpack.c.l.b16 %v5555
      %v6076 = vunpack.c.l.b16 %v5556
      %v6077 = vunpack.c.l.b16 %v5557
      %v6078 = vunpack.c.l.b16 %v5558
      %v6079 = vunpack.c.l.b16 %v5559
      %v6080 = vunpack.c.l.b16 %v5560
      %v6081 = vunpack.c.l.b16 %v5561
      %v6082 = vunpack.c.l.b16 %v5562
      %v6083 = vunpack.c.l.b16 %v5563
      %v6084 = vunpack.c.l.b16 %v5564
      %v6085 = vunpack.c.l.b16 %v5565
      %v6086 = vunpack.c.l.b16 %v5566
      %v6087 = vunpack.c.l.b16 %v5567
      %v6088 = vunpack.c.l.b16 %v5568
      %v6089 = vunpack.c.l.b16 %v5569
      %v6090 = vunpack.c.l.b16 %v5570
      %v6091 = vunpack.c.l.b16 %v5571
      %v6092 = vunpack.c.l.b16 %v5572
      %v6093 = vunpack.c.l.b16 %v5573
      %v6094 = vunpack.c.l.b16 %v5574
      %v6095 = vunpack.c.l.b16 %v5575
      %v6096 = vunpack.c.l.b16 %v5576
      %v6097 = vunpack.c.l.b16 %v5577
      %v6098 = vunpack.c.l.b16 %v5578
      %v6099 = vunpack.c.l.b16 %v5579
      %v6100 = vunpack.c.l.b16 %v5580
      %v6101 = vunpack.c.l.b16 %v5581
      %v6102 = vunpack.c.l.b16 %v5582
      %v6103 = vunpack.c.l.b16 %v5583
      %v6104 = vunpack.c.l.b16 %v5584
      %v6105 = vunpack.c.l.b16 %v5585
      %v6106 = vunpack.c.l.b16 %v5586
      %v6107 = vunpack.c.l.b16 %v5587
      %v6108 = vunpack.c.l.b16 %v5588
      %v6109 = vunpack.c.l.b16 %v5589
      %v6110 = vunpack.c.l.b16 %v5590
      %v6111 = vunpack.c.l.b16 %v5591
      %v6112 = vunpack.c.l.b16 %v5592
      %v6113 = vunpack.c.l.b16 %v5593
      %v6114 = vunpack.c.l.b16 %v5594
      %v6115 = vunpack.c.l.b16 %v5595
      %v6116 = vunpack.c.l.b16 %v5596
      %v6117 = vunpack.c.l.b16 %v5597
      %v6118 = vunpack.c.l.b16 %v5598
      %v6119 = vunpack.c.l.b16 %v5599
      %v6120 = vunpack.c.l.b16 %v5600
      %v6121 = vunpack.c.l.b16 %v5601
      %v6122 = vunpack.c.l.b16 %v5602
      %v6123 = vunpack.c.l.b16 %v5603
      %v6124 = vunpack.c.l.b16 %v5604
      %v6125 = vunpack.c.l.b16 %v5605
      %v6126 = vunpack.c.l.b16 %v5606
      %v6127 = vunpack.c.l.b16 %v5607
      %v6128 = vunpack.c.l.b16 %v5608
      %v6129 = vunpack.c.l.b16 %v5609
      %v6130 = vunpack.c.l.b16 %v5610
      %v6131 = vunpack.c.l.b16 %v5611
      %v6132 = vunpack.c.l.b16 %v5612
      %v6133 = vunpack.c.l.b16 %v5613
      %v6134 = vunpack.c.l.b16 %v5614
      %v6135 = vunpack.c.l.b16 %v5615
      %v6136 = vunpack.c.l.b16 %v5616
      %v6137 = vunpack.c.l.b16 %v5617
      %v6138 = vunpack.c.l.b16 %v5618
      %v6139 = vunpack.c.l.b16 %v5619
      %v6140 = vunpack.c.l.b16 %v5620
      %v6141 = vunpack.c.l.b16 %v5621
      %v6142 = vunpack.c.l.b16 %v5622
      %v6143 = vunpack.c.l.b16 %v5623
      %v6144 = vunpack.c.l.b16 %v5624
      %v6145 = vunpack.c.l.b16 %v5625
      %v6146 = vunpack.c.l.b16 %v5626
      %v6147 = vunpack.c.l.b16 %v5627
      %v6148 = vunpack.c.l.b16 %v5628
      %v6149 = vunpack.c.l.b16 %v5629
      %v6150 = vunpack.c.l.b16 %v5630
      %v6151 = vunpack.c.l.b16 %v5631
      %v6152 = vunpack.c.l.b16 %v5632
      %v6153 = vunpack.c.l.b16 %v5633
      %v6154 = vunpack.c.l.b16 %v5634
      %v6155 = vunpack.c.l.b16 %v5635
      %v6156 = vunpack.c.l.b16 %v5636
      %v6157 = vunpack.c.l.b16 %v5637
      %v6158 = vunpack.c.l.b16 %v5638
      %v6159 = vunpack.c.l.b16 %v5639
      %v6160 = vunpack.c.l.b16 %v5640
      %v6161 = vunpack.c.l.b16 %v5641
      %v6162 = vunpack.c.l.b16 %v5642
      %v6163 = vunpack.c.l.b16 %v5643
      %v6164 = vunpack.c.l.b16 %v5644
      %v6165 = vunpack.c.l.b16 %v5645
      %v6166 = vunpack.c.l.b16 %v5646
      %v6167 = vunpack.c.l.b16 %v5647
      %v6168 = vunpack.c.l.b16 %v5648
      %v6169 = vunpack.c.l.b16 %v5649
      %v6170 = vunpack.c.l.b16 %v5650
      %v6171 = vunpack.c.l.b16 %v5651
      %v6172 = vunpack.c.l.b16 %v5652
      %v6173 = vunpack.c.l.b16 %v5653
      %v6174 = vunpack.c.l.b16 %v5654
      %v6175 = vunpack.c.l.b16 %v5655
      %v6176 = vunpack.c.l.b16 %v5656
      %v6177 = vunpack.c.l.b16 %v5657
      %v6178 = vunpack.c.l.b16 %v5658
      %v6179 = vunpack.c.l.b16 %v5659
      %v6180 = vunpack.c.l.b16 %v5660
      %v6181 = vunpack.c.l.b16 %v5661
      %v6182 = vunpack.c.l.b16 %v5662
      %v6183 = vunpack.c.l.b16 %v5663
      %v6184 = vunpack.c.l.b16 %v5664
      %v6185 = vunpack.c.l.b16 %v5665
      %v6186 = vunpack.c.l.b16 %v5666
      %v6187 = vunpack.c.l.b16 %v5667
      %v6188 = vunpack.c.l.b16 %v5668
      %v6189 = vunpack.c.l.b16 %v5669
      %v6190 = vunpack.c.l.b16 %v5670
      %v6191 = vunpack.c.l.b16 %v5671
      %v6192 = vunpack.c.l.b16 %v5672
      %v6193 = vunpack.c.l.b16 %v5673
      %v6194 = vunpack.c.l.b16 %v5674
      %v6195 = vunpack.c.l.b16 %v5675
      %v6196 = vunpack.c.l.b16 %v5676
      %v6197 = vunpack.c.l.b16 %v5677
      %v6198 = vunpack.c.l.b16 %v5678
      %v6199 = vunpack.c.l.b16 %v5679
      %v6200 = vunpack.c.l.b16 %v5680
      %v6201 = vunpack.c.l.b16 %v5681
      %v6202 = vunpack.c.l.b16 %v5682
      %v6203 = vunpack.c.l.b16 %v5683
      %v6204 = vunpack.c.l.b16 %v5684
      %v6205 = vunpack.c.l.b16 %v5685
      %v6206 = vunpack.c.l.b16 %v5686
      %v6207 = vunpack.c.l.b16 %v5687
      %v6208 = vunpack.c.l.b16 %v5688
      %v6209 = vunpack.c.l.b16 %v5689
      %v6210 = vunpack.c.l.b16 %v5690
      %v6211 = vunpack.c.l.b16 %v5691
      %v6212 = vunpack.c.l.b16 %v5692
      %v6213 = vunpack.c.l.b16 %v5693
      %v6214 = vunpack.c.l.b16 %v5694
      %v6215 = vunpack.c.l.b16 %v5695
      %v6216 = vunpack.c.l.b16 %v5696
      %v6217 = vunpack.c.l.b16 %v5697
      %v6218 = vunpack.c.l.b16 %v5698
      %v6219 = vunpack.c.l.b16 %v5699
      %v6220 = vunpack.c.l.b16 %v5700
      %v6221 = vunpack.c.l.b16 %v5701
      %v6222 = vunpack.c.l.b16 %v5702
      %v6223 = vunpack.c.l.b16 %v5703
      %v6224 = vunpack.c.l.b16 %v5704
      %v6225 = vunpack.c.l.b16 %v5705
      %v6226 = vunpack.c.l.b16 %v5706
      %v6227 = vunpack.c.l.b16 %v5707
      %v6228 = vunpack.c.l.b16 %v5708
      %v6229 = vunpack.c.l.b16 %v5709
      %v6230 = vunpack.c.l.b16 %v5710
      %v6231 = vunpack.c.l.b16 %v5711
      %v6232 = vunpack.c.l.b16 %v5712
      %v6233 = vunpack.c.l.b16 %v5713
      %v6234 = vunpack.c.l.b16 %v5714
      %v6235 = vunpack.c.l.b16 %v5715
      %v6236 = vunpack.c.l.b16 %v5716
      %v6237 = vunpack.c.l.b16 %v5717
      %v6238 = vunpack.c.l.b16 %v5718
      %v6239 = vunpack.c.l.b16 %v5719
      %v6240 = vunpack.c.l.b16 %v5720
      %v6241 = vunpack.c.l.b16 %v5721
      %v6242 = vunpack.c.l.b16 %v5722
      %v6243 = vunpack.c.l.b16 %v5723
      %v6244 = vunpack.c.l.b16 %v5724
      %v6245 = vunpack.c.l.b16 %v5725
      %v6246 = vunpack.c.l.b16 %v5726
      %v6247 = vunpack.c.l.b16 %v5727
      %v6248 = vunpack.c.l.b16 %v5728
      %v6249 = vunpack.c.l.b16 %v5729
      %v6250 = vunpack.c.l.b16 %v5730
      %v6251 = vunpack.c.l.b16 %v5731
      %v6252 = vunpack.c.l.b16 %v5732
      %v6253 = vunpack.c.l.b16 %v5733
      %v6254 = vunpack.c.l.b16 %v5734
      %v6255 = vunpack.c.l.b16 %v5735
      %v6256 = vunpack.c.l.b16 %v5736
      %v6257 = vunpack.c.l.b16 %v5737
      %v6258 = vunpack.c.l.b16 %v5738
      %v6259 = vunpack.c.l.b16 %v5739
      %v6260 = vunpack.c.l.b16 %v5740
      %v6261 = vunpack.c.l.b16 %v5741
      %v6262 = vunpack.c.l.b16 %v5742
      %v6263 = vunpack.c.l.b16 %v5743
      %v6264 = vunpack.c.l.b16 %v5744
      %v6265 = vunpack.c.l.b16 %v5745
      %v6266 = vunpack.c.l.b16 %v5746
      %v6267 = vunpack.c.l.b16 %v5747
      %v6268 = vpack.c.b16 %v6061, %v6060
      %v6269 = vpack.c.b16 %v6063, %v6062
      %v6270 = vpack.c.b16 %v6065, %v6064
      %v6271 = vpack.c.b16 %v6067, %v6066
      %v6272 = vpack.c.b16 %v6069, %v6068
      %v6273 = vpack.c.b16 %v6071, %v6070
      %v6274 = vpack.c.b16 %v6073, %v6072
      %v6275 = vpack.c.b16 %v6075, %v6074
      %v6276 = vpack.c.b16 %v6077, %v6076
      %v6277 = vpack.c.b16 %v6079, %v6078
      %v6278 = vpack.c.b16 %v6081, %v6080
      %v6279 = vpack.c.b16 %v6083, %v6082
      %v6280 = vpack.c.b16 %v6085, %v6084
      %v6281 = vpack.c.b16 %v6087, %v6086
      %v6282 = vpack.c.b16 %v6089, %v6088
      %v6283 = vpack.c.b16 %v6091, %v6090
      %v6284 = vpack.c.b16 %v6093, %v6092
      %v6285 = vpack.c.b16 %v6095, %v6094
      %v6286 = vpack.c.b16 %v6097, %v6096
      %v6287 = vpack.c.b16 %v6099, %v6098
      %v6288 = vpack.c.b16 %v6101, %v6100
      %v6289 = vpack.c.b16 %v6103, %v6102
      %v6290 = vpack.c.b16 %v6105, %v6104
      %v6291 = vpack.c.b16 %v6107, %v6106
      %v6292 = vpack.c.b16 %v6109, %v6108
      %v6293 = vpack.c.b16 %v6111, %v6110
      %v6294 = vpack.c.b16 %v6113, %v6112
      %v6295 = vpack.c.b16 %v6115, %v6114
      %v6296 = vpack.c.b16 %v6117, %v6116
      %v6297 = vpack.c.b16 %v6119, %v6118
      %v6298 = vpack.c.b16 %v6121, %v6120
      %v6299 = vpack.c.b16 %v6123, %v6122
      %v6300 = vpack.c.b16 %v6125, %v6124
      %v6301 = vpack.c.b16 %v6127, %v6126
      %v6302 = vpack.c.b16 %v6129, %v6128
      %v6303 = vpack.c.b16 %v6131, %v6130
      %v6304 = vpack.c.b16 %v6133, %v6132
      %v6305 = vpack.c.b16 %v6135, %v6134
      %v6306 = vpack.c.b16 %v6137, %v6136
      %v6307 = vpack.c.b16 %v6139, %v6138
      %v6308 = vpack.c.b16 %v6141, %v6140
      %v6309 = vpack.c.b16 %v6143, %v6142
      %v6310 = vpack.c.b16 %v6145, %v6144
      %v6311 = vpack.c.b16 %v6147, %v6146
      %v6312 = vpack.c.b16 %v6149, %v6148
      %v6313 = vpack.c.b16 %v6151, %v6150
      %v6314 = vpack.c.b16 %v6153, %v6152
      %v6315 = vpack.c.b16 %v6155, %v6154
      %v6316 = vpack.c.b16 %v6157, %v6156
      %v6317 = vpack.c.b16 %v6159, %v6158
      %v6318 = vpack.c.b16 %v6161, %v6160
      %v6319 = vpack.c.b16 %v6163, %v6162
      %v6320 = vpack.c.b16 %v6165, %v6164
      %v6321 = vpack.c.b16 %v6167, %v6166
      %v6322 = vpack.c.b16 %v6169, %v6168
      %v6323 = vpack.c.b16 %v6171, %v6170
      %v6324 = vpack.c.b16 %v6173, %v6172
      %v6325 = vpack.c.b16 %v6175, %v6174
      %v6326 = vpack.c.b16 %v6177, %v6176
      %v6327 = vpack.c.b16 %v6179, %v6178
      %v6328 = vpack.c.b16 %v6181, %v6180
      %v6329 = vpack.c.b16 %v6183, %v6182
      %v6330 = vpack.c.b16 %v6185, %v6184
      %v6331 = vpack.c.b16 %v6187, %v6186
      %v6332 = vpack.c.b16 %v6189, %v6188
      %v6333 = vpack.c.b16 %v6191, %v6190
      %v6334 = vpack.c.b16 %v6193, %v6192
      %v6335 = vpack.c.b16 %v6195, %v6194
      %v6336 = vpack.c.b16 %v6197, %v6196
      %v6337 = vpack.c.b16 %v6199, %v6198
      %v6338 = vpack.c.b16 %v6201, %v6200
      %v6339 = vpack.c.b16 %v6203, %v6202
      %v6340 = vpack.c.b16 %v6205, %v6204
      %v6341 = vpack.c.b16 %v6207, %v6206
      %v6342 = vpack.c.b16 %v6209, %v6208
      %v6343 = vpack.c.b16 %v6211, %v6210
      %v6344 = vpack.c.b16 %v6213, %v6212
      %v6345 = vpack.c.b16 %v6215, %v6214
      %v6346 = vpack.c.b16 %v6217, %v6216
      %v6347 = vpack.c.b16 %v6219, %v6218
      %v6348 = vpack.c.b16 %v6221, %v6220
      %v6349 = vpack.c.b16 %v6223, %v6222
      %v6350 = vpack.c.b16 %v6225, %v6224
      %v6351 = vpack.c.b16 %v6227, %v6226
      %v6352 = vpack.c.b16 %v6229, %v6228
      %v6353 = vpack.c.b16 %v6231, %v6230
      %v6354 = vpack.c.b16 %v6233, %v6232
      %v6355 = vpack.c.b16 %v6235, %v6234
      %v6356 = vpack.c.b16 %v6237, %v6236
      %v6357 = vpack.c.b16 %v6239, %v6238
      %v6358 = vpack.c.b16 %v6241, %v6240
      %v6359 = vpack.c.b16 %v6243, %v6242
      %v6360 = vpack.c.b16 %v6245, %v6244
      %v6361 = vpack.c.b16 %v6247, %v6246
      %v6362 = vpack.c.b16 %v6249, %v6248
      %v6363 = vpack.c.b16 %v6251, %v6250
      %v6364 = vpack.c.b16 %v6253, %v6252
      %v6365 = vpack.c.b16 %v6255, %v6254
      %v6366 = vpack.c.b16 %v6257, %v6256
      %v6367 = vpack.c.b16 %v6259, %v6258
      %v6368 = vpack.c.b16 %v6261, %v6260
      %v6369 = vpack.c.b16 %v6263, %v6262
      %v6370 = vpack.c.b16 %v6265, %v6264
      %v6371 = vpack.c.b16 %v6267, %v6266
      %6476 = vmatprep.subr.bf16.mxu0 0
      %6477 = vmatpush1.bf16.msra.mxu0 %v6268
      %6478 = vmatprep.subr.bf16.mxu0 0
      %6479 = vmatpush1.bf16.msra.mxu0 %v6269
      %6480 = vmatprep.subr.bf16.mxu0 0
      %6481 = vmatpush1.bf16.msra.mxu0 %v6270
      %6482 = vmatprep.subr.bf16.mxu0 0
      %6483 = vmatpush1.bf16.msra.mxu0 %v6271
      %6484 = vmatprep.subr.bf16.mxu0 0
      %6485 = vmatpush1.bf16.msra.mxu0 %v6272
      %6486 = vmatprep.subr.bf16.mxu0 0
      %6487 = vmatpush1.bf16.msra.mxu0 %v6273
      %6488 = vmatprep.subr.bf16.mxu0 0
      %6489 = vmatpush1.bf16.msra.mxu0 %v6274
      %6490 = vmatprep.subr.bf16.mxu0 0
      %6491 = vmatpush1.bf16.msra.mxu0 %v6275
      %6492 = vmatprep.subr.bf16.mxu0 0
      %6493 = vmatpush1.bf16.msra.mxu0 %v6276
      %6494 = vmatprep.subr.bf16.mxu0 0
      %6495 = vmatpush1.bf16.msra.mxu0 %v6277
      %6496 = vmatprep.subr.bf16.mxu0 0
      %6497 = vmatpush1.bf16.msra.mxu0 %v6278
      %6498 = vmatprep.subr.bf16.mxu0 0
      %6499 = vmatpush1.bf16.msra.mxu0 %v6279
      %6500 = vmatprep.subr.bf16.mxu0 0
      %6501 = vmatpush1.bf16.msra.mxu0 %v6280
      %6502 = vmatprep.subr.bf16.mxu0 0
      %6503 = vmatpush1.bf16.msra.mxu0 %v6281
      %6504 = vmatprep.subr.bf16.mxu0 0
      %6505 = vmatpush1.bf16.msra.mxu0 %v6282
      %6506 = vmatprep.subr.bf16.mxu0 0
      %6507 = vmatpush1.bf16.msra.mxu0 %v6283
      %6508 = vmatprep.mubr.bf16.mxu0 %v5788
      %6509 = vmatmul.mubr.bf16.gmra.mrb[0].mxu0 %v5774
      %v6510 = vpop.f32.mrb[0].mxu0
      %v6511 = vadd.f32 %v5748, %v6510
      %v6512 = vpop.f32.mrb[0].mxu0
      %v6513 = vpop.f32.mrb[0].mxu0
      %v6514 = vpop.f32.mrb[0].mxu0
      %6515 = vdwg.mxu0
      %6516 = vmatprep.subr.bf16.mxu0 0
      %6517 = vmatpush1.bf16.msra.mxu0 %v6284
      %6518 = vmatprep.subr.bf16.mxu0 0
      %6519 = vmatpush1.bf16.msra.mxu0 %v6285
      %6520 = vmatprep.subr.bf16.mxu0 0
      %6521 = vmatpush1.bf16.msra.mxu0 %v6286
      %6522 = vmatprep.subr.bf16.mxu0 0
      %6523 = vmatpush1.bf16.msra.mxu0 %v6287
      %6524 = vmatprep.subr.bf16.mxu0 0
      %6525 = vmatpush1.bf16.msra.mxu0 %v6288
      %6526 = vmatprep.subr.bf16.mxu0 0
      %6527 = vmatpush1.bf16.msra.mxu0 %v6289
      %6528 = vmatprep.subr.bf16.mxu0 0
      %6529 = vmatpush1.bf16.msra.mxu0 %v6290
      %6530 = vmatprep.subr.bf16.mxu0 0
      %6531 = vmatpush1.bf16.msra.mxu0 %v6291
      %6532 = vmatprep.subr.bf16.mxu0 0
      %6533 = vmatpush1.bf16.msra.mxu0 %v6292
      %6534 = vmatprep.subr.bf16.mxu0 0
      %6535 = vmatpush1.bf16.msra.mxu0 %v6293
      %6536 = vmatprep.subr.bf16.mxu0 0
      %6537 = vmatpush1.bf16.msra.mxu0 %v6294
      %6538 = vmatprep.subr.bf16.mxu0 0
      %6539 = vmatpush1.bf16.msra.mxu0 %v6295
      %6540 = vmatprep.subr.bf16.mxu0 0
      %6541 = vmatpush1.bf16.msra.mxu0 %v6296
      %6542 = vmatprep.subr.bf16.mxu0 0
      %6543 = vmatpush1.bf16.msra.mxu0 %v6297
      %6544 = vmatprep.subr.bf16.mxu0 0
      %6545 = vmatpush1.bf16.msra.mxu0 %v6298
      %6546 = vmatprep.subr.bf16.mxu0 0
      %6547 = vmatpush1.bf16.msra.mxu0 %v6299
      %6548 = vmatprep.mubr.bf16.mxu0 %v5798
      %6549 = vmatmul.mubr.bf16.gmra.mrb[0].mxu0 %v5796
      %v6550 = vpop.f32.mrb[0].mxu0
      %v6551 = vadd.f32 %v6511, %v6550
      %v6552 = vpop.f32.mrb[0].mxu0
      %v6553 = vpop.f32.mrb[0].mxu0
      %v6554 = vpop.f32.mrb[0].mxu0
      %6555 = vdwg.mxu0
      %6556 = vmatprep.subr.bf16.mxu0 0
      %6557 = vmatpush1.bf16.msra.mxu0 %v6300
      %6558 = vmatprep.subr.bf16.mxu0 0
      %6559 = vmatpush1.bf16.msra.mxu0 %v6301
      %6560 = vmatprep.subr.bf16.mxu0 0
      %6561 = vmatpush1.bf16.msra.mxu0 %v6302
      %6562 = vmatprep.subr.bf16.mxu0 0
      %6563 = vmatpush1.bf16.msra.mxu0 %v6303
      %6564 = vmatprep.subr.bf16.mxu0 0
      %6565 = vmatpush1.bf16.msra.mxu0 %v6304
      %6566 = vmatprep.subr.bf16.mxu0 0
      %6567 = vmatpush1.bf16.msra.mxu0 %v6305
      %6568 = vmatprep.subr.bf16.mxu0 0
      %6569 = vmatpush1.bf16.msra.mxu0 %v6306
      %6570 = vmatprep.subr.bf16.mxu0 0
      %6571 = vmatpush1.bf16.msra.mxu0 %v6307
      %6572 = vmatprep.subr.bf16.mxu0 0
      %6573 = vmatpush1.bf16.msra.mxu0 %v6308
      %6574 = vmatprep.subr.bf16.mxu0 0
      %6575 = vmatpush1.bf16.msra.mxu0 %v6309
      %6576 = vmatprep.subr.bf16.mxu0 0
      %6577 = vmatpush1.bf16.msra.mxu0 %v6310
      %6578 = vmatprep.subr.bf16.mxu0 0
      %6579 = vmatpush1.bf16.msra.mxu0 %v6311
      %6580 = vmatprep.subr.bf16.mxu0 0
      %6581 = vmatpush1.bf16.msra.mxu0 %v6312
      %6582 = vmatprep.subr.bf16.mxu0 0
      %6583 = vmatpush1.bf16.msra.mxu0 %v6313
      %6584 = vmatprep.subr.bf16.mxu0 0
      %6585 = vmatpush1.bf16.msra.mxu0 %v6314
      %6586 = vmatprep.subr.bf16.mxu0 0
      %6587 = vmatpush1.bf16.msra.mxu0 %v6315
      %6588 = vmatprep.mubr.bf16.mxu0 %v5795
      %6589 = vmatmul.mubr.bf16.gmra.mrb[0].mxu0 %v5781
      %v6590 = vpop.f32.mrb[0].mxu0
      %v6591 = vadd.f32 %v6551, %v6590
      %v6592 = vpop.f32.mrb[0].mxu0
      %v6593 = vpop.f32.mrb[0].mxu0
      %v6594 = vpop.f32.mrb[0].mxu0
      %6595 = vdwg.mxu0
      %6596 = vmatprep.subr.bf16.mxu0 0
      %6597 = vmatpush1.bf16.msra.mxu0 %v6316
      %6598 = vmatprep.subr.bf16.mxu0 0
      %6599 = vmatpush1.bf16.msra.mxu0 %v6317
      %6600 = vmatprep.subr.bf16.mxu0 0
      %6601 = vmatpush1.bf16.msra.mxu0 %v6318
      %6602 = vmatprep.subr.bf16.mxu0 0
      %6603 = vmatpush1.bf16.msra.mxu0 %v6319
      %6604 = vmatprep.subr.bf16.mxu0 0
      %6605 = vmatpush1.bf16.msra.mxu0 %v6320
      %6606 = vmatprep.subr.bf16.mxu0 0
      %6607 = vmatpush1.bf16.msra.mxu0 %v6321
      %6608 = vmatprep.subr.bf16.mxu0 0
      %6609 = vmatpush1.bf16.msra.mxu0 %v6322
      %6610 = vmatprep.subr.bf16.mxu0 0
      %6611 = vmatpush1.bf16.msra.mxu0 %v6323
      %6612 = vmatprep.subr.bf16.mxu0 0
      %6613 = vmatpush1.bf16.msra.mxu0 %v6324
      %6614 = vmatprep.subr.bf16.mxu0 0
      %6615 = vmatpush1.bf16.msra.mxu0 %v6325
      %6616 = vmatprep.subr.bf16.mxu0 0
      %6617 = vmatpush1.bf16.msra.mxu0 %v6326
      %6618 = vmatprep.subr.bf16.mxu0 0
      %6619 = vmatpush1.bf16.msra.mxu0 %v6327
      %6620 = vmatprep.subr.bf16.mxu0 0
      %6621 = vmatpush1.bf16.msra.mxu0 %v6328
      %6622 = vmatprep.subr.bf16.mxu0 0
      %6623 = vmatpush1.bf16.msra.mxu0 %v6329
      %6624 = vmatprep.subr.bf16.mxu0 0
      %6625 = vmatpush1.bf16.msra.mxu0 %v6330
      %6626 = vmatprep.subr.bf16.mxu0 0
      %6627 = vmatpush1.bf16.msra.mxu0 %v6331
      %6628 = vmatprep.mubr.bf16.mxu0 %v5799
      %6629 = vmatmul.mubr.bf16.gmra.mrb[0].mxu0 %v5797
      %v6630 = vpop.f32.mrb[0].mxu0
      %v6631 = vadd.f32 %v6591, %v6630
      %v6632 = vpop.f32.mrb[0].mxu0
      %v6633 = vpop.f32.mrb[0].mxu0
      %v6634 = vpop.f32.mrb[0].mxu0
      %6635 = vdwg.mxu0
      %6636 = vmatprep.subr.bf16.mxu0 0
      %6637 = vmatpush1.bf16.msra.mxu0 %v6332
      %6638 = vmatprep.subr.bf16.mxu0 0
      %6639 = vmatpush1.bf16.msra.mxu0 %v6333
      %6640 = vmatprep.subr.bf16.mxu0 0
      %6641 = vmatpush1.bf16.msra.mxu0 %v6334
      %6642 = vmatprep.subr.bf16.mxu0 0
      %6643 = vmatpush1.bf16.msra.mxu0 %v6335
      %6644 = vmatprep.subr.bf16.mxu0 0
      %6645 = vmatpush1.bf16.msra.mxu0 %v6336
      %6646 = vmatprep.subr.bf16.mxu0 0
      %6647 = vmatpush1.bf16.msra.mxu0 %v6337
      %6648 = vmatprep.subr.bf16.mxu0 0
      %6649 = vmatpush1.bf16.msra.mxu0 %v6338
      %6650 = vmatprep.subr.bf16.mxu0 0
      %6651 = vmatpush1.bf16.msra.mxu0 %v6339
      %6652 = vmatprep.subr.bf16.mxu0 0
      %6653 = vmatpush1.bf16.msra.mxu0 %v6340
      %6654 = vmatprep.subr.bf16.mxu0 0
      %6655 = vmatpush1.bf16.msra.mxu0 %v6341
      %6656 = vmatprep.subr.bf16.mxu0 0
      %6657 = vmatpush1.bf16.msra.mxu0 %v6342
      %6658 = vmatprep.subr.bf16.mxu0 0
      %6659 = vmatpush1.bf16.msra.mxu0 %v6343
      %6660 = vmatprep.subr.bf16.mxu0 0
      %6661 = vmatpush1.bf16.msra.mxu0 %v6344
      %6662 = vmatprep.subr.bf16.mxu0 0
      %6663 = vmatpush1.bf16.msra.mxu0 %v6345
      %6664 = vmatprep.subr.bf16.mxu0 0
      %6665 = vmatpush1.bf16.msra.mxu0 %v6346
      %6666 = vmatprep.subr.bf16.mxu0 0
      %6667 = vmatpush1.bf16.msra.mxu0 %v6347
      %6668 = vmatprep.mubr.bf16.mxu0 %v5836
      %6669 = vmatmul.mubr.bf16.gmra.mrb[0].mxu0 %v5822
      %v6670 = vpop.f32.mrb[0].mxu0
      %v6671 = vadd.f32 %v6631, %v6670
      %v6672 = vpop.f32.mrb[0].mxu0
      %v6673 = vpop.f32.mrb[0].mxu0
      %v6674 = vpop.f32.mrb[0].mxu0
      %6675 = vdwg.mxu0
      %6676 = vmatprep.subr.bf16.mxu0 0
      %6677 = vmatpush1.bf16.msra.mxu0 %v6348
      %6678 = vmatprep.subr.bf16.mxu0 0
      %6679 = vmatpush1.bf16.msra.mxu0 %v6349
      %6680 = vmatprep.subr.bf16.mxu0 0
      %6681 = vmatpush1.bf16.msra.mxu0 %v6350
      %6682 = vmatprep.subr.bf16.mxu0 0
      %6683 = vmatpush1.bf16.msra.mxu0 %v6351
      %6684 = vmatprep.subr.bf16.mxu0 0
      %6685 = vmatpush1.bf16.msra.mxu0 %v6352
      %6686 = vmatprep.subr.bf16.mxu0 0
      %6687 = vmatpush1.bf16.msra.mxu0 %v6353
      %6688 = vmatprep.subr.bf16.mxu0 0
      %6689 = vmatpush1.bf16.msra.mxu0 %v6354
      %6690 = vmatprep.subr.bf16.mxu0 0
      %6691 = vmatpush1.bf16.msra.mxu0 %v6355
      %6692 = vmatprep.subr.bf16.mxu0 0
      %6693 = vmatpush1.bf16.msra.mxu0 %v6356
      %6694 = vmatprep.subr.bf16.mxu0 0
      %6695 = vmatpush1.bf16.msra.mxu0 %v6357
      %6696 = vmatprep.subr.bf16.mxu0 0
      %6697 = vmatpush1.bf16.msra.mxu0 %v6358
      %6698 = vmatprep.subr.bf16.mxu0 0
      %6699 = vmatpush1.bf16.msra.mxu0 %v6359
      %6700 = vmatprep.subr.bf16.mxu0 0
      %6701 = vmatpush1.bf16.msra.mxu0 %v6360
      %6702 = vmatprep.subr.bf16.mxu0 0
      %6703 = vmatpush1.bf16.msra.mxu0 %v6361
      %6704 = vmatprep.subr.bf16.mxu0 0
      %6705 = vmatpush1.bf16.msra.mxu0 %v6362
      %6706 = vmatprep.subr.bf16.mxu0 0
      %6707 = vmatpush1.bf16.msra.mxu0 %v6363
      %6708 = vmatprep.mubr.bf16.mxu0 %v5838
      %6709 = vmatmul.mubr.bf16.gmra.mrb[0].mxu0 %v5837
      %v6710 = vpop.f32.mrb[0].mxu0
      %v6711 = vadd.f32 %v6671, %v6710
      %v6712 = vpop.f32.mrb[0].mxu0
      %v6713 = vpop.f32.mrb[0].mxu0
      %v6714 = vpop.f32.mrb[0].mxu0
      %6715 = vdwg.mxu0
      %6716 = vmatprep.subr.bf16.mxu0 0
      %6717 = vmatpush1.bf16.msra.mxu0 %v6364
      %6718 = vmatprep.subr.bf16.mxu0 0
      %6719 = vmatpush1.bf16.msra.mxu0 %v6365
      %6720 = vmatprep.subr.bf16.mxu0 0
      %6721 = vmatpush1.bf16.msra.mxu0 %v6366
      %6722 = vmatprep.subr.bf16.mxu0 0
      %6723 = vmatpush1.bf16.msra.mxu0 %v6367
      %6724 = vmatprep.subr.bf16.mxu0 0
      %6725 = vmatpush1.bf16.msra.mxu0 %v6368
      %6726 = vmatprep.subr.bf16.mxu0 0
      %6727 = vmatpush1.bf16.msra.mxu0 %v6369
      %6728 = vmatprep.subr.bf16.mxu0 0
      %6729 = vmatpush1.bf16.msra.mxu0 %v6370
      %6730 = vmatprep.subr.bf16.mxu0 0
      %6731 = vmatpush1.bf16.msra.mxu0 %v6371
      %6732 = vmatprep.subr.bf16.mxu0 0
      %6733 = vmatpush1.bf16.msra.mxu0 0
      %6734 = vmatprep.subr.bf16.mxu0 0
      %6735 = vmatpush1.bf16.msra.mxu0 0
      %6736 = vmatprep.subr.bf16.mxu0 0
      %6737 = vmatpush1.bf16.msra.mxu0 0
      %6738 = vmatprep.subr.bf16.mxu0 0
      %6739 = vmatpush1.bf16.msra.mxu0 0
      %6740 = vmatprep.subr.bf16.mxu0 0
      %6741 = vmatpush1.bf16.msra.mxu0 0
      %6742 = vmatprep.subr.bf16.mxu0 0
      %6743 = vmatpush1.bf16.msra.mxu0 0
      %6744 = vmatprep.subr.bf16.mxu0 0
      %6745 = vmatpush1.bf16.msra.mxu0 0
      %6746 = vmatprep.subr.bf16.mxu0 0
      %6747 = vmatpush1.bf16.msra.mxu0 0
      %6748 = vmatprep.mubr.bf16.mxu0 0
      %6749 = vmatmul.mubr.bf16.gmra.mrb[0].mxu0 %v5829
      %v6750 = vpop.f32.mrb[0].mxu0
      %v6751 = vadd.f32 %v6711, %v6750
      %v6752 = vpop.f32.mrb[0].mxu0
      %v6753 = vpop.f32.mrb[0].mxu0
      %v6754 = vpop.f32.mrb[0].mxu0
      %6755 = vdwg.mxu0
      %v6756 = vmax.f32 %v6751, 0.0
      %v6757 = vpack.c.bf16 %v6756, %v6756
      %v6758 = vld [vmem:[%s7] sm:$0xf]
      %v6759 = vld [vmem:[%s7 + $0x4] sm:$0xf]
      %v6760 = vld [vmem:[%s7 + $0x8] sm:$0xf]
      %v6761 = vld [vmem:[%s7 + $0xc] sm:$0xf]
      %v6762 = vld [vmem:[%s7 + $0x10] sm:$0xf]
      %v6763 = vld [vmem:[%s7 + $0x14] sm:$0xf]
      %v6764 = vld [vmem:[%s7 + $0x18] sm:$0xf]
      %v6765 = vld [vmem:[%s7 + $0x1c] sm:$0xf]
      %v6766 = vld [vmem:[%s7 + $0x20] sm:$0xf]
      %v6767 = vld [vmem:[%s7 + $0x24] sm:$0xf]
      %v6768 = vld [vmem:[%s7 + $0x28] sm:$0xf]
      %v6769 = vld [vmem:[%s7 + $0x2c] sm:$0xf]
      %v6770 = vld [vmem:[%s7 + $0x30] sm:$0xf]
      %v6771 = vld [vmem:[%s7 + $0x34] sm:$0xf]
      %v6772 = vld [vmem:[%s7 + $0x38] sm:$0xf]
      %v6773 = vld [vmem:[%s7 + $0x3c] sm:$0xf]
      %v6774 = vld [vmem:[%s8] sm:$0x1]
      %v6791 = vunpack.c.l.b16 %v6758
      %v6792 = vunpack.c.l.b16 %v6759
      %v6793 = vunpack.c.l.b16 %v6760
      %v6794 = vunpack.c.l.b16 %v6761
      %v6795 = vunpack.c.l.b16 %v6762
      %v6796 = vunpack.c.l.b16 %v6763
      %v6797 = vunpack.c.l.b16 %v6764
      %v6798 = vunpack.c.l.b16 %v6765
      %v6799 = vunpack.c.l.b16 %v6766
      %v6800 = vunpack.c.l.b16 %v6767
      %v6801 = vunpack.c.l.b16 %v6768
      %v6802 = vunpack.c.l.b16 %v6769
      %v6803 = vunpack.c.l.b16 %v6770
      %v6804 = vunpack.c.l.b16 %v6771
      %v6805 = vunpack.c.l.b16 %v6772
      %v6806 = vunpack.c.l.b16 %v6773
      %v6807 = vpack.c.b16 %v6792, %v6791
      %v6808 = vpack.c.b16 %v6794, %v6793
      %v6809 = vpack.c.b16 %v6796, %v6795
      %v6810 = vpack.c.b16 %v6798, %v6797
      %v6811 = vpack.c.b16 %v6800, %v6799
      %v6812 = vpack.c.b16 %v6802, %v6801
      %v6813 = vpack.c.b16 %v6804, %v6803
      %v6814 = vpack.c.b16 %v6806, %v6805
      %6823 = vmatprep.subr.bf16.mxu0 0
      %6824 = vmatpush1.bf16.msra.mxu0 %v6807
      %6825 = vmatprep.subr.bf16.mxu0 0
      %6826 = vmatpush1.bf16.msra.mxu0 %v6808
      %6827 = vmatprep.subr.bf16.mxu0 0
      %6828 = vmatpush1.bf16.msra.mxu0 %v6809
      %6829 = vmatprep.subr.bf16.mxu0 0
      %6830 = vmatpush1.bf16.msra.mxu0 %v6810
      %6831 = vmatprep.subr.bf16.mxu0 0
      %6832 = vmatpush1.bf16.msra.mxu0 %v6811
      %6833 = vmatprep.subr.bf16.mxu0 0
      %6834 = vmatpush1.bf16.msra.mxu0 %v6812
      %6835 = vmatprep.subr.bf16.mxu0 0
      %6836 = vmatpush1.bf16.msra.mxu0 %v6813
      %6837 = vmatprep.subr.bf16.mxu0 0
      %6838 = vmatpush1.bf16.msra.mxu0 %v6814
      %6839 = vmatprep.subr.bf16.mxu0 0
      %6840 = vmatpush1.bf16.msra.mxu0 0
      %6841 = vmatprep.subr.bf16.mxu0 0
      %6842 = vmatpush1.bf16.msra.mxu0 0
      %6843 = vmatprep.subr.bf16.mxu0 0
      %6844 = vmatpush1.bf16.msra.mxu0 0
      %6845 = vmatprep.subr.bf16.mxu0 0
      %6846 = vmatpush1.bf16.msra.mxu0 0
      %6847 = vmatprep.subr.bf16.mxu0 0
      %6848 = vmatpush1.bf16.msra.mxu0 0
      %6849 = vmatprep.subr.bf16.mxu0 0
      %6850 = vmatpush1.bf16.msra.mxu0 0
      %6851 = vmatprep.subr.bf16.mxu0 0
      %6852 = vmatpush1.bf16.msra.mxu0 0
      %6853 = vmatprep.subr.bf16.mxu0 0
      %6854 = vmatpush1.bf16.msra.mxu0 0
      %6855 = vmatprep.mubr.bf16.mxu0 0
      %6856 = vmatmul.mubr.bf16.gmra.mrb[0].mxu0 %v6757
      %v6857 = vpop.f32.mrb[0].mxu0
      %v6858 = vadd.f32 %v6774, %v6857
      %v6859 = vpop.f32.mrb[0].mxu0
      %v6860 = vpop.f32.mrb[0].mxu0
      %v6861 = vpop.f32.mrb[0].mxu0
      %6862 = vdwg.mxu0
      %v6863 = vmax.f32 %v6858, 0.0
      %v6864 = vpack.c.bf16 %v6863, %v6863
      %v6865 = vld [vmem:[%s9] sm:$0xf]
      %v6866 = vld [vmem:[%s9 + $0x4] sm:$0xf]
      %v6867 = vld [vmem:[%s9 + $0x8] sm:$0xf]
      %v6868 = vld [vmem:[%s9 + $0xc] sm:$0xf]
      %v6869 = vld [vmem:[%s9 + $0x10] sm:$0xf]
      %v6870 = vld [vmem:[%s9 + $0x14] sm:$0xf]
      %v6871 = vld [vmem:[%s9 + $0x18] sm:$0xf]
      %v6872 = vld [vmem:[%s9 + $0x1c] sm:$0xf]
      %v6873 = vld [vmem:[%s9 + $0x20] sm:$0xf]
      %v6874 = vld [vmem:[%s9 + $0x24] sm:$0xf]
      %v6875 = vld [vmem:[%s9 + $0x28] sm:$0xf]
      %v6876 = vld [vmem:[%s9 + $0x2c] sm:$0xf]
      %v6877 = vld [vmem:[%s9 + $0x30] sm:$0xf]
      %v6878 = vld [vmem:[%s9 + $0x34] sm:$0xf]
      %v6879 = vld [vmem:[%s9 + $0x38] sm:$0xf]
      %v6880 = vld [vmem:[%s9 + $0x3c] sm:$0xf]
      %v6881 = vld [vmem:[%s10] sm:$0x1]
      %v6898 = vunpack.c.l.b16 %v6865
      %v6899 = vunpack.c.l.b16 %v6866
      %v6900 = vunpack.c.l.b16 %v6867
      %v6901 = vunpack.c.l.b16 %v6868
      %v6902 = vunpack.c.l.b16 %v6869
      %v6903 = vunpack.c.l.b16 %v6870
      %v6904 = vunpack.c.l.b16 %v6871
      %v6905 = vunpack.c.l.b16 %v6872
      %v6906 = vunpack.c.l.b16 %v6873
      %v6907 = vunpack.c.l.b16 %v6874
      %v6908 = vunpack.c.l.b16 %v6875
      %v6909 = vunpack.c.l.b16 %v6876
      %v6910 = vunpack.c.l.b16 %v6877
      %v6911 = vunpack.c.l.b16 %v6878
      %v6912 = vunpack.c.l.b16 %v6879
      %v6913 = vunpack.c.l.b16 %v6880
      %v6914 = vpack.c.b16 %v6899, %v6898
      %v6915 = vpack.c.b16 %v6901, %v6900
      %v6916 = vpack.c.b16 %v6903, %v6902
      %v6917 = vpack.c.b16 %v6905, %v6904
      %v6918 = vpack.c.b16 %v6907, %v6906
      %v6919 = vpack.c.b16 %v6909, %v6908
      %v6920 = vpack.c.b16 %v6911, %v6910
      %v6921 = vpack.c.b16 %v6913, %v6912
      %6930 = vmatprep.subr.bf16.mxu0 0
      %6931 = vmatpush1.bf16.msra.mxu0 %v6914
      %6932 = vmatprep.subr.bf16.mxu0 0
      %6933 = vmatpush1.bf16.msra.mxu0 %v6915
      %6934 = vmatprep.subr.bf16.mxu0 0
      %6935 = vmatpush1.bf16.msra.mxu0 %v6916
      %6936 = vmatprep.subr.bf16.mxu0 0
      %6937 = vmatpush1.bf16.msra.mxu0 %v6917
      %6938 = vmatprep.subr.bf16.mxu0 0
      %6939 = vmatpush1.bf16.msra.mxu0 %v6918
      %6940 = vmatprep.subr.bf16.mxu0 0
      %6941 = vmatpush1.bf16.msra.mxu0 %v6919
      %6942 = vmatprep.subr.bf16.mxu0 0
      %6943 = vmatpush1.bf16.msra.mxu0 %v6920
      %6944 = vmatprep.subr.bf16.mxu0 0
      %6945 = vmatpush1.bf16.msra.mxu0 %v6921
      %6946 = vmatprep.subr.bf16.mxu0 0
      %6947 = vmatpush1.bf16.msra.mxu0 0
      %6948 = vmatprep.subr.bf16.mxu0 0
      %6949 = vmatpush1.bf16.msra.mxu0 0
      %6950 = vmatprep.subr.bf16.mxu0 0
      %6951 = vmatpush1.bf16.msra.mxu0 0
      %6952 = vmatprep.subr.bf16.mxu0 0
      %6953 = vmatpush1.bf16.msra.mxu0 0
      %6954 = vmatprep.subr.bf16.mxu0 0
      %6955 = vmatpush1.bf16.msra.mxu0 0
      %6956 = vmatprep.subr.bf16.mxu0 0
      %6957 = vmatpush1.bf16.msra.mxu0 0
      %6958 = vmatprep.subr.bf16.mxu0 0
      %6959 = vmatpush1.bf16.msra.mxu0 0
      %6960 = vmatprep.subr.bf16.mxu0 0
      %6961 = vmatpush1.bf16.msra.mxu0 0
      %6962 = vmatprep.mubr.bf16.mxu0 0
      %6963 = vmatmul.mubr.bf16.gmra.mrb[0].mxu0 %v6864
      %v6964 = vpop.f32.mrb[0].mxu0
      %v6965 = vadd.f32 %v6881, %v6964
      %v6966 = vpop.f32.mrb[0].mxu0
      %v6967 = vpop.f32.mrb[0].mxu0
      %v6968 = vpop.f32.mrb[0].mxu0
      %6969 = vdwg.mxu0
      %v6970 = vlaneseq
      %v6971 = vshrl.u32 %v6970, 7
      %v6972 = vsub.s32 0, %v6971
      %v6973 = vrot.slane %v6965, %v6972
      %6974 = vst [vmem:[%s384] sm:$0xff] %v6973
      %p6975 = scmp.lt.s32.totalorder %s22, 1
      %s6976 = scalar_select %p6975, %s22, 1
      %s6977 = smul.addr %s6976, 8
      %s6978 = scalar_lea.vmem %s11, %s6977
      // Predicated region
      $region65: #{net_forward.1} parent=63 // pred_check
        %p6979 = pneg %p276
      $region66: #{net_forward.1} parent=63 // pred_check_branch
        %6981 = sbr.rel (%p6979) target = $region68
      $region67: #{net_forward.1} parent=63 // pred_region
        _
      $region68: #{net_forward.1} parent=63 // pred_fallthru
        _
    $region64: #{net_forward.1} parent=5 // pred_fallthru
      _
    %p6982 = scmp.le.s32.totalorder 2, %s17
    // Predicated region
    $region69: #{net_forward.1} parent=5 // pred_check
      %p6983 = pneg %p6982
    $region70: #{net_forward.1} parent=5 // pred_check_branch
      %6985 = sbr.rel (%p6983) target = $region72
    $region71: #{net_forward.1} parent=5 // pred_region
      %s6986 = ssub.s32 %s17, 2
      // Predicated region
      $region73: #{net_forward.1} parent=71 // pred_check
        %p6987 = pneg %p282
      $region74: #{net_forward.1} parent=71 // pred_check_branch
        %6989 = sbr.rel (%p6987) target = $region76
      $region75: #{net_forward.1} parent=71 // pred_region
        %p6990 = scmp.lt.s32.totalorder %s23, 1
        %s6991 = scalar_select %p6990, %s23, 1
        %s6992 = smul.addr %s6991, 8
        %s6993 = scalar_lea.vmem %s11, %s6992
      $region76: #{net_forward.1} parent=71 // pred_fallthru
        _
    $region72: #{net_forward.1} parent=5 // pred_fallthru
      _
  $region6: #{net_forward.1} parent=0 // loop_footer
    %s21 = sadd.s32 1, %s17
  $region7: #{net_forward.1} parent=0 // loop_footer_branch
    %16 = sbr.rel target = $region3
  $region8: #{net_forward.1} parent=0 // loop_exit
    _

</llo_original>
